<compile_context>
chip_gen: v5e
topology: v5e:2x2
jax: 0.10.0
libtpu: 0.0.40
codegen_flags: <defaults>
</compile_context>

<pallas_src>
import math
import jax
import jax.numpy as jnp
from jax.experimental import pallas as pl
from jax.experimental.pallas import tpu as pltpu

PADDING_IDX = 0
VMEM = pltpu.MemorySpace.VMEM

# On v6e/v7x with non-toy shapes set this to jnp.bfloat16 (MXU-native); f32
# accumulation is kept via preferred_element_type either way.  Kept f32 here to
# match the PyTorch reference numerics at these tiny shapes (and v5e has no
# bf16 VPU).
MATMUL_DTYPE = jnp.float32

SCAL_W = 128  # lane width of the packed scalar output


def _vspec():
    return pl.BlockSpec(memory_space=VMEM)


# ----------------------------- fused forward kernel -------------------------

def _make_fused_kernel(L, B, T, S, H, Dh, D, Dff, Vp):
    N = B * T

    def _log_softmax(x):
        m = jnp.max(x, axis=-1, keepdims=True)
        e = jnp.exp(x - m)
        return x - m - jnp.log(jnp.sum(e, axis=-1, keepdims=True))

    def _softplus(x):
        # numerically stable, avoids log1p for maximal Mosaic compatibility
        return jnp.where(x > 20.0, x, jnp.log(1.0 + jnp.exp(jnp.minimum(x, 20.0))))

    def _layernorm(h, g, b):
        mu = jnp.mean(h, axis=-1, keepdims=True)
        var = jnp.mean(jnp.square(h - mu), axis=-1, keepdims=True)
        return (h - mu) * jax.lax.rsqrt(var + 1e-5) * g + b

    def _mm(a, w):
        return jnp.dot(a.astype(MATMUL_DTYPE), w.astype(MATMUL_DTYPE),
                       preferred_element_type=jnp.float32)

    def _write_scalar(scal_ref, idx, val11):
        scal_ref[idx:idx + 1, :] = jnp.broadcast_to(val11, (1, SCAL_W))

    def _mha(q2d, k2d, v2d, Tq, Tk, wo, bo):
        # q2d: (B*Tq, D), k2d/v2d: (B*Tk, D); per-head attention with the
        # output projection folded into a per-head accumulation (no concat,
        # no transposes).
        scale = 1.0 / math.sqrt(Dh)
        q3 = q2d.reshape(B, Tq, D)
        k3 = k2d.reshape(B, Tk, D)
        v3 = v2d.reshape(B, Tk, D)
        acc = jnp.zeros((B * Tq, D), jnp.float32)
        for h in range(H):
            lo, hi = h * Dh, (h + 1) * Dh
            qh = q3[:, :, lo:hi]
            kh = k3[:, :, lo:hi]
            vh = v3[:, :, lo:hi]
            s = jnp.einsum('bqd,bkd->bqk',
                           qh.astype(MATMUL_DTYPE), kh.astype(MATMUL_DTYPE),
                           preferred_element_type=jnp.float32) * scale
            m = jnp.max(s, axis=-1, keepdims=True)
            p = jnp.exp(s - m)
            p = p / jnp.sum(p, axis=-1, keepdims=True)
            oh = jnp.einsum('bqk,bkd->bqd',
                            p.astype(MATMUL_DTYPE), vh.astype(MATMUL_DTYPE),
                            preferred_element_type=jnp.float32)
            acc = acc + _mm(oh.reshape(B * Tq, Dh), wo[lo:hi, :])
        return acc + bo

    def kernel(x_ref, mem_ref, onehot_ref, vmask_ref, gum_ref,
               emb_in_ref, w_lo_ref, b_lo_ref,
               sqkv_w_ref, sqkv_b_ref, s_wo_ref, s_bo_ref,
               cq_w_ref, cq_b_ref, ckv_w_ref, ckv_b_ref, c_wo_ref, c_bo_ref,
               ln_g_ref, ln_b_ref,
               ff_w1_ref, ff_b1_ref, ff_w2_ref, ff_b2_ref,
               small_w_ref, small_b_ref, hw_g_ref, hw_b_ref,
               logprobs_ref, scal_ref):
        scal_ref[...] = jnp.zeros_like(scal_ref)

        vmask = vmask_ref[...]                       # (1, Vp) 1 for real vocab
        neg = (vmask - 1.0) * 1e9                    # -1e9 on padded lanes
        onehot_valid = onehot_ref[...]               # (N, Vp), already * pad-mask
        mem2d = mem_ref[...]                         # (B*S, D)
        emb_in = emb_in_ref[...]                     # (Vp, D), padded rows = 0
        w_lo = w_lo_ref[...]                         # (D, Vp)
        b_lo = b_lo_ref[...]                         # (1, Vp)

        x = x_ref[...]                               # (N, D), b-major rows

        for l in range(L):                           # static unroll over layers
            # ----------------- VAE head + Highway (use_vae = l > 0) ---------
            if l > 0:
                logits = _mm(x, w_lo) + b_lo + neg
                logprob = _log_softmax(logits)
                # nll_loss(logprob, tgt, ignore_index=pad, reduction='sum')
                recon = -jnp.sum(logprob * onehot_valid, keepdims=True)

                sw = small_w_ref[l]                  # (3, D): alpha_w|beta_w|gate_w
                sb = small_b_ref[l]                  # (1, 4)
                alpha = _softplus(
                    jnp.sum(x * sw[0:1, :], axis=-1, keepdims=True) + sb[:, 0:1])
                beta = _softplus(
                    jnp.sum(x * sw[1:2, :], axis=-1, keepdims=True) + sb[:, 1:2])

                joined = alpha * logprob             # eval: no target one-hot mix
                joined_lp = _log_softmax(joined)
                # kl_div(joined_lp, logprob) = sum(exp(j)*(j - logprob))
                kl = jnp.sum(jnp.exp(joined_lp) * (joined_lp - logprob) * vmask,
                             keepdims=True)
                # log_gumbel_softmax(joined, tau=1.0)
                sampled_lp = _log_softmax(joined + gum_ref[l])
                probs = jnp.exp(sampled_lp) * vmask
                inp_embed = _mm(probs, emb_in)       # input_embedding(probs)

                gate = jax.nn.sigmoid(
                    jnp.sum(x * sw[2:3, :], axis=-1, keepdims=True) + sb[:, 2:3])
                x = _layernorm(x * gate + inp_embed * (1.0 - gate),
                               hw_g_ref[l], hw_b_ref[l])

                alpha_m = jnp.mean(alpha, keepdims=True)
                beta_m = jnp.mean(beta, keepdims=True)
            else:
                recon = jnp.zeros((1, 1), jnp.float32)
                kl = jnp.zeros((1, 1), jnp.float32)
                alpha_m = jnp.ones((1, 1), jnp.float32)   # self.alpha
                beta_m = jnp.ones((1, 1), jnp.float32)    # self.beta

            _write_scalar(scal_ref, l, recon)
            _write_scalar(scal_ref, L + l, kl)
            _write_scalar(scal_ref, 2 * L + l, alpha_m)
            _write_scalar(scal_ref, 3 * L + l, beta_m)

            # ----------------- post-norm transformer decoder layer ----------
            lng = ln_g_ref[l]                         # (3, D)
            lnb = ln_b_ref[l]

            # self-attention (fused QKV projection)
            qkv = _mm(x, sqkv_w_ref[l]) + sqkv_b_ref[l]           # (N, 3D)
            sa = _mha(qkv[:, 0:D], qkv[:, D:2 * D], qkv[:, 2 * D:3 * D],
                      T, T, s_wo_ref[l], s_bo_ref[l])
            x = _layernorm(x + sa, lng[0:1, :], lnb[0:1, :])

            # cross-attention (fused K/V projection of the memory)
            q = _mm(x, cq_w_ref[l]) + cq_b_ref[l]                 # (N, D)
            kv = _mm(mem2d, ckv_w_ref[l]) + ckv_b_ref[l]          # (B*S, 2D)
            ca = _mha(q, kv[:, 0:D], kv[:, D:2 * D],
                      T, S, c_wo_ref[l], c_bo_ref[l])
            x = _layernorm(x + ca, lng[1:2, :], lnb[1:2, :])

            # feed-forward
            hdn = jax.nn.gelu(_mm(x, ff_w1_ref[l]) + ff_b1_ref[l],
                              approximate=True)
            ff = _mm(hdn, ff_w2_ref[l]) + ff_b2_ref[l]
            x = _layernorm(x + ff, lng[2:3, :], lnb[2:3, :])

        # ----------------- final projection, log-softmax, NLL ---------------
        logits = _mm(x, w_lo) + b_lo + neg
        logprobs = _log_softmax(logits)
        final_loss = -jnp.sum(logprobs * onehot_valid, keepdims=True)
        logprobs_ref[...] = logprobs
        _write_scalar(scal_ref, 4 * L, final_loss)

    return kernel


# ------------------------------ host wrapper ---------------------------------

def transformer_decoder_vae_forward(params, prev_decoder_input, memory, tgt_seq,
                                    gumbels, nhead):
    T, B, D = prev_decoder_input.shape
    S = memory.shape[0]
    L = params['sqkv_w'].shape[0]
    V = params['w_lo'].shape[1]
    Dff = params['ff_w1'].shape[2]
    H = nhead
    Dh = D // H
    N, M = T * B, S * B
    Vp = 128 * pl.cdiv(V, 128)                  # lane-pad vocab to 128 multiple
    SR = 8 * pl.cdiv(4 * L + 1, 8)              # rows in the packed scalar output

    # b-major activations inside the kernel (row = b*T + t): avoids any
    # transposes inside the kernel; one cheap XLA transpose here and one at the
    # end to restore the module's time-first layout.
    x0 = prev_decoder_input.transpose(1, 0, 2).reshape(N, D)
    mem2d = memory.transpose(1, 0, 2).reshape(M, D)

    onehot = jax.nn.one_hot(tgt_seq, Vp, dtype=jnp.float32)        # (B, T, Vp)
    valid = (tgt_seq != PADDING_IDX).astype(jnp.float32)[..., None]
    onehot_valid = (onehot * valid).reshape(N, Vp)
    vmask = (jnp.arange(Vp) < V).astype(jnp.float32).reshape(1, Vp)

    emb_in = jnp.zeros((Vp, D), jnp.float32).at[:V, :].set(params['emb_in'])
    w_lo = jnp.zeros((D, Vp), jnp.float32).at[:, :V].set(params['w_lo'])
    b_lo = jnp.zeros((1, Vp), jnp.float32).at[:, :V].set(params['b_lo'])
    gum = jnp.zeros((L, 1, Vp), jnp.float32).at[:, :, :V].set(
        jnp.stack(gumbels, axis=0))

    kernel = _make_fused_kernel(L, B, T, S, H, Dh, D, Dff, Vp)
    n_in = 28
    logprobs_p, scal = pl.pallas_call(
        kernel,
        out_shape=(jax.ShapeDtypeStruct((N, Vp), jnp.float32),
                   jax.ShapeDtypeStruct((SR, SCAL_W), jnp.float32)),
        in_specs=[_vspec()] * n_in,
        out_specs=(_vspec(), _vspec()),
    )(x0, mem2d, onehot_valid, vmask, gum,
      emb_in, w_lo, b_lo,
      params['sqkv_w'], params['sqkv_b'], params['s_wo'], params['s_bo'],
      params['cq_w'], params['cq_b'], params['ckv_w'], params['ckv_b'],
      params['c_wo'], params['c_bo'],
      params['ln_g'], params['ln_b'],
      params['ff_w1'], params['ff_b1'], params['ff_w2'], params['ff_b2'],
      params['small_w'], params['small_b'], params['hw_g'], params['hw_b'])

    logprobs = logprobs_p.reshape(B, T, Vp)[:, :, :V].transpose(1, 0, 2)

    recon = [scal[l, 0] for l in range(L)]
    kl_losses = [scal[L + l, 0] for l in range(L)]
    alphas = [scal[2 * L + l, 0] for l in range(L)]
    betas = [scal[3 * L + l, 0] for l in range(L)]
    final_loss = scal[4 * L, 0]
    re_losses = recon[1:] + [final_loss]
    return logprobs, re_losses, kl_losses, alphas, betas


# ------------------------------- init / main --------------------------------

def init_params(key, nlayers, D, V, Dff):
    keys = jax.random.split(key, 32)
    it = iter(keys)

    def w(shape, scale=0.05):
        return scale * jax.random.normal(next(it), shape, jnp.float32)

    # one layer's parameters (copy.deepcopy in the PyTorch __init__ => all
    # layers start identical).  Real torch weights map by concatenation:
    #   sqkv_w = [Wq | Wk | Wv] (in_proj), ckv_w = [Wk | Wv], small_w rows are
    #   alpha_linear.weight / beta_linear.weight / highway.gate.weight.
    wq, wk, wv, wo = w((D, D)), w((D, D)), w((D, D)), w((D, D))
    cwq, cwk, cwv, cwo = w((D, D)), w((D, D)), w((D, D)), w((D, D))
    layer = dict(
        sqkv_w=jnp.concatenate([wq, wk, wv], axis=1),
        sqkv_b=jnp.zeros((1, 3 * D), jnp.float32),
        s_wo=wo, s_bo=jnp.zeros((1, D), jnp.float32),
        cq_w=cwq, cq_b=jnp.zeros((1, D), jnp.float32),
        ckv_w=jnp.concatenate([cwk, cwv], axis=1),
        ckv_b=jnp.zeros((1, 2 * D), jnp.float32),
        c_wo=cwo, c_bo=jnp.zeros((1, D), jnp.float32),
        ln_g=jnp.ones((3, D), jnp.float32),
        ln_b=jnp.zeros((3, D), jnp.float32),
        ff_w1=w((D, Dff)), ff_b1=jnp.zeros((1, Dff), jnp.float32),
        ff_w2=w((Dff, D)), ff_b2=jnp.zeros((1, D), jnp.float32),
        small_w=jnp.concatenate([w((1, D)), w((1, D)), w((1, D))], axis=0),
        small_b=jnp.zeros((1, 4), jnp.float32),   # [alpha_b, beta_b, gate_b, 0]
        hw_g=jnp.ones((1, D), jnp.float32),
        hw_b=jnp.zeros((1, D), jnp.float32),
    )
    params = {k: jnp.stack([v] * nlayers, axis=0) for k, v in layer.items()}
    params['emb_in'] = w((V, D), 0.1)
    params['w_lo'] = w((D, V), 0.1)
    params['b_lo'] = jnp.zeros((1, V), jnp.float32)
    return params


def gumbel_noise(key, V, eps=1e-20):
    U = jax.random.uniform(key, (V,), jnp.float32)
    return (-jnp.log(-jnp.log(U + eps) + eps)).reshape(1, V)


if __name__ == "__main__":
    T, B, S, D, V, H, Dff, L = 8, 2, 8, 32, 64, 4, 64, 2

    key = jax.random.PRNGKey(0)
    k_prev, k_mem, k_tgt, k_par, k_g = jax.random.split(key, 5)

    prev_decoder_input = jax.random.normal(k_prev, (T, B, D), jnp.float32)
    memory = jax.random.normal(k_mem, (S, B, D), jnp.float32)
    tgt_seq = jax.random.randint(k_tgt, (B, T), 0, V)
    tgt_seq = tgt_seq.at[:, -1].set(PADDING_IDX)   # exercise ignore_index

    params = init_params(k_par, L, D, V, Dff)
    gkeys = jax.random.split(k_g, L)
    gumbels = [gumbel_noise(gkeys[i], V) for i in range(L)]

    logprobs, re_losses, kl_losses, alphas, betas = transformer_decoder_vae_forward(
        params, prev_decoder_input, memory, tgt_seq, gumbels, H)

    jax.block_until_ready(logprobs)
    for x in list(re_losses) + list(kl_losses) + list(alphas) + list(betas):
        jax.block_until_ready(x)

    assert logprobs.shape == (T, B, V)
    assert bool(jnp.isfinite(logprobs).all())
    print("KERNEL_OK")
</pallas_src>

<mosaic_0001>
module attributes {stable_mosaic.version = 11 : i64} {
  func.func @kernel(%arg0: memref<16x32xf32, #tpu.memory_space<vmem>>, %arg1: memref<16x32xf32, #tpu.memory_space<vmem>>, %arg2: memref<16x128xf32, #tpu.memory_space<vmem>>, %arg3: memref<1x128xf32, #tpu.memory_space<vmem>>, %arg4: memref<2x1x128xf32, #tpu.memory_space<vmem>>, %arg5: memref<128x32xf32, #tpu.memory_space<vmem>>, %arg6: memref<32x128xf32, #tpu.memory_space<vmem>>, %arg7: memref<1x128xf32, #tpu.memory_space<vmem>>, %arg8: memref<2x32x96xf32, #tpu.memory_space<vmem>>, %arg9: memref<2x1x96xf32, #tpu.memory_space<vmem>>, %arg10: memref<2x32x32xf32, #tpu.memory_space<vmem>>, %arg11: memref<2x1x32xf32, #tpu.memory_space<vmem>>, %arg12: memref<2x32x32xf32, #tpu.memory_space<vmem>>, %arg13: memref<2x1x32xf32, #tpu.memory_space<vmem>>, %arg14: memref<2x32x64xf32, #tpu.memory_space<vmem>>, %arg15: memref<2x1x64xf32, #tpu.memory_space<vmem>>, %arg16: memref<2x32x32xf32, #tpu.memory_space<vmem>>, %arg17: memref<2x1x32xf32, #tpu.memory_space<vmem>>, %arg18: memref<2x3x32xf32, #tpu.memory_space<vmem>>, %arg19: memref<2x3x32xf32, #tpu.memory_space<vmem>>, %arg20: memref<2x32x64xf32, #tpu.memory_space<vmem>>, %arg21: memref<2x1x64xf32, #tpu.memory_space<vmem>>, %arg22: memref<2x64x32xf32, #tpu.memory_space<vmem>>, %arg23: memref<2x1x32xf32, #tpu.memory_space<vmem>>, %arg24: memref<2x3x32xf32, #tpu.memory_space<vmem>>, %arg25: memref<2x1x4xf32, #tpu.memory_space<vmem>>, %arg26: memref<2x1x32xf32, #tpu.memory_space<vmem>>, %arg27: memref<2x1x32xf32, #tpu.memory_space<vmem>>, %arg28: memref<16x128xf32, #tpu.memory_space<vmem>>, %arg29: memref<16x128xf32, #tpu.memory_space<vmem>>) attributes {dimension_semantics = [], scalar_prefetch = 0 : i64, scratch_operands = 0 : i64, tpu.core_type = #tpu.core_type<tc>} {
    %cst = arith.constant 0.000000e+00 : f32
    %0 = vector.broadcast %cst : f32 to vector<16x128xf32>
    %c0 = arith.constant 0 : index
    %c0_0 = arith.constant 0 : index
    %1 = vector.load %arg29[%c0, %c0_0] : memref<16x128xf32, #tpu.memory_space<vmem>>, vector<16x128xf32>
    tpu.vector_store %arg29[%c0, %c0_0], %0 {strides = array<i32>} : memref<16x128xf32, #tpu.memory_space<vmem>>, vector<16x128xf32>,
    %c0_1 = arith.constant 0 : index
    %c0_2 = arith.constant 0 : index
    %2 = vector.load %arg3[%c0_1, %c0_2] : memref<1x128xf32, #tpu.memory_space<vmem>>, vector<1x128xf32>
    %cst_3 = arith.constant 1.000000e+00 : f32
    %3 = vector.broadcast %cst_3 : f32 to vector<1x128xf32>
    %4 = arith.subf %2, %3 : vector<1x128xf32>
    %cst_4 = arith.constant 1.000000e+09 : f32
    %5 = vector.broadcast %cst_4 : f32 to vector<1x128xf32>
    %6 = arith.mulf %4, %5 : vector<1x128xf32>
    %c0_5 = arith.constant 0 : index
    %c0_6 = arith.constant 0 : index
    %7 = vector.load %arg2[%c0_5, %c0_6] : memref<16x128xf32, #tpu.memory_space<vmem>>, vector<16x128xf32>
    %c0_7 = arith.constant 0 : index
    %c0_8 = arith.constant 0 : index
    %8 = vector.load %arg1[%c0_7, %c0_8] : memref<16x32xf32, #tpu.memory_space<vmem>>, vector<16x32xf32>
    %c0_9 = arith.constant 0 : index
    %c0_10 = arith.constant 0 : index
    %9 = vector.load %arg5[%c0_9, %c0_10] : memref<128x32xf32, #tpu.memory_space<vmem>>, vector<128x32xf32>
    %c0_11 = arith.constant 0 : index
    %c0_12 = arith.constant 0 : index
    %10 = vector.load %arg6[%c0_11, %c0_12] : memref<32x128xf32, #tpu.memory_space<vmem>>, vector<32x128xf32>
    %c0_13 = arith.constant 0 : index
    %c0_14 = arith.constant 0 : index
    %11 = vector.load %arg7[%c0_13, %c0_14] : memref<1x128xf32, #tpu.memory_space<vmem>>, vector<1x128xf32>
    %c0_15 = arith.constant 0 : index
    %c0_16 = arith.constant 0 : index
    %12 = vector.load %arg0[%c0_15, %c0_16] : memref<16x32xf32, #tpu.memory_space<vmem>>, vector<16x32xf32>
    %cst_17 = arith.constant 0.000000e+00 : f32
    %13 = vector.broadcast %cst_17 : f32 to vector<1x1xf32>
    %cst_18 = arith.constant 0.000000e+00 : f32
    %14 = vector.broadcast %cst_18 : f32 to vector<1x1xf32>
    %cst_19 = arith.constant 1.000000e+00 : f32
    %15 = vector.broadcast %cst_19 : f32 to vector<1x1xf32>
    %cst_20 = arith.constant 1.000000e+00 : f32
    %16 = vector.broadcast %cst_20 : f32 to vector<1x1xf32>
    %17 = vector.shape_cast %13 : vector<1x1xf32> to vector<1x1xf32>
    %18 = vector.broadcast %17 : vector<1x1xf32> to vector<1x128xf32>
    %c0_21 = arith.constant 0 : index
    %c0_22 = arith.constant 0 : index
    %19 = vector.load %arg29[%c0_21, %c0_22] : memref<16x128xf32, #tpu.memory_space<vmem>>, vector<1x128xf32>
    tpu.vector_store %arg29[%c0_21, %c0_22], %18 {strides = array<i32>} : memref<16x128xf32, #tpu.memory_space<vmem>>, vector<1x128xf32>,
    %20 = vector.shape_cast %14 : vector<1x1xf32> to vector<1x1xf32>
    %21 = vector.broadcast %20 : vector<1x1xf32> to vector<1x128xf32>
    %c2 = arith.constant 2 : index
    %c0_23 = arith.constant 0 : index
    %22 = vector.load %arg29[%c2, %c0_23] : memref<16x128xf32, #tpu.memory_space<vmem>>, vector<1x128xf32>
    tpu.vector_store %arg29[%c2, %c0_23], %21 {strides = array<i32>} : memref<16x128xf32, #tpu.memory_space<vmem>>, vector<1x128xf32>,
    %23 = vector.shape_cast %15 : vector<1x1xf32> to vector<1x1xf32>
    %24 = vector.broadcast %23 : vector<1x1xf32> to vector<1x128xf32>
    %c4 = arith.constant 4 : index
    %c0_24 = arith.constant 0 : index
    %25 = vector.load %arg29[%c4, %c0_24] : memref<16x128xf32, #tpu.memory_space<vmem>>, vector<1x128xf32>
    tpu.vector_store %arg29[%c4, %c0_24], %24 {strides = array<i32>} : memref<16x128xf32, #tpu.memory_space<vmem>>, vector<1x128xf32>,
    %26 = vector.shape_cast %16 : vector<1x1xf32> to vector<1x1xf32>
    %27 = vector.broadcast %26 : vector<1x1xf32> to vector<1x128xf32>
    %c6 = arith.constant 6 : index
    %c0_25 = arith.constant 0 : index
    %28 = vector.load %arg29[%c6, %c0_25] : memref<16x128xf32, #tpu.memory_space<vmem>>, vector<1x128xf32>
    tpu.vector_store %arg29[%c6, %c0_25], %27 {strides = array<i32>} : memref<16x128xf32, #tpu.memory_space<vmem>>, vector<1x128xf32>,
    %c0_26 = arith.constant 0 : index
    %c0_27 = arith.constant 0 : index
    %c0_28 = arith.constant 0 : index
    %29 = vector.load %arg18[%c0_26, %c0_27, %c0_28] : memref<2x3x32xf32, #tpu.memory_space<vmem>>, vector<1x3x32xf32>
    %30 = vector.shape_cast %29 : vector<1x3x32xf32> to vector<3x32xf32>
    %c0_29 = arith.constant 0 : index
    %c0_30 = arith.constant 0 : index
    %c0_31 = arith.constant 0 : index
    %31 = vector.load %arg19[%c0_29, %c0_30, %c0_31] : memref<2x3x32xf32, #tpu.memory_space<vmem>>, vector<1x3x32xf32>
    %32 = vector.shape_cast %31 : vector<1x3x32xf32> to vector<3x32xf32>
    %c0_32 = arith.constant 0 : index
    %c0_33 = arith.constant 0 : index
    %c0_34 = arith.constant 0 : index
    %33 = vector.load %arg8[%c0_32, %c0_33, %c0_34] : memref<2x32x96xf32, #tpu.memory_space<vmem>>, vector<1x32x96xf32>
    %34 = vector.shape_cast %33 : vector<1x32x96xf32> to vector<32x96xf32>
    %cst_35 = arith.constant dense<0.000000e+00> : vector<16x96xf32>
    %35 = tpu.matmul %12, %34, %cst_35 {dimension_numbers = #tpu.dot_dimension_numbers<[1], [0], [0], [1], [0, 0, 1, 1], [], []>} : vector<16x32xf32>, vector<32x96xf32>, vector<16x96xf32> -> vector<16x96xf32>
    %c0_36 = arith.constant 0 : index
    %c0_37 = arith.constant 0 : index
    %c0_38 = arith.constant 0 : index
    %36 = vector.load %arg9[%c0_36, %c0_37, %c0_38] : memref<2x1x96xf32, #tpu.memory_space<vmem>>, vector<1x1x96xf32>
    %37 = vector.shape_cast %36 : vector<1x1x96xf32> to vector<1x96xf32>
    %38 = vector.broadcast %37 : vector<1x96xf32> to vector<16x96xf32>
    %39 = arith.addf %35, %38 : vector<16x96xf32>
    %40 = vector.extract_strided_slice %39 {offsets = [0, 0], sizes = [16, 32], strides = [1, 1]} : vector<16x96xf32> to vector<16x32xf32>
    %41 = vector.extract_strided_slice %39 {offsets = [0, 32], sizes = [16, 32], strides = [1, 1]} : vector<16x96xf32> to vector<16x32xf32>
    %42 = vector.extract_strided_slice %39 {offsets = [0, 64], sizes = [16, 32], strides = [1, 1]} : vector<16x96xf32> to vector<16x32xf32>
    %c0_39 = arith.constant 0 : index
    %c0_40 = arith.constant 0 : index
    %c0_41 = arith.constant 0 : index
    %43 = vector.load %arg10[%c0_39, %c0_40, %c0_41] : memref<2x32x32xf32, #tpu.memory_space<vmem>>, vector<1x32x32xf32>
    %44 = vector.shape_cast %43 : vector<1x32x32xf32> to vector<32x32xf32>
    %c0_42 = arith.constant 0 : index
    %c0_43 = arith.constant 0 : index
    %c0_44 = arith.constant 0 : index
    %45 = vector.load %arg11[%c0_42, %c0_43, %c0_44] : memref<2x1x32xf32, #tpu.memory_space<vmem>>, vector<1x1x32xf32>
    %46 = vector.shape_cast %45 : vector<1x1x32xf32> to vector<1x32xf32>
    %47 = vector.shape_cast %40 : vector<16x32xf32> to vector<2x8x32xf32>
    %48 = vector.shape_cast %41 : vector<16x32xf32> to vector<2x8x32xf32>
    %49 = vector.shape_cast %42 : vector<16x32xf32> to vector<2x8x32xf32>
    %cst_45 = arith.constant 0.000000e+00 : f32
    %50 = vector.broadcast %cst_45 : f32 to vector<16x32xf32>
    %51 = vector.extract_strided_slice %47 {offsets = [0, 0, 0], sizes = [2, 8, 8], strides = [1, 1, 1]} : vector<2x8x32xf32> to vector<2x8x8xf32>
    %52 = vector.extract_strided_slice %48 {offsets = [0, 0, 0], sizes = [2, 8, 8], strides = [1, 1, 1]} : vector<2x8x32xf32> to vector<2x8x8xf32>
    %53 = vector.extract_strided_slice %49 {offsets = [0, 0, 0], sizes = [2, 8, 8], strides = [1, 1, 1]} : vector<2x8x32xf32> to vector<2x8x8xf32>
    "tpu.trace_start"() <{level = 10 : i32, message = "bqd,bkd->bqk"}> : () -> ()
    %cst_46 = arith.constant dense<0.000000e+00> : vector<2x8x8xf32>
    %54 = tpu.matmul %51, %52, %cst_46 {dimension_numbers = #tpu.dot_dimension_numbers<[2], [2], [1], [1], [0, 0, 0, 1, 1, 1], [0], [0]>} : vector<2x8x8xf32>, vector<2x8x8xf32>, vector<2x8x8xf32> -> vector<2x8x8xf32>
    "tpu.trace_stop"() : () -> ()
    %cst_47 = arith.constant 0.353553385 : f32
    %55 = vector.broadcast %cst_47 : f32 to vector<2x8x8xf32>
    %56 = arith.mulf %54, %55 : vector<2x8x8xf32>
    %cst_48 = arith.constant dense<0xFF800000> : vector<2x8xf32>
    %57 = vector.multi_reduction <maximumf>, %56, %cst_48 [2] : vector<2x8x8xf32> to vector<2x8xf32>
    %58 = vector.shape_cast %57 : vector<2x8xf32> to vector<2x8x1xf32>
    %59 = vector.broadcast %58 : vector<2x8x1xf32> to vector<2x8x8xf32>
    %60 = arith.subf %56, %59 : vector<2x8x8xf32>
    %61 = math.exp %60 : vector<2x8x8xf32>
    %cst_49 = arith.constant dense<0.000000e+00> : vector<2x8xf32>
    %62 = vector.multi_reduction <add>, %61, %cst_49 [2] : vector<2x8x8xf32> to vector<2x8xf32>
    %63 = vector.shape_cast %62 : vector<2x8xf32> to vector<2x8x1xf32>
    %64 = vector.broadcast %63 : vector<2x8x1xf32> to vector<2x8x8xf32>
    %65 = arith.divf %61, %64 : vector<2x8x8xf32>
    "tpu.trace_start"() <{level = 10 : i32, message = "bqk,bkd->bqd"}> : () -> ()
    %cst_50 = arith.constant dense<0.000000e+00> : vector<2x8x8xf32>
    %66 = tpu.matmul %65, %53, %cst_50 {dimension_numbers = #tpu.dot_dimension_numbers<[2], [1], [1], [2], [0, 0, 0, 1, 1, 2], [0], [0]>} : vector<2x8x8xf32>, vector<2x8x8xf32>, vector<2x8x8xf32> -> vector<2x8x8xf32>
    "tpu.trace_stop"() : () -> ()
    %67 = vector.shape_cast %66 : vector<2x8x8xf32> to vector<16x8xf32>
    %68 = vector.extract_strided_slice %44 {offsets = [0, 0], sizes = [8, 32], strides = [1, 1]} : vector<32x32xf32> to vector<8x32xf32>
    %cst_51 = arith.constant dense<0.000000e+00> : vector<16x32xf32>
    %69 = tpu.matmul %67, %68, %cst_51 {dimension_numbers = #tpu.dot_dimension_numbers<[1], [0], [0], [1], [0, 0, 1, 1], [], []>} : vector<16x8xf32>, vector<8x32xf32>, vector<16x32xf32> -> vector<16x32xf32>
    %70 = arith.addf %50, %69 : vector<16x32xf32>
    %71 = vector.extract_strided_slice %47 {offsets = [0, 0, 8], sizes = [2, 8, 8], strides = [1, 1, 1]} : vector<2x8x32xf32> to vector<2x8x8xf32>
    %72 = vector.extract_strided_slice %48 {offsets = [0, 0, 8], sizes = [2, 8, 8], strides = [1, 1, 1]} : vector<2x8x32xf32> to vector<2x8x8xf32>
    %73 = vector.extract_strided_slice %49 {offsets = [0, 0, 8], sizes = [2, 8, 8], strides = [1, 1, 1]} : vector<2x8x32xf32> to vector<2x8x8xf32>
    "tpu.trace_start"() <{level = 10 : i32, message = "bqd,bkd->bqk"}> : () -> ()
    %cst_52 = arith.constant dense<0.000000e+00> : vector<2x8x8xf32>
    %74 = tpu.matmul %71, %72, %cst_52 {dimension_numbers = #tpu.dot_dimension_numbers<[2], [2], [1], [1], [0, 0, 0, 1, 1, 1], [0], [0]>} : vector<2x8x8xf32>, vector<2x8x8xf32>, vector<2x8x8xf32> -> vector<2x8x8xf32>
    "tpu.trace_stop"() : () -> ()
    %cst_53 = arith.constant 0.353553385 : f32
    %75 = vector.broadcast %cst_53 : f32 to vector<2x8x8xf32>
    %76 = arith.mulf %74, %75 : vector<2x8x8xf32>
    %cst_54 = arith.constant dense<0xFF800000> : vector<2x8xf32>
    %77 = vector.multi_reduction <maximumf>, %76, %cst_54 [2] : vector<2x8x8xf32> to vector<2x8xf32>
    %78 = vector.shape_cast %77 : vector<2x8xf32> to vector<2x8x1xf32>
    %79 = vector.broadcast %78 : vector<2x8x1xf32> to vector<2x8x8xf32>
    %80 = arith.subf %76, %79 : vector<2x8x8xf32>
    %81 = math.exp %80 : vector<2x8x8xf32>
    %cst_55 = arith.constant dense<0.000000e+00> : vector<2x8xf32>
    %82 = vector.multi_reduction <add>, %81, %cst_55 [2] : vector<2x8x8xf32> to vector<2x8xf32>
    %83 = vector.shape_cast %82 : vector<2x8xf32> to vector<2x8x1xf32>
    %84 = vector.broadcast %83 : vector<2x8x1xf32> to vector<2x8x8xf32>
    %85 = arith.divf %81, %84 : vector<2x8x8xf32>
    "tpu.trace_start"() <{level = 10 : i32, message = "bqk,bkd->bqd"}> : () -> ()
    %cst_56 = arith.constant dense<0.000000e+00> : vector<2x8x8xf32>
    %86 = tpu.matmul %85, %73, %cst_56 {dimension_numbers = #tpu.dot_dimension_numbers<[2], [1], [1], [2], [0, 0, 0, 1, 1, 2], [0], [0]>} : vector<2x8x8xf32>, vector<2x8x8xf32>, vector<2x8x8xf32> -> vector<2x8x8xf32>
    "tpu.trace_stop"() : () -> ()
    %87 = vector.shape_cast %86 : vector<2x8x8xf32> to vector<16x8xf32>
    %88 = vector.extract_strided_slice %44 {offsets = [8, 0], sizes = [8, 32], strides = [1, 1]} : vector<32x32xf32> to vector<8x32xf32>
    %cst_57 = arith.constant dense<0.000000e+00> : vector<16x32xf32>
    %89 = tpu.matmul %87, %88, %cst_57 {dimension_numbers = #tpu.dot_dimension_numbers<[1], [0], [0], [1], [0, 0, 1, 1], [], []>} : vector<16x8xf32>, vector<8x32xf32>, vector<16x32xf32> -> vector<16x32xf32>
    %90 = arith.addf %70, %89 : vector<16x32xf32>
    %91 = vector.extract_strided_slice %47 {offsets = [0, 0, 16], sizes = [2, 8, 8], strides = [1, 1, 1]} : vector<2x8x32xf32> to vector<2x8x8xf32>
    %92 = vector.extract_strided_slice %48 {offsets = [0, 0, 16], sizes = [2, 8, 8], strides = [1, 1, 1]} : vector<2x8x32xf32> to vector<2x8x8xf32>
    %93 = vector.extract_strided_slice %49 {offsets = [0, 0, 16], sizes = [2, 8, 8], strides = [1, 1, 1]} : vector<2x8x32xf32> to vector<2x8x8xf32>
    "tpu.trace_start"() <{level = 10 : i32, message = "bqd,bkd->bqk"}> : () -> ()
    %cst_58 = arith.constant dense<0.000000e+00> : vector<2x8x8xf32>
    %94 = tpu.matmul %91, %92, %cst_58 {dimension_numbers = #tpu.dot_dimension_numbers<[2], [2], [1], [1], [0, 0, 0, 1, 1, 1], [0], [0]>} : vector<2x8x8xf32>, vector<2x8x8xf32>, vector<2x8x8xf32> -> vector<2x8x8xf32>
    "tpu.trace_stop"() : () -> ()
    %cst_59 = arith.constant 0.353553385 : f32
    %95 = vector.broadcast %cst_59 : f32 to vector<2x8x8xf32>
    %96 = arith.mulf %94, %95 : vector<2x8x8xf32>
    %cst_60 = arith.constant dense<0xFF800000> : vector<2x8xf32>
    %97 = vector.multi_reduction <maximumf>, %96, %cst_60 [2] : vector<2x8x8xf32> to vector<2x8xf32>
    %98 = vector.shape_cast %97 : vector<2x8xf32> to vector<2x8x1xf32>
    %99 = vector.broadcast %98 : vector<2x8x1xf32> to vector<2x8x8xf32>
    %100 = arith.subf %96, %99 : vector<2x8x8xf32>
    %101 = math.exp %100 : vector<2x8x8xf32>
    %cst_61 = arith.constant dense<0.000000e+00> : vector<2x8xf32>
    %102 = vector.multi_reduction <add>, %101, %cst_61 [2] : vector<2x8x8xf32> to vector<2x8xf32>
    %103 = vector.shape_cast %102 : vector<2x8xf32> to vector<2x8x1xf32>
    %104 = vector.broadcast %103 : vector<2x8x1xf32> to vector<2x8x8xf32>
    %105 = arith.divf %101, %104 : vector<2x8x8xf32>
    "tpu.trace_start"() <{level = 10 : i32, message = "bqk,bkd->bqd"}> : () -> ()
    %cst_62 = arith.constant dense<0.000000e+00> : vector<2x8x8xf32>
    %106 = tpu.matmul %105, %93, %cst_62 {dimension_numbers = #tpu.dot_dimension_numbers<[2], [1], [1], [2], [0, 0, 0, 1, 1, 2], [0], [0]>} : vector<2x8x8xf32>, vector<2x8x8xf32>, vector<2x8x8xf32> -> vector<2x8x8xf32>
    "tpu.trace_stop"() : () -> ()
    %107 = vector.shape_cast %106 : vector<2x8x8xf32> to vector<16x8xf32>
    %108 = vector.extract_strided_slice %44 {offsets = [16, 0], sizes = [8, 32], strides = [1, 1]} : vector<32x32xf32> to vector<8x32xf32>
    %cst_63 = arith.constant dense<0.000000e+00> : vector<16x32xf32>
    %109 = tpu.matmul %107, %108, %cst_63 {dimension_numbers = #tpu.dot_dimension_numbers<[1], [0], [0], [1], [0, 0, 1, 1], [], []>} : vector<16x8xf32>, vector<8x32xf32>, vector<16x32xf32> -> vector<16x32xf32>
    %110 = arith.addf %90, %109 : vector<16x32xf32>
    %111 = vector.extract_strided_slice %47 {offsets = [0, 0, 24], sizes = [2, 8, 8], strides = [1, 1, 1]} : vector<2x8x32xf32> to vector<2x8x8xf32>
    %112 = vector.extract_strided_slice %48 {offsets = [0, 0, 24], sizes = [2, 8, 8], strides = [1, 1, 1]} : vector<2x8x32xf32> to vector<2x8x8xf32>
    %113 = vector.extract_strided_slice %49 {offsets = [0, 0, 24], sizes = [2, 8, 8], strides = [1, 1, 1]} : vector<2x8x32xf32> to vector<2x8x8xf32>
    "tpu.trace_start"() <{level = 10 : i32, message = "bqd,bkd->bqk"}> : () -> ()
    %cst_64 = arith.constant dense<0.000000e+00> : vector<2x8x8xf32>
    %114 = tpu.matmul %111, %112, %cst_64 {dimension_numbers = #tpu.dot_dimension_numbers<[2], [2], [1], [1], [0, 0, 0, 1, 1, 1], [0], [0]>} : vector<2x8x8xf32>, vector<2x8x8xf32>, vector<2x8x8xf32> -> vector<2x8x8xf32>
    "tpu.trace_stop"() : () -> ()
    %cst_65 = arith.constant 0.353553385 : f32
    %115 = vector.broadcast %cst_65 : f32 to vector<2x8x8xf32>
    %116 = arith.mulf %114, %115 : vector<2x8x8xf32>
    %cst_66 = arith.constant dense<0xFF800000> : vector<2x8xf32>
    %117 = vector.multi_reduction <maximumf>, %116, %cst_66 [2] : vector<2x8x8xf32> to vector<2x8xf32>
    %118 = vector.shape_cast %117 : vector<2x8xf32> to vector<2x8x1xf32>
    %119 = vector.broadcast %118 : vector<2x8x1xf32> to vector<2x8x8xf32>
    %120 = arith.subf %116, %119 : vector<2x8x8xf32>
    %121 = math.exp %120 : vector<2x8x8xf32>
    %cst_67 = arith.constant dense<0.000000e+00> : vector<2x8xf32>
    %122 = vector.multi_reduction <add>, %121, %cst_67 [2] : vector<2x8x8xf32> to vector<2x8xf32>
    %123 = vector.shape_cast %122 : vector<2x8xf32> to vector<2x8x1xf32>
    %124 = vector.broadcast %123 : vector<2x8x1xf32> to vector<2x8x8xf32>
    %125 = arith.divf %121, %124 : vector<2x8x8xf32>
    "tpu.trace_start"() <{level = 10 : i32, message = "bqk,bkd->bqd"}> : () -> ()
    %cst_68 = arith.constant dense<0.000000e+00> : vector<2x8x8xf32>
    %126 = tpu.matmul %125, %113, %cst_68 {dimension_numbers = #tpu.dot_dimension_numbers<[2], [1], [1], [2], [0, 0, 0, 1, 1, 2], [0], [0]>} : vector<2x8x8xf32>, vector<2x8x8xf32>, vector<2x8x8xf32> -> vector<2x8x8xf32>
    "tpu.trace_stop"() : () -> ()
    %127 = vector.shape_cast %126 : vector<2x8x8xf32> to vector<16x8xf32>
    %128 = vector.extract_strided_slice %44 {offsets = [24, 0], sizes = [8, 32], strides = [1, 1]} : vector<32x32xf32> to vector<8x32xf32>
    %cst_69 = arith.constant dense<0.000000e+00> : vector<16x32xf32>
    %129 = tpu.matmul %127, %128, %cst_69 {dimension_numbers = #tpu.dot_dimension_numbers<[1], [0], [0], [1], [0, 0, 1, 1], [], []>} : vector<16x8xf32>, vector<8x32xf32>, vector<16x32xf32> -> vector<16x32xf32>
    %130 = arith.addf %110, %129 : vector<16x32xf32>
    %131 = vector.broadcast %46 : vector<1x32xf32> to vector<16x32xf32>
    %132 = arith.addf %130, %131 : vector<16x32xf32>
    %133 = arith.addf %12, %132 : vector<16x32xf32>
    %134 = vector.extract_strided_slice %30 {offsets = [0, 0], sizes = [1, 32], strides = [1, 1]} : vector<3x32xf32> to vector<1x32xf32>
    %135 = vector.extract_strided_slice %32 {offsets = [0, 0], sizes = [1, 32], strides = [1, 1]} : vector<3x32xf32> to vector<1x32xf32>
    %cst_70 = arith.constant dense<0.000000e+00> : vector<16xf32>
    %136 = vector.multi_reduction <add>, %133, %cst_70 [1] : vector<16x32xf32> to vector<16xf32>
    %137 = vector.shape_cast %136 : vector<16xf32> to vector<16x1xf32>
    %cst_71 = arith.constant 3.200000e+01 : f32
    %138 = vector.broadcast %cst_71 : f32 to vector<16x1xf32>
    %139 = arith.divf %137, %138 : vector<16x1xf32>
    %140 = vector.broadcast %139 : vector<16x1xf32> to vector<16x32xf32>
    %141 = arith.subf %133, %140 : vector<16x32xf32>
    %142 = arith.mulf %141, %141 : vector<16x32xf32>
    %cst_72 = arith.constant dense<0.000000e+00> : vector<16xf32>
    %143 = vector.multi_reduction <add>, %142, %cst_72 [1] : vector<16x32xf32> to vector<16xf32>
    %144 = vector.shape_cast %143 : vector<16xf32> to vector<16x1xf32>
    %cst_73 = arith.constant 3.200000e+01 : f32
    %145 = vector.broadcast %cst_73 : f32 to vector<16x1xf32>
    %146 = arith.divf %144, %145 : vector<16x1xf32>
    %147 = vector.broadcast %139 : vector<16x1xf32> to vector<16x32xf32>
    %148 = arith.subf %133, %147 : vector<16x32xf32>
    %cst_74 = arith.constant 9.99999974E-6 : f32
    %149 = vector.broadcast %cst_74 : f32 to vector<16x1xf32>
    %150 = arith.addf %146, %149 : vector<16x1xf32>
    %151 = math.rsqrt %150 : vector<16x1xf32>
    %152 = vector.broadcast %151 : vector<16x1xf32> to vector<16x32xf32>
    %153 = arith.mulf %148, %152 : vector<16x32xf32>
    %154 = vector.broadcast %134 : vector<1x32xf32> to vector<16x32xf32>
    %155 = arith.mulf %153, %154 : vector<16x32xf32>
    %156 = vector.broadcast %135 : vector<1x32xf32> to vector<16x32xf32>
    %157 = arith.addf %155, %156 : vector<16x32xf32>
    %c0_75 = arith.constant 0 : index
    %c0_76 = arith.constant 0 : index
    %c0_77 = arith.constant 0 : index
    %158 = vector.load %arg12[%c0_75, %c0_76, %c0_77] : memref<2x32x32xf32, #tpu.memory_space<vmem>>, vector<1x32x32xf32>
    %159 = vector.shape_cast %158 : vector<1x32x32xf32> to vector<32x32xf32>
    %cst_78 = arith.constant dense<0.000000e+00> : vector<16x32xf32>
    %160 = tpu.matmul %157, %159, %cst_78 {dimension_numbers = #tpu.dot_dimension_numbers<[1], [0], [0], [1], [0, 0, 1, 1], [], []>} : vector<16x32xf32>, vector<32x32xf32>, vector<16x32xf32> -> vector<16x32xf32>
    %c0_79 = arith.constant 0 : index
    %c0_80 = arith.constant 0 : index
    %c0_81 = arith.constant 0 : index
    %161 = vector.load %arg13[%c0_79, %c0_80, %c0_81] : memref<2x1x32xf32, #tpu.memory_space<vmem>>, vector<1x1x32xf32>
    %162 = vector.shape_cast %161 : vector<1x1x32xf32> to vector<1x32xf32>
    %163 = vector.broadcast %162 : vector<1x32xf32> to vector<16x32xf32>
    %164 = arith.addf %160, %163 : vector<16x32xf32>
    %c0_82 = arith.constant 0 : index
    %c0_83 = arith.constant 0 : index
    %c0_84 = arith.constant 0 : index
    %165 = vector.load %arg14[%c0_82, %c0_83, %c0_84] : memref<2x32x64xf32, #tpu.memory_space<vmem>>, vector<1x32x64xf32>
    %166 = vector.shape_cast %165 : vector<1x32x64xf32> to vector<32x64xf32>
    %cst_85 = arith.constant dense<0.000000e+00> : vector<16x64xf32>
    %167 = tpu.matmul %8, %166, %cst_85 {dimension_numbers = #tpu.dot_dimension_numbers<[1], [0], [0], [1], [0, 0, 1, 1], [], []>} : vector<16x32xf32>, vector<32x64xf32>, vector<16x64xf32> -> vector<16x64xf32>
    %c0_86 = arith.constant 0 : index
    %c0_87 = arith.constant 0 : index
    %c0_88 = arith.constant 0 : index
    %168 = vector.load %arg15[%c0_86, %c0_87, %c0_88] : memref<2x1x64xf32, #tpu.memory_space<vmem>>, vector<1x1x64xf32>
    %169 = vector.shape_cast %168 : vector<1x1x64xf32> to vector<1x64xf32>
    %170 = vector.broadcast %169 : vector<1x64xf32> to vector<16x64xf32>
    %171 = arith.addf %167, %170 : vector<16x64xf32>
    %172 = vector.extract_strided_slice %171 {offsets = [0, 0], sizes = [16, 32], strides = [1, 1]} : vector<16x64xf32> to vector<16x32xf32>
    %173 = vector.extract_strided_slice %171 {offsets = [0, 32], sizes = [16, 32], strides = [1, 1]} : vector<16x64xf32> to vector<16x32xf32>
    %c0_89 = arith.constant 0 : index
    %c0_90 = arith.constant 0 : index
    %c0_91 = arith.constant 0 : index
    %174 = vector.load %arg16[%c0_89, %c0_90, %c0_91] : memref<2x32x32xf32, #tpu.memory_space<vmem>>, vector<1x32x32xf32>
    %175 = vector.shape_cast %174 : vector<1x32x32xf32> to vector<32x32xf32>
    %c0_92 = arith.constant 0 : index
    %c0_93 = arith.constant 0 : index
    %c0_94 = arith.constant 0 : index
    %176 = vector.load %arg17[%c0_92, %c0_93, %c0_94] : memref<2x1x32xf32, #tpu.memory_space<vmem>>, vector<1x1x32xf32>
    %177 = vector.shape_cast %176 : vector<1x1x32xf32> to vector<1x32xf32>
    %178 = vector.shape_cast %164 : vector<16x32xf32> to vector<2x8x32xf32>
    %179 = vector.shape_cast %172 : vector<16x32xf32> to vector<2x8x32xf32>
    %180 = vector.shape_cast %173 : vector<16x32xf32> to vector<2x8x32xf32>
    %cst_95 = arith.constant 0.000000e+00 : f32
    %181 = vector.broadcast %cst_95 : f32 to vector<16x32xf32>
    %182 = vector.extract_strided_slice %178 {offsets = [0, 0, 0], sizes = [2, 8, 8], strides = [1, 1, 1]} : vector<2x8x32xf32> to vector<2x8x8xf32>
    %183 = vector.extract_strided_slice %179 {offsets = [0, 0, 0], sizes = [2, 8, 8], strides = [1, 1, 1]} : vector<2x8x32xf32> to vector<2x8x8xf32>
    %184 = vector.extract_strided_slice %180 {offsets = [0, 0, 0], sizes = [2, 8, 8], strides = [1, 1, 1]} : vector<2x8x32xf32> to vector<2x8x8xf32>
    "tpu.trace_start"() <{level = 10 : i32, message = "bqd,bkd->bqk"}> : () -> ()
    %cst_96 = arith.constant dense<0.000000e+00> : vector<2x8x8xf32>
    %185 = tpu.matmul %182, %183, %cst_96 {dimension_numbers = #tpu.dot_dimension_numbers<[2], [2], [1], [1], [0, 0, 0, 1, 1, 1], [0], [0]>} : vector<2x8x8xf32>, vector<2x8x8xf32>, vector<2x8x8xf32> -> vector<2x8x8xf32>
    "tpu.trace_stop"() : () -> ()
    %cst_97 = arith.constant 0.353553385 : f32
    %186 = vector.broadcast %cst_97 : f32 to vector<2x8x8xf32>
    %187 = arith.mulf %185, %186 : vector<2x8x8xf32>
    %cst_98 = arith.constant dense<0xFF800000> : vector<2x8xf32>
    %188 = vector.multi_reduction <maximumf>, %187, %cst_98 [2] : vector<2x8x8xf32> to vector<2x8xf32>
    %189 = vector.shape_cast %188 : vector<2x8xf32> to vector<2x8x1xf32>
    %190 = vector.broadcast %189 : vector<2x8x1xf32> to vector<2x8x8xf32>
    %191 = arith.subf %187, %190 : vector<2x8x8xf32>
    %192 = math.exp %191 : vector<2x8x8xf32>
    %cst_99 = arith.constant dense<0.000000e+00> : vector<2x8xf32>
    %193 = vector.multi_reduction <add>, %192, %cst_99 [2] : vector<2x8x8xf32> to vector<2x8xf32>
    %194 = vector.shape_cast %193 : vector<2x8xf32> to vector<2x8x1xf32>
    %195 = vector.broadcast %194 : vector<2x8x1xf32> to vector<2x8x8xf32>
    %196 = arith.divf %192, %195 : vector<2x8x8xf32>
    "tpu.trace_start"() <{level = 10 : i32, message = "bqk,bkd->bqd"}> : () -> ()
    %cst_100 = arith.constant dense<0.000000e+00> : vector<2x8x8xf32>
    %197 = tpu.matmul %196, %184, %cst_100 {dimension_numbers = #tpu.dot_dimension_numbers<[2], [1], [1], [2], [0, 0, 0, 1, 1, 2], [0], [0]>} : vector<2x8x8xf32>, vector<2x8x8xf32>, vector<2x8x8xf32> -> vector<2x8x8xf32>
    "tpu.trace_stop"() : () -> ()
    %198 = vector.shape_cast %197 : vector<2x8x8xf32> to vector<16x8xf32>
    %199 = vector.extract_strided_slice %175 {offsets = [0, 0], sizes = [8, 32], strides = [1, 1]} : vector<32x32xf32> to vector<8x32xf32>
    %cst_101 = arith.constant dense<0.000000e+00> : vector<16x32xf32>
    %200 = tpu.matmul %198, %199, %cst_101 {dimension_numbers = #tpu.dot_dimension_numbers<[1], [0], [0], [1], [0, 0, 1, 1], [], []>} : vector<16x8xf32>, vector<8x32xf32>, vector<16x32xf32> -> vector<16x32xf32>
    %201 = arith.addf %181, %200 : vector<16x32xf32>
    %202 = vector.extract_strided_slice %178 {offsets = [0, 0, 8], sizes = [2, 8, 8], strides = [1, 1, 1]} : vector<2x8x32xf32> to vector<2x8x8xf32>
    %203 = vector.extract_strided_slice %179 {offsets = [0, 0, 8], sizes = [2, 8, 8], strides = [1, 1, 1]} : vector<2x8x32xf32> to vector<2x8x8xf32>
    %204 = vector.extract_strided_slice %180 {offsets = [0, 0, 8], sizes = [2, 8, 8], strides = [1, 1, 1]} : vector<2x8x32xf32> to vector<2x8x8xf32>
    "tpu.trace_start"() <{level = 10 : i32, message = "bqd,bkd->bqk"}> : () -> ()
    %cst_102 = arith.constant dense<0.000000e+00> : vector<2x8x8xf32>
    %205 = tpu.matmul %202, %203, %cst_102 {dimension_numbers = #tpu.dot_dimension_numbers<[2], [2], [1], [1], [0, 0, 0, 1, 1, 1], [0], [0]>} : vector<2x8x8xf32>, vector<2x8x8xf32>, vector<2x8x8xf32> -> vector<2x8x8xf32>
    "tpu.trace_stop"() : () -> ()
    %cst_103 = arith.constant 0.353553385 : f32
    %206 = vector.broadcast %cst_103 : f32 to vector<2x8x8xf32>
    %207 = arith.mulf %205, %206 : vector<2x8x8xf32>
    %cst_104 = arith.constant dense<0xFF800000> : vector<2x8xf32>
    %208 = vector.multi_reduction <maximumf>, %207, %cst_104 [2] : vector<2x8x8xf32> to vector<2x8xf32>
    %209 = vector.shape_cast %208 : vector<2x8xf32> to vector<2x8x1xf32>
    %210 = vector.broadcast %209 : vector<2x8x1xf32> to vector<2x8x8xf32>
    %211 = arith.subf %207, %210 : vector<2x8x8xf32>
    %212 = math.exp %211 : vector<2x8x8xf32>
    %cst_105 = arith.constant dense<0.000000e+00> : vector<2x8xf32>
    %213 = vector.multi_reduction <add>, %212, %cst_105 [2] : vector<2x8x8xf32> to vector<2x8xf32>
    %214 = vector.shape_cast %213 : vector<2x8xf32> to vector<2x8x1xf32>
    %215 = vector.broadcast %214 : vector<2x8x1xf32> to vector<2x8x8xf32>
    %216 = arith.divf %212, %215 : vector<2x8x8xf32>
    "tpu.trace_start"() <{level = 10 : i32, message = "bqk,bkd->bqd"}> : () -> ()
    %cst_106 = arith.constant dense<0.000000e+00> : vector<2x8x8xf32>
    %217 = tpu.matmul %216, %204, %cst_106 {dimension_numbers = #tpu.dot_dimension_numbers<[2], [1], [1], [2], [0, 0, 0, 1, 1, 2], [0], [0]>} : vector<2x8x8xf32>, vector<2x8x8xf32>, vector<2x8x8xf32> -> vector<2x8x8xf32>
    "tpu.trace_stop"() : () -> ()
    %218 = vector.shape_cast %217 : vector<2x8x8xf32> to vector<16x8xf32>
    %219 = vector.extract_strided_slice %175 {offsets = [8, 0], sizes = [8, 32], strides = [1, 1]} : vector<32x32xf32> to vector<8x32xf32>
    %cst_107 = arith.constant dense<0.000000e+00> : vector<16x32xf32>
    %220 = tpu.matmul %218, %219, %cst_107 {dimension_numbers = #tpu.dot_dimension_numbers<[1], [0], [0], [1], [0, 0, 1, 1], [], []>} : vector<16x8xf32>, vector<8x32xf32>, vector<16x32xf32> -> vector<16x32xf32>
    %221 = arith.addf %201, %220 : vector<16x32xf32>
    %222 = vector.extract_strided_slice %178 {offsets = [0, 0, 16], sizes = [2, 8, 8], strides = [1, 1, 1]} : vector<2x8x32xf32> to vector<2x8x8xf32>
    %223 = vector.extract_strided_slice %179 {offsets = [0, 0, 16], sizes = [2, 8, 8], strides = [1, 1, 1]} : vector<2x8x32xf32> to vector<2x8x8xf32>
    %224 = vector.extract_strided_slice %180 {offsets = [0, 0, 16], sizes = [2, 8, 8], strides = [1, 1, 1]} : vector<2x8x32xf32> to vector<2x8x8xf32>
    "tpu.trace_start"() <{level = 10 : i32, message = "bqd,bkd->bqk"}> : () -> ()
    %cst_108 = arith.constant dense<0.000000e+00> : vector<2x8x8xf32>
    %225 = tpu.matmul %222, %223, %cst_108 {dimension_numbers = #tpu.dot_dimension_numbers<[2], [2], [1], [1], [0, 0, 0, 1, 1, 1], [0], [0]>} : vector<2x8x8xf32>, vector<2x8x8xf32>, vector<2x8x8xf32> -> vector<2x8x8xf32>
    "tpu.trace_stop"() : () -> ()
    %cst_109 = arith.constant 0.353553385 : f32
    %226 = vector.broadcast %cst_109 : f32 to vector<2x8x8xf32>
    %227 = arith.mulf %225, %226 : vector<2x8x8xf32>
    %cst_110 = arith.constant dense<0xFF800000> : vector<2x8xf32>
    %228 = vector.multi_reduction <maximumf>, %227, %cst_110 [2] : vector<2x8x8xf32> to vector<2x8xf32>
    %229 = vector.shape_cast %228 : vector<2x8xf32> to vector<2x8x1xf32>
    %230 = vector.broadcast %229 : vector<2x8x1xf32> to vector<2x8x8xf32>
    %231 = arith.subf %227, %230 : vector<2x8x8xf32>
    %232 = math.exp %231 : vector<2x8x8xf32>
    %cst_111 = arith.constant dense<0.000000e+00> : vector<2x8xf32>
    %233 = vector.multi_reduction <add>, %232, %cst_111 [2] : vector<2x8x8xf32> to vector<2x8xf32>
    %234 = vector.shape_cast %233 : vector<2x8xf32> to vector<2x8x1xf32>
    %235 = vector.broadcast %234 : vector<2x8x1xf32> to vector<2x8x8xf32>
    %236 = arith.divf %232, %235 : vector<2x8x8xf32>
    "tpu.trace_start"() <{level = 10 : i32, message = "bqk,bkd->bqd"}> : () -> ()
    %cst_112 = arith.constant dense<0.000000e+00> : vector<2x8x8xf32>
    %237 = tpu.matmul %236, %224, %cst_112 {dimension_numbers = #tpu.dot_dimension_numbers<[2], [1], [1], [2], [0, 0, 0, 1, 1, 2], [0], [0]>} : vector<2x8x8xf32>, vector<2x8x8xf32>, vector<2x8x8xf32> -> vector<2x8x8xf32>
    "tpu.trace_stop"() : () -> ()
    %238 = vector.shape_cast %237 : vector<2x8x8xf32> to vector<16x8xf32>
    %239 = vector.extract_strided_slice %175 {offsets = [16, 0], sizes = [8, 32], strides = [1, 1]} : vector<32x32xf32> to vector<8x32xf32>
    %cst_113 = arith.constant dense<0.000000e+00> : vector<16x32xf32>
    %240 = tpu.matmul %238, %239, %cst_113 {dimension_numbers = #tpu.dot_dimension_numbers<[1], [0], [0], [1], [0, 0, 1, 1], [], []>} : vector<16x8xf32>, vector<8x32xf32>, vector<16x32xf32> -> vector<16x32xf32>
    %241 = arith.addf %221, %240 : vector<16x32xf32>
    %242 = vector.extract_strided_slice %178 {offsets = [0, 0, 24], sizes = [2, 8, 8], strides = [1, 1, 1]} : vector<2x8x32xf32> to vector<2x8x8xf32>
    %243 = vector.extract_strided_slice %179 {offsets = [0, 0, 24], sizes = [2, 8, 8], strides = [1, 1, 1]} : vector<2x8x32xf32> to vector<2x8x8xf32>
    %244 = vector.extract_strided_slice %180 {offsets = [0, 0, 24], sizes = [2, 8, 8], strides = [1, 1, 1]} : vector<2x8x32xf32> to vector<2x8x8xf32>
    "tpu.trace_start"() <{level = 10 : i32, message = "bqd,bkd->bqk"}> : () -> ()
    %cst_114 = arith.constant dense<0.000000e+00> : vector<2x8x8xf32>
    %245 = tpu.matmul %242, %243, %cst_114 {dimension_numbers = #tpu.dot_dimension_numbers<[2], [2], [1], [1], [0, 0, 0, 1, 1, 1], [0], [0]>} : vector<2x8x8xf32>, vector<2x8x8xf32>, vector<2x8x8xf32> -> vector<2x8x8xf32>
    "tpu.trace_stop"() : () -> ()
    %cst_115 = arith.constant 0.353553385 : f32
    %246 = vector.broadcast %cst_115 : f32 to vector<2x8x8xf32>
    %247 = arith.mulf %245, %246 : vector<2x8x8xf32>
    %cst_116 = arith.constant dense<0xFF800000> : vector<2x8xf32>
    %248 = vector.multi_reduction <maximumf>, %247, %cst_116 [2] : vector<2x8x8xf32> to vector<2x8xf32>
    %249 = vector.shape_cast %248 : vector<2x8xf32> to vector<2x8x1xf32>
    %250 = vector.broadcast %249 : vector<2x8x1xf32> to vector<2x8x8xf32>
    %251 = arith.subf %247, %250 : vector<2x8x8xf32>
    %252 = math.exp %251 : vector<2x8x8xf32>
    %cst_117 = arith.constant dense<0.000000e+00> : vector<2x8xf32>
    %253 = vector.multi_reduction <add>, %252, %cst_117 [2] : vector<2x8x8xf32> to vector<2x8xf32>
    %254 = vector.shape_cast %253 : vector<2x8xf32> to vector<2x8x1xf32>
    %255 = vector.broadcast %254 : vector<2x8x1xf32> to vector<2x8x8xf32>
    %256 = arith.divf %252, %255 : vector<2x8x8xf32>
    "tpu.trace_start"() <{level = 10 : i32, message = "bqk,bkd->bqd"}> : () -> ()
    %cst_118 = arith.constant dense<0.000000e+00> : vector<2x8x8xf32>
    %257 = tpu.matmul %256, %244, %cst_118 {dimension_numbers = #tpu.dot_dimension_numbers<[2], [1], [1], [2], [0, 0, 0, 1, 1, 2], [0], [0]>} : vector<2x8x8xf32>, vector<2x8x8xf32>, vector<2x8x8xf32> -> vector<2x8x8xf32>
    "tpu.trace_stop"() : () -> ()
    %258 = vector.shape_cast %257 : vector<2x8x8xf32> to vector<16x8xf32>
    %259 = vector.extract_strided_slice %175 {offsets = [24, 0], sizes = [8, 32], strides = [1, 1]} : vector<32x32xf32> to vector<8x32xf32>
    %cst_119 = arith.constant dense<0.000000e+00> : vector<16x32xf32>
    %260 = tpu.matmul %258, %259, %cst_119 {dimension_numbers = #tpu.dot_dimension_numbers<[1], [0], [0], [1], [0, 0, 1, 1], [], []>} : vector<16x8xf32>, vector<8x32xf32>, vector<16x32xf32> -> vector<16x32xf32>
    %261 = arith.addf %241, %260 : vector<16x32xf32>
    %262 = vector.broadcast %177 : vector<1x32xf32> to vector<16x32xf32>
    %263 = arith.addf %261, %262 : vector<16x32xf32>
    %264 = arith.addf %157, %263 : vector<16x32xf32>
    %265 = vector.extract_strided_slice %30 {offsets = [1, 0], sizes = [1, 32], strides = [1, 1]} : vector<3x32xf32> to vector<1x32xf32>
    %266 = vector.extract_strided_slice %32 {offsets = [1, 0], sizes = [1, 32], strides = [1, 1]} : vector<3x32xf32> to vector<1x32xf32>
    %cst_120 = arith.constant dense<0.000000e+00> : vector<16xf32>
    %267 = vector.multi_reduction <add>, %264, %cst_120 [1] : vector<16x32xf32> to vector<16xf32>
    %268 = vector.shape_cast %267 : vector<16xf32> to vector<16x1xf32>
    %cst_121 = arith.constant 3.200000e+01 : f32
    %269 = vector.broadcast %cst_121 : f32 to vector<16x1xf32>
    %270 = arith.divf %268, %269 : vector<16x1xf32>
    %271 = vector.broadcast %270 : vector<16x1xf32> to vector<16x32xf32>
    %272 = arith.subf %264, %271 : vector<16x32xf32>
    %273 = arith.mulf %272, %272 : vector<16x32xf32>
    %cst_122 = arith.constant dense<0.000000e+00> : vector<16xf32>
    %274 = vector.multi_reduction <add>, %273, %cst_122 [1] : vector<16x32xf32> to vector<16xf32>
    %275 = vector.shape_cast %274 : vector<16xf32> to vector<16x1xf32>
    %cst_123 = arith.constant 3.200000e+01 : f32
    %276 = vector.broadcast %cst_123 : f32 to vector<16x1xf32>
    %277 = arith.divf %275, %276 : vector<16x1xf32>
    %278 = vector.broadcast %270 : vector<16x1xf32> to vector<16x32xf32>
    %279 = arith.subf %264, %278 : vector<16x32xf32>
    %cst_124 = arith.constant 9.99999974E-6 : f32
    %280 = vector.broadcast %cst_124 : f32 to vector<16x1xf32>
    %281 = arith.addf %277, %280 : vector<16x1xf32>
    %282 = math.rsqrt %281 : vector<16x1xf32>
    %283 = vector.broadcast %282 : vector<16x1xf32> to vector<16x32xf32>
    %284 = arith.mulf %279, %283 : vector<16x32xf32>
    %285 = vector.broadcast %265 : vector<1x32xf32> to vector<16x32xf32>
    %286 = arith.mulf %284, %285 : vector<16x32xf32>
    %287 = vector.broadcast %266 : vector<1x32xf32> to vector<16x32xf32>
    %288 = arith.addf %286, %287 : vector<16x32xf32>
    %c0_125 = arith.constant 0 : index
    %c0_126 = arith.constant 0 : index
    %c0_127 = arith.constant 0 : index
    %289 = vector.load %arg20[%c0_125, %c0_126, %c0_127] : memref<2x32x64xf32, #tpu.memory_space<vmem>>, vector<1x32x64xf32>
    %290 = vector.shape_cast %289 : vector<1x32x64xf32> to vector<32x64xf32>
    %cst_128 = arith.constant dense<0.000000e+00> : vector<16x64xf32>
    %291 = tpu.matmul %288, %290, %cst_128 {dimension_numbers = #tpu.dot_dimension_numbers<[1], [0], [0], [1], [0, 0, 1, 1], [], []>} : vector<16x32xf32>, vector<32x64xf32>, vector<16x64xf32> -> vector<16x64xf32>
    %c0_129 = arith.constant 0 : index
    %c0_130 = arith.constant 0 : index
    %c0_131 = arith.constant 0 : index
    %292 = vector.load %arg21[%c0_129, %c0_130, %c0_131] : memref<2x1x64xf32, #tpu.memory_space<vmem>>, vector<1x1x64xf32>
    %293 = vector.shape_cast %292 : vector<1x1x64xf32> to vector<1x64xf32>
    %294 = vector.broadcast %293 : vector<1x64xf32> to vector<16x64xf32>
    %295 = arith.addf %291, %294 : vector<16x64xf32>
    %296 = arith.mulf %295, %295 : vector<16x64xf32>
    %297 = arith.mulf %295, %296 : vector<16x64xf32>
    %cst_132 = arith.constant 4.471500e-02 : f32
    %298 = vector.broadcast %cst_132 : f32 to vector<16x64xf32>
    %299 = arith.mulf %298, %297 : vector<16x64xf32>
    %300 = arith.addf %295, %299 : vector<16x64xf32>
    %cst_133 = arith.constant 0.797884583 : f32
    %301 = vector.broadcast %cst_133 : f32 to vector<16x64xf32>
    %302 = arith.mulf %301, %300 : vector<16x64xf32>
    %303 = math.tanh %302 : vector<16x64xf32>
    %cst_134 = arith.constant 1.000000e+00 : f32
    %304 = vector.broadcast %cst_134 : f32 to vector<16x64xf32>
    %305 = arith.addf %304, %303 : vector<16x64xf32>
    %cst_135 = arith.constant 5.000000e-01 : f32
    %306 = vector.broadcast %cst_135 : f32 to vector<16x64xf32>
    %307 = arith.mulf %306, %305 : vector<16x64xf32>
    %308 = arith.mulf %295, %307 : vector<16x64xf32>
    %c0_136 = arith.constant 0 : index
    %c0_137 = arith.constant 0 : index
    %c0_138 = arith.constant 0 : index
    %309 = vector.load %arg22[%c0_136, %c0_137, %c0_138] : memref<2x64x32xf32, #tpu.memory_space<vmem>>, vector<1x64x32xf32>
    %310 = vector.shape_cast %309 : vector<1x64x32xf32> to vector<64x32xf32>
    %cst_139 = arith.constant dense<0.000000e+00> : vector<16x32xf32>
    %311 = tpu.matmul %308, %310, %cst_139 {dimension_numbers = #tpu.dot_dimension_numbers<[1], [0], [0], [1], [0, 0, 1, 1], [], []>} : vector<16x64xf32>, vector<64x32xf32>, vector<16x32xf32> -> vector<16x32xf32>
    %c0_140 = arith.constant 0 : index
    %c0_141 = arith.constant 0 : index
    %c0_142 = arith.constant 0 : index
    %312 = vector.load %arg23[%c0_140, %c0_141, %c0_142] : memref<2x1x32xf32, #tpu.memory_space<vmem>>, vector<1x1x32xf32>
    %313 = vector.shape_cast %312 : vector<1x1x32xf32> to vector<1x32xf32>
    %314 = vector.broadcast %313 : vector<1x32xf32> to vector<16x32xf32>
    %315 = arith.addf %311, %314 : vector<16x32xf32>
    %316 = arith.addf %288, %315 : vector<16x32xf32>
    %317 = vector.extract_strided_slice %30 {offsets = [2, 0], sizes = [1, 32], strides = [1, 1]} : vector<3x32xf32> to vector<1x32xf32>
    %318 = vector.extract_strided_slice %32 {offsets = [2, 0], sizes = [1, 32], strides = [1, 1]} : vector<3x32xf32> to vector<1x32xf32>
    %cst_143 = arith.constant dense<0.000000e+00> : vector<16xf32>
    %319 = vector.multi_reduction <add>, %316, %cst_143 [1] : vector<16x32xf32> to vector<16xf32>
    %320 = vector.shape_cast %319 : vector<16xf32> to vector<16x1xf32>
    %cst_144 = arith.constant 3.200000e+01 : f32
    %321 = vector.broadcast %cst_144 : f32 to vector<16x1xf32>
    %322 = arith.divf %320, %321 : vector<16x1xf32>
    %323 = vector.broadcast %322 : vector<16x1xf32> to vector<16x32xf32>
    %324 = arith.subf %316, %323 : vector<16x32xf32>
    %325 = arith.mulf %324, %324 : vector<16x32xf32>
    %cst_145 = arith.constant dense<0.000000e+00> : vector<16xf32>
    %326 = vector.multi_reduction <add>, %325, %cst_145 [1] : vector<16x32xf32> to vector<16xf32>
    %327 = vector.shape_cast %326 : vector<16xf32> to vector<16x1xf32>
    %cst_146 = arith.constant 3.200000e+01 : f32
    %328 = vector.broadcast %cst_146 : f32 to vector<16x1xf32>
    %329 = arith.divf %327, %328 : vector<16x1xf32>
    %330 = vector.broadcast %322 : vector<16x1xf32> to vector<16x32xf32>
    %331 = arith.subf %316, %330 : vector<16x32xf32>
    %cst_147 = arith.constant 9.99999974E-6 : f32
    %332 = vector.broadcast %cst_147 : f32 to vector<16x1xf32>
    %333 = arith.addf %329, %332 : vector<16x1xf32>
    %334 = math.rsqrt %333 : vector<16x1xf32>
    %335 = vector.broadcast %334 : vector<16x1xf32> to vector<16x32xf32>
    %336 = arith.mulf %331, %335 : vector<16x32xf32>
    %337 = vector.broadcast %317 : vector<1x32xf32> to vector<16x32xf32>
    %338 = arith.mulf %336, %337 : vector<16x32xf32>
    %339 = vector.broadcast %318 : vector<1x32xf32> to vector<16x32xf32>
    %340 = arith.addf %338, %339 : vector<16x32xf32>
    %cst_148 = arith.constant dense<0.000000e+00> : vector<16x128xf32>
    %341 = tpu.matmul %340, %10, %cst_148 {dimension_numbers = #tpu.dot_dimension_numbers<[1], [0], [0], [1], [0, 0, 1, 1], [], []>} : vector<16x32xf32>, vector<32x128xf32>, vector<16x128xf32> -> vector<16x128xf32>
    %342 = vector.broadcast %11 : vector<1x128xf32> to vector<16x128xf32>
    %343 = arith.addf %341, %342 : vector<16x128xf32>
    %344 = vector.broadcast %6 : vector<1x128xf32> to vector<16x128xf32>
    %345 = arith.addf %343, %344 : vector<16x128xf32>
    %cst_149 = arith.constant dense<0xFF800000> : vector<16xf32>
    %346 = vector.multi_reduction <maximumf>, %345, %cst_149 [1] : vector<16x128xf32> to vector<16xf32>
    %347 = vector.shape_cast %346 : vector<16xf32> to vector<16x1xf32>
    %348 = vector.broadcast %347 : vector<16x1xf32> to vector<16x128xf32>
    %349 = arith.subf %345, %348 : vector<16x128xf32>
    %350 = math.exp %349 : vector<16x128xf32>
    %351 = vector.broadcast %347 : vector<16x1xf32> to vector<16x128xf32>
    %352 = arith.subf %345, %351 : vector<16x128xf32>
    %cst_150 = arith.constant dense<0.000000e+00> : vector<16xf32>
    %353 = vector.multi_reduction <add>, %350, %cst_150 [1] : vector<16x128xf32> to vector<16xf32>
    %354 = vector.shape_cast %353 : vector<16xf32> to vector<16x1xf32>
    %355 = math.log %354 : vector<16x1xf32>
    %356 = vector.broadcast %355 : vector<16x1xf32> to vector<16x128xf32>
    %357 = arith.subf %352, %356 : vector<16x128xf32>
    %358 = arith.mulf %357, %7 : vector<16x128xf32>
    %359 = vector.shape_cast %358 : vector<16x128xf32> to vector<1x16x128xf32>
    %cst_151 = arith.constant dense<0.000000e+00> : vector<1xf32>
    %360 = vector.multi_reduction <add>, %359, %cst_151 [1, 2] : vector<1x16x128xf32> to vector<1xf32>
    %361 = vector.shape_cast %360 : vector<1xf32> to vector<1x1x1xf32>
    %362 = vector.extract %361[0, 0, 0] : f32 from vector<1x1x1xf32>
    %363 = vector.broadcast %362 : f32 to vector<1x1xf32>
    %cst_152 = arith.constant 0.000000e+00 : f32
    %364 = vector.broadcast %cst_152 : f32 to vector<1x1xf32>
    %365 = arith.subf %364, %363 : vector<1x1xf32>
    %c1 = arith.constant 1 : index
    %c0_153 = arith.constant 0 : index
    %c0_154 = arith.constant 0 : index
    %366 = vector.load %arg24[%c1, %c0_153, %c0_154] : memref<2x3x32xf32, #tpu.memory_space<vmem>>, vector<1x3x32xf32>
    %367 = vector.shape_cast %366 : vector<1x3x32xf32> to vector<3x32xf32>
    %c1_155 = arith.constant 1 : index
    %c0_156 = arith.constant 0 : index
    %c0_157 = arith.constant 0 : index
    %368 = vector.load %arg25[%c1_155, %c0_156, %c0_157] : memref<2x1x4xf32, #tpu.memory_space<vmem>>, vector<1x1x4xf32>
    %369 = vector.shape_cast %368 : vector<1x1x4xf32> to vector<1x4xf32>
    %370 = vector.extract_strided_slice %367 {offsets = [0, 0], sizes = [1, 32], strides = [1, 1]} : vector<3x32xf32> to vector<1x32xf32>
    %371 = vector.broadcast %370 : vector<1x32xf32> to vector<16x32xf32>
    %372 = arith.mulf %340, %371 : vector<16x32xf32>
    %cst_158 = arith.constant dense<0.000000e+00> : vector<16xf32>
    %373 = vector.multi_reduction <add>, %372, %cst_158 [1] : vector<16x32xf32> to vector<16xf32>
    %374 = vector.shape_cast %373 : vector<16xf32> to vector<16x1xf32>
    %375 = vector.extract_strided_slice %369 {offsets = [0, 0], sizes = [1, 1], strides = [1, 1]} : vector<1x4xf32> to vector<1x1xf32>
    %376 = vector.broadcast %375 : vector<1x1xf32> to vector<16x1xf32>
    %377 = arith.addf %374, %376 : vector<16x1xf32>
    %cst_159 = arith.constant 2.000000e+01 : f32
    %378 = vector.broadcast %cst_159 : f32 to vector<16x1xf32>
    %379 = arith.cmpf ogt, %377, %378 : vector<16x1xf32>
    %cst_160 = arith.constant 2.000000e+01 : f32
    %380 = vector.broadcast %cst_160 : f32 to vector<16x1xf32>
    %381 = arith.minimumf %377, %380 : vector<16x1xf32>
    %382 = math.exp %381 : vector<16x1xf32>
    %cst_161 = arith.constant 1.000000e+00 : f32
    %383 = vector.broadcast %cst_161 : f32 to vector<16x1xf32>
    %384 = arith.addf %383, %382 : vector<16x1xf32>
    %385 = math.log %384 : vector<16x1xf32>
    %386 = arith.select %379, %377, %385 : vector<16x1xi1>, vector<16x1xf32>
    %387 = vector.extract_strided_slice %367 {offsets = [1, 0], sizes = [1, 32], strides = [1, 1]} : vector<3x32xf32> to vector<1x32xf32>
    %388 = vector.broadcast %387 : vector<1x32xf32> to vector<16x32xf32>
    %389 = arith.mulf %340, %388 : vector<16x32xf32>
    %cst_162 = arith.constant dense<0.000000e+00> : vector<16xf32>
    %390 = vector.multi_reduction <add>, %389, %cst_162 [1] : vector<16x32xf32> to vector<16xf32>
    %391 = vector.shape_cast %390 : vector<16xf32> to vector<16x1xf32>
    %392 = vector.extract_strided_slice %369 {offsets = [0, 1], sizes = [1, 1], strides = [1, 1]} : vector<1x4xf32> to vector<1x1xf32>
    %393 = vector.broadcast %392 : vector<1x1xf32> to vector<16x1xf32>
    %394 = arith.addf %391, %393 : vector<16x1xf32>
    %cst_163 = arith.constant 2.000000e+01 : f32
    %395 = vector.broadcast %cst_163 : f32 to vector<16x1xf32>
    %396 = arith.cmpf ogt, %394, %395 : vector<16x1xf32>
    %cst_164 = arith.constant 2.000000e+01 : f32
    %397 = vector.broadcast %cst_164 : f32 to vector<16x1xf32>
    %398 = arith.minimumf %394, %397 : vector<16x1xf32>
    %399 = math.exp %398 : vector<16x1xf32>
    %cst_165 = arith.constant 1.000000e+00 : f32
    %400 = vector.broadcast %cst_165 : f32 to vector<16x1xf32>
    %401 = arith.addf %400, %399 : vector<16x1xf32>
    %402 = math.log %401 : vector<16x1xf32>
    %403 = arith.select %396, %394, %402 : vector<16x1xi1>, vector<16x1xf32>
    %404 = vector.broadcast %386 : vector<16x1xf32> to vector<16x128xf32>
    %405 = arith.mulf %404, %357 : vector<16x128xf32>
    %cst_166 = arith.constant dense<0xFF800000> : vector<16xf32>
    %406 = vector.multi_reduction <maximumf>, %405, %cst_166 [1] : vector<16x128xf32> to vector<16xf32>
    %407 = vector.shape_cast %406 : vector<16xf32> to vector<16x1xf32>
    %408 = vector.broadcast %407 : vector<16x1xf32> to vector<16x128xf32>
    %409 = arith.subf %405, %408 : vector<16x128xf32>
    %410 = math.exp %409 : vector<16x128xf32>
    %411 = vector.broadcast %407 : vector<16x1xf32> to vector<16x128xf32>
    %412 = arith.subf %405, %411 : vector<16x128xf32>
    %cst_167 = arith.constant dense<0.000000e+00> : vector<16xf32>
    %413 = vector.multi_reduction <add>, %410, %cst_167 [1] : vector<16x128xf32> to vector<16xf32>
    %414 = vector.shape_cast %413 : vector<16xf32> to vector<16x1xf32>
    %415 = math.log %414 : vector<16x1xf32>
    %416 = vector.broadcast %415 : vector<16x1xf32> to vector<16x128xf32>
    %417 = arith.subf %412, %416 : vector<16x128xf32>
    %418 = math.exp %417 : vector<16x128xf32>
    %419 = arith.subf %417, %357 : vector<16x128xf32>
    %420 = arith.mulf %418, %419 : vector<16x128xf32>
    %421 = vector.broadcast %2 : vector<1x128xf32> to vector<16x128xf32>
    %422 = arith.mulf %420, %421 : vector<16x128xf32>
    %423 = vector.shape_cast %422 : vector<16x128xf32> to vector<1x16x128xf32>
    %cst_168 = arith.constant dense<0.000000e+00> : vector<1xf32>
    %424 = vector.multi_reduction <add>, %423, %cst_168 [1, 2] : vector<1x16x128xf32> to vector<1xf32>
    %425 = vector.shape_cast %424 : vector<1xf32> to vector<1x1x1xf32>
    %426 = vector.extract %425[0, 0, 0] : f32 from vector<1x1x1xf32>
    %427 = vector.broadcast %426 : f32 to vector<1x1xf32>
    %c1_169 = arith.constant 1 : index
    %c0_170 = arith.constant 0 : index
    %c0_171 = arith.constant 0 : index
    %428 = vector.load %arg4[%c1_169, %c0_170, %c0_171] : memref<2x1x128xf32, #tpu.memory_space<vmem>>, vector<1x1x128xf32>
    %429 = vector.shape_cast %428 : vector<1x1x128xf32> to vector<1x128xf32>
    %430 = vector.broadcast %429 : vector<1x128xf32> to vector<16x128xf32>
    %431 = arith.addf %405, %430 : vector<16x128xf32>
    %cst_172 = arith.constant dense<0xFF800000> : vector<16xf32>
    %432 = vector.multi_reduction <maximumf>, %431, %cst_172 [1] : vector<16x128xf32> to vector<16xf32>
    %433 = vector.shape_cast %432 : vector<16xf32> to vector<16x1xf32>
    %434 = vector.broadcast %433 : vector<16x1xf32> to vector<16x128xf32>
    %435 = arith.subf %431, %434 : vector<16x128xf32>
    %436 = math.exp %435 : vector<16x128xf32>
    %437 = vector.broadcast %433 : vector<16x1xf32> to vector<16x128xf32>
    %438 = arith.subf %431, %437 : vector<16x128xf32>
    %cst_173 = arith.constant dense<0.000000e+00> : vector<16xf32>
    %439 = vector.multi_reduction <add>, %436, %cst_173 [1] : vector<16x128xf32> to vector<16xf32>
    %440 = vector.shape_cast %439 : vector<16xf32> to vector<16x1xf32>
    %441 = math.log %440 : vector<16x1xf32>
    %442 = vector.broadcast %441 : vector<16x1xf32> to vector<16x128xf32>
    %443 = arith.subf %438, %442 : vector<16x128xf32>
    %444 = math.exp %443 : vector<16x128xf32>
    %445 = vector.broadcast %2 : vector<1x128xf32> to vector<16x128xf32>
    %446 = arith.mulf %444, %445 : vector<16x128xf32>
    %cst_174 = arith.constant dense<0.000000e+00> : vector<16x32xf32>
    %447 = tpu.matmul %446, %9, %cst_174 {dimension_numbers = #tpu.dot_dimension_numbers<[1], [0], [0], [1], [0, 0, 1, 1], [], []>} : vector<16x128xf32>, vector<128x32xf32>, vector<16x32xf32> -> vector<16x32xf32>
    %448 = vector.extract_strided_slice %367 {offsets = [2, 0], sizes = [1, 32], strides = [1, 1]} : vector<3x32xf32> to vector<1x32xf32>
    %449 = vector.broadcast %448 : vector<1x32xf32> to vector<16x32xf32>
    %450 = arith.mulf %340, %449 : vector<16x32xf32>
    %cst_175 = arith.constant dense<0.000000e+00> : vector<16xf32>
    %451 = vector.multi_reduction <add>, %450, %cst_175 [1] : vector<16x32xf32> to vector<16xf32>
    %452 = vector.shape_cast %451 : vector<16xf32> to vector<16x1xf32>
    %453 = vector.extract_strided_slice %369 {offsets = [0, 2], sizes = [1, 1], strides = [1, 1]} : vector<1x4xf32> to vector<1x1xf32>
    %454 = vector.broadcast %453 : vector<1x1xf32> to vector<16x1xf32>
    %455 = arith.addf %452, %454 : vector<16x1xf32>
    %456 = arith.negf %455 : vector<16x1xf32>
    %457 = math.exp %456 : vector<16x1xf32>
    %cst_176 = arith.constant 1.000000e+00 : f32
    %458 = vector.broadcast %cst_176 : f32 to vector<16x1xf32>
    %459 = arith.addf %458, %457 : vector<16x1xf32>
    %460 = arith.divf %458, %459 : vector<16x1xf32>
    %461 = vector.broadcast %460 : vector<16x1xf32> to vector<16x32xf32>
    %462 = arith.mulf %340, %461 : vector<16x32xf32>
    %cst_177 = arith.constant 1.000000e+00 : f32
    %463 = vector.broadcast %cst_177 : f32 to vector<16x1xf32>
    %464 = arith.subf %463, %460 : vector<16x1xf32>
    %465 = vector.broadcast %464 : vector<16x1xf32> to vector<16x32xf32>
    %466 = arith.mulf %447, %465 : vector<16x32xf32>
    %467 = arith.addf %462, %466 : vector<16x32xf32>
    %c1_178 = arith.constant 1 : index
    %c0_179 = arith.constant 0 : index
    %c0_180 = arith.constant 0 : index
    %468 = vector.load %arg26[%c1_178, %c0_179, %c0_180] : memref<2x1x32xf32, #tpu.memory_space<vmem>>, vector<1x1x32xf32>
    %469 = vector.shape_cast %468 : vector<1x1x32xf32> to vector<1x32xf32>
    %c1_181 = arith.constant 1 : index
    %c0_182 = arith.constant 0 : index
    %c0_183 = arith.constant 0 : index
    %470 = vector.load %arg27[%c1_181, %c0_182, %c0_183] : memref<2x1x32xf32, #tpu.memory_space<vmem>>, vector<1x1x32xf32>
    %471 = vector.shape_cast %470 : vector<1x1x32xf32> to vector<1x32xf32>
    %cst_184 = arith.constant dense<0.000000e+00> : vector<16xf32>
    %472 = vector.multi_reduction <add>, %467, %cst_184 [1] : vector<16x32xf32> to vector<16xf32>
    %473 = vector.shape_cast %472 : vector<16xf32> to vector<16x1xf32>
    %cst_185 = arith.constant 3.200000e+01 : f32
    %474 = vector.broadcast %cst_185 : f32 to vector<16x1xf32>
    %475 = arith.divf %473, %474 : vector<16x1xf32>
    %476 = vector.broadcast %475 : vector<16x1xf32> to vector<16x32xf32>
    %477 = arith.subf %467, %476 : vector<16x32xf32>
    %478 = arith.mulf %477, %477 : vector<16x32xf32>
    %cst_186 = arith.constant dense<0.000000e+00> : vector<16xf32>
    %479 = vector.multi_reduction <add>, %478, %cst_186 [1] : vector<16x32xf32> to vector<16xf32>
    %480 = vector.shape_cast %479 : vector<16xf32> to vector<16x1xf32>
    %cst_187 = arith.constant 3.200000e+01 : f32
    %481 = vector.broadcast %cst_187 : f32 to vector<16x1xf32>
    %482 = arith.divf %480, %481 : vector<16x1xf32>
    %483 = vector.broadcast %475 : vector<16x1xf32> to vector<16x32xf32>
    %484 = arith.subf %467, %483 : vector<16x32xf32>
    %cst_188 = arith.constant 9.99999974E-6 : f32
    %485 = vector.broadcast %cst_188 : f32 to vector<16x1xf32>
    %486 = arith.addf %482, %485 : vector<16x1xf32>
    %487 = math.rsqrt %486 : vector<16x1xf32>
    %488 = vector.broadcast %487 : vector<16x1xf32> to vector<16x32xf32>
    %489 = arith.mulf %484, %488 : vector<16x32xf32>
    %490 = vector.broadcast %469 : vector<1x32xf32> to vector<16x32xf32>
    %491 = arith.mulf %489, %490 : vector<16x32xf32>
    %492 = vector.broadcast %471 : vector<1x32xf32> to vector<16x32xf32>
    %493 = arith.addf %491, %492 : vector<16x32xf32>
    %494 = vector.shape_cast %386 : vector<16x1xf32> to vector<1x16x1xf32>
    %cst_189 = arith.constant dense<0.000000e+00> : vector<1xf32>
    %495 = vector.multi_reduction <add>, %494, %cst_189 [1, 2] : vector<1x16x1xf32> to vector<1xf32>
    %496 = vector.shape_cast %495 : vector<1xf32> to vector<1x1x1xf32>
    %497 = vector.extract %496[0, 0, 0] : f32 from vector<1x1x1xf32>
    %498 = vector.broadcast %497 : f32 to vector<1x1xf32>
    %cst_190 = arith.constant 1.600000e+01 : f32
    %499 = vector.broadcast %cst_190 : f32 to vector<1x1xf32>
    %500 = arith.divf %498, %499 : vector<1x1xf32>
    %501 = vector.shape_cast %403 : vector<16x1xf32> to vector<1x16x1xf32>
    %cst_191 = arith.constant dense<0.000000e+00> : vector<1xf32>
    %502 = vector.multi_reduction <add>, %501, %cst_191 [1, 2] : vector<1x16x1xf32> to vector<1xf32>
    %503 = vector.shape_cast %502 : vector<1xf32> to vector<1x1x1xf32>
    %504 = vector.extract %503[0, 0, 0] : f32 from vector<1x1x1xf32>
    %505 = vector.broadcast %504 : f32 to vector<1x1xf32>
    %cst_192 = arith.constant 1.600000e+01 : f32
    %506 = vector.broadcast %cst_192 : f32 to vector<1x1xf32>
    %507 = arith.divf %505, %506 : vector<1x1xf32>
    %508 = vector.shape_cast %365 : vector<1x1xf32> to vector<1x1xf32>
    %509 = vector.broadcast %508 : vector<1x1xf32> to vector<1x128xf32>
    %c1_193 = arith.constant 1 : index
    %c0_194 = arith.constant 0 : index
    %510 = vector.load %arg29[%c1_193, %c0_194] : memref<16x128xf32, #tpu.memory_space<vmem>>, vector<1x128xf32>
    tpu.vector_store %arg29[%c1_193, %c0_194], %509 {strides = array<i32>} : memref<16x128xf32, #tpu.memory_space<vmem>>, vector<1x128xf32>,
    %511 = vector.shape_cast %427 : vector<1x1xf32> to vector<1x1xf32>
    %512 = vector.broadcast %511 : vector<1x1xf32> to vector<1x128xf32>
    %c3 = arith.constant 3 : index
    %c0_195 = arith.constant 0 : index
    %513 = vector.load %arg29[%c3, %c0_195] : memref<16x128xf32, #tpu.memory_space<vmem>>, vector<1x128xf32>
    tpu.vector_store %arg29[%c3, %c0_195], %512 {strides = array<i32>} : memref<16x128xf32, #tpu.memory_space<vmem>>, vector<1x128xf32>,
    %514 = vector.shape_cast %500 : vector<1x1xf32> to vector<1x1xf32>
    %515 = vector.broadcast %514 : vector<1x1xf32> to vector<1x128xf32>
    %c5 = arith.constant 5 : index
    %c0_196 = arith.constant 0 : index
    %516 = vector.load %arg29[%c5, %c0_196] : memref<16x128xf32, #tpu.memory_space<vmem>>, vector<1x128xf32>
    tpu.vector_store %arg29[%c5, %c0_196], %515 {strides = array<i32>} : memref<16x128xf32, #tpu.memory_space<vmem>>, vector<1x128xf32>,
    %517 = vector.shape_cast %507 : vector<1x1xf32> to vector<1x1xf32>
    %518 = vector.broadcast %517 : vector<1x1xf32> to vector<1x128xf32>
    %c7 = arith.constant 7 : index
    %c0_197 = arith.constant 0 : index
    %519 = vector.load %arg29[%c7, %c0_197] : memref<16x128xf32, #tpu.memory_space<vmem>>, vector<1x128xf32>
    tpu.vector_store %arg29[%c7, %c0_197], %518 {strides = array<i32>} : memref<16x128xf32, #tpu.memory_space<vmem>>, vector<1x128xf32>,
    %c1_198 = arith.constant 1 : index
    %c0_199 = arith.constant 0 : index
    %c0_200 = arith.constant 0 : index
    %520 = vector.load %arg18[%c1_198, %c0_199, %c0_200] : memref<2x3x32xf32, #tpu.memory_space<vmem>>, vector<1x3x32xf32>
    %521 = vector.shape_cast %520 : vector<1x3x32xf32> to vector<3x32xf32>
    %c1_201 = arith.constant 1 : index
    %c0_202 = arith.constant 0 : index
    %c0_203 = arith.constant 0 : index
    %522 = vector.load %arg19[%c1_201, %c0_202, %c0_203] : memref<2x3x32xf32, #tpu.memory_space<vmem>>, vector<1x3x32xf32>
    %523 = vector.shape_cast %522 : vector<1x3x32xf32> to vector<3x32xf32>
    %c1_204 = arith.constant 1 : index
    %c0_205 = arith.constant 0 : index
    %c0_206 = arith.constant 0 : index
    %524 = vector.load %arg8[%c1_204, %c0_205, %c0_206] : memref<2x32x96xf32, #tpu.memory_space<vmem>>, vector<1x32x96xf32>
    %525 = vector.shape_cast %524 : vector<1x32x96xf32> to vector<32x96xf32>
    %cst_207 = arith.constant dense<0.000000e+00> : vector<16x96xf32>
    %526 = tpu.matmul %493, %525, %cst_207 {dimension_numbers = #tpu.dot_dimension_numbers<[1], [0], [0], [1], [0, 0, 1, 1], [], []>} : vector<16x32xf32>, vector<32x96xf32>, vector<16x96xf32> -> vector<16x96xf32>
    %c1_208 = arith.constant 1 : index
    %c0_209 = arith.constant 0 : index
    %c0_210 = arith.constant 0 : index
    %527 = vector.load %arg9[%c1_208, %c0_209, %c0_210] : memref<2x1x96xf32, #tpu.memory_space<vmem>>, vector<1x1x96xf32>
    %528 = vector.shape_cast %527 : vector<1x1x96xf32> to vector<1x96xf32>
    %529 = vector.broadcast %528 : vector<1x96xf32> to vector<16x96xf32>
    %530 = arith.addf %526, %529 : vector<16x96xf32>
    %531 = vector.extract_strided_slice %530 {offsets = [0, 0], sizes = [16, 32], strides = [1, 1]} : vector<16x96xf32> to vector<16x32xf32>
    %532 = vector.extract_strided_slice %530 {offsets = [0, 32], sizes = [16, 32], strides = [1, 1]} : vector<16x96xf32> to vector<16x32xf32>
    %533 = vector.extract_strided_slice %530 {offsets = [0, 64], sizes = [16, 32], strides = [1, 1]} : vector<16x96xf32> to vector<16x32xf32>
    %c1_211 = arith.constant 1 : index
    %c0_212 = arith.constant 0 : index
    %c0_213 = arith.constant 0 : index
    %534 = vector.load %arg10[%c1_211, %c0_212, %c0_213] : memref<2x32x32xf32, #tpu.memory_space<vmem>>, vector<1x32x32xf32>
    %535 = vector.shape_cast %534 : vector<1x32x32xf32> to vector<32x32xf32>
    %c1_214 = arith.constant 1 : index
    %c0_215 = arith.constant 0 : index
    %c0_216 = arith.constant 0 : index
    %536 = vector.load %arg11[%c1_214, %c0_215, %c0_216] : memref<2x1x32xf32, #tpu.memory_space<vmem>>, vector<1x1x32xf32>
    %537 = vector.shape_cast %536 : vector<1x1x32xf32> to vector<1x32xf32>
    %538 = vector.shape_cast %531 : vector<16x32xf32> to vector<2x8x32xf32>
    %539 = vector.shape_cast %532 : vector<16x32xf32> to vector<2x8x32xf32>
    %540 = vector.shape_cast %533 : vector<16x32xf32> to vector<2x8x32xf32>
    %cst_217 = arith.constant 0.000000e+00 : f32
    %541 = vector.broadcast %cst_217 : f32 to vector<16x32xf32>
    %542 = vector.extract_strided_slice %538 {offsets = [0, 0, 0], sizes = [2, 8, 8], strides = [1, 1, 1]} : vector<2x8x32xf32> to vector<2x8x8xf32>
    %543 = vector.extract_strided_slice %539 {offsets = [0, 0, 0], sizes = [2, 8, 8], strides = [1, 1, 1]} : vector<2x8x32xf32> to vector<2x8x8xf32>
    %544 = vector.extract_strided_slice %540 {offsets = [0, 0, 0], sizes = [2, 8, 8], strides = [1, 1, 1]} : vector<2x8x32xf32> to vector<2x8x8xf32>
    "tpu.trace_start"() <{level = 10 : i32, message = "bqd,bkd->bqk"}> : () -> ()
    %cst_218 = arith.constant dense<0.000000e+00> : vector<2x8x8xf32>
    %545 = tpu.matmul %542, %543, %cst_218 {dimension_numbers = #tpu.dot_dimension_numbers<[2], [2], [1], [1], [0, 0, 0, 1, 1, 1], [0], [0]>} : vector<2x8x8xf32>, vector<2x8x8xf32>, vector<2x8x8xf32> -> vector<2x8x8xf32>
    "tpu.trace_stop"() : () -> ()
    %cst_219 = arith.constant 0.353553385 : f32
    %546 = vector.broadcast %cst_219 : f32 to vector<2x8x8xf32>
    %547 = arith.mulf %545, %546 : vector<2x8x8xf32>
    %cst_220 = arith.constant dense<0xFF800000> : vector<2x8xf32>
    %548 = vector.multi_reduction <maximumf>, %547, %cst_220 [2] : vector<2x8x8xf32> to vector<2x8xf32>
    %549 = vector.shape_cast %548 : vector<2x8xf32> to vector<2x8x1xf32>
    %550 = vector.broadcast %549 : vector<2x8x1xf32> to vector<2x8x8xf32>
    %551 = arith.subf %547, %550 : vector<2x8x8xf32>
    %552 = math.exp %551 : vector<2x8x8xf32>
    %cst_221 = arith.constant dense<0.000000e+00> : vector<2x8xf32>
    %553 = vector.multi_reduction <add>, %552, %cst_221 [2] : vector<2x8x8xf32> to vector<2x8xf32>
    %554 = vector.shape_cast %553 : vector<2x8xf32> to vector<2x8x1xf32>
    %555 = vector.broadcast %554 : vector<2x8x1xf32> to vector<2x8x8xf32>
    %556 = arith.divf %552, %555 : vector<2x8x8xf32>
    "tpu.trace_start"() <{level = 10 : i32, message = "bqk,bkd->bqd"}> : () -> ()
    %cst_222 = arith.constant dense<0.000000e+00> : vector<2x8x8xf32>
    %557 = tpu.matmul %556, %544, %cst_222 {dimension_numbers = #tpu.dot_dimension_numbers<[2], [1], [1], [2], [0, 0, 0, 1, 1, 2], [0], [0]>} : vector<2x8x8xf32>, vector<2x8x8xf32>, vector<2x8x8xf32> -> vector<2x8x8xf32>
    "tpu.trace_stop"() : () -> ()
    %558 = vector.shape_cast %557 : vector<2x8x8xf32> to vector<16x8xf32>
    %559 = vector.extract_strided_slice %535 {offsets = [0, 0], sizes = [8, 32], strides = [1, 1]} : vector<32x32xf32> to vector<8x32xf32>
    %cst_223 = arith.constant dense<0.000000e+00> : vector<16x32xf32>
    %560 = tpu.matmul %558, %559, %cst_223 {dimension_numbers = #tpu.dot_dimension_numbers<[1], [0], [0], [1], [0, 0, 1, 1], [], []>} : vector<16x8xf32>, vector<8x32xf32>, vector<16x32xf32> -> vector<16x32xf32>
    %561 = arith.addf %541, %560 : vector<16x32xf32>
    %562 = vector.extract_strided_slice %538 {offsets = [0, 0, 8], sizes = [2, 8, 8], strides = [1, 1, 1]} : vector<2x8x32xf32> to vector<2x8x8xf32>
    %563 = vector.extract_strided_slice %539 {offsets = [0, 0, 8], sizes = [2, 8, 8], strides = [1, 1, 1]} : vector<2x8x32xf32> to vector<2x8x8xf32>
    %564 = vector.extract_strided_slice %540 {offsets = [0, 0, 8], sizes = [2, 8, 8], strides = [1, 1, 1]} : vector<2x8x32xf32> to vector<2x8x8xf32>
    "tpu.trace_start"() <{level = 10 : i32, message = "bqd,bkd->bqk"}> : () -> ()
    %cst_224 = arith.constant dense<0.000000e+00> : vector<2x8x8xf32>
    %565 = tpu.matmul %562, %563, %cst_224 {dimension_numbers = #tpu.dot_dimension_numbers<[2], [2], [1], [1], [0, 0, 0, 1, 1, 1], [0], [0]>} : vector<2x8x8xf32>, vector<2x8x8xf32>, vector<2x8x8xf32> -> vector<2x8x8xf32>
    "tpu.trace_stop"() : () -> ()
    %cst_225 = arith.constant 0.353553385 : f32
    %566 = vector.broadcast %cst_225 : f32 to vector<2x8x8xf32>
    %567 = arith.mulf %565, %566 : vector<2x8x8xf32>
    %cst_226 = arith.constant dense<0xFF800000> : vector<2x8xf32>
    %568 = vector.multi_reduction <maximumf>, %567, %cst_226 [2] : vector<2x8x8xf32> to vector<2x8xf32>
    %569 = vector.shape_cast %568 : vector<2x8xf32> to vector<2x8x1xf32>
    %570 = vector.broadcast %569 : vector<2x8x1xf32> to vector<2x8x8xf32>
    %571 = arith.subf %567, %570 : vector<2x8x8xf32>
    %572 = math.exp %571 : vector<2x8x8xf32>
    %cst_227 = arith.constant dense<0.000000e+00> : vector<2x8xf32>
    %573 = vector.multi_reduction <add>, %572, %cst_227 [2] : vector<2x8x8xf32> to vector<2x8xf32>
    %574 = vector.shape_cast %573 : vector<2x8xf32> to vector<2x8x1xf32>
    %575 = vector.broadcast %574 : vector<2x8x1xf32> to vector<2x8x8xf32>
    %576 = arith.divf %572, %575 : vector<2x8x8xf32>
    "tpu.trace_start"() <{level = 10 : i32, message = "bqk,bkd->bqd"}> : () -> ()
    %cst_228 = arith.constant dense<0.000000e+00> : vector<2x8x8xf32>
    %577 = tpu.matmul %576, %564, %cst_228 {dimension_numbers = #tpu.dot_dimension_numbers<[2], [1], [1], [2], [0, 0, 0, 1, 1, 2], [0], [0]>} : vector<2x8x8xf32>, vector<2x8x8xf32>, vector<2x8x8xf32> -> vector<2x8x8xf32>
    "tpu.trace_stop"() : () -> ()
    %578 = vector.shape_cast %577 : vector<2x8x8xf32> to vector<16x8xf32>
    %579 = vector.extract_strided_slice %535 {offsets = [8, 0], sizes = [8, 32], strides = [1, 1]} : vector<32x32xf32> to vector<8x32xf32>
    %cst_229 = arith.constant dense<0.000000e+00> : vector<16x32xf32>
    %580 = tpu.matmul %578, %579, %cst_229 {dimension_numbers = #tpu.dot_dimension_numbers<[1], [0], [0], [1], [0, 0, 1, 1], [], []>} : vector<16x8xf32>, vector<8x32xf32>, vector<16x32xf32> -> vector<16x32xf32>
    %581 = arith.addf %561, %580 : vector<16x32xf32>
    %582 = vector.extract_strided_slice %538 {offsets = [0, 0, 16], sizes = [2, 8, 8], strides = [1, 1, 1]} : vector<2x8x32xf32> to vector<2x8x8xf32>
    %583 = vector.extract_strided_slice %539 {offsets = [0, 0, 16], sizes = [2, 8, 8], strides = [1, 1, 1]} : vector<2x8x32xf32> to vector<2x8x8xf32>
    %584 = vector.extract_strided_slice %540 {offsets = [0, 0, 16], sizes = [2, 8, 8], strides = [1, 1, 1]} : vector<2x8x32xf32> to vector<2x8x8xf32>
    "tpu.trace_start"() <{level = 10 : i32, message = "bqd,bkd->bqk"}> : () -> ()
    %cst_230 = arith.constant dense<0.000000e+00> : vector<2x8x8xf32>
    %585 = tpu.matmul %582, %583, %cst_230 {dimension_numbers = #tpu.dot_dimension_numbers<[2], [2], [1], [1], [0, 0, 0, 1, 1, 1], [0], [0]>} : vector<2x8x8xf32>, vector<2x8x8xf32>, vector<2x8x8xf32> -> vector<2x8x8xf32>
    "tpu.trace_stop"() : () -> ()
    %cst_231 = arith.constant 0.353553385 : f32
    %586 = vector.broadcast %cst_231 : f32 to vector<2x8x8xf32>
    %587 = arith.mulf %585, %586 : vector<2x8x8xf32>
    %cst_232 = arith.constant dense<0xFF800000> : vector<2x8xf32>
    %588 = vector.multi_reduction <maximumf>, %587, %cst_232 [2] : vector<2x8x8xf32> to vector<2x8xf32>
    %589 = vector.shape_cast %588 : vector<2x8xf32> to vector<2x8x1xf32>
    %590 = vector.broadcast %589 : vector<2x8x1xf32> to vector<2x8x8xf32>
    %591 = arith.subf %587, %590 : vector<2x8x8xf32>
    %592 = math.exp %591 : vector<2x8x8xf32>
    %cst_233 = arith.constant dense<0.000000e+00> : vector<2x8xf32>
    %593 = vector.multi_reduction <add>, %592, %cst_233 [2] : vector<2x8x8xf32> to vector<2x8xf32>
    %594 = vector.shape_cast %593 : vector<2x8xf32> to vector<2x8x1xf32>
    %595 = vector.broadcast %594 : vector<2x8x1xf32> to vector<2x8x8xf32>
    %596 = arith.divf %592, %595 : vector<2x8x8xf32>
    "tpu.trace_start"() <{level = 10 : i32, message = "bqk,bkd->bqd"}> : () -> ()
    %cst_234 = arith.constant dense<0.000000e+00> : vector<2x8x8xf32>
    %597 = tpu.matmul %596, %584, %cst_234 {dimension_numbers = #tpu.dot_dimension_numbers<[2], [1], [1], [2], [0, 0, 0, 1, 1, 2], [0], [0]>} : vector<2x8x8xf32>, vector<2x8x8xf32>, vector<2x8x8xf32> -> vector<2x8x8xf32>
    "tpu.trace_stop"() : () -> ()
    %598 = vector.shape_cast %597 : vector<2x8x8xf32> to vector<16x8xf32>
    %599 = vector.extract_strided_slice %535 {offsets = [16, 0], sizes = [8, 32], strides = [1, 1]} : vector<32x32xf32> to vector<8x32xf32>
    %cst_235 = arith.constant dense<0.000000e+00> : vector<16x32xf32>
    %600 = tpu.matmul %598, %599, %cst_235 {dimension_numbers = #tpu.dot_dimension_numbers<[1], [0], [0], [1], [0, 0, 1, 1], [], []>} : vector<16x8xf32>, vector<8x32xf32>, vector<16x32xf32> -> vector<16x32xf32>
    %601 = arith.addf %581, %600 : vector<16x32xf32>
    %602 = vector.extract_strided_slice %538 {offsets = [0, 0, 24], sizes = [2, 8, 8], strides = [1, 1, 1]} : vector<2x8x32xf32> to vector<2x8x8xf32>
    %603 = vector.extract_strided_slice %539 {offsets = [0, 0, 24], sizes = [2, 8, 8], strides = [1, 1, 1]} : vector<2x8x32xf32> to vector<2x8x8xf32>
    %604 = vector.extract_strided_slice %540 {offsets = [0, 0, 24], sizes = [2, 8, 8], strides = [1, 1, 1]} : vector<2x8x32xf32> to vector<2x8x8xf32>
    "tpu.trace_start"() <{level = 10 : i32, message = "bqd,bkd->bqk"}> : () -> ()
    %cst_236 = arith.constant dense<0.000000e+00> : vector<2x8x8xf32>
    %605 = tpu.matmul %602, %603, %cst_236 {dimension_numbers = #tpu.dot_dimension_numbers<[2], [2], [1], [1], [0, 0, 0, 1, 1, 1], [0], [0]>} : vector<2x8x8xf32>, vector<2x8x8xf32>, vector<2x8x8xf32> -> vector<2x8x8xf32>
    "tpu.trace_stop"() : () -> ()
    %cst_237 = arith.constant 0.353553385 : f32
    %606 = vector.broadcast %cst_237 : f32 to vector<2x8x8xf32>
    %607 = arith.mulf %605, %606 : vector<2x8x8xf32>
    %cst_238 = arith.constant dense<0xFF800000> : vector<2x8xf32>
    %608 = vector.multi_reduction <maximumf>, %607, %cst_238 [2] : vector<2x8x8xf32> to vector<2x8xf32>
    %609 = vector.shape_cast %608 : vector<2x8xf32> to vector<2x8x1xf32>
    %610 = vector.broadcast %609 : vector<2x8x1xf32> to vector<2x8x8xf32>
    %611 = arith.subf %607, %610 : vector<2x8x8xf32>
    %612 = math.exp %611 : vector<2x8x8xf32>
    %cst_239 = arith.constant dense<0.000000e+00> : vector<2x8xf32>
    %613 = vector.multi_reduction <add>, %612, %cst_239 [2] : vector<2x8x8xf32> to vector<2x8xf32>
    %614 = vector.shape_cast %613 : vector<2x8xf32> to vector<2x8x1xf32>
    %615 = vector.broadcast %614 : vector<2x8x1xf32> to vector<2x8x8xf32>
    %616 = arith.divf %612, %615 : vector<2x8x8xf32>
    "tpu.trace_start"() <{level = 10 : i32, message = "bqk,bkd->bqd"}> : () -> ()
    %cst_240 = arith.constant dense<0.000000e+00> : vector<2x8x8xf32>
    %617 = tpu.matmul %616, %604, %cst_240 {dimension_numbers = #tpu.dot_dimension_numbers<[2], [1], [1], [2], [0, 0, 0, 1, 1, 2], [0], [0]>} : vector<2x8x8xf32>, vector<2x8x8xf32>, vector<2x8x8xf32> -> vector<2x8x8xf32>
    "tpu.trace_stop"() : () -> ()
    %618 = vector.shape_cast %617 : vector<2x8x8xf32> to vector<16x8xf32>
    %619 = vector.extract_strided_slice %535 {offsets = [24, 0], sizes = [8, 32], strides = [1, 1]} : vector<32x32xf32> to vector<8x32xf32>
    %cst_241 = arith.constant dense<0.000000e+00> : vector<16x32xf32>
    %620 = tpu.matmul %618, %619, %cst_241 {dimension_numbers = #tpu.dot_dimension_numbers<[1], [0], [0], [1], [0, 0, 1, 1], [], []>} : vector<16x8xf32>, vector<8x32xf32>, vector<16x32xf32> -> vector<16x32xf32>
    %621 = arith.addf %601, %620 : vector<16x32xf32>
    %622 = vector.broadcast %537 : vector<1x32xf32> to vector<16x32xf32>
    %623 = arith.addf %621, %622 : vector<16x32xf32>
    %624 = arith.addf %493, %623 : vector<16x32xf32>
    %625 = vector.extract_strided_slice %521 {offsets = [0, 0], sizes = [1, 32], strides = [1, 1]} : vector<3x32xf32> to vector<1x32xf32>
    %626 = vector.extract_strided_slice %523 {offsets = [0, 0], sizes = [1, 32], strides = [1, 1]} : vector<3x32xf32> to vector<1x32xf32>
    %cst_242 = arith.constant dense<0.000000e+00> : vector<16xf32>
    %627 = vector.multi_reduction <add>, %624, %cst_242 [1] : vector<16x32xf32> to vector<16xf32>
    %628 = vector.shape_cast %627 : vector<16xf32> to vector<16x1xf32>
    %cst_243 = arith.constant 3.200000e+01 : f32
    %629 = vector.broadcast %cst_243 : f32 to vector<16x1xf32>
    %630 = arith.divf %628, %629 : vector<16x1xf32>
    %631 = vector.broadcast %630 : vector<16x1xf32> to vector<16x32xf32>
    %632 = arith.subf %624, %631 : vector<16x32xf32>
    %633 = arith.mulf %632, %632 : vector<16x32xf32>
    %cst_244 = arith.constant dense<0.000000e+00> : vector<16xf32>
    %634 = vector.multi_reduction <add>, %633, %cst_244 [1] : vector<16x32xf32> to vector<16xf32>
    %635 = vector.shape_cast %634 : vector<16xf32> to vector<16x1xf32>
    %cst_245 = arith.constant 3.200000e+01 : f32
    %636 = vector.broadcast %cst_245 : f32 to vector<16x1xf32>
    %637 = arith.divf %635, %636 : vector<16x1xf32>
    %638 = vector.broadcast %630 : vector<16x1xf32> to vector<16x32xf32>
    %639 = arith.subf %624, %638 : vector<16x32xf32>
    %cst_246 = arith.constant 9.99999974E-6 : f32
    %640 = vector.broadcast %cst_246 : f32 to vector<16x1xf32>
    %641 = arith.addf %637, %640 : vector<16x1xf32>
    %642 = math.rsqrt %641 : vector<16x1xf32>
    %643 = vector.broadcast %642 : vector<16x1xf32> to vector<16x32xf32>
    %644 = arith.mulf %639, %643 : vector<16x32xf32>
    %645 = vector.broadcast %625 : vector<1x32xf32> to vector<16x32xf32>
    %646 = arith.mulf %644, %645 : vector<16x32xf32>
    %647 = vector.broadcast %626 : vector<1x32xf32> to vector<16x32xf32>
    %648 = arith.addf %646, %647 : vector<16x32xf32>
    %c1_247 = arith.constant 1 : index
    %c0_248 = arith.constant 0 : index
    %c0_249 = arith.constant 0 : index
    %649 = vector.load %arg12[%c1_247, %c0_248, %c0_249] : memref<2x32x32xf32, #tpu.memory_space<vmem>>, vector<1x32x32xf32>
    %650 = vector.shape_cast %649 : vector<1x32x32xf32> to vector<32x32xf32>
    %cst_250 = arith.constant dense<0.000000e+00> : vector<16x32xf32>
    %651 = tpu.matmul %648, %650, %cst_250 {dimension_numbers = #tpu.dot_dimension_numbers<[1], [0], [0], [1], [0, 0, 1, 1], [], []>} : vector<16x32xf32>, vector<32x32xf32>, vector<16x32xf32> -> vector<16x32xf32>
    %c1_251 = arith.constant 1 : index
    %c0_252 = arith.constant 0 : index
    %c0_253 = arith.constant 0 : index
    %652 = vector.load %arg13[%c1_251, %c0_252, %c0_253] : memref<2x1x32xf32, #tpu.memory_space<vmem>>, vector<1x1x32xf32>
    %653 = vector.shape_cast %652 : vector<1x1x32xf32> to vector<1x32xf32>
    %654 = vector.broadcast %653 : vector<1x32xf32> to vector<16x32xf32>
    %655 = arith.addf %651, %654 : vector<16x32xf32>
    %c1_254 = arith.constant 1 : index
    %c0_255 = arith.constant 0 : index
    %c0_256 = arith.constant 0 : index
    %656 = vector.load %arg14[%c1_254, %c0_255, %c0_256] : memref<2x32x64xf32, #tpu.memory_space<vmem>>, vector<1x32x64xf32>
    %657 = vector.shape_cast %656 : vector<1x32x64xf32> to vector<32x64xf32>
    %cst_257 = arith.constant dense<0.000000e+00> : vector<16x64xf32>
    %658 = tpu.matmul %8, %657, %cst_257 {dimension_numbers = #tpu.dot_dimension_numbers<[1], [0], [0], [1], [0, 0, 1, 1], [], []>} : vector<16x32xf32>, vector<32x64xf32>, vector<16x64xf32> -> vector<16x64xf32>
    %c1_258 = arith.constant 1 : index
    %c0_259 = arith.constant 0 : index
    %c0_260 = arith.constant 0 : index
    %659 = vector.load %arg15[%c1_258, %c0_259, %c0_260] : memref<2x1x64xf32, #tpu.memory_space<vmem>>, vector<1x1x64xf32>
    %660 = vector.shape_cast %659 : vector<1x1x64xf32> to vector<1x64xf32>
    %661 = vector.broadcast %660 : vector<1x64xf32> to vector<16x64xf32>
    %662 = arith.addf %658, %661 : vector<16x64xf32>
    %663 = vector.extract_strided_slice %662 {offsets = [0, 0], sizes = [16, 32], strides = [1, 1]} : vector<16x64xf32> to vector<16x32xf32>
    %664 = vector.extract_strided_slice %662 {offsets = [0, 32], sizes = [16, 32], strides = [1, 1]} : vector<16x64xf32> to vector<16x32xf32>
    %c1_261 = arith.constant 1 : index
    %c0_262 = arith.constant 0 : index
    %c0_263 = arith.constant 0 : index
    %665 = vector.load %arg16[%c1_261, %c0_262, %c0_263] : memref<2x32x32xf32, #tpu.memory_space<vmem>>, vector<1x32x32xf32>
    %666 = vector.shape_cast %665 : vector<1x32x32xf32> to vector<32x32xf32>
    %c1_264 = arith.constant 1 : index
    %c0_265 = arith.constant 0 : index
    %c0_266 = arith.constant 0 : index
    %667 = vector.load %arg17[%c1_264, %c0_265, %c0_266] : memref<2x1x32xf32, #tpu.memory_space<vmem>>, vector<1x1x32xf32>
    %668 = vector.shape_cast %667 : vector<1x1x32xf32> to vector<1x32xf32>
    %669 = vector.shape_cast %655 : vector<16x32xf32> to vector<2x8x32xf32>
    %670 = vector.shape_cast %663 : vector<16x32xf32> to vector<2x8x32xf32>
    %671 = vector.shape_cast %664 : vector<16x32xf32> to vector<2x8x32xf32>
    %cst_267 = arith.constant 0.000000e+00 : f32
    %672 = vector.broadcast %cst_267 : f32 to vector<16x32xf32>
    %673 = vector.extract_strided_slice %669 {offsets = [0, 0, 0], sizes = [2, 8, 8], strides = [1, 1, 1]} : vector<2x8x32xf32> to vector<2x8x8xf32>
    %674 = vector.extract_strided_slice %670 {offsets = [0, 0, 0], sizes = [2, 8, 8], strides = [1, 1, 1]} : vector<2x8x32xf32> to vector<2x8x8xf32>
    %675 = vector.extract_strided_slice %671 {offsets = [0, 0, 0], sizes = [2, 8, 8], strides = [1, 1, 1]} : vector<2x8x32xf32> to vector<2x8x8xf32>
    "tpu.trace_start"() <{level = 10 : i32, message = "bqd,bkd->bqk"}> : () -> ()
    %cst_268 = arith.constant dense<0.000000e+00> : vector<2x8x8xf32>
    %676 = tpu.matmul %673, %674, %cst_268 {dimension_numbers = #tpu.dot_dimension_numbers<[2], [2], [1], [1], [0, 0, 0, 1, 1, 1], [0], [0]>} : vector<2x8x8xf32>, vector<2x8x8xf32>, vector<2x8x8xf32> -> vector<2x8x8xf32>
    "tpu.trace_stop"() : () -> ()
    %cst_269 = arith.constant 0.353553385 : f32
    %677 = vector.broadcast %cst_269 : f32 to vector<2x8x8xf32>
    %678 = arith.mulf %676, %677 : vector<2x8x8xf32>
    %cst_270 = arith.constant dense<0xFF800000> : vector<2x8xf32>
    %679 = vector.multi_reduction <maximumf>, %678, %cst_270 [2] : vector<2x8x8xf32> to vector<2x8xf32>
    %680 = vector.shape_cast %679 : vector<2x8xf32> to vector<2x8x1xf32>
    %681 = vector.broadcast %680 : vector<2x8x1xf32> to vector<2x8x8xf32>
    %682 = arith.subf %678, %681 : vector<2x8x8xf32>
    %683 = math.exp %682 : vector<2x8x8xf32>
    %cst_271 = arith.constant dense<0.000000e+00> : vector<2x8xf32>
    %684 = vector.multi_reduction <add>, %683, %cst_271 [2] : vector<2x8x8xf32> to vector<2x8xf32>
    %685 = vector.shape_cast %684 : vector<2x8xf32> to vector<2x8x1xf32>
    %686 = vector.broadcast %685 : vector<2x8x1xf32> to vector<2x8x8xf32>
    %687 = arith.divf %683, %686 : vector<2x8x8xf32>
    "tpu.trace_start"() <{level = 10 : i32, message = "bqk,bkd->bqd"}> : () -> ()
    %cst_272 = arith.constant dense<0.000000e+00> : vector<2x8x8xf32>
    %688 = tpu.matmul %687, %675, %cst_272 {dimension_numbers = #tpu.dot_dimension_numbers<[2], [1], [1], [2], [0, 0, 0, 1, 1, 2], [0], [0]>} : vector<2x8x8xf32>, vector<2x8x8xf32>, vector<2x8x8xf32> -> vector<2x8x8xf32>
    "tpu.trace_stop"() : () -> ()
    %689 = vector.shape_cast %688 : vector<2x8x8xf32> to vector<16x8xf32>
    %690 = vector.extract_strided_slice %666 {offsets = [0, 0], sizes = [8, 32], strides = [1, 1]} : vector<32x32xf32> to vector<8x32xf32>
    %cst_273 = arith.constant dense<0.000000e+00> : vector<16x32xf32>
    %691 = tpu.matmul %689, %690, %cst_273 {dimension_numbers = #tpu.dot_dimension_numbers<[1], [0], [0], [1], [0, 0, 1, 1], [], []>} : vector<16x8xf32>, vector<8x32xf32>, vector<16x32xf32> -> vector<16x32xf32>
    %692 = arith.addf %672, %691 : vector<16x32xf32>
    %693 = vector.extract_strided_slice %669 {offsets = [0, 0, 8], sizes = [2, 8, 8], strides = [1, 1, 1]} : vector<2x8x32xf32> to vector<2x8x8xf32>
    %694 = vector.extract_strided_slice %670 {offsets = [0, 0, 8], sizes = [2, 8, 8], strides = [1, 1, 1]} : vector<2x8x32xf32> to vector<2x8x8xf32>
    %695 = vector.extract_strided_slice %671 {offsets = [0, 0, 8], sizes = [2, 8, 8], strides = [1, 1, 1]} : vector<2x8x32xf32> to vector<2x8x8xf32>
    "tpu.trace_start"() <{level = 10 : i32, message = "bqd,bkd->bqk"}> : () -> ()
    %cst_274 = arith.constant dense<0.000000e+00> : vector<2x8x8xf32>
    %696 = tpu.matmul %693, %694, %cst_274 {dimension_numbers = #tpu.dot_dimension_numbers<[2], [2], [1], [1], [0, 0, 0, 1, 1, 1], [0], [0]>} : vector<2x8x8xf32>, vector<2x8x8xf32>, vector<2x8x8xf32> -> vector<2x8x8xf32>
    "tpu.trace_stop"() : () -> ()
    %cst_275 = arith.constant 0.353553385 : f32
    %697 = vector.broadcast %cst_275 : f32 to vector<2x8x8xf32>
    %698 = arith.mulf %696, %697 : vector<2x8x8xf32>
    %cst_276 = arith.constant dense<0xFF800000> : vector<2x8xf32>
    %699 = vector.multi_reduction <maximumf>, %698, %cst_276 [2] : vector<2x8x8xf32> to vector<2x8xf32>
    %700 = vector.shape_cast %699 : vector<2x8xf32> to vector<2x8x1xf32>
    %701 = vector.broadcast %700 : vector<2x8x1xf32> to vector<2x8x8xf32>
    %702 = arith.subf %698, %701 : vector<2x8x8xf32>
    %703 = math.exp %702 : vector<2x8x8xf32>
    %cst_277 = arith.constant dense<0.000000e+00> : vector<2x8xf32>
    %704 = vector.multi_reduction <add>, %703, %cst_277 [2] : vector<2x8x8xf32> to vector<2x8xf32>
    %705 = vector.shape_cast %704 : vector<2x8xf32> to vector<2x8x1xf32>
    %706 = vector.broadcast %705 : vector<2x8x1xf32> to vector<2x8x8xf32>
    %707 = arith.divf %703, %706 : vector<2x8x8xf32>
    "tpu.trace_start"() <{level = 10 : i32, message = "bqk,bkd->bqd"}> : () -> ()
    %cst_278 = arith.constant dense<0.000000e+00> : vector<2x8x8xf32>
    %708 = tpu.matmul %707, %695, %cst_278 {dimension_numbers = #tpu.dot_dimension_numbers<[2], [1], [1], [2], [0, 0, 0, 1, 1, 2], [0], [0]>} : vector<2x8x8xf32>, vector<2x8x8xf32>, vector<2x8x8xf32> -> vector<2x8x8xf32>
    "tpu.trace_stop"() : () -> ()
    %709 = vector.shape_cast %708 : vector<2x8x8xf32> to vector<16x8xf32>
    %710 = vector.extract_strided_slice %666 {offsets = [8, 0], sizes = [8, 32], strides = [1, 1]} : vector<32x32xf32> to vector<8x32xf32>
    %cst_279 = arith.constant dense<0.000000e+00> : vector<16x32xf32>
    %711 = tpu.matmul %709, %710, %cst_279 {dimension_numbers = #tpu.dot_dimension_numbers<[1], [0], [0], [1], [0, 0, 1, 1], [], []>} : vector<16x8xf32>, vector<8x32xf32>, vector<16x32xf32> -> vector<16x32xf32>
    %712 = arith.addf %692, %711 : vector<16x32xf32>
    %713 = vector.extract_strided_slice %669 {offsets = [0, 0, 16], sizes = [2, 8, 8], strides = [1, 1, 1]} : vector<2x8x32xf32> to vector<2x8x8xf32>
    %714 = vector.extract_strided_slice %670 {offsets = [0, 0, 16], sizes = [2, 8, 8], strides = [1, 1, 1]} : vector<2x8x32xf32> to vector<2x8x8xf32>
    %715 = vector.extract_strided_slice %671 {offsets = [0, 0, 16], sizes = [2, 8, 8], strides = [1, 1, 1]} : vector<2x8x32xf32> to vector<2x8x8xf32>
    "tpu.trace_start"() <{level = 10 : i32, message = "bqd,bkd->bqk"}> : () -> ()
    %cst_280 = arith.constant dense<0.000000e+00> : vector<2x8x8xf32>
    %716 = tpu.matmul %713, %714, %cst_280 {dimension_numbers = #tpu.dot_dimension_numbers<[2], [2], [1], [1], [0, 0, 0, 1, 1, 1], [0], [0]>} : vector<2x8x8xf32>, vector<2x8x8xf32>, vector<2x8x8xf32> -> vector<2x8x8xf32>
    "tpu.trace_stop"() : () -> ()
    %cst_281 = arith.constant 0.353553385 : f32
    %717 = vector.broadcast %cst_281 : f32 to vector<2x8x8xf32>
    %718 = arith.mulf %716, %717 : vector<2x8x8xf32>
    %cst_282 = arith.constant dense<0xFF800000> : vector<2x8xf32>
    %719 = vector.multi_reduction <maximumf>, %718, %cst_282 [2] : vector<2x8x8xf32> to vector<2x8xf32>
    %720 = vector.shape_cast %719 : vector<2x8xf32> to vector<2x8x1xf32>
    %721 = vector.broadcast %720 : vector<2x8x1xf32> to vector<2x8x8xf32>
    %722 = arith.subf %718, %721 : vector<2x8x8xf32>
    %723 = math.exp %722 : vector<2x8x8xf32>
    %cst_283 = arith.constant dense<0.000000e+00> : vector<2x8xf32>
    %724 = vector.multi_reduction <add>, %723, %cst_283 [2] : vector<2x8x8xf32> to vector<2x8xf32>
    %725 = vector.shape_cast %724 : vector<2x8xf32> to vector<2x8x1xf32>
    %726 = vector.broadcast %725 : vector<2x8x1xf32> to vector<2x8x8xf32>
    %727 = arith.divf %723, %726 : vector<2x8x8xf32>
    "tpu.trace_start"() <{level = 10 : i32, message = "bqk,bkd->bqd"}> : () -> ()
    %cst_284 = arith.constant dense<0.000000e+00> : vector<2x8x8xf32>
    %728 = tpu.matmul %727, %715, %cst_284 {dimension_numbers = #tpu.dot_dimension_numbers<[2], [1], [1], [2], [0, 0, 0, 1, 1, 2], [0], [0]>} : vector<2x8x8xf32>, vector<2x8x8xf32>, vector<2x8x8xf32> -> vector<2x8x8xf32>
    "tpu.trace_stop"() : () -> ()
    %729 = vector.shape_cast %728 : vector<2x8x8xf32> to vector<16x8xf32>
    %730 = vector.extract_strided_slice %666 {offsets = [16, 0], sizes = [8, 32], strides = [1, 1]} : vector<32x32xf32> to vector<8x32xf32>
    %cst_285 = arith.constant dense<0.000000e+00> : vector<16x32xf32>
    %731 = tpu.matmul %729, %730, %cst_285 {dimension_numbers = #tpu.dot_dimension_numbers<[1], [0], [0], [1], [0, 0, 1, 1], [], []>} : vector<16x8xf32>, vector<8x32xf32>, vector<16x32xf32> -> vector<16x32xf32>
    %732 = arith.addf %712, %731 : vector<16x32xf32>
    %733 = vector.extract_strided_slice %669 {offsets = [0, 0, 24], sizes = [2, 8, 8], strides = [1, 1, 1]} : vector<2x8x32xf32> to vector<2x8x8xf32>
    %734 = vector.extract_strided_slice %670 {offsets = [0, 0, 24], sizes = [2, 8, 8], strides = [1, 1, 1]} : vector<2x8x32xf32> to vector<2x8x8xf32>
    %735 = vector.extract_strided_slice %671 {offsets = [0, 0, 24], sizes = [2, 8, 8], strides = [1, 1, 1]} : vector<2x8x32xf32> to vector<2x8x8xf32>
    "tpu.trace_start"() <{level = 10 : i32, message = "bqd,bkd->bqk"}> : () -> ()
    %cst_286 = arith.constant dense<0.000000e+00> : vector<2x8x8xf32>
    %736 = tpu.matmul %733, %734, %cst_286 {dimension_numbers = #tpu.dot_dimension_numbers<[2], [2], [1], [1], [0, 0, 0, 1, 1, 1], [0], [0]>} : vector<2x8x8xf32>, vector<2x8x8xf32>, vector<2x8x8xf32> -> vector<2x8x8xf32>
    "tpu.trace_stop"() : () -> ()
    %cst_287 = arith.constant 0.353553385 : f32
    %737 = vector.broadcast %cst_287 : f32 to vector<2x8x8xf32>
    %738 = arith.mulf %736, %737 : vector<2x8x8xf32>
    %cst_288 = arith.constant dense<0xFF800000> : vector<2x8xf32>
    %739 = vector.multi_reduction <maximumf>, %738, %cst_288 [2] : vector<2x8x8xf32> to vector<2x8xf32>
    %740 = vector.shape_cast %739 : vector<2x8xf32> to vector<2x8x1xf32>
    %741 = vector.broadcast %740 : vector<2x8x1xf32> to vector<2x8x8xf32>
    %742 = arith.subf %738, %741 : vector<2x8x8xf32>
    %743 = math.exp %742 : vector<2x8x8xf32>
    %cst_289 = arith.constant dense<0.000000e+00> : vector<2x8xf32>
    %744 = vector.multi_reduction <add>, %743, %cst_289 [2] : vector<2x8x8xf32> to vector<2x8xf32>
    %745 = vector.shape_cast %744 : vector<2x8xf32> to vector<2x8x1xf32>
    %746 = vector.broadcast %745 : vector<2x8x1xf32> to vector<2x8x8xf32>
    %747 = arith.divf %743, %746 : vector<2x8x8xf32>
    "tpu.trace_start"() <{level = 10 : i32, message = "bqk,bkd->bqd"}> : () -> ()
    %cst_290 = arith.constant dense<0.000000e+00> : vector<2x8x8xf32>
    %748 = tpu.matmul %747, %735, %cst_290 {dimension_numbers = #tpu.dot_dimension_numbers<[2], [1], [1], [2], [0, 0, 0, 1, 1, 2], [0], [0]>} : vector<2x8x8xf32>, vector<2x8x8xf32>, vector<2x8x8xf32> -> vector<2x8x8xf32>
    "tpu.trace_stop"() : () -> ()
    %749 = vector.shape_cast %748 : vector<2x8x8xf32> to vector<16x8xf32>
    %750 = vector.extract_strided_slice %666 {offsets = [24, 0], sizes = [8, 32], strides = [1, 1]} : vector<32x32xf32> to vector<8x32xf32>
    %cst_291 = arith.constant dense<0.000000e+00> : vector<16x32xf32>
    %751 = tpu.matmul %749, %750, %cst_291 {dimension_numbers = #tpu.dot_dimension_numbers<[1], [0], [0], [1], [0, 0, 1, 1], [], []>} : vector<16x8xf32>, vector<8x32xf32>, vector<16x32xf32> -> vector<16x32xf32>
    %752 = arith.addf %732, %751 : vector<16x32xf32>
    %753 = vector.broadcast %668 : vector<1x32xf32> to vector<16x32xf32>
    %754 = arith.addf %752, %753 : vector<16x32xf32>
    %755 = arith.addf %648, %754 : vector<16x32xf32>
    %756 = vector.extract_strided_slice %521 {offsets = [1, 0], sizes = [1, 32], strides = [1, 1]} : vector<3x32xf32> to vector<1x32xf32>
    %757 = vector.extract_strided_slice %523 {offsets = [1, 0], sizes = [1, 32], strides = [1, 1]} : vector<3x32xf32> to vector<1x32xf32>
    %cst_292 = arith.constant dense<0.000000e+00> : vector<16xf32>
    %758 = vector.multi_reduction <add>, %755, %cst_292 [1] : vector<16x32xf32> to vector<16xf32>
    %759 = vector.shape_cast %758 : vector<16xf32> to vector<16x1xf32>
    %cst_293 = arith.constant 3.200000e+01 : f32
    %760 = vector.broadcast %cst_293 : f32 to vector<16x1xf32>
    %761 = arith.divf %759, %760 : vector<16x1xf32>
    %762 = vector.broadcast %761 : vector<16x1xf32> to vector<16x32xf32>
    %763 = arith.subf %755, %762 : vector<16x32xf32>
    %764 = arith.mulf %763, %763 : vector<16x32xf32>
    %cst_294 = arith.constant dense<0.000000e+00> : vector<16xf32>
    %765 = vector.multi_reduction <add>, %764, %cst_294 [1] : vector<16x32xf32> to vector<16xf32>
    %766 = vector.shape_cast %765 : vector<16xf32> to vector<16x1xf32>
    %cst_295 = arith.constant 3.200000e+01 : f32
    %767 = vector.broadcast %cst_295 : f32 to vector<16x1xf32>
    %768 = arith.divf %766, %767 : vector<16x1xf32>
    %769 = vector.broadcast %761 : vector<16x1xf32> to vector<16x32xf32>
    %770 = arith.subf %755, %769 : vector<16x32xf32>
    %cst_296 = arith.constant 9.99999974E-6 : f32
    %771 = vector.broadcast %cst_296 : f32 to vector<16x1xf32>
    %772 = arith.addf %768, %771 : vector<16x1xf32>
    %773 = math.rsqrt %772 : vector<16x1xf32>
    %774 = vector.broadcast %773 : vector<16x1xf32> to vector<16x32xf32>
    %775 = arith.mulf %770, %774 : vector<16x32xf32>
    %776 = vector.broadcast %756 : vector<1x32xf32> to vector<16x32xf32>
    %777 = arith.mulf %775, %776 : vector<16x32xf32>
    %778 = vector.broadcast %757 : vector<1x32xf32> to vector<16x32xf32>
    %779 = arith.addf %777, %778 : vector<16x32xf32>
    %c1_297 = arith.constant 1 : index
    %c0_298 = arith.constant 0 : index
    %c0_299 = arith.constant 0 : index
    %780 = vector.load %arg20[%c1_297, %c0_298, %c0_299] : memref<2x32x64xf32, #tpu.memory_space<vmem>>, vector<1x32x64xf32>
    %781 = vector.shape_cast %780 : vector<1x32x64xf32> to vector<32x64xf32>
    %cst_300 = arith.constant dense<0.000000e+00> : vector<16x64xf32>
    %782 = tpu.matmul %779, %781, %cst_300 {dimension_numbers = #tpu.dot_dimension_numbers<[1], [0], [0], [1], [0, 0, 1, 1], [], []>} : vector<16x32xf32>, vector<32x64xf32>, vector<16x64xf32> -> vector<16x64xf32>
    %c1_301 = arith.constant 1 : index
    %c0_302 = arith.constant 0 : index
    %c0_303 = arith.constant 0 : index
    %783 = vector.load %arg21[%c1_301, %c0_302, %c0_303] : memref<2x1x64xf32, #tpu.memory_space<vmem>>, vector<1x1x64xf32>
    %784 = vector.shape_cast %783 : vector<1x1x64xf32> to vector<1x64xf32>
    %785 = vector.broadcast %784 : vector<1x64xf32> to vector<16x64xf32>
    %786 = arith.addf %782, %785 : vector<16x64xf32>
    %787 = arith.mulf %786, %786 : vector<16x64xf32>
    %788 = arith.mulf %786, %787 : vector<16x64xf32>
    %cst_304 = arith.constant 4.471500e-02 : f32
    %789 = vector.broadcast %cst_304 : f32 to vector<16x64xf32>
    %790 = arith.mulf %789, %788 : vector<16x64xf32>
    %791 = arith.addf %786, %790 : vector<16x64xf32>
    %cst_305 = arith.constant 0.797884583 : f32
    %792 = vector.broadcast %cst_305 : f32 to vector<16x64xf32>
    %793 = arith.mulf %792, %791 : vector<16x64xf32>
    %794 = math.tanh %793 : vector<16x64xf32>
    %cst_306 = arith.constant 1.000000e+00 : f32
    %795 = vector.broadcast %cst_306 : f32 to vector<16x64xf32>
    %796 = arith.addf %795, %794 : vector<16x64xf32>
    %cst_307 = arith.constant 5.000000e-01 : f32
    %797 = vector.broadcast %cst_307 : f32 to vector<16x64xf32>
    %798 = arith.mulf %797, %796 : vector<16x64xf32>
    %799 = arith.mulf %786, %798 : vector<16x64xf32>
    %c1_308 = arith.constant 1 : index
    %c0_309 = arith.constant 0 : index
    %c0_310 = arith.constant 0 : index
    %800 = vector.load %arg22[%c1_308, %c0_309, %c0_310] : memref<2x64x32xf32, #tpu.memory_space<vmem>>, vector<1x64x32xf32>
    %801 = vector.shape_cast %800 : vector<1x64x32xf32> to vector<64x32xf32>
    %cst_311 = arith.constant dense<0.000000e+00> : vector<16x32xf32>
    %802 = tpu.matmul %799, %801, %cst_311 {dimension_numbers = #tpu.dot_dimension_numbers<[1], [0], [0], [1], [0, 0, 1, 1], [], []>} : vector<16x64xf32>, vector<64x32xf32>, vector<16x32xf32> -> vector<16x32xf32>
    %c1_312 = arith.constant 1 : index
    %c0_313 = arith.constant 0 : index
    %c0_314 = arith.constant 0 : index
    %803 = vector.load %arg23[%c1_312, %c0_313, %c0_314] : memref<2x1x32xf32, #tpu.memory_space<vmem>>, vector<1x1x32xf32>
    %804 = vector.shape_cast %803 : vector<1x1x32xf32> to vector<1x32xf32>
    %805 = vector.broadcast %804 : vector<1x32xf32> to vector<16x32xf32>
    %806 = arith.addf %802, %805 : vector<16x32xf32>
    %807 = arith.addf %779, %806 : vector<16x32xf32>
    %808 = vector.extract_strided_slice %521 {offsets = [2, 0], sizes = [1, 32], strides = [1, 1]} : vector<3x32xf32> to vector<1x32xf32>
    %809 = vector.extract_strided_slice %523 {offsets = [2, 0], sizes = [1, 32], strides = [1, 1]} : vector<3x32xf32> to vector<1x32xf32>
    %cst_315 = arith.constant dense<0.000000e+00> : vector<16xf32>
    %810 = vector.multi_reduction <add>, %807, %cst_315 [1] : vector<16x32xf32> to vector<16xf32>
    %811 = vector.shape_cast %810 : vector<16xf32> to vector<16x1xf32>
    %cst_316 = arith.constant 3.200000e+01 : f32
    %812 = vector.broadcast %cst_316 : f32 to vector<16x1xf32>
    %813 = arith.divf %811, %812 : vector<16x1xf32>
    %814 = vector.broadcast %813 : vector<16x1xf32> to vector<16x32xf32>
    %815 = arith.subf %807, %814 : vector<16x32xf32>
    %816 = arith.mulf %815, %815 : vector<16x32xf32>
    %cst_317 = arith.constant dense<0.000000e+00> : vector<16xf32>
    %817 = vector.multi_reduction <add>, %816, %cst_317 [1] : vector<16x32xf32> to vector<16xf32>
    %818 = vector.shape_cast %817 : vector<16xf32> to vector<16x1xf32>
    %cst_318 = arith.constant 3.200000e+01 : f32
    %819 = vector.broadcast %cst_318 : f32 to vector<16x1xf32>
    %820 = arith.divf %818, %819 : vector<16x1xf32>
    %821 = vector.broadcast %813 : vector<16x1xf32> to vector<16x32xf32>
    %822 = arith.subf %807, %821 : vector<16x32xf32>
    %cst_319 = arith.constant 9.99999974E-6 : f32
    %823 = vector.broadcast %cst_319 : f32 to vector<16x1xf32>
    %824 = arith.addf %820, %823 : vector<16x1xf32>
    %825 = math.rsqrt %824 : vector<16x1xf32>
    %826 = vector.broadcast %825 : vector<16x1xf32> to vector<16x32xf32>
    %827 = arith.mulf %822, %826 : vector<16x32xf32>
    %828 = vector.broadcast %808 : vector<1x32xf32> to vector<16x32xf32>
    %829 = arith.mulf %827, %828 : vector<16x32xf32>
    %830 = vector.broadcast %809 : vector<1x32xf32> to vector<16x32xf32>
    %831 = arith.addf %829, %830 : vector<16x32xf32>
    %cst_320 = arith.constant dense<0.000000e+00> : vector<16x128xf32>
    %832 = tpu.matmul %831, %10, %cst_320 {dimension_numbers = #tpu.dot_dimension_numbers<[1], [0], [0], [1], [0, 0, 1, 1], [], []>} : vector<16x32xf32>, vector<32x128xf32>, vector<16x128xf32> -> vector<16x128xf32>
    %833 = vector.broadcast %11 : vector<1x128xf32> to vector<16x128xf32>
    %834 = arith.addf %832, %833 : vector<16x128xf32>
    %835 = vector.broadcast %6 : vector<1x128xf32> to vector<16x128xf32>
    %836 = arith.addf %834, %835 : vector<16x128xf32>
    %cst_321 = arith.constant dense<0xFF800000> : vector<16xf32>
    %837 = vector.multi_reduction <maximumf>, %836, %cst_321 [1] : vector<16x128xf32> to vector<16xf32>
    %838 = vector.shape_cast %837 : vector<16xf32> to vector<16x1xf32>
    %839 = vector.broadcast %838 : vector<16x1xf32> to vector<16x128xf32>
    %840 = arith.subf %836, %839 : vector<16x128xf32>
    %841 = math.exp %840 : vector<16x128xf32>
    %842 = vector.broadcast %838 : vector<16x1xf32> to vector<16x128xf32>
    %843 = arith.subf %836, %842 : vector<16x128xf32>
    %cst_322 = arith.constant dense<0.000000e+00> : vector<16xf32>
    %844 = vector.multi_reduction <add>, %841, %cst_322 [1] : vector<16x128xf32> to vector<16xf32>
    %845 = vector.shape_cast %844 : vector<16xf32> to vector<16x1xf32>
    %846 = math.log %845 : vector<16x1xf32>
    %847 = vector.broadcast %846 : vector<16x1xf32> to vector<16x128xf32>
    %848 = arith.subf %843, %847 : vector<16x128xf32>
    %849 = arith.mulf %848, %7 : vector<16x128xf32>
    %850 = vector.shape_cast %849 : vector<16x128xf32> to vector<1x16x128xf32>
    %cst_323 = arith.constant dense<0.000000e+00> : vector<1xf32>
    %851 = vector.multi_reduction <add>, %850, %cst_323 [1, 2] : vector<1x16x128xf32> to vector<1xf32>
    %852 = vector.shape_cast %851 : vector<1xf32> to vector<1x1x1xf32>
    %853 = vector.extract %852[0, 0, 0] : f32 from vector<1x1x1xf32>
    %854 = vector.broadcast %853 : f32 to vector<1x1xf32>
    %cst_324 = arith.constant 0.000000e+00 : f32
    %855 = vector.broadcast %cst_324 : f32 to vector<1x1xf32>
    %856 = arith.subf %855, %854 : vector<1x1xf32>
    %c0_325 = arith.constant 0 : index
    %c0_326 = arith.constant 0 : index
    %857 = vector.load %arg28[%c0_325, %c0_326] : memref<16x128xf32, #tpu.memory_space<vmem>>, vector<16x128xf32>
    tpu.vector_store %arg28[%c0_325, %c0_326], %848 {strides = array<i32>} : memref<16x128xf32, #tpu.memory_space<vmem>>, vector<16x128xf32>,
    %858 = vector.shape_cast %856 : vector<1x1xf32> to vector<1x1xf32>
    %859 = vector.broadcast %858 : vector<1x1xf32> to vector<1x128xf32>
    %c8 = arith.constant 8 : index
    %c0_327 = arith.constant 0 : index
    %860 = vector.load %arg29[%c8, %c0_327] : memref<16x128xf32, #tpu.memory_space<vmem>>, vector<1x128xf32>
    tpu.vector_store %arg29[%c8, %c0_327], %859 {strides = array<i32>} : memref<16x128xf32, #tpu.memory_space<vmem>>, vector<1x128xf32>,
    return
  }
}

</mosaic_0001>

<llo_original>
// kernel: tpu_custom_call.1
$region0: #{tpu_custom_call.1}
  #allocation0 [shape = 'u32[]', space=smem, size = 0x4, offset = 0x4, fixed_abs, tag = 'smem constant byte address 0x4 - core index']
  #allocation1 [shape = 'u32[72,128]{1,0:T(1,128)}', space=vmem, size = 0x9000, scoped, tag = 'internal scratch']
  %s0 = inlined_call_operand.smem [shape: u32[30], index: -1, kind: input, shape index: {}]
  %s1 = sld [smem:[%s0]]
  %s2 = scalar_lea.smem %s0, 1
  %s3 = sld [smem:[%s2]]
  %s4 = scalar_lea.smem %s0, 2
  %s5 = sld [smem:[%s4]]
  %s6 = scalar_lea.smem %s0, 3
  %s7 = sld [smem:[%s6]]
  %s8 = scalar_lea.smem %s0, 4
  %s9 = sld [smem:[%s8]]
  %s10 = scalar_lea.smem %s0, 5
  %s11 = sld [smem:[%s10]]
  %s12 = scalar_lea.smem %s0, 6
  %s13 = sld [smem:[%s12]]
  %s14 = scalar_lea.smem %s0, 7
  %s15 = sld [smem:[%s14]]
  %s16 = scalar_lea.smem %s0, 8
  %s17 = sld [smem:[%s16]]
  %s18 = scalar_lea.smem %s0, 9
  %s19 = sld [smem:[%s18]]
  %s20 = scalar_lea.smem %s0, 10
  %s21 = sld [smem:[%s20]]
  %s22 = scalar_lea.smem %s0, 11
  %s23 = sld [smem:[%s22]]
  %s24 = scalar_lea.smem %s0, 12
  %s25 = sld [smem:[%s24]]
  %s26 = scalar_lea.smem %s0, 13
  %s27 = sld [smem:[%s26]]
  %s28 = scalar_lea.smem %s0, 14
  %s29 = sld [smem:[%s28]]
  %s30 = scalar_lea.smem %s0, 15
  %s31 = sld [smem:[%s30]]
  %s32 = scalar_lea.smem %s0, 16
  %s33 = sld [smem:[%s32]]
  %s34 = scalar_lea.smem %s0, 17
  %s35 = sld [smem:[%s34]]
  %s36 = scalar_lea.smem %s0, 18
  %s37 = sld [smem:[%s36]]
  %s38 = scalar_lea.smem %s0, 19
  %s39 = sld [smem:[%s38]]
  %s40 = scalar_lea.smem %s0, 20
  %s41 = sld [smem:[%s40]]
  %s42 = scalar_lea.smem %s0, 21
  %s43 = sld [smem:[%s42]]
  %s44 = scalar_lea.smem %s0, 22
  %s45 = sld [smem:[%s44]]
  %s46 = scalar_lea.smem %s0, 23
  %s47 = sld [smem:[%s46]]
  %s48 = scalar_lea.smem %s0, 24
  %s49 = sld [smem:[%s48]]
  %s50 = scalar_lea.smem %s0, 25
  %s51 = sld [smem:[%s50]]
  %s52 = scalar_lea.smem %s0, 26
  %s53 = sld [smem:[%s52]]
  %s54 = scalar_lea.smem %s0, 27
  %s55 = sld [smem:[%s54]]
  %s56 = scalar_lea.smem %s0, 28
  %s57 = sld [smem:[%s56]]
  %s58 = scalar_lea.smem %s0, 29
  %s59 = sld [smem:[%s58]]
  %60 = xla_tuple %s57, %s59
  %s61 = sld [smem:[#allocation0]]
  $region170: #{tpu_custom_call.1} parent=0
    _
  %s63 = ssub.s32 1, %s61
  %s64 = scalar_select 0, %s63, %s61
  $region1: #{tpu_custom_call.1} parent=0
    #allocation2 [shape = 'u8[8192]{0}', space=vmem, size = 0x2000, scoped, tag = 'input window, operand 0, single buffered']
    #allocation3 [shape = 's32[1]{0}', space=sflag, size = 0x4, scoped, tag = 'scoped memory for tpu_custom_call.1']
    #allocation4 [shape = 's32[1]{0}', space=sflag, size = 0x4, scoped, tag = 'scoped memory for tpu_custom_call.1']
    #allocation5 [shape = 'u8[8192]{0}', space=vmem, size = 0x2000, scoped, tag = 'input window, operand 1, single buffered']
    #allocation6 [shape = 's32[1]{0}', space=sflag, size = 0x4, scoped, tag = 'scoped memory for tpu_custom_call.1']
    #allocation7 [shape = 'u8[8192]{0}', space=vmem, size = 0x2000, scoped, tag = 'input window, operand 2, single buffered']
    #allocation8 [shape = 'u8[512]{0}', space=vmem, size = 0x400, scoped, tag = 'input window, operand 3, single buffered']
    #allocation9 [shape = 's32[1]{0}', space=sflag, size = 0x4, scoped, tag = 'scoped memory for tpu_custom_call.1']
    #allocation10 [shape = 'u8[512]{0}', space=vmem, size = 0x400, scoped, tag = 'input window, operand 7, single buffered']
    #allocation11 [shape = 'u8[1024]{0}', space=vmem, size = 0x400, scoped, tag = 'input window, operand 9, single buffered']
    #allocation12 [shape = 's32[1]{0}', space=sflag, size = 0x4, scoped, tag = 'scoped memory for tpu_custom_call.1']
    #allocation13 [shape = 'u8[1024]{0}', space=vmem, size = 0x400, scoped, tag = 'input window, operand 11, single buffered']
    #allocation14 [shape = 'u8[1024]{0}', space=vmem, size = 0x400, scoped, tag = 'input window, operand 13, single buffered']
    #allocation15 [shape = 's32[1]{0}', space=sflag, size = 0x4, scoped, tag = 'scoped memory for tpu_custom_call.1']
    #allocation16 [shape = 'u8[32768]{0}', space=vmem, size = 0x8000, scoped, tag = 'input window, operand 16, single buffered']
    #allocation17 [shape = 'u8[32768]{0}', space=vmem, size = 0x8000, scoped, tag = 'input window, operand 20, single buffered']
    #allocation18 [shape = 's32[1]{0}', space=sflag, size = 0x4, scoped, tag = 'scoped memory for tpu_custom_call.1']
    #allocation19 [shape = 'u8[8192]{0}', space=vmem, size = 0x2000, scoped, tag = 'output window, operand 0, single buffered']
    #allocation20 [shape = 'u8[8192]{0}', space=vmem, size = 0x2000, scoped, tag = 'output window, operand 1, single buffered']
    #allocation21 [shape = 's32[1]{0}', space=sflag, size = 0x4, scoped, tag = 'scoped memory for tpu_custom_call.1']
    %65 = vsyncpa [#allocation3], 0
    %66 = vsyncpa [#allocation6], 0
    %67 = vsyncpa [#allocation9], 0
    %68 = vsyncpa [#allocation12], 0
    %69 = vsyncpa [#allocation15], 0
    %70 = vsyncpa [#allocation18], 0
    %71 = vsyncpa [#allocation4], 0
    %72 = vsyncpa [#allocation21], 0
    // Predicated region
    $region2: #{tpu_custom_call.1} parent=1 // pred_check
      _
    $region3: #{tpu_custom_call.1} parent=1 // pred_check_branch
      %74 = sbr.rel (0) target = $region5
    $region4: #{tpu_custom_call.1} parent=1 // pred_region
      %76 = vsyncadd [#allocation3], 0
      %s77 = sshll.u32 %s1, 4
      %s78 = int_to_ptr.hbm [resolvable:$true] %s77
      %s79 = sshll.u32 [#allocation2], 4
      %s80 = int_to_ptr.vmem [resolvable:$true] %s79
      %85 = dma.hbm_to_vmem [thread:$0]  %s78, 256, %s80, [#allocation3], 128, 128, 8
    $region5: #{tpu_custom_call.1} parent=1 // pred_fallthru
      _
    // Predicated region
    $region6: #{tpu_custom_call.1} parent=1 // pred_check
      _
    $region7: #{tpu_custom_call.1} parent=1 // pred_check_branch
      %87 = sbr.rel (0) target = $region9
    $region8: #{tpu_custom_call.1} parent=1 // pred_region
      %89 = vsyncadd [#allocation6], 0
      %s90 = sshll.u32 %s3, 4
      %s91 = int_to_ptr.hbm [resolvable:$true] %s90
      %s92 = sshll.u32 [#allocation5], 4
      %s93 = int_to_ptr.vmem [resolvable:$true] %s92
      %98 = dma.hbm_to_vmem [thread:$0]  %s91, 256, %s93, [#allocation6], 128, 128, 8
    $region9: #{tpu_custom_call.1} parent=1 // pred_fallthru
      _
    // Predicated region
    $region10: #{tpu_custom_call.1} parent=1 // pred_check
      _
    $region11: #{tpu_custom_call.1} parent=1 // pred_check_branch
      %100 = sbr.rel (0) target = $region13
    $region12: #{tpu_custom_call.1} parent=1 // pred_region
      %102 = vsyncadd [#allocation6], 0
      %s103 = sshll.u32 %s5, 4
      %s104 = int_to_ptr.hbm [resolvable:$true] %s103
      %s105 = sshll.u32 [#allocation7], 4
      %s106 = int_to_ptr.vmem [resolvable:$true] %s105
      %111 = dma.hbm_to_vmem [thread:$0]  %s104, 256, %s106, [#allocation6], 128, 128, 8
    $region13: #{tpu_custom_call.1} parent=1 // pred_fallthru
      _
    // Predicated region
    $region14: #{tpu_custom_call.1} parent=1 // pred_check
      _
    $region15: #{tpu_custom_call.1} parent=1 // pred_check_branch
      %113 = sbr.rel (0) target = $region17
    $region16: #{tpu_custom_call.1} parent=1 // pred_region
      %115 = vsyncadd [#allocation9], 0
      %s117 = sshll.u32 %s7, 4
      %s118 = int_to_ptr.hbm [resolvable:$true] %s117
      %s119 = sshll.u32 [#allocation8], 4
      %s120 = int_to_ptr.vmem [resolvable:$true] %s119
      %122 = dma.hbm_to_vmem [thread:$0]  %s118, 16, %s120, [#allocation9]
    $region17: #{tpu_custom_call.1} parent=1 // pred_fallthru
      _
    // Predicated region
    $region18: #{tpu_custom_call.1} parent=1 // pred_check
      _
    $region19: #{tpu_custom_call.1} parent=1 // pred_check_branch
      %124 = sbr.rel (0) target = $region21
    $region20: #{tpu_custom_call.1} parent=1 // pred_region
      _
    $region21: #{tpu_custom_call.1} parent=1 // pred_fallthru
      _
    // Predicated region
    $region22: #{tpu_custom_call.1} parent=1 // pred_check
      _
    $region23: #{tpu_custom_call.1} parent=1 // pred_check_branch
      %126 = sbr.rel (0) target = $region25
    $region24: #{tpu_custom_call.1} parent=1 // pred_region
      _
    $region25: #{tpu_custom_call.1} parent=1 // pred_fallthru
      _
    // Predicated region
    $region26: #{tpu_custom_call.1} parent=1 // pred_check
      _
    $region27: #{tpu_custom_call.1} parent=1 // pred_check_branch
      %128 = sbr.rel (0) target = $region29
    $region28: #{tpu_custom_call.1} parent=1 // pred_region
      _
    $region29: #{tpu_custom_call.1} parent=1 // pred_fallthru
      _
    // Predicated region
    $region30: #{tpu_custom_call.1} parent=1 // pred_check
      _
    $region31: #{tpu_custom_call.1} parent=1 // pred_check_branch
      %130 = sbr.rel (0) target = $region33
    $region32: #{tpu_custom_call.1} parent=1 // pred_region
      %132 = vsyncadd [#allocation9], 0
      %s134 = sshll.u32 %s15, 4
      %s135 = int_to_ptr.hbm [resolvable:$true] %s134
      %s136 = sshll.u32 [#allocation10], 4
      %s137 = int_to_ptr.vmem [resolvable:$true] %s136
      %139 = dma.hbm_to_vmem [thread:$0]  %s135, 16, %s137, [#allocation9]
    $region33: #{tpu_custom_call.1} parent=1 // pred_fallthru
      _
    // Predicated region
    $region34: #{tpu_custom_call.1} parent=1 // pred_check
      _
    $region35: #{tpu_custom_call.1} parent=1 // pred_check_branch
      %141 = sbr.rel (0) target = $region37
    $region36: #{tpu_custom_call.1} parent=1 // pred_region
      _
    $region37: #{tpu_custom_call.1} parent=1 // pred_fallthru
      _
    // Predicated region
    $region38: #{tpu_custom_call.1} parent=1 // pred_check
      _
    $region39: #{tpu_custom_call.1} parent=1 // pred_check_branch
      %143 = sbr.rel (0) target = $region41
    $region40: #{tpu_custom_call.1} parent=1 // pred_region
      %145 = vsyncadd [#allocation12], 0
      %s146 = sshll.u32 %s19, 4
      %s147 = int_to_ptr.hbm [resolvable:$true] %s146
      %s148 = sshll.u32 [#allocation11], 4
      %s149 = int_to_ptr.vmem [resolvable:$true] %s148
      %154 = dma.hbm_to_vmem [thread:$0]  %s147, 32, %s149, [#allocation12], 16, 16, 1
    $region41: #{tpu_custom_call.1} parent=1 // pred_fallthru
      _
    // Predicated region
    $region42: #{tpu_custom_call.1} parent=1 // pred_check
      _
    $region43: #{tpu_custom_call.1} parent=1 // pred_check_branch
      %156 = sbr.rel (0) target = $region45
    $region44: #{tpu_custom_call.1} parent=1 // pred_region
      _
    $region45: #{tpu_custom_call.1} parent=1 // pred_fallthru
      _
    // Predicated region
    $region46: #{tpu_custom_call.1} parent=1 // pred_check
      _
    $region47: #{tpu_custom_call.1} parent=1 // pred_check_branch
      %158 = sbr.rel (0) target = $region49
    $region48: #{tpu_custom_call.1} parent=1 // pred_region
      %160 = vsyncadd [#allocation12], 0
      %s161 = sshll.u32 %s23, 4
      %s162 = int_to_ptr.hbm [resolvable:$true] %s161
      %s163 = sshll.u32 [#allocation13], 4
      %s164 = int_to_ptr.vmem [resolvable:$true] %s163
      %169 = dma.hbm_to_vmem [thread:$0]  %s162, 32, %s164, [#allocation12], 16, 16, 1
    $region49: #{tpu_custom_call.1} parent=1 // pred_fallthru
      _
    // Predicated region
    $region50: #{tpu_custom_call.1} parent=1 // pred_check
      _
    $region51: #{tpu_custom_call.1} parent=1 // pred_check_branch
      %171 = sbr.rel (0) target = $region53
    $region52: #{tpu_custom_call.1} parent=1 // pred_region
      _
    $region53: #{tpu_custom_call.1} parent=1 // pred_fallthru
      _
    // Predicated region
    $region54: #{tpu_custom_call.1} parent=1 // pred_check
      _
    $region55: #{tpu_custom_call.1} parent=1 // pred_check_branch
      %173 = sbr.rel (0) target = $region57
    $region56: #{tpu_custom_call.1} parent=1 // pred_region
      %175 = vsyncadd [#allocation15], 0
      %s176 = sshll.u32 %s27, 4
      %s177 = int_to_ptr.hbm [resolvable:$true] %s176
      %s178 = sshll.u32 [#allocation14], 4
      %s179 = int_to_ptr.vmem [resolvable:$true] %s178
      %184 = dma.hbm_to_vmem [thread:$0]  %s177, 32, %s179, [#allocation15], 16, 16, 1
    $region57: #{tpu_custom_call.1} parent=1 // pred_fallthru
      _
    // Predicated region
    $region58: #{tpu_custom_call.1} parent=1 // pred_check
      _
    $region59: #{tpu_custom_call.1} parent=1 // pred_check_branch
      %186 = sbr.rel (0) target = $region61
    $region60: #{tpu_custom_call.1} parent=1 // pred_region
      _
    $region61: #{tpu_custom_call.1} parent=1 // pred_fallthru
      _
    // Predicated region
    $region62: #{tpu_custom_call.1} parent=1 // pred_check
      _
    $region63: #{tpu_custom_call.1} parent=1 // pred_check_branch
      %188 = sbr.rel (0) target = $region65
    $region64: #{tpu_custom_call.1} parent=1 // pred_region
      _
    $region65: #{tpu_custom_call.1} parent=1 // pred_fallthru
      _
    // Predicated region
    $region66: #{tpu_custom_call.1} parent=1 // pred_check
      _
    $region67: #{tpu_custom_call.1} parent=1 // pred_check_branch
      %190 = sbr.rel (0) target = $region69
    $region68: #{tpu_custom_call.1} parent=1 // pred_region
      %192 = vsyncadd [#allocation15], 0
      %s193 = sshll.u32 %s33, 4
      %s194 = int_to_ptr.hbm [resolvable:$true] %s193
      %s195 = sshll.u32 [#allocation16], 4
      %s196 = int_to_ptr.vmem [resolvable:$true] %s195
      %201 = dma.hbm_to_vmem [thread:$0]  %s194, 1024, %s196, [#allocation15], 128, 128, 8
    $region69: #{tpu_custom_call.1} parent=1 // pred_fallthru
      _
    // Predicated region
    $region70: #{tpu_custom_call.1} parent=1 // pred_check
      _
    $region71: #{tpu_custom_call.1} parent=1 // pred_check_branch
      %203 = sbr.rel (0) target = $region73
    $region72: #{tpu_custom_call.1} parent=1 // pred_region
      _
    $region73: #{tpu_custom_call.1} parent=1 // pred_fallthru
      _
    // Predicated region
    $region74: #{tpu_custom_call.1} parent=1 // pred_check
      _
    $region75: #{tpu_custom_call.1} parent=1 // pred_check_branch
      %205 = sbr.rel (0) target = $region77
    $region76: #{tpu_custom_call.1} parent=1 // pred_region
      _
    $region77: #{tpu_custom_call.1} parent=1 // pred_fallthru
      _
    // Predicated region
    $region78: #{tpu_custom_call.1} parent=1 // pred_check
      _
    $region79: #{tpu_custom_call.1} parent=1 // pred_check_branch
      %207 = sbr.rel (0) target = $region81
    $region80: #{tpu_custom_call.1} parent=1 // pred_region
      _
    $region81: #{tpu_custom_call.1} parent=1 // pred_fallthru
      _
    // Predicated region
    $region82: #{tpu_custom_call.1} parent=1 // pred_check
      _
    $region83: #{tpu_custom_call.1} parent=1 // pred_check_branch
      %209 = sbr.rel (0) target = $region85
    $region84: #{tpu_custom_call.1} parent=1 // pred_region
      %211 = vsyncadd [#allocation18], 0
      %s212 = sshll.u32 %s41, 4
      %s213 = int_to_ptr.hbm [resolvable:$true] %s212
      %s214 = sshll.u32 [#allocation17], 4
      %s215 = int_to_ptr.vmem [resolvable:$true] %s214
      %220 = dma.hbm_to_vmem [thread:$0]  %s213, 1024, %s215, [#allocation18], 128, 128, 8
    $region85: #{tpu_custom_call.1} parent=1 // pred_fallthru
      _
    // Predicated region
    $region86: #{tpu_custom_call.1} parent=1 // pred_check
      _
    $region87: #{tpu_custom_call.1} parent=1 // pred_check_branch
      %222 = sbr.rel (0) target = $region89
    $region88: #{tpu_custom_call.1} parent=1 // pred_region
      _
    $region89: #{tpu_custom_call.1} parent=1 // pred_fallthru
      _
    // Predicated region
    $region90: #{tpu_custom_call.1} parent=1 // pred_check
      _
    $region91: #{tpu_custom_call.1} parent=1 // pred_check_branch
      %224 = sbr.rel (0) target = $region93
    $region92: #{tpu_custom_call.1} parent=1 // pred_region
      _
    $region93: #{tpu_custom_call.1} parent=1 // pred_fallthru
      _
    // Predicated region
    $region94: #{tpu_custom_call.1} parent=1 // pred_check
      _
    $region95: #{tpu_custom_call.1} parent=1 // pred_check_branch
      %226 = sbr.rel (0) target = $region97
    $region96: #{tpu_custom_call.1} parent=1 // pred_region
      _
    $region97: #{tpu_custom_call.1} parent=1 // pred_fallthru
      _
    // Predicated region
    $region98: #{tpu_custom_call.1} parent=1 // pred_check
      _
    $region99: #{tpu_custom_call.1} parent=1 // pred_check_branch
      %228 = sbr.rel (0) target = $region101
    $region100: #{tpu_custom_call.1} parent=1 // pred_region
      _
    $region101: #{tpu_custom_call.1} parent=1 // pred_fallthru
      _
    // Predicated region
    $region102: #{tpu_custom_call.1} parent=1 // pred_check
      _
    $region103: #{tpu_custom_call.1} parent=1 // pred_check_branch
      %230 = sbr.rel (0) target = $region105
    $region104: #{tpu_custom_call.1} parent=1 // pred_region
      _
    $region105: #{tpu_custom_call.1} parent=1 // pred_fallthru
      _
    // Predicated region
    $region106: #{tpu_custom_call.1} parent=1 // pred_check
      _
    $region107: #{tpu_custom_call.1} parent=1 // pred_check_branch
      %232 = sbr.rel (0) target = $region109
    $region108: #{tpu_custom_call.1} parent=1 // pred_region
      _
    $region109: #{tpu_custom_call.1} parent=1 // pred_fallthru
      _
    // Predicated region
    $region110: #{tpu_custom_call.1} parent=1 // pred_check
      _
    $region111: #{tpu_custom_call.1} parent=1 // pred_check_branch
      %234 = sbr.rel (0) target = $region113
    $region112: #{tpu_custom_call.1} parent=1 // pred_region
      _
    $region113: #{tpu_custom_call.1} parent=1 // pred_fallthru
      _
    // Predicated region
    $region114: #{tpu_custom_call.1} parent=1 // pred_check
      _
    $region115: #{tpu_custom_call.1} parent=1 // pred_check_branch
      %236 = sbr.rel (0) target = $region117
    $region116: #{tpu_custom_call.1} parent=1 // pred_region
      %238 = dma.done [#allocation3], 256
    $region117: #{tpu_custom_call.1} parent=1 // pred_fallthru
      _
    // Predicated region
    $region118: #{tpu_custom_call.1} parent=1 // pred_check
      _
    $region119: #{tpu_custom_call.1} parent=1 // pred_check_branch
      %240 = sbr.rel (0) target = $region121
    $region120: #{tpu_custom_call.1} parent=1 // pred_region
      %242 = dma.done [#allocation6], 256
    $region121: #{tpu_custom_call.1} parent=1 // pred_fallthru
      _
    // Predicated region
    $region122: #{tpu_custom_call.1} parent=1 // pred_check
      _
    $region123: #{tpu_custom_call.1} parent=1 // pred_check_branch
      %244 = sbr.rel (0) target = $region125
    $region124: #{tpu_custom_call.1} parent=1 // pred_region
      %246 = dma.done [#allocation6], 256
    $region125: #{tpu_custom_call.1} parent=1 // pred_fallthru
      _
    // Predicated region
    $region126: #{tpu_custom_call.1} parent=1 // pred_check
      _
    $region127: #{tpu_custom_call.1} parent=1 // pred_check_branch
      %248 = sbr.rel (0) target = $region129
    $region128: #{tpu_custom_call.1} parent=1 // pred_region
      %250 = dma.done [#allocation9], 16
    $region129: #{tpu_custom_call.1} parent=1 // pred_fallthru
      _
    // Predicated region
    $region130: #{tpu_custom_call.1} parent=1 // pred_check
      _
    $region131: #{tpu_custom_call.1} parent=1 // pred_check_branch
      %252 = sbr.rel (0) target = $region133
    $region132: #{tpu_custom_call.1} parent=1 // pred_region
      %254 = dma.done [#allocation9], 16
    $region133: #{tpu_custom_call.1} parent=1 // pred_fallthru
      _
    // Predicated region
    $region134: #{tpu_custom_call.1} parent=1 // pred_check
      _
    $region135: #{tpu_custom_call.1} parent=1 // pred_check_branch
      %256 = sbr.rel (0) target = $region137
    $region136: #{tpu_custom_call.1} parent=1 // pred_region
      %258 = dma.done [#allocation12], 32
    $region137: #{tpu_custom_call.1} parent=1 // pred_fallthru
      _
    // Predicated region
    $region138: #{tpu_custom_call.1} parent=1 // pred_check
      _
    $region139: #{tpu_custom_call.1} parent=1 // pred_check_branch
      %260 = sbr.rel (0) target = $region141
    $region140: #{tpu_custom_call.1} parent=1 // pred_region
      %262 = dma.done [#allocation12], 32
    $region141: #{tpu_custom_call.1} parent=1 // pred_fallthru
      _
    // Predicated region
    $region142: #{tpu_custom_call.1} parent=1 // pred_check
      _
    $region143: #{tpu_custom_call.1} parent=1 // pred_check_branch
      %264 = sbr.rel (0) target = $region145
    $region144: #{tpu_custom_call.1} parent=1 // pred_region
      %266 = dma.done [#allocation15], 32
    $region145: #{tpu_custom_call.1} parent=1 // pred_fallthru
      _
    // Predicated region
    $region146: #{tpu_custom_call.1} parent=1 // pred_check
      _
    $region147: #{tpu_custom_call.1} parent=1 // pred_check_branch
      %268 = sbr.rel (0) target = $region149
    $region148: #{tpu_custom_call.1} parent=1 // pred_region
      %270 = dma.done [#allocation15], 1024
    $region149: #{tpu_custom_call.1} parent=1 // pred_fallthru
      _
    // Predicated region
    $region150: #{tpu_custom_call.1} parent=1 // pred_check
      _
    $region151: #{tpu_custom_call.1} parent=1 // pred_check_branch
      %272 = sbr.rel (0) target = $region153
    $region152: #{tpu_custom_call.1} parent=1 // pred_region
      %274 = dma.done [#allocation18], 1024
    $region153: #{tpu_custom_call.1} parent=1 // pred_fallthru
      _
    %275 = vst [vmem:[#allocation20] sm:$0xff] 0.0
    %276 = vst [vmem:[#allocation20 + $0x8] sm:$0xff] 0.0
    %v277 = vld [vmem:[#allocation8] sm:$0x1]
    %v278 = vsub.f32 %v277, 1.0
    %v279 = vmul.f32 %v278, 1e+09
    %v280 = vld [vmem:[#allocation7] sm:$0xff]
    %v281 = vld [vmem:[#allocation7 + $0x8] sm:$0xff]
    %v282 = vld [vmem:[#allocation5] sm:$0xff]
    %v283 = vld [vmem:[#allocation5 + $0x8] sm:$0xff]
    %v284 = vld [vmem:[%s11] sm:$0xff]
    %v285 = vld [vmem:[%s11 + $0x8] sm:$0xff]
    %v286 = vld [vmem:[%s11 + $0x10] sm:$0xff]
    %v287 = vld [vmem:[%s11 + $0x18] sm:$0xff]
    %v288 = vld [vmem:[%s11 + $0x20] sm:$0xff]
    %v289 = vld [vmem:[%s11 + $0x28] sm:$0xff]
    %v290 = vld [vmem:[%s11 + $0x30] sm:$0xff]
    %v291 = vld [vmem:[%s11 + $0x38] sm:$0xff]
    %v292 = vld [vmem:[%s11 + $0x40] sm:$0xff]
    %v293 = vld [vmem:[%s11 + $0x48] sm:$0xff]
    %v294 = vld [vmem:[%s11 + $0x50] sm:$0xff]
    %v295 = vld [vmem:[%s11 + $0x58] sm:$0xff]
    %v296 = vld [vmem:[%s11 + $0x60] sm:$0xff]
    %v297 = vld [vmem:[%s11 + $0x68] sm:$0xff]
    %v298 = vld [vmem:[%s11 + $0x70] sm:$0xff]
    %v299 = vld [vmem:[%s11 + $0x78] sm:$0xff]
    %v300 = vld [vmem:[%s13] sm:$0xff]
    %v301 = vld [vmem:[%s13 + $0x8] sm:$0xff]
    %v302 = vld [vmem:[%s13 + $0x10] sm:$0xff]
    %v303 = vld [vmem:[%s13 + $0x18] sm:$0xff]
    %v304 = vld [vmem:[#allocation10] sm:$0x1]
    %v305 = vld [vmem:[#allocation2] sm:$0xff]
    %v306 = vld [vmem:[#allocation2 + $0x8] sm:$0xff]
    %307 = vst [vmem:[#allocation20] sm:$0x1] 0.0
    %308 = vst [vmem:[#allocation20 + $0x2] sm:$0x1] 0.0
    %309 = vst [vmem:[#allocation20 + $0x4] sm:$0x1] 1.0
    %310 = vst [vmem:[#allocation20 + $0x6] sm:$0x1] 1.0
    %v311 = vld [vmem:[%s37] sm:$0x7]
    %v312 = vld [vmem:[%s39] sm:$0x7]
    %v313 = vld [vmem:[%s17] sm:$0xff]
    %v314 = vld [vmem:[%s17 + $0x8] sm:$0xff]
    %v315 = vld [vmem:[%s17 + $0x10] sm:$0xff]
    %v316 = vld [vmem:[%s17 + $0x18] sm:$0xff]
    %v317 = vld [vmem:[#allocation11] sm:$0x1]
    %v319 = vperm.slane %v317, 0
    %vm321 = vcmask 261120
    %v323 = vsel %vm321, %v305, 0
    %v326 = vsel %vm321, %v306, 0
    %328 = vmatpush.msra.mxu0 0.0
    %329 = vmatpush.msra.mxu0 0.0
    %330 = vmatpush.msra.mxu0 0.0
    %331 = vmatpush.msra.mxu0 0.0
    %332 = vmatpush.msra.mxu0 0.0
    %333 = vmatpush.msra.mxu0 0.0
    %334 = vmatpush.msra.mxu0 0.0
    %335 = vmatpush.msra.mxu0 0.0
    %336 = vmatpush.msra.mxu0 0.0
    %337 = vmatpush.msra.mxu0 0.0
    %338 = vmatpush.msra.mxu0 0.0
    %339 = vmatpush.msra.mxu0 0.0
    %340 = vmatpush.msra.mxu0 %v316
    %341 = vmatpush.msra.mxu0 %v315
    %342 = vmatpush.msra.mxu0 %v314
    %343 = vmatpush.msra.mxu0 %v313
    %344 = vmatmul.f32.gmra.mxu0 %v323
    %v345 = vpop.f32.mrf.mxu0
    %v346 = vadd.f32 %v319, %v345
    %347 = vmatmul.f32.gmra.mxu0 %v326
    %v348 = vpop.f32.mrf.mxu0
    %v349 = vadd.f32 %v319, %v348
    %350 = vdwg.mxu0
    %v351 = vld [vmem:[%s21] sm:$0xff]
    %v352 = vld [vmem:[%s21 + $0x8] sm:$0xff]
    %v353 = vld [vmem:[%s21 + $0x10] sm:$0xff]
    %v354 = vld [vmem:[%s21 + $0x18] sm:$0xff]
    %v355 = vld [vmem:[#allocation13] sm:$0x1]
    %357 = vrot.lane.b32.xlu0 %v346, 96
    %v358 = vpop.permute.xlu0 %357
    %vm359 = vcmask 64512
    %v360 = vsel %vm359, %v346, 0
    %v362 = vsel %vm359, %v358, 0
    %364 = vmatpush.xpose.msra.mxu0 0.0
    %365 = vmatpush.xpose.msra.mxu0 0.0
    %366 = vmatpush.xpose.msra.mxu0 0.0
    %367 = vmatpush.xpose.msra.mxu0 0.0
    %368 = vmatpush.xpose.msra.mxu0 0.0
    %369 = vmatpush.xpose.msra.mxu0 0.0
    %370 = vmatpush.xpose.msra.mxu0 0.0
    %371 = vmatpush.xpose.msra.mxu0 0.0
    %372 = vmatpush.xpose.msra.mxu0 0.0
    %373 = vmatpush.xpose.msra.mxu0 0.0
    %374 = vmatpush.xpose.msra.mxu0 0.0
    %375 = vmatpush.xpose.msra.mxu0 0.0
    %376 = vmatpush.xpose.msra.mxu0 0.0
    %377 = vmatpush.xpose.msra.mxu0 0.0
    %378 = vmatpush.xpose.msra.mxu0 0.0
    %379 = vmatpush.xpose.msra.mxu0 %v362
    %380 = vmatmul.f32.gmra.mxu0 %v360
    %v381 = vpop.f32.mrf.mxu0
    %v382 = vadd.f32 0.0, %v381
    %383 = vdwg.mxu0
    %385 = vrot.lane.b32.xlu0 %v349, 96
    %v386 = vpop.permute.xlu0 %385
    %v387 = vsel %vm359, %v349, 0
    %v389 = vsel %vm359, %v386, 0
    %391 = vmatpush.xpose.msra.mxu0 0.0
    %392 = vmatpush.xpose.msra.mxu0 0.0
    %393 = vmatpush.xpose.msra.mxu0 0.0
    %394 = vmatpush.xpose.msra.mxu0 0.0
    %395 = vmatpush.xpose.msra.mxu0 0.0
    %396 = vmatpush.xpose.msra.mxu0 0.0
    %397 = vmatpush.xpose.msra.mxu0 0.0
    %398 = vmatpush.xpose.msra.mxu0 0.0
    %399 = vmatpush.xpose.msra.mxu0 0.0
    %400 = vmatpush.xpose.msra.mxu0 0.0
    %401 = vmatpush.xpose.msra.mxu0 0.0
    %402 = vmatpush.xpose.msra.mxu0 0.0
    %403 = vmatpush.xpose.msra.mxu0 0.0
    %404 = vmatpush.xpose.msra.mxu0 0.0
    %405 = vmatpush.xpose.msra.mxu0 0.0
    %406 = vmatpush.xpose.msra.mxu0 %v389
    %407 = vmatmul.f32.gmra.mxu0 %v387
    %v408 = vpop.f32.mrf.mxu0
    %v409 = vadd.f32 0.0, %v408
    %410 = vdwg.mxu0
    %v411 = vmul.f32 %v382, 0.35355338
    %v412 = vmul.f32 %v409, 0.35355338
    %v413 = vsel %vm359, %v411, -inf
    %414 = vmax.xlane.f32.xlu0 %v413
    %v415 = vpop.xlane.xlu0 %414
    %v416 = vsel %vm359, %v412, -inf
    %417 = vmax.xlane.f32.xlu0 %v416
    %v418 = vpop.xlane.xlu0 %417
    %v419 = vsub.f32 %v411, %v415
    %v420 = vsub.f32 %v412, %v418
    %v421 = vmul.f32 %v419, 1.442695
    %v422 = vpow.pop %v421
    %v423 = vmul.f32 %v420, 1.442695
    %v424 = vpow.pop %v423
    %v425 = vsel %vm359, %v422, 0.0
    %426 = vadd.xlane.f32.xlu0 %v425
    %v427 = vpop.xlane.xlu0 %426
    %v428 = vsel %vm359, %v424, 0.0
    %429 = vadd.xlane.f32.xlu0 %v428
    %v430 = vpop.xlane.xlu0 %429
    %v431 = vrcp.pop %v427
    %v432 = vmul.f32 %v427, %v431
    %v433 = vsub.f32 1.0, %v432
    %v434 = vmul.f32 %v431, %v433
    %v435 = vadd.f32 %v431, %v434
    %vm436 = vweird.f32 %v427
    %vm437 = vweird.f32 %v431
    %vm438 = vmor %vm436, %vm437
    %v439 = vsel %vm438, %v431, %v435
    %v440 = vand.u32 2147483647, %v427
    %vm441 = vcmp.eq.f32.partialorder %v440, 8.507059e+37
    %v442 = vand.u32 %v427, 2147483648
    %v443 = vor.u32 1.1754944e-38, %v442
    %v444 = vsel %vm441, %v443, %v439
    %v445 = vmul.f32 %v422, %v444
    %v446 = vrcp.pop %v430
    %v447 = vmul.f32 %v430, %v446
    %v448 = vsub.f32 1.0, %v447
    %v449 = vmul.f32 %v446, %v448
    %v450 = vadd.f32 %v446, %v449
    %vm451 = vweird.f32 %v430
    %vm452 = vweird.f32 %v446
    %vm453 = vmor %vm451, %vm452
    %v454 = vsel %vm453, %v446, %v450
    %v455 = vand.u32 2147483647, %v430
    %vm456 = vcmp.eq.f32.partialorder %v455, 8.507059e+37
    %v457 = vand.u32 %v430, 2147483648
    %v458 = vor.u32 1.1754944e-38, %v457
    %v459 = vsel %vm456, %v458, %v454
    %v460 = vmul.f32 %v424, %v459
    %461 = vrot.lane.b32.xlu0 %v346, 64
    %v462 = vpop.permute.xlu0 %461
    %v465 = vsel %vm359, %v445, 0
    %467 = vmatpush.msra.mxu0 0.0
    %468 = vmatpush.msra.mxu0 0.0
    %469 = vmatpush.msra.mxu0 0.0
    %470 = vmatpush.msra.mxu0 0.0
    %471 = vmatpush.msra.mxu0 0.0
    %472 = vmatpush.msra.mxu0 0.0
    %473 = vmatpush.msra.mxu0 0.0
    %474 = vmatpush.msra.mxu0 0.0
    %475 = vmatpush.msra.mxu0 0.0
    %476 = vmatpush.msra.mxu0 0.0
    %477 = vmatpush.msra.mxu0 0.0
    %478 = vmatpush.msra.mxu0 0.0
    %479 = vmatpush.msra.mxu0 0.0
    %480 = vmatpush.msra.mxu0 0.0
    %481 = vmatpush.msra.mxu0 0.0
    %482 = vmatpush.msra.mxu0 %v462
    %483 = vmatmul.f32.gmra.mxu0 %v465
    %v484 = vpop.f32.mrf.mxu0
    %v485 = vadd.f32 0.0, %v484
    %486 = vdwg.mxu0
    %487 = vrot.lane.b32.xlu0 %v349, 64
    %v488 = vpop.permute.xlu0 %487
    %v491 = vsel %vm359, %v460, 0
    %493 = vmatpush.msra.mxu0 0.0
    %494 = vmatpush.msra.mxu0 0.0
    %495 = vmatpush.msra.mxu0 0.0
    %496 = vmatpush.msra.mxu0 0.0
    %497 = vmatpush.msra.mxu0 0.0
    %498 = vmatpush.msra.mxu0 0.0
    %499 = vmatpush.msra.mxu0 0.0
    %500 = vmatpush.msra.mxu0 0.0
    %501 = vmatpush.msra.mxu0 0.0
    %502 = vmatpush.msra.mxu0 0.0
    %503 = vmatpush.msra.mxu0 0.0
    %504 = vmatpush.msra.mxu0 0.0
    %505 = vmatpush.msra.mxu0 0.0
    %506 = vmatpush.msra.mxu0 0.0
    %507 = vmatpush.msra.mxu0 0.0
    %508 = vmatpush.msra.mxu0 %v488
    %509 = vmatmul.f32.gmra.mxu0 %v491
    %v510 = vpop.f32.mrf.mxu0
    %v511 = vadd.f32 0.0, %v510
    %512 = vdwg.mxu0
    %513 = vrot.lane.b32.xlu0 %v346, 120
    %v514 = vpop.permute.xlu0 %513
    %515 = vrot.lane.b32.xlu0 %v346, 88
    %v516 = vpop.permute.xlu0 %515
    %v517 = vsel %vm359, %v514, 0
    %v519 = vsel %vm359, %v516, 0
    %521 = vmatpush.xpose.msra.mxu0 0.0
    %522 = vmatpush.xpose.msra.mxu0 0.0
    %523 = vmatpush.xpose.msra.mxu0 0.0
    %524 = vmatpush.xpose.msra.mxu0 0.0
    %525 = vmatpush.xpose.msra.mxu0 0.0
    %526 = vmatpush.xpose.msra.mxu0 0.0
    %527 = vmatpush.xpose.msra.mxu0 0.0
    %528 = vmatpush.xpose.msra.mxu0 0.0
    %529 = vmatpush.xpose.msra.mxu0 0.0
    %530 = vmatpush.xpose.msra.mxu0 0.0
    %531 = vmatpush.xpose.msra.mxu0 0.0
    %532 = vmatpush.xpose.msra.mxu0 0.0
    %533 = vmatpush.xpose.msra.mxu0 0.0
    %534 = vmatpush.xpose.msra.mxu0 0.0
    %535 = vmatpush.xpose.msra.mxu0 0.0
    %536 = vmatpush.xpose.msra.mxu0 %v519
    %537 = vmatmul.f32.gmra.mxu0 %v517
    %v538 = vpop.f32.mrf.mxu0
    %v539 = vadd.f32 0.0, %v538
    %540 = vdwg.mxu0
    %541 = vrot.lane.b32.xlu0 %v349, 120
    %v542 = vpop.permute.xlu0 %541
    %543 = vrot.lane.b32.xlu0 %v349, 88
    %v544 = vpop.permute.xlu0 %543
    %v545 = vsel %vm359, %v542, 0
    %v547 = vsel %vm359, %v544, 0
    %549 = vmatpush.xpose.msra.mxu0 0.0
    %550 = vmatpush.xpose.msra.mxu0 0.0
    %551 = vmatpush.xpose.msra.mxu0 0.0
    %552 = vmatpush.xpose.msra.mxu0 0.0
    %553 = vmatpush.xpose.msra.mxu0 0.0
    %554 = vmatpush.xpose.msra.mxu0 0.0
    %555 = vmatpush.xpose.msra.mxu0 0.0
    %556 = vmatpush.xpose.msra.mxu0 0.0
    %557 = vmatpush.xpose.msra.mxu0 0.0
    %558 = vmatpush.xpose.msra.mxu0 0.0
    %559 = vmatpush.xpose.msra.mxu0 0.0
    %560 = vmatpush.xpose.msra.mxu0 0.0
    %561 = vmatpush.xpose.msra.mxu0 0.0
    %562 = vmatpush.xpose.msra.mxu0 0.0
    %563 = vmatpush.xpose.msra.mxu0 0.0
    %564 = vmatpush.xpose.msra.mxu0 %v547
    %565 = vmatmul.f32.gmra.mxu0 %v545
    %v566 = vpop.f32.mrf.mxu0
    %v567 = vadd.f32 0.0, %v566
    %568 = vdwg.mxu0
    %v569 = vmul.f32 %v539, 0.35355338
    %v570 = vmul.f32 %v567, 0.35355338
    %v571 = vsel %vm359, %v569, -inf
    %572 = vmax.xlane.f32.xlu0 %v571
    %v573 = vpop.xlane.xlu0 %572
    %v574 = vsel %vm359, %v570, -inf
    %575 = vmax.xlane.f32.xlu0 %v574
    %v576 = vpop.xlane.xlu0 %575
    %v577 = vsub.f32 %v569, %v573
    %v578 = vsub.f32 %v570, %v576
    %v579 = vmul.f32 %v577, 1.442695
    %v580 = vpow.pop %v579
    %v581 = vmul.f32 %v578, 1.442695
    %v582 = vpow.pop %v581
    %v583 = vsel %vm359, %v580, 0.0
    %584 = vadd.xlane.f32.xlu0 %v583
    %v585 = vpop.xlane.xlu0 %584
    %v586 = vsel %vm359, %v582, 0.0
    %587 = vadd.xlane.f32.xlu0 %v586
    %v588 = vpop.xlane.xlu0 %587
    %v589 = vrcp.pop %v585
    %v590 = vmul.f32 %v585, %v589
    %v591 = vsub.f32 1.0, %v590
    %v592 = vmul.f32 %v589, %v591
    %v593 = vadd.f32 %v589, %v592
    %vm594 = vweird.f32 %v585
    %vm595 = vweird.f32 %v589
    %vm596 = vmor %vm594, %vm595
    %v597 = vsel %vm596, %v589, %v593
    %v598 = vand.u32 2147483647, %v585
    %vm599 = vcmp.eq.f32.partialorder %v598, 8.507059e+37
    %v600 = vand.u32 %v585, 2147483648
    %v601 = vor.u32 1.1754944e-38, %v600
    %v602 = vsel %vm599, %v601, %v597
    %v603 = vmul.f32 %v580, %v602
    %v604 = vrcp.pop %v588
    %v605 = vmul.f32 %v588, %v604
    %v606 = vsub.f32 1.0, %v605
    %v607 = vmul.f32 %v604, %v606
    %v608 = vadd.f32 %v604, %v607
    %vm609 = vweird.f32 %v588
    %vm610 = vweird.f32 %v604
    %vm611 = vmor %vm609, %vm610
    %v612 = vsel %vm611, %v604, %v608
    %v613 = vand.u32 2147483647, %v588
    %vm614 = vcmp.eq.f32.partialorder %v613, 8.507059e+37
    %v615 = vand.u32 %v588, 2147483648
    %v616 = vor.u32 1.1754944e-38, %v615
    %v617 = vsel %vm614, %v616, %v612
    %v618 = vmul.f32 %v582, %v617
    %619 = vrot.lane.b32.xlu0 %v346, 56
    %v620 = vpop.permute.xlu0 %619
    %v623 = vsel %vm359, %v603, 0
    %625 = vmatpush.msra.mxu0 0.0
    %626 = vmatpush.msra.mxu0 0.0
    %627 = vmatpush.msra.mxu0 0.0
    %628 = vmatpush.msra.mxu0 0.0
    %629 = vmatpush.msra.mxu0 0.0
    %630 = vmatpush.msra.mxu0 0.0
    %631 = vmatpush.msra.mxu0 0.0
    %632 = vmatpush.msra.mxu0 0.0
    %633 = vmatpush.msra.mxu0 0.0
    %634 = vmatpush.msra.mxu0 0.0
    %635 = vmatpush.msra.mxu0 0.0
    %636 = vmatpush.msra.mxu0 0.0
    %637 = vmatpush.msra.mxu0 0.0
    %638 = vmatpush.msra.mxu0 0.0
    %639 = vmatpush.msra.mxu0 0.0
    %640 = vmatpush.msra.mxu0 %v620
    %641 = vmatmul.f32.gmra.mxu0 %v623
    %v642 = vpop.f32.mrf.mxu0
    %v643 = vadd.f32 0.0, %v642
    %644 = vdwg.mxu0
    %645 = vrot.lane.b32.xlu0 %v349, 56
    %v646 = vpop.permute.xlu0 %645
    %v649 = vsel %vm359, %v618, 0
    %651 = vmatpush.msra.mxu0 0.0
    %652 = vmatpush.msra.mxu0 0.0
    %653 = vmatpush.msra.mxu0 0.0
    %654 = vmatpush.msra.mxu0 0.0
    %655 = vmatpush.msra.mxu0 0.0
    %656 = vmatpush.msra.mxu0 0.0
    %657 = vmatpush.msra.mxu0 0.0
    %658 = vmatpush.msra.mxu0 0.0
    %659 = vmatpush.msra.mxu0 0.0
    %660 = vmatpush.msra.mxu0 0.0
    %661 = vmatpush.msra.mxu0 0.0
    %662 = vmatpush.msra.mxu0 0.0
    %663 = vmatpush.msra.mxu0 0.0
    %664 = vmatpush.msra.mxu0 0.0
    %665 = vmatpush.msra.mxu0 0.0
    %666 = vmatpush.msra.mxu0 %v646
    %667 = vmatmul.f32.gmra.mxu0 %v649
    %v668 = vpop.f32.mrf.mxu0
    %v669 = vadd.f32 0.0, %v668
    %670 = vdwg.mxu0
    %v672 = vsel %vm359, %v643, 0
    %v675 = vsel %vm359, %v669, 0
    %677 = vmatpush.msra.mxu0 0.0
    %678 = vmatpush.msra.mxu0 0.0
    %679 = vmatpush.msra.mxu0 0.0
    %680 = vmatpush.msra.mxu0 0.0
    %681 = vmatpush.msra.mxu0 0.0
    %682 = vmatpush.msra.mxu0 0.0
    %683 = vmatpush.msra.mxu0 0.0
    %684 = vmatpush.msra.mxu0 0.0
    %685 = vmatpush.msra.mxu0 0.0
    %686 = vmatpush.msra.mxu0 0.0
    %687 = vmatpush.msra.mxu0 0.0
    %688 = vmatpush.msra.mxu0 0.0
    %689 = vmatpush.msra.mxu0 0.0
    %690 = vmatpush.msra.mxu0 0.0
    %691 = vmatpush.msra.mxu0 0.0
    %692 = vmatpush.msra.mxu0 %v352
    %693 = vmatmul.f32.gmra.mxu0 %v672
    %v694 = vpop.f32.mrf.mxu0
    %v695 = vadd.f32 0.0, %v694
    %696 = vmatmul.f32.gmra.mxu0 %v675
    %v697 = vpop.f32.mrf.mxu0
    %v698 = vadd.f32 0.0, %v697
    %699 = vdwg.mxu0
    %v701 = vsel %vm359, %v485, 0
    %v704 = vsel %vm359, %v511, 0
    %706 = vmatpush.msra.mxu0 0.0
    %707 = vmatpush.msra.mxu0 0.0
    %708 = vmatpush.msra.mxu0 0.0
    %709 = vmatpush.msra.mxu0 0.0
    %710 = vmatpush.msra.mxu0 0.0
    %711 = vmatpush.msra.mxu0 0.0
    %712 = vmatpush.msra.mxu0 0.0
    %713 = vmatpush.msra.mxu0 0.0
    %714 = vmatpush.msra.mxu0 0.0
    %715 = vmatpush.msra.mxu0 0.0
    %716 = vmatpush.msra.mxu0 0.0
    %717 = vmatpush.msra.mxu0 0.0
    %718 = vmatpush.msra.mxu0 0.0
    %719 = vmatpush.msra.mxu0 0.0
    %720 = vmatpush.msra.mxu0 0.0
    %721 = vmatpush.msra.mxu0 %v351
    %722 = vmatmul.f32.gmra.mxu0 %v701
    %v723 = vpop.f32.mrf.mxu0
    %v724 = vadd.f32 %v695, %v723
    %725 = vmatmul.f32.gmra.mxu0 %v704
    %v726 = vpop.f32.mrf.mxu0
    %v727 = vadd.f32 %v698, %v726
    %728 = vdwg.mxu0
    %729 = vrot.lane.b32.xlu0 %v346, 112
    %v730 = vpop.permute.xlu0 %729
    %731 = vrot.lane.b32.xlu0 %v346, 80
    %v732 = vpop.permute.xlu0 %731
    %v733 = vsel %vm359, %v730, 0
    %v735 = vsel %vm359, %v732, 0
    %737 = vmatpush.xpose.msra.mxu0 0.0
    %738 = vmatpush.xpose.msra.mxu0 0.0
    %739 = vmatpush.xpose.msra.mxu0 0.0
    %740 = vmatpush.xpose.msra.mxu0 0.0
    %741 = vmatpush.xpose.msra.mxu0 0.0
    %742 = vmatpush.xpose.msra.mxu0 0.0
    %743 = vmatpush.xpose.msra.mxu0 0.0
    %744 = vmatpush.xpose.msra.mxu0 0.0
    %745 = vmatpush.xpose.msra.mxu0 0.0
    %746 = vmatpush.xpose.msra.mxu0 0.0
    %747 = vmatpush.xpose.msra.mxu0 0.0
    %748 = vmatpush.xpose.msra.mxu0 0.0
    %749 = vmatpush.xpose.msra.mxu0 0.0
    %750 = vmatpush.xpose.msra.mxu0 0.0
    %751 = vmatpush.xpose.msra.mxu0 0.0
    %752 = vmatpush.xpose.msra.mxu0 %v735
    %753 = vmatmul.f32.gmra.mxu0 %v733
    %v754 = vpop.f32.mrf.mxu0
    %v755 = vadd.f32 0.0, %v754
    %756 = vdwg.mxu0
    %757 = vrot.lane.b32.xlu0 %v349, 112
    %v758 = vpop.permute.xlu0 %757
    %759 = vrot.lane.b32.xlu0 %v349, 80
    %v760 = vpop.permute.xlu0 %759
    %v761 = vsel %vm359, %v758, 0
    %v763 = vsel %vm359, %v760, 0
    %765 = vmatpush.xpose.msra.mxu0 0.0
    %766 = vmatpush.xpose.msra.mxu0 0.0
    %767 = vmatpush.xpose.msra.mxu0 0.0
    %768 = vmatpush.xpose.msra.mxu0 0.0
    %769 = vmatpush.xpose.msra.mxu0 0.0
    %770 = vmatpush.xpose.msra.mxu0 0.0
    %771 = vmatpush.xpose.msra.mxu0 0.0
    %772 = vmatpush.xpose.msra.mxu0 0.0
    %773 = vmatpush.xpose.msra.mxu0 0.0
    %774 = vmatpush.xpose.msra.mxu0 0.0
    %775 = vmatpush.xpose.msra.mxu0 0.0
    %776 = vmatpush.xpose.msra.mxu0 0.0
    %777 = vmatpush.xpose.msra.mxu0 0.0
    %778 = vmatpush.xpose.msra.mxu0 0.0
    %779 = vmatpush.xpose.msra.mxu0 0.0
    %780 = vmatpush.xpose.msra.mxu0 %v763
    %781 = vmatmul.f32.gmra.mxu0 %v761
    %v782 = vpop.f32.mrf.mxu0
    %v783 = vadd.f32 0.0, %v782
    %784 = vdwg.mxu0
    %v785 = vmul.f32 %v755, 0.35355338
    %v786 = vmul.f32 %v783, 0.35355338
    %v787 = vsel %vm359, %v785, -inf
    %788 = vmax.xlane.f32.xlu0 %v787
    %v789 = vpop.xlane.xlu0 %788
    %v790 = vsel %vm359, %v786, -inf
    %791 = vmax.xlane.f32.xlu0 %v790
    %v792 = vpop.xlane.xlu0 %791
    %v793 = vsub.f32 %v785, %v789
    %v794 = vsub.f32 %v786, %v792
    %v795 = vmul.f32 %v793, 1.442695
    %v796 = vpow.pop %v795
    %v797 = vmul.f32 %v794, 1.442695
    %v798 = vpow.pop %v797
    %v799 = vsel %vm359, %v796, 0.0
    %800 = vadd.xlane.f32.xlu0 %v799
    %v801 = vpop.xlane.xlu0 %800
    %v802 = vsel %vm359, %v798, 0.0
    %803 = vadd.xlane.f32.xlu0 %v802
    %v804 = vpop.xlane.xlu0 %803
    %v805 = vrcp.pop %v801
    %v806 = vmul.f32 %v801, %v805
    %v807 = vsub.f32 1.0, %v806
    %v808 = vmul.f32 %v805, %v807
    %v809 = vadd.f32 %v805, %v808
    %vm810 = vweird.f32 %v801
    %vm811 = vweird.f32 %v805
    %vm812 = vmor %vm810, %vm811
    %v813 = vsel %vm812, %v805, %v809
    %v814 = vand.u32 2147483647, %v801
    %vm815 = vcmp.eq.f32.partialorder %v814, 8.507059e+37
    %v816 = vand.u32 %v801, 2147483648
    %v817 = vor.u32 1.1754944e-38, %v816
    %v818 = vsel %vm815, %v817, %v813
    %v819 = vmul.f32 %v796, %v818
    %v820 = vrcp.pop %v804
    %v821 = vmul.f32 %v804, %v820
    %v822 = vsub.f32 1.0, %v821
    %v823 = vmul.f32 %v820, %v822
    %v824 = vadd.f32 %v820, %v823
    %vm825 = vweird.f32 %v804
    %vm826 = vweird.f32 %v820
    %vm827 = vmor %vm825, %vm826
    %v828 = vsel %vm827, %v820, %v824
    %v829 = vand.u32 2147483647, %v804
    %vm830 = vcmp.eq.f32.partialorder %v829, 8.507059e+37
    %v831 = vand.u32 %v804, 2147483648
    %v832 = vor.u32 1.1754944e-38, %v831
    %v833 = vsel %vm830, %v832, %v828
    %v834 = vmul.f32 %v798, %v833
    %835 = vrot.lane.b32.xlu0 %v346, 48
    %v836 = vpop.permute.xlu0 %835
    %v839 = vsel %vm359, %v819, 0
    %841 = vmatpush.msra.mxu0 0.0
    %842 = vmatpush.msra.mxu0 0.0
    %843 = vmatpush.msra.mxu0 0.0
    %844 = vmatpush.msra.mxu0 0.0
    %845 = vmatpush.msra.mxu0 0.0
    %846 = vmatpush.msra.mxu0 0.0
    %847 = vmatpush.msra.mxu0 0.0
    %848 = vmatpush.msra.mxu0 0.0
    %849 = vmatpush.msra.mxu0 0.0
    %850 = vmatpush.msra.mxu0 0.0
    %851 = vmatpush.msra.mxu0 0.0
    %852 = vmatpush.msra.mxu0 0.0
    %853 = vmatpush.msra.mxu0 0.0
    %854 = vmatpush.msra.mxu0 0.0
    %855 = vmatpush.msra.mxu0 0.0
    %856 = vmatpush.msra.mxu0 %v836
    %857 = vmatmul.f32.gmra.mxu0 %v839
    %v858 = vpop.f32.mrf.mxu0
    %v859 = vadd.f32 0.0, %v858
    %860 = vdwg.mxu0
    %861 = vrot.lane.b32.xlu0 %v349, 48
    %v862 = vpop.permute.xlu0 %861
    %v865 = vsel %vm359, %v834, 0
    %867 = vmatpush.msra.mxu0 0.0
    %868 = vmatpush.msra.mxu0 0.0
    %869 = vmatpush.msra.mxu0 0.0
    %870 = vmatpush.msra.mxu0 0.0
    %871 = vmatpush.msra.mxu0 0.0
    %872 = vmatpush.msra.mxu0 0.0
    %873 = vmatpush.msra.mxu0 0.0
    %874 = vmatpush.msra.mxu0 0.0
    %875 = vmatpush.msra.mxu0 0.0
    %876 = vmatpush.msra.mxu0 0.0
    %877 = vmatpush.msra.mxu0 0.0
    %878 = vmatpush.msra.mxu0 0.0
    %879 = vmatpush.msra.mxu0 0.0
    %880 = vmatpush.msra.mxu0 0.0
    %881 = vmatpush.msra.mxu0 0.0
    %882 = vmatpush.msra.mxu0 %v862
    %883 = vmatmul.f32.gmra.mxu0 %v865
    %v884 = vpop.f32.mrf.mxu0
    %v885 = vadd.f32 0.0, %v884
    %886 = vdwg.mxu0
    %v888 = vsel %vm359, %v859, 0
    %v891 = vsel %vm359, %v885, 0
    %893 = vmatpush.msra.mxu0 0.0
    %894 = vmatpush.msra.mxu0 0.0
    %895 = vmatpush.msra.mxu0 0.0
    %896 = vmatpush.msra.mxu0 0.0
    %897 = vmatpush.msra.mxu0 0.0
    %898 = vmatpush.msra.mxu0 0.0
    %899 = vmatpush.msra.mxu0 0.0
    %900 = vmatpush.msra.mxu0 0.0
    %901 = vmatpush.msra.mxu0 0.0
    %902 = vmatpush.msra.mxu0 0.0
    %903 = vmatpush.msra.mxu0 0.0
    %904 = vmatpush.msra.mxu0 0.0
    %905 = vmatpush.msra.mxu0 0.0
    %906 = vmatpush.msra.mxu0 0.0
    %907 = vmatpush.msra.mxu0 0.0
    %908 = vmatpush.msra.mxu0 %v353
    %909 = vmatmul.f32.gmra.mxu0 %v888
    %v910 = vpop.f32.mrf.mxu0
    %v911 = vadd.f32 0.0, %v910
    %912 = vmatmul.f32.gmra.mxu0 %v891
    %v913 = vpop.f32.mrf.mxu0
    %v914 = vadd.f32 0.0, %v913
    %915 = vdwg.mxu0
    %v916 = vadd.f32 %v724, %v911
    %v917 = vadd.f32 %v727, %v914
    %918 = vrot.lane.b32.xlu0 %v346, 104
    %v919 = vpop.permute.xlu0 %918
    %920 = vrot.lane.b32.xlu0 %v346, 72
    %v921 = vpop.permute.xlu0 %920
    %v922 = vsel %vm359, %v919, 0
    %v924 = vsel %vm359, %v921, 0
    %926 = vmatpush.xpose.msra.mxu0 0.0
    %927 = vmatpush.xpose.msra.mxu0 0.0
    %928 = vmatpush.xpose.msra.mxu0 0.0
    %929 = vmatpush.xpose.msra.mxu0 0.0
    %930 = vmatpush.xpose.msra.mxu0 0.0
    %931 = vmatpush.xpose.msra.mxu0 0.0
    %932 = vmatpush.xpose.msra.mxu0 0.0
    %933 = vmatpush.xpose.msra.mxu0 0.0
    %934 = vmatpush.xpose.msra.mxu0 0.0
    %935 = vmatpush.xpose.msra.mxu0 0.0
    %936 = vmatpush.xpose.msra.mxu0 0.0
    %937 = vmatpush.xpose.msra.mxu0 0.0
    %938 = vmatpush.xpose.msra.mxu0 0.0
    %939 = vmatpush.xpose.msra.mxu0 0.0
    %940 = vmatpush.xpose.msra.mxu0 0.0
    %941 = vmatpush.xpose.msra.mxu0 %v924
    %942 = vmatmul.f32.gmra.mxu0 %v922
    %v943 = vpop.f32.mrf.mxu0
    %v944 = vadd.f32 0.0, %v943
    %945 = vdwg.mxu0
    %946 = vrot.lane.b32.xlu0 %v349, 104
    %v947 = vpop.permute.xlu0 %946
    %948 = vrot.lane.b32.xlu0 %v349, 72
    %v949 = vpop.permute.xlu0 %948
    %v950 = vsel %vm359, %v947, 0
    %v952 = vsel %vm359, %v949, 0
    %954 = vmatpush.xpose.msra.mxu0 0.0
    %955 = vmatpush.xpose.msra.mxu0 0.0
    %956 = vmatpush.xpose.msra.mxu0 0.0
    %957 = vmatpush.xpose.msra.mxu0 0.0
    %958 = vmatpush.xpose.msra.mxu0 0.0
    %959 = vmatpush.xpose.msra.mxu0 0.0
    %960 = vmatpush.xpose.msra.mxu0 0.0
    %961 = vmatpush.xpose.msra.mxu0 0.0
    %962 = vmatpush.xpose.msra.mxu0 0.0
    %963 = vmatpush.xpose.msra.mxu0 0.0
    %964 = vmatpush.xpose.msra.mxu0 0.0
    %965 = vmatpush.xpose.msra.mxu0 0.0
    %966 = vmatpush.xpose.msra.mxu0 0.0
    %967 = vmatpush.xpose.msra.mxu0 0.0
    %968 = vmatpush.xpose.msra.mxu0 0.0
    %969 = vmatpush.xpose.msra.mxu0 %v952
    %970 = vmatmul.f32.gmra.mxu0 %v950
    %v971 = vpop.f32.mrf.mxu0
    %v972 = vadd.f32 0.0, %v971
    %973 = vdwg.mxu0
    %v974 = vmul.f32 %v944, 0.35355338
    %v975 = vmul.f32 %v972, 0.35355338
    %v976 = vsel %vm359, %v974, -inf
    %977 = vmax.xlane.f32.xlu0 %v976
    %v978 = vpop.xlane.xlu0 %977
    %v979 = vsel %vm359, %v975, -inf
    %980 = vmax.xlane.f32.xlu0 %v979
    %v981 = vpop.xlane.xlu0 %980
    %v982 = vsub.f32 %v974, %v978
    %v983 = vsub.f32 %v975, %v981
    %v984 = vmul.f32 %v982, 1.442695
    %v985 = vpow.pop %v984
    %v986 = vmul.f32 %v983, 1.442695
    %v987 = vpow.pop %v986
    %v988 = vsel %vm359, %v985, 0.0
    %989 = vadd.xlane.f32.xlu0 %v988
    %v990 = vpop.xlane.xlu0 %989
    %v991 = vsel %vm359, %v987, 0.0
    %992 = vadd.xlane.f32.xlu0 %v991
    %v993 = vpop.xlane.xlu0 %992
    %v994 = vrcp.pop %v990
    %v995 = vmul.f32 %v990, %v994
    %v996 = vsub.f32 1.0, %v995
    %v997 = vmul.f32 %v994, %v996
    %v998 = vadd.f32 %v994, %v997
    %vm999 = vweird.f32 %v990
    %vm1000 = vweird.f32 %v994
    %vm1001 = vmor %vm999, %vm1000
    %v1002 = vsel %vm1001, %v994, %v998
    %v1003 = vand.u32 2147483647, %v990
    %vm1004 = vcmp.eq.f32.partialorder %v1003, 8.507059e+37
    %v1005 = vand.u32 %v990, 2147483648
    %v1006 = vor.u32 1.1754944e-38, %v1005
    %v1007 = vsel %vm1004, %v1006, %v1002
    %v1008 = vmul.f32 %v985, %v1007
    %v1009 = vrcp.pop %v993
    %v1010 = vmul.f32 %v993, %v1009
    %v1011 = vsub.f32 1.0, %v1010
    %v1012 = vmul.f32 %v1009, %v1011
    %v1013 = vadd.f32 %v1009, %v1012
    %vm1014 = vweird.f32 %v993
    %vm1015 = vweird.f32 %v1009
    %vm1016 = vmor %vm1014, %vm1015
    %v1017 = vsel %vm1016, %v1009, %v1013
    %v1018 = vand.u32 2147483647, %v993
    %vm1019 = vcmp.eq.f32.partialorder %v1018, 8.507059e+37
    %v1020 = vand.u32 %v993, 2147483648
    %v1021 = vor.u32 1.1754944e-38, %v1020
    %v1022 = vsel %vm1019, %v1021, %v1017
    %v1023 = vmul.f32 %v987, %v1022
    %1024 = vrot.lane.b32.xlu0 %v346, 40
    %v1025 = vpop.permute.xlu0 %1024
    %v1028 = vsel %vm359, %v1008, 0
    %1030 = vmatpush.msra.mxu0 0.0
    %1031 = vmatpush.msra.mxu0 0.0
    %1032 = vmatpush.msra.mxu0 0.0
    %1033 = vmatpush.msra.mxu0 0.0
    %1034 = vmatpush.msra.mxu0 0.0
    %1035 = vmatpush.msra.mxu0 0.0
    %1036 = vmatpush.msra.mxu0 0.0
    %1037 = vmatpush.msra.mxu0 0.0
    %1038 = vmatpush.msra.mxu0 0.0
    %1039 = vmatpush.msra.mxu0 0.0
    %1040 = vmatpush.msra.mxu0 0.0
    %1041 = vmatpush.msra.mxu0 0.0
    %1042 = vmatpush.msra.mxu0 0.0
    %1043 = vmatpush.msra.mxu0 0.0
    %1044 = vmatpush.msra.mxu0 0.0
    %1045 = vmatpush.msra.mxu0 %v1025
    %1046 = vmatmul.f32.gmra.mxu0 %v1028
    %v1047 = vpop.f32.mrf.mxu0
    %v1048 = vadd.f32 0.0, %v1047
    %1049 = vdwg.mxu0
    %1050 = vrot.lane.b32.xlu0 %v349, 40
    %v1051 = vpop.permute.xlu0 %1050
    %v1054 = vsel %vm359, %v1023, 0
    %1056 = vmatpush.msra.mxu0 0.0
    %1057 = vmatpush.msra.mxu0 0.0
    %1058 = vmatpush.msra.mxu0 0.0
    %1059 = vmatpush.msra.mxu0 0.0
    %1060 = vmatpush.msra.mxu0 0.0
    %1061 = vmatpush.msra.mxu0 0.0
    %1062 = vmatpush.msra.mxu0 0.0
    %1063 = vmatpush.msra.mxu0 0.0
    %1064 = vmatpush.msra.mxu0 0.0
    %1065 = vmatpush.msra.mxu0 0.0
    %1066 = vmatpush.msra.mxu0 0.0
    %1067 = vmatpush.msra.mxu0 0.0
    %1068 = vmatpush.msra.mxu0 0.0
    %1069 = vmatpush.msra.mxu0 0.0
    %1070 = vmatpush.msra.mxu0 0.0
    %1071 = vmatpush.msra.mxu0 %v1051
    %1072 = vmatmul.f32.gmra.mxu0 %v1054
    %v1073 = vpop.f32.mrf.mxu0
    %v1074 = vadd.f32 0.0, %v1073
    %1075 = vdwg.mxu0
    %v1077 = vsel %vm359, %v1048, 0
    %v1080 = vsel %vm359, %v1074, 0
    %1082 = vmatpush.msra.mxu0 0.0
    %1083 = vmatpush.msra.mxu0 0.0
    %1084 = vmatpush.msra.mxu0 0.0
    %1085 = vmatpush.msra.mxu0 0.0
    %1086 = vmatpush.msra.mxu0 0.0
    %1087 = vmatpush.msra.mxu0 0.0
    %1088 = vmatpush.msra.mxu0 0.0
    %1089 = vmatpush.msra.mxu0 0.0
    %1090 = vmatpush.msra.mxu0 0.0
    %1091 = vmatpush.msra.mxu0 0.0
    %1092 = vmatpush.msra.mxu0 0.0
    %1093 = vmatpush.msra.mxu0 0.0
    %1094 = vmatpush.msra.mxu0 0.0
    %1095 = vmatpush.msra.mxu0 0.0
    %1096 = vmatpush.msra.mxu0 0.0
    %1097 = vmatpush.msra.mxu0 %v354
    %1098 = vmatmul.f32.gmra.mxu0 %v1077
    %v1099 = vpop.f32.mrf.mxu0
    %v1100 = vadd.f32 0.0, %v1099
    %1101 = vmatmul.f32.gmra.mxu0 %v1080
    %v1102 = vpop.f32.mrf.mxu0
    %v1103 = vadd.f32 0.0, %v1102
    %1104 = vdwg.mxu0
    %v1105 = vadd.f32 %v916, %v1100
    %v1106 = vadd.f32 %v917, %v1103
    %v1108 = vperm.slane %v355, 0
    %v1110 = vadd.f32 %v1105, %v1108
    %v1111 = vadd.f32 %v1106, %v1108
    %v1112 = vadd.f32 %v305, %v1110
    %v1113 = vadd.f32 %v306, %v1111
    %v1114 = vsel %vm321, %v1112, 0.0
    %1115 = vadd.xlane.f32.xlu0 %v1114
    %v1116 = vpop.xlane.xlu0 %1115
    %v1117 = vsel %vm321, %v1113, 0.0
    %1118 = vadd.xlane.f32.xlu0 %v1117
    %v1119 = vpop.xlane.xlu0 %1118
    %v1120 = vrcp.pop 32.0
    %v1121 = vmul.f32 32.0, %v1120
    %v1122 = vsub.f32 1.0, %v1121
    %v1123 = vmul.f32 %v1120, %v1122
    %v1124 = vadd.f32 %v1120, %v1123
    %vm1125 = vweird.f32 %v1120
    %v1126 = vsel %vm1125, %v1120, %v1124
    %v1127 = vmul.f32 %v1116, %v1126
    %v1128 = vmul.f32 %v1119, %v1126
    %v1129 = vsub.f32 %v1112, %v1127
    %v1130 = vsub.f32 %v1113, %v1128
    %v1131 = vmul.f32 %v1129, %v1129
    %v1132 = vmul.f32 %v1130, %v1130
    %v1133 = vsel %vm321, %v1131, 0.0
    %1134 = vadd.xlane.f32.xlu0 %v1133
    %v1135 = vpop.xlane.xlu0 %1134
    %v1136 = vsel %vm321, %v1132, 0.0
    %1137 = vadd.xlane.f32.xlu0 %v1136
    %v1138 = vpop.xlane.xlu0 %1137
    %v1139 = vmul.f32 %v1135, %v1126
    %v1140 = vmul.f32 %v1138, %v1126
    %v1141 = vadd.f32 %v1139, 1e-05
    %v1142 = vadd.f32 %v1140, 1e-05
    %v1143 = vrsqrt.pop %v1141
    %v1144 = vmul.f32 %v1143, %v1141
    %v1145 = vmul.f32 %v1144, %v1143
    %v1146 = vmul.f32 0.5, %v1145
    %v1147 = vsub.f32 1.5, %v1146
    %v1148 = vmul.f32 %v1143, %v1147
    %vm1149 = vweird.f32 %v1141
    %vm1150 = vweird.f32 %v1143
    %vm1151 = vmor %vm1149, %vm1150
    %v1152 = vsel %vm1151, %v1143, %v1148
    %v1153 = vrsqrt.pop %v1142
    %v1154 = vmul.f32 %v1153, %v1142
    %v1155 = vmul.f32 %v1154, %v1153
    %v1156 = vmul.f32 0.5, %v1155
    %v1157 = vsub.f32 1.5, %v1156
    %v1158 = vmul.f32 %v1153, %v1157
    %vm1159 = vweird.f32 %v1142
    %vm1160 = vweird.f32 %v1153
    %vm1161 = vmor %vm1159, %vm1160
    %v1162 = vsel %vm1161, %v1153, %v1158
    %v1163 = vmul.f32 %v1129, %v1152
    %v1164 = vmul.f32 %v1130, %v1162
    %v1165 = vperm.slane %v311, 0
    %v1166 = vmul.f32 %v1163, %v1165
    %v1167 = vmul.f32 %v1164, %v1165
    %v1168 = vperm.slane %v312, 0
    %v1169 = vadd.f32 %v1166, %v1168
    %v1170 = vadd.f32 %v1167, %v1168
    %v1171 = vld [vmem:[%s25] sm:$0xff]
    %v1172 = vld [vmem:[%s25 + $0x8] sm:$0xff]
    %v1173 = vld [vmem:[%s25 + $0x10] sm:$0xff]
    %v1174 = vld [vmem:[%s25 + $0x18] sm:$0xff]
    %v1175 = vld [vmem:[#allocation14] sm:$0x1]
    %v1177 = vperm.slane %v1175, 0
    %v1180 = vsel %vm321, %v1169, 0
    %v1183 = vsel %vm321, %v1170, 0
    %1185 = vmatpush.msra.mxu0 0.0
    %1186 = vmatpush.msra.mxu0 0.0
    %1187 = vmatpush.msra.mxu0 0.0
    %1188 = vmatpush.msra.mxu0 0.0
    %1189 = vmatpush.msra.mxu0 0.0
    %1190 = vmatpush.msra.mxu0 0.0
    %1191 = vmatpush.msra.mxu0 0.0
    %1192 = vmatpush.msra.mxu0 0.0
    %1193 = vmatpush.msra.mxu0 0.0
    %1194 = vmatpush.msra.mxu0 0.0
    %1195 = vmatpush.msra.mxu0 0.0
    %1196 = vmatpush.msra.mxu0 0.0
    %1197 = vmatpush.msra.mxu0 %v1174
    %1198 = vmatpush.msra.mxu0 %v1173
    %1199 = vmatpush.msra.mxu0 %v1172
    %1200 = vmatpush.msra.mxu0 %v1171
    %1201 = vmatmul.f32.gmra.mxu0 %v1180
    %v1202 = vpop.f32.mrf.mxu0
    %v1203 = vadd.f32 %v1177, %v1202
    %1204 = vmatmul.f32.gmra.mxu0 %v1183
    %v1205 = vpop.f32.mrf.mxu0
    %v1206 = vadd.f32 %v1177, %v1205
    %1207 = vdwg.mxu0
    %v1208 = vld [vmem:[%s29] sm:$0xff]
    %v1209 = vld [vmem:[%s29 + $0x8] sm:$0xff]
    %v1210 = vld [vmem:[%s29 + $0x10] sm:$0xff]
    %v1211 = vld [vmem:[%s29 + $0x18] sm:$0xff]
    %v1212 = vld [vmem:[%s31] sm:$0x1]
    %v1214 = vperm.slane %v1212, 0
    %v1217 = vsel %vm321, %v282, 0
    %v1220 = vsel %vm321, %v283, 0
    %1222 = vmatpush.msra.mxu0 0.0
    %1223 = vmatpush.msra.mxu0 0.0
    %1224 = vmatpush.msra.mxu0 0.0
    %1225 = vmatpush.msra.mxu0 0.0
    %1226 = vmatpush.msra.mxu0 0.0
    %1227 = vmatpush.msra.mxu0 0.0
    %1228 = vmatpush.msra.mxu0 0.0
    %1229 = vmatpush.msra.mxu0 0.0
    %1230 = vmatpush.msra.mxu0 0.0
    %1231 = vmatpush.msra.mxu0 0.0
    %1232 = vmatpush.msra.mxu0 0.0
    %1233 = vmatpush.msra.mxu0 0.0
    %1234 = vmatpush.msra.mxu0 %v1211
    %1235 = vmatpush.msra.mxu0 %v1210
    %1236 = vmatpush.msra.mxu0 %v1209
    %1237 = vmatpush.msra.mxu0 %v1208
    %1238 = vmatmul.f32.gmra.mxu0 %v1217
    %v1239 = vpop.f32.mrf.mxu0
    %v1240 = vadd.f32 %v1214, %v1239
    %1241 = vmatmul.f32.gmra.mxu0 %v1220
    %v1242 = vpop.f32.mrf.mxu0
    %v1243 = vadd.f32 %v1214, %v1242
    %1244 = vdwg.mxu0
    %v1245 = vld [vmem:[#allocation16] sm:$0xff]
    %v1246 = vld [vmem:[#allocation16 + $0x8] sm:$0xff]
    %v1247 = vld [vmem:[#allocation16 + $0x10] sm:$0xff]
    %v1248 = vld [vmem:[#allocation16 + $0x18] sm:$0xff]
    %v1249 = vld [vmem:[%s35] sm:$0x1]
    %v1251 = vsel %vm359, %v1203, 0
    %v1254 = vsel %vm359, %v1240, 0
    %1256 = vmatpush.xpose.msra.mxu0 0.0
    %1257 = vmatpush.xpose.msra.mxu0 0.0
    %1258 = vmatpush.xpose.msra.mxu0 0.0
    %1259 = vmatpush.xpose.msra.mxu0 0.0
    %1260 = vmatpush.xpose.msra.mxu0 0.0
    %1261 = vmatpush.xpose.msra.mxu0 0.0
    %1262 = vmatpush.xpose.msra.mxu0 0.0
    %1263 = vmatpush.xpose.msra.mxu0 0.0
    %1264 = vmatpush.xpose.msra.mxu0 0.0
    %1265 = vmatpush.xpose.msra.mxu0 0.0
    %1266 = vmatpush.xpose.msra.mxu0 0.0
    %1267 = vmatpush.xpose.msra.mxu0 0.0
    %1268 = vmatpush.xpose.msra.mxu0 0.0
    %1269 = vmatpush.xpose.msra.mxu0 0.0
    %1270 = vmatpush.xpose.msra.mxu0 0.0
    %1271 = vmatpush.xpose.msra.mxu0 %v1254
    %1272 = vmatmul.f32.gmra.mxu0 %v1251
    %v1273 = vpop.f32.mrf.mxu0
    %v1274 = vadd.f32 0.0, %v1273
    %1275 = vdwg.mxu0
    %v1277 = vsel %vm359, %v1206, 0
    %v1280 = vsel %vm359, %v1243, 0
    %1282 = vmatpush.xpose.msra.mxu0 0.0
    %1283 = vmatpush.xpose.msra.mxu0 0.0
    %1284 = vmatpush.xpose.msra.mxu0 0.0
    %1285 = vmatpush.xpose.msra.mxu0 0.0
    %1286 = vmatpush.xpose.msra.mxu0 0.0
    %1287 = vmatpush.xpose.msra.mxu0 0.0
    %1288 = vmatpush.xpose.msra.mxu0 0.0
    %1289 = vmatpush.xpose.msra.mxu0 0.0
    %1290 = vmatpush.xpose.msra.mxu0 0.0
    %1291 = vmatpush.xpose.msra.mxu0 0.0
    %1292 = vmatpush.xpose.msra.mxu0 0.0
    %1293 = vmatpush.xpose.msra.mxu0 0.0
    %1294 = vmatpush.xpose.msra.mxu0 0.0
    %1295 = vmatpush.xpose.msra.mxu0 0.0
    %1296 = vmatpush.xpose.msra.mxu0 0.0
    %1297 = vmatpush.xpose.msra.mxu0 %v1280
    %1298 = vmatmul.f32.gmra.mxu0 %v1277
    %v1299 = vpop.f32.mrf.mxu0
    %v1300 = vadd.f32 0.0, %v1299
    %1301 = vdwg.mxu0
    %v1302 = vmul.f32 %v1274, 0.35355338
    %v1303 = vmul.f32 %v1300, 0.35355338
    %v1304 = vsel %vm359, %v1302, -inf
    %1305 = vmax.xlane.f32.xlu0 %v1304
    %v1306 = vpop.xlane.xlu0 %1305
    %v1307 = vsel %vm359, %v1303, -inf
    %1308 = vmax.xlane.f32.xlu0 %v1307
    %v1309 = vpop.xlane.xlu0 %1308
    %v1310 = vsub.f32 %v1302, %v1306
    %v1311 = vsub.f32 %v1303, %v1309
    %v1312 = vmul.f32 %v1310, 1.442695
    %v1313 = vpow.pop %v1312
    %v1314 = vmul.f32 %v1311, 1.442695
    %v1315 = vpow.pop %v1314
    %v1316 = vsel %vm359, %v1313, 0.0
    %1317 = vadd.xlane.f32.xlu0 %v1316
    %v1318 = vpop.xlane.xlu0 %1317
    %v1319 = vsel %vm359, %v1315, 0.0
    %1320 = vadd.xlane.f32.xlu0 %v1319
    %v1321 = vpop.xlane.xlu0 %1320
    %v1322 = vrcp.pop %v1318
    %v1323 = vmul.f32 %v1318, %v1322
    %v1324 = vsub.f32 1.0, %v1323
    %v1325 = vmul.f32 %v1322, %v1324
    %v1326 = vadd.f32 %v1322, %v1325
    %vm1327 = vweird.f32 %v1318
    %vm1328 = vweird.f32 %v1322
    %vm1329 = vmor %vm1327, %vm1328
    %v1330 = vsel %vm1329, %v1322, %v1326
    %v1331 = vand.u32 2147483647, %v1318
    %vm1332 = vcmp.eq.f32.partialorder %v1331, 8.507059e+37
    %v1333 = vand.u32 %v1318, 2147483648
    %v1334 = vor.u32 1.1754944e-38, %v1333
    %v1335 = vsel %vm1332, %v1334, %v1330
    %v1336 = vmul.f32 %v1313, %v1335
    %v1337 = vrcp.pop %v1321
    %v1338 = vmul.f32 %v1321, %v1337
    %v1339 = vsub.f32 1.0, %v1338
    %v1340 = vmul.f32 %v1337, %v1339
    %v1341 = vadd.f32 %v1337, %v1340
    %vm1342 = vweird.f32 %v1321
    %vm1343 = vweird.f32 %v1337
    %vm1344 = vmor %vm1342, %vm1343
    %v1345 = vsel %vm1344, %v1337, %v1341
    %v1346 = vand.u32 2147483647, %v1321
    %vm1347 = vcmp.eq.f32.partialorder %v1346, 8.507059e+37
    %v1348 = vand.u32 %v1321, 2147483648
    %v1349 = vor.u32 1.1754944e-38, %v1348
    %v1350 = vsel %vm1347, %v1349, %v1345
    %v1351 = vmul.f32 %v1315, %v1350
    %1352 = vrot.lane.b32.xlu0 %v1240, 96
    %v1353 = vpop.permute.xlu0 %1352
    %v1356 = vsel %vm359, %v1336, 0
    %1358 = vmatpush.msra.mxu0 0.0
    %1359 = vmatpush.msra.mxu0 0.0
    %1360 = vmatpush.msra.mxu0 0.0
    %1361 = vmatpush.msra.mxu0 0.0
    %1362 = vmatpush.msra.mxu0 0.0
    %1363 = vmatpush.msra.mxu0 0.0
    %1364 = vmatpush.msra.mxu0 0.0
    %1365 = vmatpush.msra.mxu0 0.0
    %1366 = vmatpush.msra.mxu0 0.0
    %1367 = vmatpush.msra.mxu0 0.0
    %1368 = vmatpush.msra.mxu0 0.0
    %1369 = vmatpush.msra.mxu0 0.0
    %1370 = vmatpush.msra.mxu0 0.0
    %1371 = vmatpush.msra.mxu0 0.0
    %1372 = vmatpush.msra.mxu0 0.0
    %1373 = vmatpush.msra.mxu0 %v1353
    %1374 = vmatmul.f32.gmra.mxu0 %v1356
    %v1375 = vpop.f32.mrf.mxu0
    %v1376 = vadd.f32 0.0, %v1375
    %1377 = vdwg.mxu0
    %1378 = vrot.lane.b32.xlu0 %v1243, 96
    %v1379 = vpop.permute.xlu0 %1378
    %v1382 = vsel %vm359, %v1351, 0
    %1384 = vmatpush.msra.mxu0 0.0
    %1385 = vmatpush.msra.mxu0 0.0
    %1386 = vmatpush.msra.mxu0 0.0
    %1387 = vmatpush.msra.mxu0 0.0
    %1388 = vmatpush.msra.mxu0 0.0
    %1389 = vmatpush.msra.mxu0 0.0
    %1390 = vmatpush.msra.mxu0 0.0
    %1391 = vmatpush.msra.mxu0 0.0
    %1392 = vmatpush.msra.mxu0 0.0
    %1393 = vmatpush.msra.mxu0 0.0
    %1394 = vmatpush.msra.mxu0 0.0
    %1395 = vmatpush.msra.mxu0 0.0
    %1396 = vmatpush.msra.mxu0 0.0
    %1397 = vmatpush.msra.mxu0 0.0
    %1398 = vmatpush.msra.mxu0 0.0
    %1399 = vmatpush.msra.mxu0 %v1379
    %1400 = vmatmul.f32.gmra.mxu0 %v1382
    %v1401 = vpop.f32.mrf.mxu0
    %v1402 = vadd.f32 0.0, %v1401
    %1403 = vdwg.mxu0
    %1404 = vrot.lane.b32.xlu0 %v1203, 120
    %v1405 = vpop.permute.xlu0 %1404
    %1406 = vrot.lane.b32.xlu0 %v1240, 120
    %v1407 = vpop.permute.xlu0 %1406
    %v1408 = vsel %vm359, %v1405, 0
    %v1410 = vsel %vm359, %v1407, 0
    %1412 = vmatpush.xpose.msra.mxu0 0.0
    %1413 = vmatpush.xpose.msra.mxu0 0.0
    %1414 = vmatpush.xpose.msra.mxu0 0.0
    %1415 = vmatpush.xpose.msra.mxu0 0.0
    %1416 = vmatpush.xpose.msra.mxu0 0.0
    %1417 = vmatpush.xpose.msra.mxu0 0.0
    %1418 = vmatpush.xpose.msra.mxu0 0.0
    %1419 = vmatpush.xpose.msra.mxu0 0.0
    %1420 = vmatpush.xpose.msra.mxu0 0.0
    %1421 = vmatpush.xpose.msra.mxu0 0.0
    %1422 = vmatpush.xpose.msra.mxu0 0.0
    %1423 = vmatpush.xpose.msra.mxu0 0.0
    %1424 = vmatpush.xpose.msra.mxu0 0.0
    %1425 = vmatpush.xpose.msra.mxu0 0.0
    %1426 = vmatpush.xpose.msra.mxu0 0.0
    %1427 = vmatpush.xpose.msra.mxu0 %v1410
    %1428 = vmatmul.f32.gmra.mxu0 %v1408
    %v1429 = vpop.f32.mrf.mxu0
    %v1430 = vadd.f32 0.0, %v1429
    %1431 = vdwg.mxu0
    %1432 = vrot.lane.b32.xlu0 %v1206, 120
    %v1433 = vpop.permute.xlu0 %1432
    %1434 = vrot.lane.b32.xlu0 %v1243, 120
    %v1435 = vpop.permute.xlu0 %1434
    %v1436 = vsel %vm359, %v1433, 0
    %v1438 = vsel %vm359, %v1435, 0
    %1440 = vmatpush.xpose.msra.mxu0 0.0
    %1441 = vmatpush.xpose.msra.mxu0 0.0
    %1442 = vmatpush.xpose.msra.mxu0 0.0
    %1443 = vmatpush.xpose.msra.mxu0 0.0
    %1444 = vmatpush.xpose.msra.mxu0 0.0
    %1445 = vmatpush.xpose.msra.mxu0 0.0
    %1446 = vmatpush.xpose.msra.mxu0 0.0
    %1447 = vmatpush.xpose.msra.mxu0 0.0
    %1448 = vmatpush.xpose.msra.mxu0 0.0
    %1449 = vmatpush.xpose.msra.mxu0 0.0
    %1450 = vmatpush.xpose.msra.mxu0 0.0
    %1451 = vmatpush.xpose.msra.mxu0 0.0
    %1452 = vmatpush.xpose.msra.mxu0 0.0
    %1453 = vmatpush.xpose.msra.mxu0 0.0
    %1454 = vmatpush.xpose.msra.mxu0 0.0
    %1455 = vmatpush.xpose.msra.mxu0 %v1438
    %1456 = vmatmul.f32.gmra.mxu0 %v1436
    %v1457 = vpop.f32.mrf.mxu0
    %v1458 = vadd.f32 0.0, %v1457
    %1459 = vdwg.mxu0
    %v1460 = vmul.f32 %v1430, 0.35355338
    %v1461 = vmul.f32 %v1458, 0.35355338
    %v1462 = vsel %vm359, %v1460, -inf
    %1463 = vmax.xlane.f32.xlu0 %v1462
    %v1464 = vpop.xlane.xlu0 %1463
    %v1465 = vsel %vm359, %v1461, -inf
    %1466 = vmax.xlane.f32.xlu0 %v1465
    %v1467 = vpop.xlane.xlu0 %1466
    %v1468 = vsub.f32 %v1460, %v1464
    %v1469 = vsub.f32 %v1461, %v1467
    %v1470 = vmul.f32 %v1468, 1.442695
    %v1471 = vpow.pop %v1470
    %v1472 = vmul.f32 %v1469, 1.442695
    %v1473 = vpow.pop %v1472
    %v1474 = vsel %vm359, %v1471, 0.0
    %1475 = vadd.xlane.f32.xlu0 %v1474
    %v1476 = vpop.xlane.xlu0 %1475
    %v1477 = vsel %vm359, %v1473, 0.0
    %1478 = vadd.xlane.f32.xlu0 %v1477
    %v1479 = vpop.xlane.xlu0 %1478
    %v1480 = vrcp.pop %v1476
    %v1481 = vmul.f32 %v1476, %v1480
    %v1482 = vsub.f32 1.0, %v1481
    %v1483 = vmul.f32 %v1480, %v1482
    %v1484 = vadd.f32 %v1480, %v1483
    %vm1485 = vweird.f32 %v1476
    %vm1486 = vweird.f32 %v1480
    %vm1487 = vmor %vm1485, %vm1486
    %v1488 = vsel %vm1487, %v1480, %v1484
    %v1489 = vand.u32 2147483647, %v1476
    %vm1490 = vcmp.eq.f32.partialorder %v1489, 8.507059e+37
    %v1491 = vand.u32 %v1476, 2147483648
    %v1492 = vor.u32 1.1754944e-38, %v1491
    %v1493 = vsel %vm1490, %v1492, %v1488
    %v1494 = vmul.f32 %v1471, %v1493
    %v1495 = vrcp.pop %v1479
    %v1496 = vmul.f32 %v1479, %v1495
    %v1497 = vsub.f32 1.0, %v1496
    %v1498 = vmul.f32 %v1495, %v1497
    %v1499 = vadd.f32 %v1495, %v1498
    %vm1500 = vweird.f32 %v1479
    %vm1501 = vweird.f32 %v1495
    %vm1502 = vmor %vm1500, %vm1501
    %v1503 = vsel %vm1502, %v1495, %v1499
    %v1504 = vand.u32 2147483647, %v1479
    %vm1505 = vcmp.eq.f32.partialorder %v1504, 8.507059e+37
    %v1506 = vand.u32 %v1479, 2147483648
    %v1507 = vor.u32 1.1754944e-38, %v1506
    %v1508 = vsel %vm1505, %v1507, %v1503
    %v1509 = vmul.f32 %v1473, %v1508
    %1510 = vrot.lane.b32.xlu0 %v1240, 88
    %v1511 = vpop.permute.xlu0 %1510
    %v1514 = vsel %vm359, %v1494, 0
    %1516 = vmatpush.msra.mxu0 0.0
    %1517 = vmatpush.msra.mxu0 0.0
    %1518 = vmatpush.msra.mxu0 0.0
    %1519 = vmatpush.msra.mxu0 0.0
    %1520 = vmatpush.msra.mxu0 0.0
    %1521 = vmatpush.msra.mxu0 0.0
    %1522 = vmatpush.msra.mxu0 0.0
    %1523 = vmatpush.msra.mxu0 0.0
    %1524 = vmatpush.msra.mxu0 0.0
    %1525 = vmatpush.msra.mxu0 0.0
    %1526 = vmatpush.msra.mxu0 0.0
    %1527 = vmatpush.msra.mxu0 0.0
    %1528 = vmatpush.msra.mxu0 0.0
    %1529 = vmatpush.msra.mxu0 0.0
    %1530 = vmatpush.msra.mxu0 0.0
    %1531 = vmatpush.msra.mxu0 %v1511
    %1532 = vmatmul.f32.gmra.mxu0 %v1514
    %v1533 = vpop.f32.mrf.mxu0
    %v1534 = vadd.f32 0.0, %v1533
    %1535 = vdwg.mxu0
    %1536 = vrot.lane.b32.xlu0 %v1243, 88
    %v1537 = vpop.permute.xlu0 %1536
    %v1540 = vsel %vm359, %v1509, 0
    %1542 = vmatpush.msra.mxu0 0.0
    %1543 = vmatpush.msra.mxu0 0.0
    %1544 = vmatpush.msra.mxu0 0.0
    %1545 = vmatpush.msra.mxu0 0.0
    %1546 = vmatpush.msra.mxu0 0.0
    %1547 = vmatpush.msra.mxu0 0.0
    %1548 = vmatpush.msra.mxu0 0.0
    %1549 = vmatpush.msra.mxu0 0.0
    %1550 = vmatpush.msra.mxu0 0.0
    %1551 = vmatpush.msra.mxu0 0.0
    %1552 = vmatpush.msra.mxu0 0.0
    %1553 = vmatpush.msra.mxu0 0.0
    %1554 = vmatpush.msra.mxu0 0.0
    %1555 = vmatpush.msra.mxu0 0.0
    %1556 = vmatpush.msra.mxu0 0.0
    %1557 = vmatpush.msra.mxu0 %v1537
    %1558 = vmatmul.f32.gmra.mxu0 %v1540
    %v1559 = vpop.f32.mrf.mxu0
    %v1560 = vadd.f32 0.0, %v1559
    %1561 = vdwg.mxu0
    %v1563 = vsel %vm359, %v1534, 0
    %v1566 = vsel %vm359, %v1560, 0
    %1568 = vmatpush.msra.mxu0 0.0
    %1569 = vmatpush.msra.mxu0 0.0
    %1570 = vmatpush.msra.mxu0 0.0
    %1571 = vmatpush.msra.mxu0 0.0
    %1572 = vmatpush.msra.mxu0 0.0
    %1573 = vmatpush.msra.mxu0 0.0
    %1574 = vmatpush.msra.mxu0 0.0
    %1575 = vmatpush.msra.mxu0 0.0
    %1576 = vmatpush.msra.mxu0 0.0
    %1577 = vmatpush.msra.mxu0 0.0
    %1578 = vmatpush.msra.mxu0 0.0
    %1579 = vmatpush.msra.mxu0 0.0
    %1580 = vmatpush.msra.mxu0 0.0
    %1581 = vmatpush.msra.mxu0 0.0
    %1582 = vmatpush.msra.mxu0 0.0
    %1583 = vmatpush.msra.mxu0 %v1246
    %1584 = vmatmul.f32.gmra.mxu0 %v1563
    %v1585 = vpop.f32.mrf.mxu0
    %v1586 = vadd.f32 0.0, %v1585
    %1587 = vmatmul.f32.gmra.mxu0 %v1566
    %v1588 = vpop.f32.mrf.mxu0
    %v1589 = vadd.f32 0.0, %v1588
    %1590 = vdwg.mxu0
    %v1592 = vsel %vm359, %v1376, 0
    %v1595 = vsel %vm359, %v1402, 0
    %1597 = vmatpush.msra.mxu0 0.0
    %1598 = vmatpush.msra.mxu0 0.0
    %1599 = vmatpush.msra.mxu0 0.0
    %1600 = vmatpush.msra.mxu0 0.0
    %1601 = vmatpush.msra.mxu0 0.0
    %1602 = vmatpush.msra.mxu0 0.0
    %1603 = vmatpush.msra.mxu0 0.0
    %1604 = vmatpush.msra.mxu0 0.0
    %1605 = vmatpush.msra.mxu0 0.0
    %1606 = vmatpush.msra.mxu0 0.0
    %1607 = vmatpush.msra.mxu0 0.0
    %1608 = vmatpush.msra.mxu0 0.0
    %1609 = vmatpush.msra.mxu0 0.0
    %1610 = vmatpush.msra.mxu0 0.0
    %1611 = vmatpush.msra.mxu0 0.0
    %1612 = vmatpush.msra.mxu0 %v1245
    %1613 = vmatmul.f32.gmra.mxu0 %v1592
    %v1614 = vpop.f32.mrf.mxu0
    %v1615 = vadd.f32 %v1586, %v1614
    %1616 = vmatmul.f32.gmra.mxu0 %v1595
    %v1617 = vpop.f32.mrf.mxu0
    %v1618 = vadd.f32 %v1589, %v1617
    %1619 = vdwg.mxu0
    %1620 = vrot.lane.b32.xlu0 %v1203, 112
    %v1621 = vpop.permute.xlu0 %1620
    %1622 = vrot.lane.b32.xlu0 %v1240, 112
    %v1623 = vpop.permute.xlu0 %1622
    %v1624 = vsel %vm359, %v1621, 0
    %v1626 = vsel %vm359, %v1623, 0
    %1628 = vmatpush.xpose.msra.mxu0 0.0
    %1629 = vmatpush.xpose.msra.mxu0 0.0
    %1630 = vmatpush.xpose.msra.mxu0 0.0
    %1631 = vmatpush.xpose.msra.mxu0 0.0
    %1632 = vmatpush.xpose.msra.mxu0 0.0
    %1633 = vmatpush.xpose.msra.mxu0 0.0
    %1634 = vmatpush.xpose.msra.mxu0 0.0
    %1635 = vmatpush.xpose.msra.mxu0 0.0
    %1636 = vmatpush.xpose.msra.mxu0 0.0
    %1637 = vmatpush.xpose.msra.mxu0 0.0
    %1638 = vmatpush.xpose.msra.mxu0 0.0
    %1639 = vmatpush.xpose.msra.mxu0 0.0
    %1640 = vmatpush.xpose.msra.mxu0 0.0
    %1641 = vmatpush.xpose.msra.mxu0 0.0
    %1642 = vmatpush.xpose.msra.mxu0 0.0
    %1643 = vmatpush.xpose.msra.mxu0 %v1626
    %1644 = vmatmul.f32.gmra.mxu0 %v1624
    %v1645 = vpop.f32.mrf.mxu0
    %v1646 = vadd.f32 0.0, %v1645
    %1647 = vdwg.mxu0
    %1648 = vrot.lane.b32.xlu0 %v1206, 112
    %v1649 = vpop.permute.xlu0 %1648
    %1650 = vrot.lane.b32.xlu0 %v1243, 112
    %v1651 = vpop.permute.xlu0 %1650
    %v1652 = vsel %vm359, %v1649, 0
    %v1654 = vsel %vm359, %v1651, 0
    %1656 = vmatpush.xpose.msra.mxu0 0.0
    %1657 = vmatpush.xpose.msra.mxu0 0.0
    %1658 = vmatpush.xpose.msra.mxu0 0.0
    %1659 = vmatpush.xpose.msra.mxu0 0.0
    %1660 = vmatpush.xpose.msra.mxu0 0.0
    %1661 = vmatpush.xpose.msra.mxu0 0.0
    %1662 = vmatpush.xpose.msra.mxu0 0.0
    %1663 = vmatpush.xpose.msra.mxu0 0.0
    %1664 = vmatpush.xpose.msra.mxu0 0.0
    %1665 = vmatpush.xpose.msra.mxu0 0.0
    %1666 = vmatpush.xpose.msra.mxu0 0.0
    %1667 = vmatpush.xpose.msra.mxu0 0.0
    %1668 = vmatpush.xpose.msra.mxu0 0.0
    %1669 = vmatpush.xpose.msra.mxu0 0.0
    %1670 = vmatpush.xpose.msra.mxu0 0.0
    %1671 = vmatpush.xpose.msra.mxu0 %v1654
    %1672 = vmatmul.f32.gmra.mxu0 %v1652
    %v1673 = vpop.f32.mrf.mxu0
    %v1674 = vadd.f32 0.0, %v1673
    %1675 = vdwg.mxu0
    %v1676 = vmul.f32 %v1646, 0.35355338
    %v1677 = vmul.f32 %v1674, 0.35355338
    %v1678 = vsel %vm359, %v1676, -inf
    %1679 = vmax.xlane.f32.xlu0 %v1678
    %v1680 = vpop.xlane.xlu0 %1679
    %v1681 = vsel %vm359, %v1677, -inf
    %1682 = vmax.xlane.f32.xlu0 %v1681
    %v1683 = vpop.xlane.xlu0 %1682
    %v1684 = vsub.f32 %v1676, %v1680
    %v1685 = vsub.f32 %v1677, %v1683
    %v1686 = vmul.f32 %v1684, 1.442695
    %v1687 = vpow.pop %v1686
    %v1688 = vmul.f32 %v1685, 1.442695
    %v1689 = vpow.pop %v1688
    %v1690 = vsel %vm359, %v1687, 0.0
    %1691 = vadd.xlane.f32.xlu0 %v1690
    %v1692 = vpop.xlane.xlu0 %1691
    %v1693 = vsel %vm359, %v1689, 0.0
    %1694 = vadd.xlane.f32.xlu0 %v1693
    %v1695 = vpop.xlane.xlu0 %1694
    %v1696 = vrcp.pop %v1692
    %v1697 = vmul.f32 %v1692, %v1696
    %v1698 = vsub.f32 1.0, %v1697
    %v1699 = vmul.f32 %v1696, %v1698
    %v1700 = vadd.f32 %v1696, %v1699
    %vm1701 = vweird.f32 %v1692
    %vm1702 = vweird.f32 %v1696
    %vm1703 = vmor %vm1701, %vm1702
    %v1704 = vsel %vm1703, %v1696, %v1700
    %v1705 = vand.u32 2147483647, %v1692
    %vm1706 = vcmp.eq.f32.partialorder %v1705, 8.507059e+37
    %v1707 = vand.u32 %v1692, 2147483648
    %v1708 = vor.u32 1.1754944e-38, %v1707
    %v1709 = vsel %vm1706, %v1708, %v1704
    %v1710 = vmul.f32 %v1687, %v1709
    %v1711 = vrcp.pop %v1695
    %v1712 = vmul.f32 %v1695, %v1711
    %v1713 = vsub.f32 1.0, %v1712
    %v1714 = vmul.f32 %v1711, %v1713
    %v1715 = vadd.f32 %v1711, %v1714
    %vm1716 = vweird.f32 %v1695
    %vm1717 = vweird.f32 %v1711
    %vm1718 = vmor %vm1716, %vm1717
    %v1719 = vsel %vm1718, %v1711, %v1715
    %v1720 = vand.u32 2147483647, %v1695
    %vm1721 = vcmp.eq.f32.partialorder %v1720, 8.507059e+37
    %v1722 = vand.u32 %v1695, 2147483648
    %v1723 = vor.u32 1.1754944e-38, %v1722
    %v1724 = vsel %vm1721, %v1723, %v1719
    %v1725 = vmul.f32 %v1689, %v1724
    %1726 = vrot.lane.b32.xlu0 %v1240, 80
    %v1727 = vpop.permute.xlu0 %1726
    %v1730 = vsel %vm359, %v1710, 0
    %1732 = vmatpush.msra.mxu0 0.0
    %1733 = vmatpush.msra.mxu0 0.0
    %1734 = vmatpush.msra.mxu0 0.0
    %1735 = vmatpush.msra.mxu0 0.0
    %1736 = vmatpush.msra.mxu0 0.0
    %1737 = vmatpush.msra.mxu0 0.0
    %1738 = vmatpush.msra.mxu0 0.0
    %1739 = vmatpush.msra.mxu0 0.0
    %1740 = vmatpush.msra.mxu0 0.0
    %1741 = vmatpush.msra.mxu0 0.0
    %1742 = vmatpush.msra.mxu0 0.0
    %1743 = vmatpush.msra.mxu0 0.0
    %1744 = vmatpush.msra.mxu0 0.0
    %1745 = vmatpush.msra.mxu0 0.0
    %1746 = vmatpush.msra.mxu0 0.0
    %1747 = vmatpush.msra.mxu0 %v1727
    %1748 = vmatmul.f32.gmra.mxu0 %v1730
    %v1749 = vpop.f32.mrf.mxu0
    %v1750 = vadd.f32 0.0, %v1749
    %1751 = vdwg.mxu0
    %1752 = vrot.lane.b32.xlu0 %v1243, 80
    %v1753 = vpop.permute.xlu0 %1752
    %v1756 = vsel %vm359, %v1725, 0
    %1758 = vmatpush.msra.mxu0 0.0
    %1759 = vmatpush.msra.mxu0 0.0
    %1760 = vmatpush.msra.mxu0 0.0
    %1761 = vmatpush.msra.mxu0 0.0
    %1762 = vmatpush.msra.mxu0 0.0
    %1763 = vmatpush.msra.mxu0 0.0
    %1764 = vmatpush.msra.mxu0 0.0
    %1765 = vmatpush.msra.mxu0 0.0
    %1766 = vmatpush.msra.mxu0 0.0
    %1767 = vmatpush.msra.mxu0 0.0
    %1768 = vmatpush.msra.mxu0 0.0
    %1769 = vmatpush.msra.mxu0 0.0
    %1770 = vmatpush.msra.mxu0 0.0
    %1771 = vmatpush.msra.mxu0 0.0
    %1772 = vmatpush.msra.mxu0 0.0
    %1773 = vmatpush.msra.mxu0 %v1753
    %1774 = vmatmul.f32.gmra.mxu0 %v1756
    %v1775 = vpop.f32.mrf.mxu0
    %v1776 = vadd.f32 0.0, %v1775
    %1777 = vdwg.mxu0
    %v1779 = vsel %vm359, %v1750, 0
    %v1782 = vsel %vm359, %v1776, 0
    %1784 = vmatpush.msra.mxu0 0.0
    %1785 = vmatpush.msra.mxu0 0.0
    %1786 = vmatpush.msra.mxu0 0.0
    %1787 = vmatpush.msra.mxu0 0.0
    %1788 = vmatpush.msra.mxu0 0.0
    %1789 = vmatpush.msra.mxu0 0.0
    %1790 = vmatpush.msra.mxu0 0.0
    %1791 = vmatpush.msra.mxu0 0.0
    %1792 = vmatpush.msra.mxu0 0.0
    %1793 = vmatpush.msra.mxu0 0.0
    %1794 = vmatpush.msra.mxu0 0.0
    %1795 = vmatpush.msra.mxu0 0.0
    %1796 = vmatpush.msra.mxu0 0.0
    %1797 = vmatpush.msra.mxu0 0.0
    %1798 = vmatpush.msra.mxu0 0.0
    %1799 = vmatpush.msra.mxu0 %v1247
    %1800 = vmatmul.f32.gmra.mxu0 %v1779
    %v1801 = vpop.f32.mrf.mxu0
    %v1802 = vadd.f32 0.0, %v1801
    %1803 = vmatmul.f32.gmra.mxu0 %v1782
    %v1804 = vpop.f32.mrf.mxu0
    %v1805 = vadd.f32 0.0, %v1804
    %1806 = vdwg.mxu0
    %v1807 = vadd.f32 %v1615, %v1802
    %v1808 = vadd.f32 %v1618, %v1805
    %1809 = vrot.lane.b32.xlu0 %v1203, 104
    %v1810 = vpop.permute.xlu0 %1809
    %1811 = vrot.lane.b32.xlu0 %v1240, 104
    %v1812 = vpop.permute.xlu0 %1811
    %v1813 = vsel %vm359, %v1810, 0
    %v1815 = vsel %vm359, %v1812, 0
    %1817 = vmatpush.xpose.msra.mxu0 0.0
    %1818 = vmatpush.xpose.msra.mxu0 0.0
    %1819 = vmatpush.xpose.msra.mxu0 0.0
    %1820 = vmatpush.xpose.msra.mxu0 0.0
    %1821 = vmatpush.xpose.msra.mxu0 0.0
    %1822 = vmatpush.xpose.msra.mxu0 0.0
    %1823 = vmatpush.xpose.msra.mxu0 0.0
    %1824 = vmatpush.xpose.msra.mxu0 0.0
    %1825 = vmatpush.xpose.msra.mxu0 0.0
    %1826 = vmatpush.xpose.msra.mxu0 0.0
    %1827 = vmatpush.xpose.msra.mxu0 0.0
    %1828 = vmatpush.xpose.msra.mxu0 0.0
    %1829 = vmatpush.xpose.msra.mxu0 0.0
    %1830 = vmatpush.xpose.msra.mxu0 0.0
    %1831 = vmatpush.xpose.msra.mxu0 0.0
    %1832 = vmatpush.xpose.msra.mxu0 %v1815
    %1833 = vmatmul.f32.gmra.mxu0 %v1813
    %v1834 = vpop.f32.mrf.mxu0
    %v1835 = vadd.f32 0.0, %v1834
    %1836 = vdwg.mxu0
    %1837 = vrot.lane.b32.xlu0 %v1206, 104
    %v1838 = vpop.permute.xlu0 %1837
    %1839 = vrot.lane.b32.xlu0 %v1243, 104
    %v1840 = vpop.permute.xlu0 %1839
    %v1841 = vsel %vm359, %v1838, 0
    %v1843 = vsel %vm359, %v1840, 0
    %1845 = vmatpush.xpose.msra.mxu0 0.0
    %1846 = vmatpush.xpose.msra.mxu0 0.0
    %1847 = vmatpush.xpose.msra.mxu0 0.0
    %1848 = vmatpush.xpose.msra.mxu0 0.0
    %1849 = vmatpush.xpose.msra.mxu0 0.0
    %1850 = vmatpush.xpose.msra.mxu0 0.0
    %1851 = vmatpush.xpose.msra.mxu0 0.0
    %1852 = vmatpush.xpose.msra.mxu0 0.0
    %1853 = vmatpush.xpose.msra.mxu0 0.0
    %1854 = vmatpush.xpose.msra.mxu0 0.0
    %1855 = vmatpush.xpose.msra.mxu0 0.0
    %1856 = vmatpush.xpose.msra.mxu0 0.0
    %1857 = vmatpush.xpose.msra.mxu0 0.0
    %1858 = vmatpush.xpose.msra.mxu0 0.0
    %1859 = vmatpush.xpose.msra.mxu0 0.0
    %1860 = vmatpush.xpose.msra.mxu0 %v1843
    %1861 = vmatmul.f32.gmra.mxu0 %v1841
    %v1862 = vpop.f32.mrf.mxu0
    %v1863 = vadd.f32 0.0, %v1862
    %1864 = vdwg.mxu0
    %v1865 = vmul.f32 %v1835, 0.35355338
    %v1866 = vmul.f32 %v1863, 0.35355338
    %v1867 = vsel %vm359, %v1865, -inf
    %1868 = vmax.xlane.f32.xlu0 %v1867
    %v1869 = vpop.xlane.xlu0 %1868
    %v1870 = vsel %vm359, %v1866, -inf
    %1871 = vmax.xlane.f32.xlu0 %v1870
    %v1872 = vpop.xlane.xlu0 %1871
    %v1873 = vsub.f32 %v1865, %v1869
    %v1874 = vsub.f32 %v1866, %v1872
    %v1875 = vmul.f32 %v1873, 1.442695
    %v1876 = vpow.pop %v1875
    %v1877 = vmul.f32 %v1874, 1.442695
    %v1878 = vpow.pop %v1877
    %v1879 = vsel %vm359, %v1876, 0.0
    %1880 = vadd.xlane.f32.xlu0 %v1879
    %v1881 = vpop.xlane.xlu0 %1880
    %v1882 = vsel %vm359, %v1878, 0.0
    %1883 = vadd.xlane.f32.xlu0 %v1882
    %v1884 = vpop.xlane.xlu0 %1883
    %v1885 = vrcp.pop %v1881
    %v1886 = vmul.f32 %v1881, %v1885
    %v1887 = vsub.f32 1.0, %v1886
    %v1888 = vmul.f32 %v1885, %v1887
    %v1889 = vadd.f32 %v1885, %v1888
    %vm1890 = vweird.f32 %v1881
    %vm1891 = vweird.f32 %v1885
    %vm1892 = vmor %vm1890, %vm1891
    %v1893 = vsel %vm1892, %v1885, %v1889
    %v1894 = vand.u32 2147483647, %v1881
    %vm1895 = vcmp.eq.f32.partialorder %v1894, 8.507059e+37
    %v1896 = vand.u32 %v1881, 2147483648
    %v1897 = vor.u32 1.1754944e-38, %v1896
    %v1898 = vsel %vm1895, %v1897, %v1893
    %v1899 = vmul.f32 %v1876, %v1898
    %v1900 = vrcp.pop %v1884
    %v1901 = vmul.f32 %v1884, %v1900
    %v1902 = vsub.f32 1.0, %v1901
    %v1903 = vmul.f32 %v1900, %v1902
    %v1904 = vadd.f32 %v1900, %v1903
    %vm1905 = vweird.f32 %v1884
    %vm1906 = vweird.f32 %v1900
    %vm1907 = vmor %vm1905, %vm1906
    %v1908 = vsel %vm1907, %v1900, %v1904
    %v1909 = vand.u32 2147483647, %v1884
    %vm1910 = vcmp.eq.f32.partialorder %v1909, 8.507059e+37
    %v1911 = vand.u32 %v1884, 2147483648
    %v1912 = vor.u32 1.1754944e-38, %v1911
    %v1913 = vsel %vm1910, %v1912, %v1908
    %v1914 = vmul.f32 %v1878, %v1913
    %1915 = vrot.lane.b32.xlu0 %v1240, 72
    %v1916 = vpop.permute.xlu0 %1915
    %v1919 = vsel %vm359, %v1899, 0
    %1921 = vmatpush.msra.mxu0 0.0
    %1922 = vmatpush.msra.mxu0 0.0
    %1923 = vmatpush.msra.mxu0 0.0
    %1924 = vmatpush.msra.mxu0 0.0
    %1925 = vmatpush.msra.mxu0 0.0
    %1926 = vmatpush.msra.mxu0 0.0
    %1927 = vmatpush.msra.mxu0 0.0
    %1928 = vmatpush.msra.mxu0 0.0
    %1929 = vmatpush.msra.mxu0 0.0
    %1930 = vmatpush.msra.mxu0 0.0
    %1931 = vmatpush.msra.mxu0 0.0
    %1932 = vmatpush.msra.mxu0 0.0
    %1933 = vmatpush.msra.mxu0 0.0
    %1934 = vmatpush.msra.mxu0 0.0
    %1935 = vmatpush.msra.mxu0 0.0
    %1936 = vmatpush.msra.mxu0 %v1916
    %1937 = vmatmul.f32.gmra.mxu0 %v1919
    %v1938 = vpop.f32.mrf.mxu0
    %v1939 = vadd.f32 0.0, %v1938
    %1940 = vdwg.mxu0
    %1941 = vrot.lane.b32.xlu0 %v1243, 72
    %v1942 = vpop.permute.xlu0 %1941
    %v1945 = vsel %vm359, %v1914, 0
    %1947 = vmatpush.msra.mxu0 0.0
    %1948 = vmatpush.msra.mxu0 0.0
    %1949 = vmatpush.msra.mxu0 0.0
    %1950 = vmatpush.msra.mxu0 0.0
    %1951 = vmatpush.msra.mxu0 0.0
    %1952 = vmatpush.msra.mxu0 0.0
    %1953 = vmatpush.msra.mxu0 0.0
    %1954 = vmatpush.msra.mxu0 0.0
    %1955 = vmatpush.msra.mxu0 0.0
    %1956 = vmatpush.msra.mxu0 0.0
    %1957 = vmatpush.msra.mxu0 0.0
    %1958 = vmatpush.msra.mxu0 0.0
    %1959 = vmatpush.msra.mxu0 0.0
    %1960 = vmatpush.msra.mxu0 0.0
    %1961 = vmatpush.msra.mxu0 0.0
    %1962 = vmatpush.msra.mxu0 %v1942
    %1963 = vmatmul.f32.gmra.mxu0 %v1945
    %v1964 = vpop.f32.mrf.mxu0
    %v1965 = vadd.f32 0.0, %v1964
    %1966 = vdwg.mxu0
    %v1968 = vsel %vm359, %v1939, 0
    %v1971 = vsel %vm359, %v1965, 0
    %1973 = vmatpush.msra.mxu0 0.0
    %1974 = vmatpush.msra.mxu0 0.0
    %1975 = vmatpush.msra.mxu0 0.0
    %1976 = vmatpush.msra.mxu0 0.0
    %1977 = vmatpush.msra.mxu0 0.0
    %1978 = vmatpush.msra.mxu0 0.0
    %1979 = vmatpush.msra.mxu0 0.0
    %1980 = vmatpush.msra.mxu0 0.0
    %1981 = vmatpush.msra.mxu0 0.0
    %1982 = vmatpush.msra.mxu0 0.0
    %1983 = vmatpush.msra.mxu0 0.0
    %1984 = vmatpush.msra.mxu0 0.0
    %1985 = vmatpush.msra.mxu0 0.0
    %1986 = vmatpush.msra.mxu0 0.0
    %1987 = vmatpush.msra.mxu0 0.0
    %1988 = vmatpush.msra.mxu0 %v1248
    %1989 = vmatmul.f32.gmra.mxu0 %v1968
    %v1990 = vpop.f32.mrf.mxu0
    %v1991 = vadd.f32 0.0, %v1990
    %1992 = vmatmul.f32.gmra.mxu0 %v1971
    %v1993 = vpop.f32.mrf.mxu0
    %v1994 = vadd.f32 0.0, %v1993
    %1995 = vdwg.mxu0
    %v1996 = vadd.f32 %v1807, %v1991
    %v1997 = vadd.f32 %v1808, %v1994
    %v1999 = vperm.slane %v1249, 0
    %v2001 = vadd.f32 %v1996, %v1999
    %v2002 = vadd.f32 %v1997, %v1999
    %v2003 = vadd.f32 %v1169, %v2001
    %v2004 = vadd.f32 %v1170, %v2002
    %v2005 = vsel %vm321, %v2003, 0.0
    %2006 = vadd.xlane.f32.xlu0 %v2005
    %v2007 = vpop.xlane.xlu0 %2006
    %v2008 = vsel %vm321, %v2004, 0.0
    %2009 = vadd.xlane.f32.xlu0 %v2008
    %v2010 = vpop.xlane.xlu0 %2009
    %v2011 = vmul.f32 %v2007, %v1126
    %v2012 = vmul.f32 %v2010, %v1126
    %v2013 = vsub.f32 %v2003, %v2011
    %v2014 = vsub.f32 %v2004, %v2012
    %v2015 = vmul.f32 %v2013, %v2013
    %v2016 = vmul.f32 %v2014, %v2014
    %v2017 = vsel %vm321, %v2015, 0.0
    %2018 = vadd.xlane.f32.xlu0 %v2017
    %v2019 = vpop.xlane.xlu0 %2018
    %v2020 = vsel %vm321, %v2016, 0.0
    %2021 = vadd.xlane.f32.xlu0 %v2020
    %v2022 = vpop.xlane.xlu0 %2021
    %v2023 = vmul.f32 %v2019, %v1126
    %v2024 = vmul.f32 %v2022, %v1126
    %v2025 = vadd.f32 %v2023, 1e-05
    %v2026 = vadd.f32 %v2024, 1e-05
    %v2027 = vrsqrt.pop %v2025
    %v2028 = vmul.f32 %v2027, %v2025
    %v2029 = vmul.f32 %v2028, %v2027
    %v2030 = vmul.f32 0.5, %v2029
    %v2031 = vsub.f32 1.5, %v2030
    %v2032 = vmul.f32 %v2027, %v2031
    %vm2033 = vweird.f32 %v2025
    %vm2034 = vweird.f32 %v2027
    %vm2035 = vmor %vm2033, %vm2034
    %v2036 = vsel %vm2035, %v2027, %v2032
    %v2037 = vrsqrt.pop %v2026
    %v2038 = vmul.f32 %v2037, %v2026
    %v2039 = vmul.f32 %v2038, %v2037
    %v2040 = vmul.f32 0.5, %v2039
    %v2041 = vsub.f32 1.5, %v2040
    %v2042 = vmul.f32 %v2037, %v2041
    %vm2043 = vweird.f32 %v2026
    %vm2044 = vweird.f32 %v2037
    %vm2045 = vmor %vm2043, %vm2044
    %v2046 = vsel %vm2045, %v2037, %v2042
    %v2047 = vmul.f32 %v2013, %v2036
    %v2048 = vmul.f32 %v2014, %v2046
    %v2049 = vperm.slane %v311, 1
    %v2050 = vmul.f32 %v2047, %v2049
    %v2051 = vmul.f32 %v2048, %v2049
    %v2052 = vperm.slane %v312, 1
    %v2053 = vadd.f32 %v2050, %v2052
    %v2054 = vadd.f32 %v2051, %v2052
    %v2055 = vld [vmem:[#allocation17] sm:$0xff]
    %v2056 = vld [vmem:[#allocation17 + $0x8] sm:$0xff]
    %v2057 = vld [vmem:[#allocation17 + $0x10] sm:$0xff]
    %v2058 = vld [vmem:[#allocation17 + $0x18] sm:$0xff]
    %v2059 = vld [vmem:[%s43] sm:$0x1]
    %v2061 = vperm.slane %v2059, 0
    %v2064 = vsel %vm321, %v2053, 0
    %v2067 = vsel %vm321, %v2054, 0
    %2069 = vmatpush.msra.mxu0 0.0
    %2070 = vmatpush.msra.mxu0 0.0
    %2071 = vmatpush.msra.mxu0 0.0
    %2072 = vmatpush.msra.mxu0 0.0
    %2073 = vmatpush.msra.mxu0 0.0
    %2074 = vmatpush.msra.mxu0 0.0
    %2075 = vmatpush.msra.mxu0 0.0
    %2076 = vmatpush.msra.mxu0 0.0
    %2077 = vmatpush.msra.mxu0 0.0
    %2078 = vmatpush.msra.mxu0 0.0
    %2079 = vmatpush.msra.mxu0 0.0
    %2080 = vmatpush.msra.mxu0 0.0
    %2081 = vmatpush.msra.mxu0 %v2058
    %2082 = vmatpush.msra.mxu0 %v2057
    %2083 = vmatpush.msra.mxu0 %v2056
    %2084 = vmatpush.msra.mxu0 %v2055
    %2085 = vmatmul.f32.gmra.mxu0 %v2064
    %v2086 = vpop.f32.mrf.mxu0
    %v2087 = vadd.f32 %v2061, %v2086
    %2088 = vmatmul.f32.gmra.mxu0 %v2067
    %v2089 = vpop.f32.mrf.mxu0
    %v2090 = vadd.f32 %v2061, %v2089
    %2091 = vdwg.mxu0
    %v2092 = vmul.f32 %v2087, %v2087
    %v2093 = vmul.f32 %v2090, %v2090
    %v2094 = vmul.f32 %v2087, %v2092
    %v2095 = vmul.f32 %v2090, %v2093
    %v2096 = vmul.f32 %v2094, 0.044715
    %v2097 = vmul.f32 %v2095, 0.044715
    %v2098 = vadd.f32 %v2087, %v2096
    %v2099 = vadd.f32 %v2090, %v2097
    %v2100 = vmul.f32 %v2098, 0.7978846
    %v2101 = vmul.f32 %v2099, 0.7978846
    %v2102 = vtanh.pop %v2100
    %v2103 = vtanh.pop %v2101
    %v2104 = vadd.f32 %v2102, 1.0
    %v2105 = vadd.f32 %v2103, 1.0
    %v2106 = vmul.f32 %v2104, 0.5
    %v2107 = vmul.f32 %v2105, 0.5
    %v2108 = vmul.f32 %v2087, %v2106
    %v2109 = vmul.f32 %v2090, %v2107
    %v2110 = vld [vmem:[%s45] sm:$0xff]
    %v2111 = vld [vmem:[%s45 + $0x8] sm:$0xff]
    %v2112 = vld [vmem:[%s45 + $0x10] sm:$0xff]
    %v2113 = vld [vmem:[%s45 + $0x18] sm:$0xff]
    %v2114 = vld [vmem:[%s45 + $0x20] sm:$0xff]
    %v2115 = vld [vmem:[%s45 + $0x28] sm:$0xff]
    %v2116 = vld [vmem:[%s45 + $0x30] sm:$0xff]
    %v2117 = vld [vmem:[%s45 + $0x38] sm:$0xff]
    %v2118 = vld [vmem:[%s47] sm:$0x1]
    %v2120 = vperm.slane %v2118, 0
    %vm2122 = vcmask 523264
    %v2124 = vsel %vm2122, %v2108, 0
    %v2127 = vsel %vm2122, %v2109, 0
    %2129 = vmatpush.msra.mxu0 0.0
    %2130 = vmatpush.msra.mxu0 0.0
    %2131 = vmatpush.msra.mxu0 0.0
    %2132 = vmatpush.msra.mxu0 0.0
    %2133 = vmatpush.msra.mxu0 0.0
    %2134 = vmatpush.msra.mxu0 0.0
    %2135 = vmatpush.msra.mxu0 0.0
    %2136 = vmatpush.msra.mxu0 0.0
    %2137 = vmatpush.msra.mxu0 %v2117
    %2138 = vmatpush.msra.mxu0 %v2116
    %2139 = vmatpush.msra.mxu0 %v2115
    %2140 = vmatpush.msra.mxu0 %v2114
    %2141 = vmatpush.msra.mxu0 %v2113
    %2142 = vmatpush.msra.mxu0 %v2112
    %2143 = vmatpush.msra.mxu0 %v2111
    %2144 = vmatpush.msra.mxu0 %v2110
    %2145 = vmatmul.f32.gmra.mxu0 %v2124
    %v2146 = vpop.f32.mrf.mxu0
    %v2147 = vadd.f32 %v2120, %v2146
    %2148 = vmatmul.f32.gmra.mxu0 %v2127
    %v2149 = vpop.f32.mrf.mxu0
    %v2150 = vadd.f32 %v2120, %v2149
    %2151 = vdwg.mxu0
    %v2152 = vadd.f32 %v2053, %v2147
    %v2153 = vadd.f32 %v2054, %v2150
    %v2154 = vsel %vm321, %v2152, 0.0
    %2155 = vadd.xlane.f32.xlu0 %v2154
    %v2156 = vpop.xlane.xlu0 %2155
    %v2157 = vsel %vm321, %v2153, 0.0
    %2158 = vadd.xlane.f32.xlu0 %v2157
    %v2159 = vpop.xlane.xlu0 %2158
    %v2160 = vmul.f32 %v2156, %v1126
    %v2161 = vmul.f32 %v2159, %v1126
    %v2162 = vsub.f32 %v2152, %v2160
    %v2163 = vsub.f32 %v2153, %v2161
    %v2164 = vmul.f32 %v2162, %v2162
    %v2165 = vmul.f32 %v2163, %v2163
    %v2166 = vsel %vm321, %v2164, 0.0
    %2167 = vadd.xlane.f32.xlu0 %v2166
    %v2168 = vpop.xlane.xlu0 %2167
    %v2169 = vsel %vm321, %v2165, 0.0
    %2170 = vadd.xlane.f32.xlu0 %v2169
    %v2171 = vpop.xlane.xlu0 %2170
    %v2172 = vmul.f32 %v2168, %v1126
    %v2173 = vmul.f32 %v2171, %v1126
    %v2174 = vadd.f32 %v2172, 1e-05
    %v2175 = vadd.f32 %v2173, 1e-05
    %v2176 = vrsqrt.pop %v2174
    %v2177 = vmul.f32 %v2176, %v2174
    %v2178 = vmul.f32 %v2177, %v2176
    %v2179 = vmul.f32 0.5, %v2178
    %v2180 = vsub.f32 1.5, %v2179
    %v2181 = vmul.f32 %v2176, %v2180
    %vm2182 = vweird.f32 %v2174
    %vm2183 = vweird.f32 %v2176
    %vm2184 = vmor %vm2182, %vm2183
    %v2185 = vsel %vm2184, %v2176, %v2181
    %v2186 = vrsqrt.pop %v2175
    %v2187 = vmul.f32 %v2186, %v2175
    %v2188 = vmul.f32 %v2187, %v2186
    %v2189 = vmul.f32 0.5, %v2188
    %v2190 = vsub.f32 1.5, %v2189
    %v2191 = vmul.f32 %v2186, %v2190
    %vm2192 = vweird.f32 %v2175
    %vm2193 = vweird.f32 %v2186
    %vm2194 = vmor %vm2192, %vm2193
    %v2195 = vsel %vm2194, %v2186, %v2191
    %v2196 = vmul.f32 %v2162, %v2185
    %v2197 = vmul.f32 %v2163, %v2195
    %v2198 = vperm.slane %v311, 2
    %v2199 = vmul.f32 %v2196, %v2198
    %v2200 = vmul.f32 %v2197, %v2198
    %v2201 = vperm.slane %v312, 2
    %v2202 = vadd.f32 %v2199, %v2201
    %v2203 = vadd.f32 %v2200, %v2201
    %v2205 = vperm.slane %v304, 0
    %v2208 = vsel %vm321, %v2202, 0
    %v2211 = vsel %vm321, %v2203, 0
    %2213 = vmatpush.msra.mxu0 0.0
    %2214 = vmatpush.msra.mxu0 0.0
    %2215 = vmatpush.msra.mxu0 0.0
    %2216 = vmatpush.msra.mxu0 0.0
    %2217 = vmatpush.msra.mxu0 0.0
    %2218 = vmatpush.msra.mxu0 0.0
    %2219 = vmatpush.msra.mxu0 0.0
    %2220 = vmatpush.msra.mxu0 0.0
    %2221 = vmatpush.msra.mxu0 0.0
    %2222 = vmatpush.msra.mxu0 0.0
    %2223 = vmatpush.msra.mxu0 0.0
    %2224 = vmatpush.msra.mxu0 0.0
    %2225 = vmatpush.msra.mxu0 %v303
    %2226 = vmatpush.msra.mxu0 %v302
    %2227 = vmatpush.msra.mxu0 %v301
    %2228 = vmatpush.msra.mxu0 %v300
    %2229 = vmatmul.f32.gmra.mxu0 %v2208
    %v2230 = vpop.f32.mrf.mxu0
    %v2231 = vadd.f32 %v2205, %v2230
    %2232 = vmatmul.f32.gmra.mxu0 %v2211
    %v2233 = vpop.f32.mrf.mxu0
    %v2234 = vadd.f32 %v2205, %v2233
    %2235 = vdwg.mxu0
    %v2237 = vperm.slane %v279, 0
    %v2239 = vadd.f32 %v2231, %v2237
    %v2240 = vadd.f32 %v2234, %v2237
    %2241 = vmax.xlane.f32.xlu0 %v2239
    %v2242 = vpop.xlane.xlu0 %2241
    %2243 = vmax.xlane.f32.xlu0 %v2240
    %v2244 = vpop.xlane.xlu0 %2243
    %v2245 = vsub.f32 %v2239, %v2242
    %v2246 = vsub.f32 %v2240, %v2244
    %v2247 = vmul.f32 %v2245, 1.442695
    %v2248 = vpow.pop %v2247
    %v2249 = vmul.f32 %v2246, 1.442695
    %v2250 = vpow.pop %v2249
    %2251 = vadd.xlane.f32.xlu0 %v2248
    %v2252 = vpop.xlane.xlu0 %2251
    %2253 = vadd.xlane.f32.xlu0 %v2250
    %v2254 = vpop.xlane.xlu0 %2253
    %v2255 = vlog2.pop %v2252
    %v2256 = vmul.f32 %v2255, 0.6931472
    %v2257 = vlog2.pop %v2254
    %v2258 = vmul.f32 %v2257, 0.6931472
    %v2259 = vsub.f32 %v2245, %v2256
    %v2260 = vsub.f32 %v2246, %v2258
    %v2261 = vmul.f32 %v2259, %v280
    %v2262 = vmul.f32 %v2260, %v281
    %v2263 = vadd.f32 %v2261, %v2262
    %2264 = vadd.xlane.f32.xlu0 %v2263
    %v2265 = vpop.xlane.xlu0 %2264
    %v2266 = vrot.slane %v2265, 4
    %v2267 = vadd.f32 %v2265, %v2266
    %v2268 = vrot.slane %v2267, 2
    %v2269 = vadd.f32 %v2267, %v2268
    %v2270 = vrot.slane %v2269, 1
    %v2271 = vadd.f32 %v2269, %v2270
    %s2272 = vtos %v2271
    %v2273 = vstv %s2272
    %v2274 = vsub.f32 0.0, %v2273
    %s2275 = scalar_lea.vmem %s49, 4
    %v2276 = vld [vmem:[%s2275] sm:$0x7]
    %s2277 = scalar_lea.vmem %s51, 1
    %v2278 = vld [vmem:[%s2277] sm:$0x1]
    %v2279 = vperm.slane %v2276, 0
    %v2280 = vmul.f32 %v2202, %v2279
    %v2281 = vmul.f32 %v2203, %v2279
    %v2282 = vsel %vm321, %v2280, 0.0
    %2283 = vadd.xlane.f32.xlu0 %v2282
    %v2284 = vpop.xlane.xlu0 %2283
    %v2285 = vsel %vm321, %v2281, 0.0
    %2286 = vadd.xlane.f32.xlu0 %v2285
    %v2287 = vpop.xlane.xlu0 %2286
    %v2289 = vperm.slane %v2278, 0
    %v2291 = vadd.f32 %v2284, %v2289
    %v2292 = vadd.f32 %v2287, %v2289
    %vm2293 = vcmp.gt.f32.partialorder %v2291, 20.0
    %vm2294 = vcmp.gt.f32.partialorder %v2292, 20.0
    %v2295 = vmin.f32 %v2291, 20.0
    %v2296 = vmin.f32 %v2292, 20.0
    %v2297 = vmul.f32 %v2295, 1.442695
    %v2298 = vpow.pop %v2297
    %v2299 = vmul.f32 %v2296, 1.442695
    %v2300 = vpow.pop %v2299
    %v2301 = vadd.f32 %v2298, 1.0
    %v2302 = vadd.f32 %v2300, 1.0
    %v2303 = vlog2.pop %v2301
    %v2304 = vmul.f32 %v2303, 0.6931472
    %v2305 = vlog2.pop %v2302
    %v2306 = vmul.f32 %v2305, 0.6931472
    %v2307 = vsel %vm2293, %v2291, %v2304
    %v2308 = vsel %vm2294, %v2292, %v2306
    %v2309 = vperm.slane %v2276, 1
    %v2310 = vmul.f32 %v2202, %v2309
    %v2311 = vmul.f32 %v2203, %v2309
    %v2312 = vsel %vm321, %v2310, 0.0
    %2313 = vadd.xlane.f32.xlu0 %v2312
    %v2314 = vpop.xlane.xlu0 %2313
    %v2315 = vsel %vm321, %v2311, 0.0
    %2316 = vadd.xlane.f32.xlu0 %v2315
    %v2317 = vpop.xlane.xlu0 %2316
    %v2318 = vadd.f32 %v2314, %v2289
    %v2319 = vadd.f32 %v2317, %v2289
    %vm2320 = vcmp.gt.f32.partialorder %v2318, 20.0
    %vm2321 = vcmp.gt.f32.partialorder %v2319, 20.0
    %v2322 = vmin.f32 %v2318, 20.0
    %v2323 = vmin.f32 %v2319, 20.0
    %v2324 = vmul.f32 %v2322, 1.442695
    %v2325 = vpow.pop %v2324
    %v2326 = vmul.f32 %v2323, 1.442695
    %v2327 = vpow.pop %v2326
    %v2328 = vadd.f32 %v2325, 1.0
    %v2329 = vadd.f32 %v2327, 1.0
    %v2330 = vlog2.pop %v2328
    %v2331 = vmul.f32 %v2330, 0.6931472
    %v2332 = vlog2.pop %v2329
    %v2333 = vmul.f32 %v2332, 0.6931472
    %v2334 = vsel %vm2320, %v2318, %v2331
    %v2335 = vsel %vm2321, %v2319, %v2333
    %2337 = vset.pattern.permute.xlu0 0
    %2338 = vperm.xlu0 %2337, %v2307
    %v2339 = vpop.permute.xlu0 %2338
    %2342 = vset.pattern.permute.xlu0 0
    %2343 = vperm.xlu0 %2342, %v2308
    %v2344 = vpop.permute.xlu0 %2343
    %v2346 = vmul.f32 %v2339, %v2259
    %v2347 = vmul.f32 %v2344, %v2260
    %2348 = vmax.xlane.f32.xlu0 %v2346
    %v2349 = vpop.xlane.xlu0 %2348
    %2350 = vmax.xlane.f32.xlu0 %v2347
    %v2351 = vpop.xlane.xlu0 %2350
    %v2352 = vsub.f32 %v2346, %v2349
    %v2353 = vsub.f32 %v2347, %v2351
    %v2354 = vmul.f32 %v2352, 1.442695
    %v2355 = vpow.pop %v2354
    %v2356 = vmul.f32 %v2353, 1.442695
    %v2357 = vpow.pop %v2356
    %2358 = vadd.xlane.f32.xlu0 %v2355
    %v2359 = vpop.xlane.xlu0 %2358
    %2360 = vadd.xlane.f32.xlu0 %v2357
    %v2361 = vpop.xlane.xlu0 %2360
    %v2362 = vlog2.pop %v2359
    %v2363 = vmul.f32 %v2362, 0.6931472
    %v2364 = vlog2.pop %v2361
    %v2365 = vmul.f32 %v2364, 0.6931472
    %v2366 = vsub.f32 %v2352, %v2363
    %v2367 = vsub.f32 %v2353, %v2365
    %v2368 = vmul.f32 %v2366, 1.442695
    %v2369 = vpow.pop %v2368
    %v2370 = vmul.f32 %v2367, 1.442695
    %v2371 = vpow.pop %v2370
    %v2372 = vsub.f32 %v2366, %v2259
    %v2373 = vsub.f32 %v2367, %v2260
    %v2374 = vmul.f32 %v2369, %v2372
    %v2375 = vmul.f32 %v2371, %v2373
    %v2377 = vperm.slane %v277, 0
    %v2379 = vmul.f32 %v2374, %v2377
    %v2380 = vmul.f32 %v2375, %v2377
    %v2381 = vadd.f32 %v2379, %v2380
    %2382 = vadd.xlane.f32.xlu0 %v2381
    %v2383 = vpop.xlane.xlu0 %2382
    %v2384 = vrot.slane %v2383, 4
    %v2385 = vadd.f32 %v2383, %v2384
    %v2386 = vrot.slane %v2385, 2
    %v2387 = vadd.f32 %v2385, %v2386
    %v2388 = vrot.slane %v2387, 1
    %v2389 = vadd.f32 %v2387, %v2388
    %s2390 = vtos %v2389
    %s2391 = scalar_lea.vmem %s9, 1
    %v2392 = vld [vmem:[%s2391] sm:$0x1]
    %v2394 = vperm.slane %v2392, 0
    %v2396 = vadd.f32 %v2346, %v2394
    %v2397 = vadd.f32 %v2347, %v2394
    %2398 = vmax.xlane.f32.xlu0 %v2396
    %v2399 = vpop.xlane.xlu0 %2398
    %2400 = vmax.xlane.f32.xlu0 %v2397
    %v2401 = vpop.xlane.xlu0 %2400
    %v2402 = vsub.f32 %v2396, %v2399
    %v2403 = vsub.f32 %v2397, %v2401
    %v2404 = vmul.f32 %v2402, 1.442695
    %v2405 = vpow.pop %v2404
    %v2406 = vmul.f32 %v2403, 1.442695
    %v2407 = vpow.pop %v2406
    %2408 = vadd.xlane.f32.xlu0 %v2405
    %v2409 = vpop.xlane.xlu0 %2408
    %2410 = vadd.xlane.f32.xlu0 %v2407
    %v2411 = vpop.xlane.xlu0 %2410
    %v2412 = vlog2.pop %v2409
    %v2413 = vmul.f32 %v2412, 0.6931472
    %v2414 = vlog2.pop %v2411
    %v2415 = vmul.f32 %v2414, 0.6931472
    %v2416 = vsub.f32 %v2402, %v2413
    %v2417 = vsub.f32 %v2403, %v2415
    %v2418 = vmul.f32 %v2416, 1.442695
    %v2419 = vpow.pop %v2418
    %v2420 = vmul.f32 %v2417, 1.442695
    %v2421 = vpow.pop %v2420
    %v2422 = vmul.f32 %v2419, %v2377
    %v2423 = vmul.f32 %v2421, %v2377
    %2424 = vmatpush.msra.mxu0 %v299
    %2425 = vmatpush.msra.mxu0 %v298
    %2426 = vmatpush.msra.mxu0 %v297
    %2427 = vmatpush.msra.mxu0 %v296
    %2428 = vmatpush.msra.mxu0 %v295
    %2429 = vmatpush.msra.mxu0 %v294
    %2430 = vmatpush.msra.mxu0 %v293
    %2431 = vmatpush.msra.mxu0 %v292
    %2432 = vmatpush.msra.mxu0 %v291
    %2433 = vmatpush.msra.mxu0 %v290
    %2434 = vmatpush.msra.mxu0 %v289
    %2435 = vmatpush.msra.mxu0 %v288
    %2436 = vmatpush.msra.mxu0 %v287
    %2437 = vmatpush.msra.mxu0 %v286
    %2438 = vmatpush.msra.mxu0 %v285
    %2439 = vmatpush.msra.mxu0 %v284
    %2440 = vmatmul.f32.gmra.mxu0 %v2422
    %v2441 = vpop.f32.mrf.mxu0
    %v2442 = vadd.f32 0.0, %v2441
    %2443 = vmatmul.f32.gmra.mxu0 %v2423
    %v2444 = vpop.f32.mrf.mxu0
    %v2445 = vadd.f32 0.0, %v2444
    %2446 = vdwg.mxu0
    %v2447 = vperm.slane %v2276, 2
    %v2448 = vmul.f32 %v2202, %v2447
    %v2449 = vmul.f32 %v2203, %v2447
    %v2450 = vsel %vm321, %v2448, 0.0
    %2451 = vadd.xlane.f32.xlu0 %v2450
    %v2452 = vpop.xlane.xlu0 %2451
    %v2453 = vsel %vm321, %v2449, 0.0
    %2454 = vadd.xlane.f32.xlu0 %v2453
    %v2455 = vpop.xlane.xlu0 %2454
    %v2456 = vadd.f32 %v2452, %v2289
    %v2457 = vadd.f32 %v2455, %v2289
    %v2458 = vxor.u32 %v2456, 2147483648
    %v2459 = vxor.u32 %v2457, 2147483648
    %v2460 = vmul.f32 %v2458, 1.442695
    %v2461 = vpow.pop %v2460
    %v2462 = vmul.f32 %v2459, 1.442695
    %v2463 = vpow.pop %v2462
    %v2464 = vadd.f32 %v2461, 1.0
    %v2465 = vadd.f32 %v2463, 1.0
    %v2466 = vrcp.pop %v2464
    %v2467 = vmul.f32 %v2464, %v2466
    %v2468 = vsub.f32 1.0, %v2467
    %v2469 = vmul.f32 %v2466, %v2468
    %v2470 = vadd.f32 %v2466, %v2469
    %vm2471 = vweird.f32 %v2464
    %vm2472 = vweird.f32 %v2466
    %vm2473 = vmor %vm2471, %vm2472
    %v2474 = vsel %vm2473, %v2466, %v2470
    %v2475 = vand.u32 2147483647, %v2464
    %vm2476 = vcmp.eq.f32.partialorder %v2475, 8.507059e+37
    %v2477 = vand.u32 %v2464, 2147483648
    %v2478 = vor.u32 1.1754944e-38, %v2477
    %v2479 = vsel %vm2476, %v2478, %v2474
    %v2480 = vmul.f32 1.0, %v2479
    %v2481 = vrcp.pop %v2465
    %v2482 = vmul.f32 %v2465, %v2481
    %v2483 = vsub.f32 1.0, %v2482
    %v2484 = vmul.f32 %v2481, %v2483
    %v2485 = vadd.f32 %v2481, %v2484
    %vm2486 = vweird.f32 %v2465
    %vm2487 = vweird.f32 %v2481
    %vm2488 = vmor %vm2486, %vm2487
    %v2489 = vsel %vm2488, %v2481, %v2485
    %v2490 = vand.u32 2147483647, %v2465
    %vm2491 = vcmp.eq.f32.partialorder %v2490, 8.507059e+37
    %v2492 = vand.u32 %v2465, 2147483648
    %v2493 = vor.u32 1.1754944e-38, %v2492
    %v2494 = vsel %vm2491, %v2493, %v2489
    %v2495 = vmul.f32 1.0, %v2494
    %2497 = vset.pattern.permute.xlu0 2
    %2498 = vperm.xlu0 %2497, %v2480
    %v2499 = vpop.permute.xlu0 %2498
    %2502 = vset.pattern.permute.xlu0 2
    %2503 = vperm.xlu0 %2502, %v2495
    %v2504 = vpop.permute.xlu0 %2503
    %v2506 = vmul.f32 %v2202, %v2499
    %v2507 = vmul.f32 %v2203, %v2504
    %v2508 = vsub.f32 1.0, %v2480
    %v2509 = vsub.f32 1.0, %v2495
    %2511 = vset.pattern.permute.xlu0 2
    %2512 = vperm.xlu0 %2511, %v2508
    %v2513 = vpop.permute.xlu0 %2512
    %2516 = vset.pattern.permute.xlu0 2
    %2517 = vperm.xlu0 %2516, %v2509
    %v2518 = vpop.permute.xlu0 %2517
    %v2520 = vmul.f32 %v2442, %v2513
    %v2521 = vmul.f32 %v2445, %v2518
    %v2522 = vadd.f32 %v2506, %v2520
    %v2523 = vadd.f32 %v2507, %v2521
    %s2524 = scalar_lea.vmem %s53, 1
    %v2525 = vld [vmem:[%s2524] sm:$0x1]
    %s2526 = scalar_lea.vmem %s55, 1
    %v2527 = vld [vmem:[%s2526] sm:$0x1]
    %v2528 = vsel %vm321, %v2522, 0.0
    %2529 = vadd.xlane.f32.xlu0 %v2528
    %v2530 = vpop.xlane.xlu0 %2529
    %v2531 = vsel %vm321, %v2523, 0.0
    %2532 = vadd.xlane.f32.xlu0 %v2531
    %v2533 = vpop.xlane.xlu0 %2532
    %v2534 = vmul.f32 %v2530, %v1126
    %v2535 = vmul.f32 %v2533, %v1126
    %v2536 = vsub.f32 %v2522, %v2534
    %v2537 = vsub.f32 %v2523, %v2535
    %v2538 = vmul.f32 %v2536, %v2536
    %v2539 = vmul.f32 %v2537, %v2537
    %v2540 = vsel %vm321, %v2538, 0.0
    %2541 = vadd.xlane.f32.xlu0 %v2540
    %v2542 = vpop.xlane.xlu0 %2541
    %v2543 = vsel %vm321, %v2539, 0.0
    %2544 = vadd.xlane.f32.xlu0 %v2543
    %v2545 = vpop.xlane.xlu0 %2544
    %v2546 = vmul.f32 %v2542, %v1126
    %v2547 = vmul.f32 %v2545, %v1126
    %v2548 = vadd.f32 %v2546, 1e-05
    %v2549 = vadd.f32 %v2547, 1e-05
    %v2550 = vrsqrt.pop %v2548
    %v2551 = vmul.f32 %v2550, %v2548
    %v2552 = vmul.f32 %v2551, %v2550
    %v2553 = vmul.f32 0.5, %v2552
    %v2554 = vsub.f32 1.5, %v2553
    %v2555 = vmul.f32 %v2550, %v2554
    %vm2556 = vweird.f32 %v2548
    %vm2557 = vweird.f32 %v2550
    %vm2558 = vmor %vm2556, %vm2557
    %v2559 = vsel %vm2558, %v2550, %v2555
    %v2560 = vrsqrt.pop %v2549
    %v2561 = vmul.f32 %v2560, %v2549
    %v2562 = vmul.f32 %v2561, %v2560
    %v2563 = vmul.f32 0.5, %v2562
    %v2564 = vsub.f32 1.5, %v2563
    %v2565 = vmul.f32 %v2560, %v2564
    %vm2566 = vweird.f32 %v2549
    %vm2567 = vweird.f32 %v2560
    %vm2568 = vmor %vm2566, %vm2567
    %v2569 = vsel %vm2568, %v2560, %v2565
    %v2570 = vmul.f32 %v2536, %v2559
    %v2571 = vmul.f32 %v2537, %v2569
    %v2573 = vperm.slane %v2525, 0
    %v2575 = vmul.f32 %v2570, %v2573
    %v2576 = vmul.f32 %v2571, %v2573
    %v2578 = vperm.slane %v2527, 0
    %v2580 = vadd.f32 %v2575, %v2578
    %v2581 = vadd.f32 %v2576, %v2578
    %vm2582 = vcmask 7168
    %v2583 = vsel %vm2582, %v2307, 0.0
    %v2584 = vsel %vm2582, %v2308, 0.0
    %v2585 = vadd.f32 %v2583, %v2584
    %2586 = vadd.xlane.f32.xlu0 %v2585
    %v2587 = vpop.xlane.xlu0 %2586
    %v2588 = vrot.slane %v2587, 4
    %v2589 = vadd.f32 %v2587, %v2588
    %v2590 = vrot.slane %v2589, 2
    %v2591 = vadd.f32 %v2589, %v2590
    %v2592 = vrot.slane %v2591, 1
    %v2593 = vadd.f32 %v2591, %v2592
    %s2594 = vtos %v2593
    %v2595 = vstv %s2594
    %v2596 = vrcp.pop 16.0
    %v2597 = vmul.f32 16.0, %v2596
    %v2598 = vsub.f32 1.0, %v2597
    %v2599 = vmul.f32 %v2596, %v2598
    %v2600 = vadd.f32 %v2596, %v2599
    %vm2601 = vweird.f32 %v2596
    %v2602 = vsel %vm2601, %v2596, %v2600
    %v2603 = vmul.f32 %v2595, %v2602
    %2606 = vrot.lane.b32.xlu0 %v2334, 127
    %v2607 = vpop.permute.xlu0 %2606
    %2608 = vrot.lane.b32.xlu0 %v2335, 127
    %v2609 = vpop.permute.xlu0 %2608
    %v2612 = vsel %vm2582, %v2607, 0.0
    %v2613 = vsel %vm2582, %v2609, 0.0
    %v2614 = vadd.f32 %v2612, %v2613
    %2615 = vadd.xlane.f32.xlu0 %v2614
    %v2616 = vpop.xlane.xlu0 %2615
    %v2617 = vrot.slane %v2616, 4
    %v2618 = vadd.f32 %v2616, %v2617
    %v2619 = vrot.slane %v2618, 2
    %v2620 = vadd.f32 %v2618, %v2619
    %v2621 = vrot.slane %v2620, 1
    %v2622 = vadd.f32 %v2620, %v2621
    %s2623 = vtos %v2622
    %v2624 = vstv %s2623
    %v2625 = vmul.f32 %v2624, %v2602
    %2626 = vst [vmem:[#allocation20 + $0x1] sm:$0x1] %v2274
    %v2627 = vstv %s2390
    %2628 = vst [vmem:[#allocation20 + $0x3] sm:$0x1] %v2627
    %2629 = vst [vmem:[#allocation20 + $0x5] sm:$0x1] %v2603
    %2630 = vst [vmem:[#allocation20 + $0x7] sm:$0x1] %v2625
    %s2631 = scalar_lea.vmem %s37, 4
    %v2632 = vld [vmem:[%s2631] sm:$0x7]
    %s2633 = scalar_lea.vmem %s39, 4
    %v2634 = vld [vmem:[%s2633] sm:$0x7]
    %s2635 = scalar_lea.vmem %s17, 32
    %v2636 = vld [vmem:[%s2635] sm:$0xff]
    %v2637 = vld [vmem:[%s2635 + $0x8] sm:$0xff]
    %v2638 = vld [vmem:[%s2635 + $0x10] sm:$0xff]
    %v2639 = vld [vmem:[%s2635 + $0x18] sm:$0xff]
    %s2640 = scalar_lea.vmem [#allocation11], 1
    %v2641 = vld [vmem:[%s2640] sm:$0x1]
    %v2643 = vperm.slane %v2641, 0
    %v2646 = vsel %vm321, %v2580, 0
    %v2649 = vsel %vm321, %v2581, 0
    %2651 = vmatpush.msra.mxu0 0.0
    %2652 = vmatpush.msra.mxu0 0.0
    %2653 = vmatpush.msra.mxu0 0.0
    %2654 = vmatpush.msra.mxu0 0.0
    %2655 = vmatpush.msra.mxu0 0.0
    %2656 = vmatpush.msra.mxu0 0.0
    %2657 = vmatpush.msra.mxu0 0.0
    %2658 = vmatpush.msra.mxu0 0.0
    %2659 = vmatpush.msra.mxu0 0.0
    %2660 = vmatpush.msra.mxu0 0.0
    %2661 = vmatpush.msra.mxu0 0.0
    %2662 = vmatpush.msra.mxu0 0.0
    %2663 = vmatpush.msra.mxu0 %v2639
    %2664 = vmatpush.msra.mxu0 %v2638
    %2665 = vmatpush.msra.mxu0 %v2637
    %2666 = vmatpush.msra.mxu0 %v2636
    %2667 = vmatmul.f32.gmra.mxu0 %v2646
    %v2668 = vpop.f32.mrf.mxu0
    %v2669 = vadd.f32 %v2643, %v2668
    %2670 = vmatmul.f32.gmra.mxu0 %v2649
    %v2671 = vpop.f32.mrf.mxu0
    %v2672 = vadd.f32 %v2643, %v2671
    %2673 = vdwg.mxu0
    %s2674 = scalar_lea.vmem %s21, 32
    %v2675 = vld [vmem:[%s2674] sm:$0xff]
    %v2676 = vld [vmem:[%s2674 + $0x8] sm:$0xff]
    %v2677 = vld [vmem:[%s2674 + $0x10] sm:$0xff]
    %v2678 = vld [vmem:[%s2674 + $0x18] sm:$0xff]
    %s2679 = scalar_lea.vmem [#allocation13], 1
    %v2680 = vld [vmem:[%s2679] sm:$0x1]
    %2682 = vrot.lane.b32.xlu0 %v2669, 96
    %v2683 = vpop.permute.xlu0 %2682
    %v2684 = vsel %vm359, %v2669, 0
    %v2686 = vsel %vm359, %v2683, 0
    %2688 = vmatpush.xpose.msra.mxu0 0.0
    %2689 = vmatpush.xpose.msra.mxu0 0.0
    %2690 = vmatpush.xpose.msra.mxu0 0.0
    %2691 = vmatpush.xpose.msra.mxu0 0.0
    %2692 = vmatpush.xpose.msra.mxu0 0.0
    %2693 = vmatpush.xpose.msra.mxu0 0.0
    %2694 = vmatpush.xpose.msra.mxu0 0.0
    %2695 = vmatpush.xpose.msra.mxu0 0.0
    %2696 = vmatpush.xpose.msra.mxu0 0.0
    %2697 = vmatpush.xpose.msra.mxu0 0.0
    %2698 = vmatpush.xpose.msra.mxu0 0.0
    %2699 = vmatpush.xpose.msra.mxu0 0.0
    %2700 = vmatpush.xpose.msra.mxu0 0.0
    %2701 = vmatpush.xpose.msra.mxu0 0.0
    %2702 = vmatpush.xpose.msra.mxu0 0.0
    %2703 = vmatpush.xpose.msra.mxu0 %v2686
    %2704 = vmatmul.f32.gmra.mxu0 %v2684
    %v2705 = vpop.f32.mrf.mxu0
    %v2706 = vadd.f32 0.0, %v2705
    %2707 = vdwg.mxu0
    %2709 = vrot.lane.b32.xlu0 %v2672, 96
    %v2710 = vpop.permute.xlu0 %2709
    %v2711 = vsel %vm359, %v2672, 0
    %v2713 = vsel %vm359, %v2710, 0
    %2715 = vmatpush.xpose.msra.mxu0 0.0
    %2716 = vmatpush.xpose.msra.mxu0 0.0
    %2717 = vmatpush.xpose.msra.mxu0 0.0
    %2718 = vmatpush.xpose.msra.mxu0 0.0
    %2719 = vmatpush.xpose.msra.mxu0 0.0
    %2720 = vmatpush.xpose.msra.mxu0 0.0
    %2721 = vmatpush.xpose.msra.mxu0 0.0
    %2722 = vmatpush.xpose.msra.mxu0 0.0
    %2723 = vmatpush.xpose.msra.mxu0 0.0
    %2724 = vmatpush.xpose.msra.mxu0 0.0
    %2725 = vmatpush.xpose.msra.mxu0 0.0
    %2726 = vmatpush.xpose.msra.mxu0 0.0
    %2727 = vmatpush.xpose.msra.mxu0 0.0
    %2728 = vmatpush.xpose.msra.mxu0 0.0
    %2729 = vmatpush.xpose.msra.mxu0 0.0
    %2730 = vmatpush.xpose.msra.mxu0 %v2713
    %2731 = vmatmul.f32.gmra.mxu0 %v2711
    %v2732 = vpop.f32.mrf.mxu0
    %v2733 = vadd.f32 0.0, %v2732
    %2734 = vdwg.mxu0
    %v2735 = vmul.f32 %v2706, 0.35355338
    %v2736 = vmul.f32 %v2733, 0.35355338
    %v2737 = vsel %vm359, %v2735, -inf
    %2738 = vmax.xlane.f32.xlu0 %v2737
    %v2739 = vpop.xlane.xlu0 %2738
    %v2740 = vsel %vm359, %v2736, -inf
    %2741 = vmax.xlane.f32.xlu0 %v2740
    %v2742 = vpop.xlane.xlu0 %2741
    %v2743 = vsub.f32 %v2735, %v2739
    %v2744 = vsub.f32 %v2736, %v2742
    %v2745 = vmul.f32 %v2743, 1.442695
    %v2746 = vpow.pop %v2745
    %v2747 = vmul.f32 %v2744, 1.442695
    %v2748 = vpow.pop %v2747
    %v2749 = vsel %vm359, %v2746, 0.0
    %2750 = vadd.xlane.f32.xlu0 %v2749
    %v2751 = vpop.xlane.xlu0 %2750
    %v2752 = vsel %vm359, %v2748, 0.0
    %2753 = vadd.xlane.f32.xlu0 %v2752
    %v2754 = vpop.xlane.xlu0 %2753
    %v2755 = vrcp.pop %v2751
    %v2756 = vmul.f32 %v2751, %v2755
    %v2757 = vsub.f32 1.0, %v2756
    %v2758 = vmul.f32 %v2755, %v2757
    %v2759 = vadd.f32 %v2755, %v2758
    %vm2760 = vweird.f32 %v2751
    %vm2761 = vweird.f32 %v2755
    %vm2762 = vmor %vm2760, %vm2761
    %v2763 = vsel %vm2762, %v2755, %v2759
    %v2764 = vand.u32 2147483647, %v2751
    %vm2765 = vcmp.eq.f32.partialorder %v2764, 8.507059e+37
    %v2766 = vand.u32 %v2751, 2147483648
    %v2767 = vor.u32 1.1754944e-38, %v2766
    %v2768 = vsel %vm2765, %v2767, %v2763
    %v2769 = vmul.f32 %v2746, %v2768
    %v2770 = vrcp.pop %v2754
    %v2771 = vmul.f32 %v2754, %v2770
    %v2772 = vsub.f32 1.0, %v2771
    %v2773 = vmul.f32 %v2770, %v2772
    %v2774 = vadd.f32 %v2770, %v2773
    %vm2775 = vweird.f32 %v2754
    %vm2776 = vweird.f32 %v2770
    %vm2777 = vmor %vm2775, %vm2776
    %v2778 = vsel %vm2777, %v2770, %v2774
    %v2779 = vand.u32 2147483647, %v2754
    %vm2780 = vcmp.eq.f32.partialorder %v2779, 8.507059e+37
    %v2781 = vand.u32 %v2754, 2147483648
    %v2782 = vor.u32 1.1754944e-38, %v2781
    %v2783 = vsel %vm2780, %v2782, %v2778
    %v2784 = vmul.f32 %v2748, %v2783
    %2785 = vrot.lane.b32.xlu0 %v2669, 64
    %v2786 = vpop.permute.xlu0 %2785
    %v2789 = vsel %vm359, %v2769, 0
    %2791 = vmatpush.msra.mxu0 0.0
    %2792 = vmatpush.msra.mxu0 0.0
    %2793 = vmatpush.msra.mxu0 0.0
    %2794 = vmatpush.msra.mxu0 0.0
    %2795 = vmatpush.msra.mxu0 0.0
    %2796 = vmatpush.msra.mxu0 0.0
    %2797 = vmatpush.msra.mxu0 0.0
    %2798 = vmatpush.msra.mxu0 0.0
    %2799 = vmatpush.msra.mxu0 0.0
    %2800 = vmatpush.msra.mxu0 0.0
    %2801 = vmatpush.msra.mxu0 0.0
    %2802 = vmatpush.msra.mxu0 0.0
    %2803 = vmatpush.msra.mxu0 0.0
    %2804 = vmatpush.msra.mxu0 0.0
    %2805 = vmatpush.msra.mxu0 0.0
    %2806 = vmatpush.msra.mxu0 %v2786
    %2807 = vmatmul.f32.gmra.mxu0 %v2789
    %v2808 = vpop.f32.mrf.mxu0
    %v2809 = vadd.f32 0.0, %v2808
    %2810 = vdwg.mxu0
    %2811 = vrot.lane.b32.xlu0 %v2672, 64
    %v2812 = vpop.permute.xlu0 %2811
    %v2815 = vsel %vm359, %v2784, 0
    %2817 = vmatpush.msra.mxu0 0.0
    %2818 = vmatpush.msra.mxu0 0.0
    %2819 = vmatpush.msra.mxu0 0.0
    %2820 = vmatpush.msra.mxu0 0.0
    %2821 = vmatpush.msra.mxu0 0.0
    %2822 = vmatpush.msra.mxu0 0.0
    %2823 = vmatpush.msra.mxu0 0.0
    %2824 = vmatpush.msra.mxu0 0.0
    %2825 = vmatpush.msra.mxu0 0.0
    %2826 = vmatpush.msra.mxu0 0.0
    %2827 = vmatpush.msra.mxu0 0.0
    %2828 = vmatpush.msra.mxu0 0.0
    %2829 = vmatpush.msra.mxu0 0.0
    %2830 = vmatpush.msra.mxu0 0.0
    %2831 = vmatpush.msra.mxu0 0.0
    %2832 = vmatpush.msra.mxu0 %v2812
    %2833 = vmatmul.f32.gmra.mxu0 %v2815
    %v2834 = vpop.f32.mrf.mxu0
    %v2835 = vadd.f32 0.0, %v2834
    %2836 = vdwg.mxu0
    %2837 = vrot.lane.b32.xlu0 %v2669, 120
    %v2838 = vpop.permute.xlu0 %2837
    %2839 = vrot.lane.b32.xlu0 %v2669, 88
    %v2840 = vpop.permute.xlu0 %2839
    %v2841 = vsel %vm359, %v2838, 0
    %v2843 = vsel %vm359, %v2840, 0
    %2845 = vmatpush.xpose.msra.mxu0 0.0
    %2846 = vmatpush.xpose.msra.mxu0 0.0
    %2847 = vmatpush.xpose.msra.mxu0 0.0
    %2848 = vmatpush.xpose.msra.mxu0 0.0
    %2849 = vmatpush.xpose.msra.mxu0 0.0
    %2850 = vmatpush.xpose.msra.mxu0 0.0
    %2851 = vmatpush.xpose.msra.mxu0 0.0
    %2852 = vmatpush.xpose.msra.mxu0 0.0
    %2853 = vmatpush.xpose.msra.mxu0 0.0
    %2854 = vmatpush.xpose.msra.mxu0 0.0
    %2855 = vmatpush.xpose.msra.mxu0 0.0
    %2856 = vmatpush.xpose.msra.mxu0 0.0
    %2857 = vmatpush.xpose.msra.mxu0 0.0
    %2858 = vmatpush.xpose.msra.mxu0 0.0
    %2859 = vmatpush.xpose.msra.mxu0 0.0
    %2860 = vmatpush.xpose.msra.mxu0 %v2843
    %2861 = vmatmul.f32.gmra.mxu0 %v2841
    %v2862 = vpop.f32.mrf.mxu0
    %v2863 = vadd.f32 0.0, %v2862
    %2864 = vdwg.mxu0
    %2865 = vrot.lane.b32.xlu0 %v2672, 120
    %v2866 = vpop.permute.xlu0 %2865
    %2867 = vrot.lane.b32.xlu0 %v2672, 88
    %v2868 = vpop.permute.xlu0 %2867
    %v2869 = vsel %vm359, %v2866, 0
    %v2871 = vsel %vm359, %v2868, 0
    %2873 = vmatpush.xpose.msra.mxu0 0.0
    %2874 = vmatpush.xpose.msra.mxu0 0.0
    %2875 = vmatpush.xpose.msra.mxu0 0.0
    %2876 = vmatpush.xpose.msra.mxu0 0.0
    %2877 = vmatpush.xpose.msra.mxu0 0.0
    %2878 = vmatpush.xpose.msra.mxu0 0.0
    %2879 = vmatpush.xpose.msra.mxu0 0.0
    %2880 = vmatpush.xpose.msra.mxu0 0.0
    %2881 = vmatpush.xpose.msra.mxu0 0.0
    %2882 = vmatpush.xpose.msra.mxu0 0.0
    %2883 = vmatpush.xpose.msra.mxu0 0.0
    %2884 = vmatpush.xpose.msra.mxu0 0.0
    %2885 = vmatpush.xpose.msra.mxu0 0.0
    %2886 = vmatpush.xpose.msra.mxu0 0.0
    %2887 = vmatpush.xpose.msra.mxu0 0.0
    %2888 = vmatpush.xpose.msra.mxu0 %v2871
    %2889 = vmatmul.f32.gmra.mxu0 %v2869
    %v2890 = vpop.f32.mrf.mxu0
    %v2891 = vadd.f32 0.0, %v2890
    %2892 = vdwg.mxu0
    %v2893 = vmul.f32 %v2863, 0.35355338
    %v2894 = vmul.f32 %v2891, 0.35355338
    %v2895 = vsel %vm359, %v2893, -inf
    %2896 = vmax.xlane.f32.xlu0 %v2895
    %v2897 = vpop.xlane.xlu0 %2896
    %v2898 = vsel %vm359, %v2894, -inf
    %2899 = vmax.xlane.f32.xlu0 %v2898
    %v2900 = vpop.xlane.xlu0 %2899
    %v2901 = vsub.f32 %v2893, %v2897
    %v2902 = vsub.f32 %v2894, %v2900
    %v2903 = vmul.f32 %v2901, 1.442695
    %v2904 = vpow.pop %v2903
    %v2905 = vmul.f32 %v2902, 1.442695
    %v2906 = vpow.pop %v2905
    %v2907 = vsel %vm359, %v2904, 0.0
    %2908 = vadd.xlane.f32.xlu0 %v2907
    %v2909 = vpop.xlane.xlu0 %2908
    %v2910 = vsel %vm359, %v2906, 0.0
    %2911 = vadd.xlane.f32.xlu0 %v2910
    %v2912 = vpop.xlane.xlu0 %2911
    %v2913 = vrcp.pop %v2909
    %v2914 = vmul.f32 %v2909, %v2913
    %v2915 = vsub.f32 1.0, %v2914
    %v2916 = vmul.f32 %v2913, %v2915
    %v2917 = vadd.f32 %v2913, %v2916
    %vm2918 = vweird.f32 %v2909
    %vm2919 = vweird.f32 %v2913
    %vm2920 = vmor %vm2918, %vm2919
    %v2921 = vsel %vm2920, %v2913, %v2917
    %v2922 = vand.u32 2147483647, %v2909
    %vm2923 = vcmp.eq.f32.partialorder %v2922, 8.507059e+37
    %v2924 = vand.u32 %v2909, 2147483648
    %v2925 = vor.u32 1.1754944e-38, %v2924
    %v2926 = vsel %vm2923, %v2925, %v2921
    %v2927 = vmul.f32 %v2904, %v2926
    %v2928 = vrcp.pop %v2912
    %v2929 = vmul.f32 %v2912, %v2928
    %v2930 = vsub.f32 1.0, %v2929
    %v2931 = vmul.f32 %v2928, %v2930
    %v2932 = vadd.f32 %v2928, %v2931
    %vm2933 = vweird.f32 %v2912
    %vm2934 = vweird.f32 %v2928
    %vm2935 = vmor %vm2933, %vm2934
    %v2936 = vsel %vm2935, %v2928, %v2932
    %v2937 = vand.u32 2147483647, %v2912
    %vm2938 = vcmp.eq.f32.partialorder %v2937, 8.507059e+37
    %v2939 = vand.u32 %v2912, 2147483648
    %v2940 = vor.u32 1.1754944e-38, %v2939
    %v2941 = vsel %vm2938, %v2940, %v2936
    %v2942 = vmul.f32 %v2906, %v2941
    %2943 = vrot.lane.b32.xlu0 %v2669, 56
    %v2944 = vpop.permute.xlu0 %2943
    %v2947 = vsel %vm359, %v2927, 0
    %2949 = vmatpush.msra.mxu0 0.0
    %2950 = vmatpush.msra.mxu0 0.0
    %2951 = vmatpush.msra.mxu0 0.0
    %2952 = vmatpush.msra.mxu0 0.0
    %2953 = vmatpush.msra.mxu0 0.0
    %2954 = vmatpush.msra.mxu0 0.0
    %2955 = vmatpush.msra.mxu0 0.0
    %2956 = vmatpush.msra.mxu0 0.0
    %2957 = vmatpush.msra.mxu0 0.0
    %2958 = vmatpush.msra.mxu0 0.0
    %2959 = vmatpush.msra.mxu0 0.0
    %2960 = vmatpush.msra.mxu0 0.0
    %2961 = vmatpush.msra.mxu0 0.0
    %2962 = vmatpush.msra.mxu0 0.0
    %2963 = vmatpush.msra.mxu0 0.0
    %2964 = vmatpush.msra.mxu0 %v2944
    %2965 = vmatmul.f32.gmra.mxu0 %v2947
    %v2966 = vpop.f32.mrf.mxu0
    %v2967 = vadd.f32 0.0, %v2966
    %2968 = vdwg.mxu0
    %2969 = vrot.lane.b32.xlu0 %v2672, 56
    %v2970 = vpop.permute.xlu0 %2969
    %v2973 = vsel %vm359, %v2942, 0
    %2975 = vmatpush.msra.mxu0 0.0
    %2976 = vmatpush.msra.mxu0 0.0
    %2977 = vmatpush.msra.mxu0 0.0
    %2978 = vmatpush.msra.mxu0 0.0
    %2979 = vmatpush.msra.mxu0 0.0
    %2980 = vmatpush.msra.mxu0 0.0
    %2981 = vmatpush.msra.mxu0 0.0
    %2982 = vmatpush.msra.mxu0 0.0
    %2983 = vmatpush.msra.mxu0 0.0
    %2984 = vmatpush.msra.mxu0 0.0
    %2985 = vmatpush.msra.mxu0 0.0
    %2986 = vmatpush.msra.mxu0 0.0
    %2987 = vmatpush.msra.mxu0 0.0
    %2988 = vmatpush.msra.mxu0 0.0
    %2989 = vmatpush.msra.mxu0 0.0
    %2990 = vmatpush.msra.mxu0 %v2970
    %2991 = vmatmul.f32.gmra.mxu0 %v2973
    %v2992 = vpop.f32.mrf.mxu0
    %v2993 = vadd.f32 0.0, %v2992
    %2994 = vdwg.mxu0
    %v2996 = vsel %vm359, %v2967, 0
    %v2999 = vsel %vm359, %v2993, 0
    %3001 = vmatpush.msra.mxu0 0.0
    %3002 = vmatpush.msra.mxu0 0.0
    %3003 = vmatpush.msra.mxu0 0.0
    %3004 = vmatpush.msra.mxu0 0.0
    %3005 = vmatpush.msra.mxu0 0.0
    %3006 = vmatpush.msra.mxu0 0.0
    %3007 = vmatpush.msra.mxu0 0.0
    %3008 = vmatpush.msra.mxu0 0.0
    %3009 = vmatpush.msra.mxu0 0.0
    %3010 = vmatpush.msra.mxu0 0.0
    %3011 = vmatpush.msra.mxu0 0.0
    %3012 = vmatpush.msra.mxu0 0.0
    %3013 = vmatpush.msra.mxu0 0.0
    %3014 = vmatpush.msra.mxu0 0.0
    %3015 = vmatpush.msra.mxu0 0.0
    %3016 = vmatpush.msra.mxu0 %v2676
    %3017 = vmatmul.f32.gmra.mxu0 %v2996
    %v3018 = vpop.f32.mrf.mxu0
    %v3019 = vadd.f32 0.0, %v3018
    %3020 = vmatmul.f32.gmra.mxu0 %v2999
    %v3021 = vpop.f32.mrf.mxu0
    %v3022 = vadd.f32 0.0, %v3021
    %3023 = vdwg.mxu0
    %v3025 = vsel %vm359, %v2809, 0
    %v3028 = vsel %vm359, %v2835, 0
    %3030 = vmatpush.msra.mxu0 0.0
    %3031 = vmatpush.msra.mxu0 0.0
    %3032 = vmatpush.msra.mxu0 0.0
    %3033 = vmatpush.msra.mxu0 0.0
    %3034 = vmatpush.msra.mxu0 0.0
    %3035 = vmatpush.msra.mxu0 0.0
    %3036 = vmatpush.msra.mxu0 0.0
    %3037 = vmatpush.msra.mxu0 0.0
    %3038 = vmatpush.msra.mxu0 0.0
    %3039 = vmatpush.msra.mxu0 0.0
    %3040 = vmatpush.msra.mxu0 0.0
    %3041 = vmatpush.msra.mxu0 0.0
    %3042 = vmatpush.msra.mxu0 0.0
    %3043 = vmatpush.msra.mxu0 0.0
    %3044 = vmatpush.msra.mxu0 0.0
    %3045 = vmatpush.msra.mxu0 %v2675
    %3046 = vmatmul.f32.gmra.mxu0 %v3025
    %v3047 = vpop.f32.mrf.mxu0
    %v3048 = vadd.f32 %v3019, %v3047
    %3049 = vmatmul.f32.gmra.mxu0 %v3028
    %v3050 = vpop.f32.mrf.mxu0
    %v3051 = vadd.f32 %v3022, %v3050
    %3052 = vdwg.mxu0
    %3053 = vrot.lane.b32.xlu0 %v2669, 112
    %v3054 = vpop.permute.xlu0 %3053
    %3055 = vrot.lane.b32.xlu0 %v2669, 80
    %v3056 = vpop.permute.xlu0 %3055
    %v3057 = vsel %vm359, %v3054, 0
    %v3059 = vsel %vm359, %v3056, 0
    %3061 = vmatpush.xpose.msra.mxu0 0.0
    %3062 = vmatpush.xpose.msra.mxu0 0.0
    %3063 = vmatpush.xpose.msra.mxu0 0.0
    %3064 = vmatpush.xpose.msra.mxu0 0.0
    %3065 = vmatpush.xpose.msra.mxu0 0.0
    %3066 = vmatpush.xpose.msra.mxu0 0.0
    %3067 = vmatpush.xpose.msra.mxu0 0.0
    %3068 = vmatpush.xpose.msra.mxu0 0.0
    %3069 = vmatpush.xpose.msra.mxu0 0.0
    %3070 = vmatpush.xpose.msra.mxu0 0.0
    %3071 = vmatpush.xpose.msra.mxu0 0.0
    %3072 = vmatpush.xpose.msra.mxu0 0.0
    %3073 = vmatpush.xpose.msra.mxu0 0.0
    %3074 = vmatpush.xpose.msra.mxu0 0.0
    %3075 = vmatpush.xpose.msra.mxu0 0.0
    %3076 = vmatpush.xpose.msra.mxu0 %v3059
    %3077 = vmatmul.f32.gmra.mxu0 %v3057
    %v3078 = vpop.f32.mrf.mxu0
    %v3079 = vadd.f32 0.0, %v3078
    %3080 = vdwg.mxu0
    %3081 = vrot.lane.b32.xlu0 %v2672, 112
    %v3082 = vpop.permute.xlu0 %3081
    %3083 = vrot.lane.b32.xlu0 %v2672, 80
    %v3084 = vpop.permute.xlu0 %3083
    %v3085 = vsel %vm359, %v3082, 0
    %v3087 = vsel %vm359, %v3084, 0
    %3089 = vmatpush.xpose.msra.mxu0 0.0
    %3090 = vmatpush.xpose.msra.mxu0 0.0
    %3091 = vmatpush.xpose.msra.mxu0 0.0
    %3092 = vmatpush.xpose.msra.mxu0 0.0
    %3093 = vmatpush.xpose.msra.mxu0 0.0
    %3094 = vmatpush.xpose.msra.mxu0 0.0
    %3095 = vmatpush.xpose.msra.mxu0 0.0
    %3096 = vmatpush.xpose.msra.mxu0 0.0
    %3097 = vmatpush.xpose.msra.mxu0 0.0
    %3098 = vmatpush.xpose.msra.mxu0 0.0
    %3099 = vmatpush.xpose.msra.mxu0 0.0
    %3100 = vmatpush.xpose.msra.mxu0 0.0
    %3101 = vmatpush.xpose.msra.mxu0 0.0
    %3102 = vmatpush.xpose.msra.mxu0 0.0
    %3103 = vmatpush.xpose.msra.mxu0 0.0
    %3104 = vmatpush.xpose.msra.mxu0 %v3087
    %3105 = vmatmul.f32.gmra.mxu0 %v3085
    %v3106 = vpop.f32.mrf.mxu0
    %v3107 = vadd.f32 0.0, %v3106
    %3108 = vdwg.mxu0
    %v3109 = vmul.f32 %v3079, 0.35355338
    %v3110 = vmul.f32 %v3107, 0.35355338
    %v3111 = vsel %vm359, %v3109, -inf
    %3112 = vmax.xlane.f32.xlu0 %v3111
    %v3113 = vpop.xlane.xlu0 %3112
    %v3114 = vsel %vm359, %v3110, -inf
    %3115 = vmax.xlane.f32.xlu0 %v3114
    %v3116 = vpop.xlane.xlu0 %3115
    %v3117 = vsub.f32 %v3109, %v3113
    %v3118 = vsub.f32 %v3110, %v3116
    %v3119 = vmul.f32 %v3117, 1.442695
    %v3120 = vpow.pop %v3119
    %v3121 = vmul.f32 %v3118, 1.442695
    %v3122 = vpow.pop %v3121
    %v3123 = vsel %vm359, %v3120, 0.0
    %3124 = vadd.xlane.f32.xlu0 %v3123
    %v3125 = vpop.xlane.xlu0 %3124
    %v3126 = vsel %vm359, %v3122, 0.0
    %3127 = vadd.xlane.f32.xlu0 %v3126
    %v3128 = vpop.xlane.xlu0 %3127
    %v3129 = vrcp.pop %v3125
    %v3130 = vmul.f32 %v3125, %v3129
    %v3131 = vsub.f32 1.0, %v3130
    %v3132 = vmul.f32 %v3129, %v3131
    %v3133 = vadd.f32 %v3129, %v3132
    %vm3134 = vweird.f32 %v3125
    %vm3135 = vweird.f32 %v3129
    %vm3136 = vmor %vm3134, %vm3135
    %v3137 = vsel %vm3136, %v3129, %v3133
    %v3138 = vand.u32 2147483647, %v3125
    %vm3139 = vcmp.eq.f32.partialorder %v3138, 8.507059e+37
    %v3140 = vand.u32 %v3125, 2147483648
    %v3141 = vor.u32 1.1754944e-38, %v3140
    %v3142 = vsel %vm3139, %v3141, %v3137
    %v3143 = vmul.f32 %v3120, %v3142
    %v3144 = vrcp.pop %v3128
    %v3145 = vmul.f32 %v3128, %v3144
    %v3146 = vsub.f32 1.0, %v3145
    %v3147 = vmul.f32 %v3144, %v3146
    %v3148 = vadd.f32 %v3144, %v3147
    %vm3149 = vweird.f32 %v3128
    %vm3150 = vweird.f32 %v3144
    %vm3151 = vmor %vm3149, %vm3150
    %v3152 = vsel %vm3151, %v3144, %v3148
    %v3153 = vand.u32 2147483647, %v3128
    %vm3154 = vcmp.eq.f32.partialorder %v3153, 8.507059e+37
    %v3155 = vand.u32 %v3128, 2147483648
    %v3156 = vor.u32 1.1754944e-38, %v3155
    %v3157 = vsel %vm3154, %v3156, %v3152
    %v3158 = vmul.f32 %v3122, %v3157
    %3159 = vrot.lane.b32.xlu0 %v2669, 48
    %v3160 = vpop.permute.xlu0 %3159
    %v3163 = vsel %vm359, %v3143, 0
    %3165 = vmatpush.msra.mxu0 0.0
    %3166 = vmatpush.msra.mxu0 0.0
    %3167 = vmatpush.msra.mxu0 0.0
    %3168 = vmatpush.msra.mxu0 0.0
    %3169 = vmatpush.msra.mxu0 0.0
    %3170 = vmatpush.msra.mxu0 0.0
    %3171 = vmatpush.msra.mxu0 0.0
    %3172 = vmatpush.msra.mxu0 0.0
    %3173 = vmatpush.msra.mxu0 0.0
    %3174 = vmatpush.msra.mxu0 0.0
    %3175 = vmatpush.msra.mxu0 0.0
    %3176 = vmatpush.msra.mxu0 0.0
    %3177 = vmatpush.msra.mxu0 0.0
    %3178 = vmatpush.msra.mxu0 0.0
    %3179 = vmatpush.msra.mxu0 0.0
    %3180 = vmatpush.msra.mxu0 %v3160
    %3181 = vmatmul.f32.gmra.mxu0 %v3163
    %v3182 = vpop.f32.mrf.mxu0
    %v3183 = vadd.f32 0.0, %v3182
    %3184 = vdwg.mxu0
    %3185 = vrot.lane.b32.xlu0 %v2672, 48
    %v3186 = vpop.permute.xlu0 %3185
    %v3189 = vsel %vm359, %v3158, 0
    %3191 = vmatpush.msra.mxu0 0.0
    %3192 = vmatpush.msra.mxu0 0.0
    %3193 = vmatpush.msra.mxu0 0.0
    %3194 = vmatpush.msra.mxu0 0.0
    %3195 = vmatpush.msra.mxu0 0.0
    %3196 = vmatpush.msra.mxu0 0.0
    %3197 = vmatpush.msra.mxu0 0.0
    %3198 = vmatpush.msra.mxu0 0.0
    %3199 = vmatpush.msra.mxu0 0.0
    %3200 = vmatpush.msra.mxu0 0.0
    %3201 = vmatpush.msra.mxu0 0.0
    %3202 = vmatpush.msra.mxu0 0.0
    %3203 = vmatpush.msra.mxu0 0.0
    %3204 = vmatpush.msra.mxu0 0.0
    %3205 = vmatpush.msra.mxu0 0.0
    %3206 = vmatpush.msra.mxu0 %v3186
    %3207 = vmatmul.f32.gmra.mxu0 %v3189
    %v3208 = vpop.f32.mrf.mxu0
    %v3209 = vadd.f32 0.0, %v3208
    %3210 = vdwg.mxu0
    %v3212 = vsel %vm359, %v3183, 0
    %v3215 = vsel %vm359, %v3209, 0
    %3217 = vmatpush.msra.mxu0 0.0
    %3218 = vmatpush.msra.mxu0 0.0
    %3219 = vmatpush.msra.mxu0 0.0
    %3220 = vmatpush.msra.mxu0 0.0
    %3221 = vmatpush.msra.mxu0 0.0
    %3222 = vmatpush.msra.mxu0 0.0
    %3223 = vmatpush.msra.mxu0 0.0
    %3224 = vmatpush.msra.mxu0 0.0
    %3225 = vmatpush.msra.mxu0 0.0
    %3226 = vmatpush.msra.mxu0 0.0
    %3227 = vmatpush.msra.mxu0 0.0
    %3228 = vmatpush.msra.mxu0 0.0
    %3229 = vmatpush.msra.mxu0 0.0
    %3230 = vmatpush.msra.mxu0 0.0
    %3231 = vmatpush.msra.mxu0 0.0
    %3232 = vmatpush.msra.mxu0 %v2677
    %3233 = vmatmul.f32.gmra.mxu0 %v3212
    %v3234 = vpop.f32.mrf.mxu0
    %v3235 = vadd.f32 0.0, %v3234
    %3236 = vmatmul.f32.gmra.mxu0 %v3215
    %v3237 = vpop.f32.mrf.mxu0
    %v3238 = vadd.f32 0.0, %v3237
    %3239 = vdwg.mxu0
    %v3240 = vadd.f32 %v3048, %v3235
    %v3241 = vadd.f32 %v3051, %v3238
    %3242 = vrot.lane.b32.xlu0 %v2669, 104
    %v3243 = vpop.permute.xlu0 %3242
    %3244 = vrot.lane.b32.xlu0 %v2669, 72
    %v3245 = vpop.permute.xlu0 %3244
    %v3246 = vsel %vm359, %v3243, 0
    %v3248 = vsel %vm359, %v3245, 0
    %3250 = vmatpush.xpose.msra.mxu0 0.0
    %3251 = vmatpush.xpose.msra.mxu0 0.0
    %3252 = vmatpush.xpose.msra.mxu0 0.0
    %3253 = vmatpush.xpose.msra.mxu0 0.0
    %3254 = vmatpush.xpose.msra.mxu0 0.0
    %3255 = vmatpush.xpose.msra.mxu0 0.0
    %3256 = vmatpush.xpose.msra.mxu0 0.0
    %3257 = vmatpush.xpose.msra.mxu0 0.0
    %3258 = vmatpush.xpose.msra.mxu0 0.0
    %3259 = vmatpush.xpose.msra.mxu0 0.0
    %3260 = vmatpush.xpose.msra.mxu0 0.0
    %3261 = vmatpush.xpose.msra.mxu0 0.0
    %3262 = vmatpush.xpose.msra.mxu0 0.0
    %3263 = vmatpush.xpose.msra.mxu0 0.0
    %3264 = vmatpush.xpose.msra.mxu0 0.0
    %3265 = vmatpush.xpose.msra.mxu0 %v3248
    %3266 = vmatmul.f32.gmra.mxu0 %v3246
    %v3267 = vpop.f32.mrf.mxu0
    %v3268 = vadd.f32 0.0, %v3267
    %3269 = vdwg.mxu0
    %3270 = vrot.lane.b32.xlu0 %v2672, 104
    %v3271 = vpop.permute.xlu0 %3270
    %3272 = vrot.lane.b32.xlu0 %v2672, 72
    %v3273 = vpop.permute.xlu0 %3272
    %v3274 = vsel %vm359, %v3271, 0
    %v3276 = vsel %vm359, %v3273, 0
    %3278 = vmatpush.xpose.msra.mxu0 0.0
    %3279 = vmatpush.xpose.msra.mxu0 0.0
    %3280 = vmatpush.xpose.msra.mxu0 0.0
    %3281 = vmatpush.xpose.msra.mxu0 0.0
    %3282 = vmatpush.xpose.msra.mxu0 0.0
    %3283 = vmatpush.xpose.msra.mxu0 0.0
    %3284 = vmatpush.xpose.msra.mxu0 0.0
    %3285 = vmatpush.xpose.msra.mxu0 0.0
    %3286 = vmatpush.xpose.msra.mxu0 0.0
    %3287 = vmatpush.xpose.msra.mxu0 0.0
    %3288 = vmatpush.xpose.msra.mxu0 0.0
    %3289 = vmatpush.xpose.msra.mxu0 0.0
    %3290 = vmatpush.xpose.msra.mxu0 0.0
    %3291 = vmatpush.xpose.msra.mxu0 0.0
    %3292 = vmatpush.xpose.msra.mxu0 0.0
    %3293 = vmatpush.xpose.msra.mxu0 %v3276
    %3294 = vmatmul.f32.gmra.mxu0 %v3274
    %v3295 = vpop.f32.mrf.mxu0
    %v3296 = vadd.f32 0.0, %v3295
    %3297 = vdwg.mxu0
    %v3298 = vmul.f32 %v3268, 0.35355338
    %v3299 = vmul.f32 %v3296, 0.35355338
    %v3300 = vsel %vm359, %v3298, -inf
    %3301 = vmax.xlane.f32.xlu0 %v3300
    %v3302 = vpop.xlane.xlu0 %3301
    %v3303 = vsel %vm359, %v3299, -inf
    %3304 = vmax.xlane.f32.xlu0 %v3303
    %v3305 = vpop.xlane.xlu0 %3304
    %v3306 = vsub.f32 %v3298, %v3302
    %v3307 = vsub.f32 %v3299, %v3305
    %v3308 = vmul.f32 %v3306, 1.442695
    %v3309 = vpow.pop %v3308
    %v3310 = vmul.f32 %v3307, 1.442695
    %v3311 = vpow.pop %v3310
    %v3312 = vsel %vm359, %v3309, 0.0
    %3313 = vadd.xlane.f32.xlu0 %v3312
    %v3314 = vpop.xlane.xlu0 %3313
    %v3315 = vsel %vm359, %v3311, 0.0
    %3316 = vadd.xlane.f32.xlu0 %v3315
    %v3317 = vpop.xlane.xlu0 %3316
    %v3318 = vrcp.pop %v3314
    %v3319 = vmul.f32 %v3314, %v3318
    %v3320 = vsub.f32 1.0, %v3319
    %v3321 = vmul.f32 %v3318, %v3320
    %v3322 = vadd.f32 %v3318, %v3321
    %vm3323 = vweird.f32 %v3314
    %vm3324 = vweird.f32 %v3318
    %vm3325 = vmor %vm3323, %vm3324
    %v3326 = vsel %vm3325, %v3318, %v3322
    %v3327 = vand.u32 2147483647, %v3314
    %vm3328 = vcmp.eq.f32.partialorder %v3327, 8.507059e+37
    %v3329 = vand.u32 %v3314, 2147483648
    %v3330 = vor.u32 1.1754944e-38, %v3329
    %v3331 = vsel %vm3328, %v3330, %v3326
    %v3332 = vmul.f32 %v3309, %v3331
    %v3333 = vrcp.pop %v3317
    %v3334 = vmul.f32 %v3317, %v3333
    %v3335 = vsub.f32 1.0, %v3334
    %v3336 = vmul.f32 %v3333, %v3335
    %v3337 = vadd.f32 %v3333, %v3336
    %vm3338 = vweird.f32 %v3317
    %vm3339 = vweird.f32 %v3333
    %vm3340 = vmor %vm3338, %vm3339
    %v3341 = vsel %vm3340, %v3333, %v3337
    %v3342 = vand.u32 2147483647, %v3317
    %vm3343 = vcmp.eq.f32.partialorder %v3342, 8.507059e+37
    %v3344 = vand.u32 %v3317, 2147483648
    %v3345 = vor.u32 1.1754944e-38, %v3344
    %v3346 = vsel %vm3343, %v3345, %v3341
    %v3347 = vmul.f32 %v3311, %v3346
    %3348 = vrot.lane.b32.xlu0 %v2669, 40
    %v3349 = vpop.permute.xlu0 %3348
    %v3352 = vsel %vm359, %v3332, 0
    %3354 = vmatpush.msra.mxu0 0.0
    %3355 = vmatpush.msra.mxu0 0.0
    %3356 = vmatpush.msra.mxu0 0.0
    %3357 = vmatpush.msra.mxu0 0.0
    %3358 = vmatpush.msra.mxu0 0.0
    %3359 = vmatpush.msra.mxu0 0.0
    %3360 = vmatpush.msra.mxu0 0.0
    %3361 = vmatpush.msra.mxu0 0.0
    %3362 = vmatpush.msra.mxu0 0.0
    %3363 = vmatpush.msra.mxu0 0.0
    %3364 = vmatpush.msra.mxu0 0.0
    %3365 = vmatpush.msra.mxu0 0.0
    %3366 = vmatpush.msra.mxu0 0.0
    %3367 = vmatpush.msra.mxu0 0.0
    %3368 = vmatpush.msra.mxu0 0.0
    %3369 = vmatpush.msra.mxu0 %v3349
    %3370 = vmatmul.f32.gmra.mxu0 %v3352
    %v3371 = vpop.f32.mrf.mxu0
    %v3372 = vadd.f32 0.0, %v3371
    %3373 = vdwg.mxu0
    %3374 = vrot.lane.b32.xlu0 %v2672, 40
    %v3375 = vpop.permute.xlu0 %3374
    %v3378 = vsel %vm359, %v3347, 0
    %3380 = vmatpush.msra.mxu0 0.0
    %3381 = vmatpush.msra.mxu0 0.0
    %3382 = vmatpush.msra.mxu0 0.0
    %3383 = vmatpush.msra.mxu0 0.0
    %3384 = vmatpush.msra.mxu0 0.0
    %3385 = vmatpush.msra.mxu0 0.0
    %3386 = vmatpush.msra.mxu0 0.0
    %3387 = vmatpush.msra.mxu0 0.0
    %3388 = vmatpush.msra.mxu0 0.0
    %3389 = vmatpush.msra.mxu0 0.0
    %3390 = vmatpush.msra.mxu0 0.0
    %3391 = vmatpush.msra.mxu0 0.0
    %3392 = vmatpush.msra.mxu0 0.0
    %3393 = vmatpush.msra.mxu0 0.0
    %3394 = vmatpush.msra.mxu0 0.0
    %3395 = vmatpush.msra.mxu0 %v3375
    %3396 = vmatmul.f32.gmra.mxu0 %v3378
    %v3397 = vpop.f32.mrf.mxu0
    %v3398 = vadd.f32 0.0, %v3397
    %3399 = vdwg.mxu0
    %v3401 = vsel %vm359, %v3372, 0
    %v3404 = vsel %vm359, %v3398, 0
    %3406 = vmatpush.msra.mxu0 0.0
    %3407 = vmatpush.msra.mxu0 0.0
    %3408 = vmatpush.msra.mxu0 0.0
    %3409 = vmatpush.msra.mxu0 0.0
    %3410 = vmatpush.msra.mxu0 0.0
    %3411 = vmatpush.msra.mxu0 0.0
    %3412 = vmatpush.msra.mxu0 0.0
    %3413 = vmatpush.msra.mxu0 0.0
    %3414 = vmatpush.msra.mxu0 0.0
    %3415 = vmatpush.msra.mxu0 0.0
    %3416 = vmatpush.msra.mxu0 0.0
    %3417 = vmatpush.msra.mxu0 0.0
    %3418 = vmatpush.msra.mxu0 0.0
    %3419 = vmatpush.msra.mxu0 0.0
    %3420 = vmatpush.msra.mxu0 0.0
    %3421 = vmatpush.msra.mxu0 %v2678
    %3422 = vmatmul.f32.gmra.mxu0 %v3401
    %v3423 = vpop.f32.mrf.mxu0
    %v3424 = vadd.f32 0.0, %v3423
    %3425 = vmatmul.f32.gmra.mxu0 %v3404
    %v3426 = vpop.f32.mrf.mxu0
    %v3427 = vadd.f32 0.0, %v3426
    %3428 = vdwg.mxu0
    %v3429 = vadd.f32 %v3240, %v3424
    %v3430 = vadd.f32 %v3241, %v3427
    %v3432 = vperm.slane %v2680, 0
    %v3434 = vadd.f32 %v3429, %v3432
    %v3435 = vadd.f32 %v3430, %v3432
    %v3436 = vadd.f32 %v2580, %v3434
    %v3437 = vadd.f32 %v2581, %v3435
    %v3438 = vsel %vm321, %v3436, 0.0
    %3439 = vadd.xlane.f32.xlu0 %v3438
    %v3440 = vpop.xlane.xlu0 %3439
    %v3441 = vsel %vm321, %v3437, 0.0
    %3442 = vadd.xlane.f32.xlu0 %v3441
    %v3443 = vpop.xlane.xlu0 %3442
    %v3444 = vmul.f32 %v3440, %v1126
    %v3445 = vmul.f32 %v3443, %v1126
    %v3446 = vsub.f32 %v3436, %v3444
    %v3447 = vsub.f32 %v3437, %v3445
    %v3448 = vmul.f32 %v3446, %v3446
    %v3449 = vmul.f32 %v3447, %v3447
    %v3450 = vsel %vm321, %v3448, 0.0
    %3451 = vadd.xlane.f32.xlu0 %v3450
    %v3452 = vpop.xlane.xlu0 %3451
    %v3453 = vsel %vm321, %v3449, 0.0
    %3454 = vadd.xlane.f32.xlu0 %v3453
    %v3455 = vpop.xlane.xlu0 %3454
    %v3456 = vmul.f32 %v3452, %v1126
    %v3457 = vmul.f32 %v3455, %v1126
    %v3458 = vadd.f32 %v3456, 1e-05
    %v3459 = vadd.f32 %v3457, 1e-05
    %v3460 = vrsqrt.pop %v3458
    %v3461 = vmul.f32 %v3460, %v3458
    %v3462 = vmul.f32 %v3461, %v3460
    %v3463 = vmul.f32 0.5, %v3462
    %v3464 = vsub.f32 1.5, %v3463
    %v3465 = vmul.f32 %v3460, %v3464
    %vm3466 = vweird.f32 %v3458
    %vm3467 = vweird.f32 %v3460
    %vm3468 = vmor %vm3466, %vm3467
    %v3469 = vsel %vm3468, %v3460, %v3465
    %v3470 = vrsqrt.pop %v3459
    %v3471 = vmul.f32 %v3470, %v3459
    %v3472 = vmul.f32 %v3471, %v3470
    %v3473 = vmul.f32 0.5, %v3472
    %v3474 = vsub.f32 1.5, %v3473
    %v3475 = vmul.f32 %v3470, %v3474
    %vm3476 = vweird.f32 %v3459
    %vm3477 = vweird.f32 %v3470
    %vm3478 = vmor %vm3476, %vm3477
    %v3479 = vsel %vm3478, %v3470, %v3475
    %v3480 = vmul.f32 %v3446, %v3469
    %v3481 = vmul.f32 %v3447, %v3479
    %v3482 = vperm.slane %v2632, 0
    %v3483 = vmul.f32 %v3480, %v3482
    %v3484 = vmul.f32 %v3481, %v3482
    %v3485 = vperm.slane %v2634, 0
    %v3486 = vadd.f32 %v3483, %v3485
    %v3487 = vadd.f32 %v3484, %v3485
    %s3488 = scalar_lea.vmem %s25, 32
    %v3489 = vld [vmem:[%s3488] sm:$0xff]
    %v3490 = vld [vmem:[%s3488 + $0x8] sm:$0xff]
    %v3491 = vld [vmem:[%s3488 + $0x10] sm:$0xff]
    %v3492 = vld [vmem:[%s3488 + $0x18] sm:$0xff]
    %s3493 = scalar_lea.vmem [#allocation14], 1
    %v3494 = vld [vmem:[%s3493] sm:$0x1]
    %v3496 = vperm.slane %v3494, 0
    %v3499 = vsel %vm321, %v3486, 0
    %v3502 = vsel %vm321, %v3487, 0
    %3504 = vmatpush.msra.mxu0 0.0
    %3505 = vmatpush.msra.mxu0 0.0
    %3506 = vmatpush.msra.mxu0 0.0
    %3507 = vmatpush.msra.mxu0 0.0
    %3508 = vmatpush.msra.mxu0 0.0
    %3509 = vmatpush.msra.mxu0 0.0
    %3510 = vmatpush.msra.mxu0 0.0
    %3511 = vmatpush.msra.mxu0 0.0
    %3512 = vmatpush.msra.mxu0 0.0
    %3513 = vmatpush.msra.mxu0 0.0
    %3514 = vmatpush.msra.mxu0 0.0
    %3515 = vmatpush.msra.mxu0 0.0
    %3516 = vmatpush.msra.mxu0 %v3492
    %3517 = vmatpush.msra.mxu0 %v3491
    %3518 = vmatpush.msra.mxu0 %v3490
    %3519 = vmatpush.msra.mxu0 %v3489
    %3520 = vmatmul.f32.gmra.mxu0 %v3499
    %v3521 = vpop.f32.mrf.mxu0
    %v3522 = vadd.f32 %v3496, %v3521
    %3523 = vmatmul.f32.gmra.mxu0 %v3502
    %v3524 = vpop.f32.mrf.mxu0
    %v3525 = vadd.f32 %v3496, %v3524
    %3526 = vdwg.mxu0
    %s3527 = scalar_lea.vmem %s29, 32
    %v3528 = vld [vmem:[%s3527] sm:$0xff]
    %v3529 = vld [vmem:[%s3527 + $0x8] sm:$0xff]
    %v3530 = vld [vmem:[%s3527 + $0x10] sm:$0xff]
    %v3531 = vld [vmem:[%s3527 + $0x18] sm:$0xff]
    %s3532 = scalar_lea.vmem %s31, 1
    %v3533 = vld [vmem:[%s3532] sm:$0x1]
    %v3535 = vperm.slane %v3533, 0
    %3537 = vmatpush.msra.mxu0 0.0
    %3538 = vmatpush.msra.mxu0 0.0
    %3539 = vmatpush.msra.mxu0 0.0
    %3540 = vmatpush.msra.mxu0 0.0
    %3541 = vmatpush.msra.mxu0 0.0
    %3542 = vmatpush.msra.mxu0 0.0
    %3543 = vmatpush.msra.mxu0 0.0
    %3544 = vmatpush.msra.mxu0 0.0
    %3545 = vmatpush.msra.mxu0 0.0
    %3546 = vmatpush.msra.mxu0 0.0
    %3547 = vmatpush.msra.mxu0 0.0
    %3548 = vmatpush.msra.mxu0 0.0
    %3549 = vmatpush.msra.mxu0 %v3531
    %3550 = vmatpush.msra.mxu0 %v3530
    %3551 = vmatpush.msra.mxu0 %v3529
    %3552 = vmatpush.msra.mxu0 %v3528
    %3553 = vmatmul.f32.gmra.mxu0 %v1217
    %v3554 = vpop.f32.mrf.mxu0
    %v3555 = vadd.f32 %v3535, %v3554
    %3556 = vmatmul.f32.gmra.mxu0 %v1220
    %v3557 = vpop.f32.mrf.mxu0
    %v3558 = vadd.f32 %v3535, %v3557
    %3559 = vdwg.mxu0
    %s3560 = scalar_lea.vmem [#allocation16], 32
    %v3561 = vld [vmem:[%s3560] sm:$0xff]
    %v3562 = vld [vmem:[%s3560 + $0x8] sm:$0xff]
    %v3563 = vld [vmem:[%s3560 + $0x10] sm:$0xff]
    %v3564 = vld [vmem:[%s3560 + $0x18] sm:$0xff]
    %s3565 = scalar_lea.vmem %s35, 1
    %v3566 = vld [vmem:[%s3565] sm:$0x1]
    %v3568 = vsel %vm359, %v3522, 0
    %v3571 = vsel %vm359, %v3555, 0
    %3573 = vmatpush.xpose.msra.mxu0 0.0
    %3574 = vmatpush.xpose.msra.mxu0 0.0
    %3575 = vmatpush.xpose.msra.mxu0 0.0
    %3576 = vmatpush.xpose.msra.mxu0 0.0
    %3577 = vmatpush.xpose.msra.mxu0 0.0
    %3578 = vmatpush.xpose.msra.mxu0 0.0
    %3579 = vmatpush.xpose.msra.mxu0 0.0
    %3580 = vmatpush.xpose.msra.mxu0 0.0
    %3581 = vmatpush.xpose.msra.mxu0 0.0
    %3582 = vmatpush.xpose.msra.mxu0 0.0
    %3583 = vmatpush.xpose.msra.mxu0 0.0
    %3584 = vmatpush.xpose.msra.mxu0 0.0
    %3585 = vmatpush.xpose.msra.mxu0 0.0
    %3586 = vmatpush.xpose.msra.mxu0 0.0
    %3587 = vmatpush.xpose.msra.mxu0 0.0
    %3588 = vmatpush.xpose.msra.mxu0 %v3571
    %3589 = vmatmul.f32.gmra.mxu0 %v3568
    %v3590 = vpop.f32.mrf.mxu0
    %v3591 = vadd.f32 0.0, %v3590
    %3592 = vdwg.mxu0
    %v3594 = vsel %vm359, %v3525, 0
    %v3597 = vsel %vm359, %v3558, 0
    %3599 = vmatpush.xpose.msra.mxu0 0.0
    %3600 = vmatpush.xpose.msra.mxu0 0.0
    %3601 = vmatpush.xpose.msra.mxu0 0.0
    %3602 = vmatpush.xpose.msra.mxu0 0.0
    %3603 = vmatpush.xpose.msra.mxu0 0.0
    %3604 = vmatpush.xpose.msra.mxu0 0.0
    %3605 = vmatpush.xpose.msra.mxu0 0.0
    %3606 = vmatpush.xpose.msra.mxu0 0.0
    %3607 = vmatpush.xpose.msra.mxu0 0.0
    %3608 = vmatpush.xpose.msra.mxu0 0.0
    %3609 = vmatpush.xpose.msra.mxu0 0.0
    %3610 = vmatpush.xpose.msra.mxu0 0.0
    %3611 = vmatpush.xpose.msra.mxu0 0.0
    %3612 = vmatpush.xpose.msra.mxu0 0.0
    %3613 = vmatpush.xpose.msra.mxu0 0.0
    %3614 = vmatpush.xpose.msra.mxu0 %v3597
    %3615 = vmatmul.f32.gmra.mxu0 %v3594
    %v3616 = vpop.f32.mrf.mxu0
    %v3617 = vadd.f32 0.0, %v3616
    %3618 = vdwg.mxu0
    %v3619 = vmul.f32 %v3591, 0.35355338
    %v3620 = vmul.f32 %v3617, 0.35355338
    %v3621 = vsel %vm359, %v3619, -inf
    %3622 = vmax.xlane.f32.xlu0 %v3621
    %v3623 = vpop.xlane.xlu0 %3622
    %v3624 = vsel %vm359, %v3620, -inf
    %3625 = vmax.xlane.f32.xlu0 %v3624
    %v3626 = vpop.xlane.xlu0 %3625
    %v3627 = vsub.f32 %v3619, %v3623
    %v3628 = vsub.f32 %v3620, %v3626
    %v3629 = vmul.f32 %v3627, 1.442695
    %v3630 = vpow.pop %v3629
    %v3631 = vmul.f32 %v3628, 1.442695
    %v3632 = vpow.pop %v3631
    %v3633 = vsel %vm359, %v3630, 0.0
    %3634 = vadd.xlane.f32.xlu0 %v3633
    %v3635 = vpop.xlane.xlu0 %3634
    %v3636 = vsel %vm359, %v3632, 0.0
    %3637 = vadd.xlane.f32.xlu0 %v3636
    %v3638 = vpop.xlane.xlu0 %3637
    %v3639 = vrcp.pop %v3635
    %v3640 = vmul.f32 %v3635, %v3639
    %v3641 = vsub.f32 1.0, %v3640
    %v3642 = vmul.f32 %v3639, %v3641
    %v3643 = vadd.f32 %v3639, %v3642
    %vm3644 = vweird.f32 %v3635
    %vm3645 = vweird.f32 %v3639
    %vm3646 = vmor %vm3644, %vm3645
    %v3647 = vsel %vm3646, %v3639, %v3643
    %v3648 = vand.u32 2147483647, %v3635
    %vm3649 = vcmp.eq.f32.partialorder %v3648, 8.507059e+37
    %v3650 = vand.u32 %v3635, 2147483648
    %v3651 = vor.u32 1.1754944e-38, %v3650
    %v3652 = vsel %vm3649, %v3651, %v3647
    %v3653 = vmul.f32 %v3630, %v3652
    %v3654 = vrcp.pop %v3638
    %v3655 = vmul.f32 %v3638, %v3654
    %v3656 = vsub.f32 1.0, %v3655
    %v3657 = vmul.f32 %v3654, %v3656
    %v3658 = vadd.f32 %v3654, %v3657
    %vm3659 = vweird.f32 %v3638
    %vm3660 = vweird.f32 %v3654
    %vm3661 = vmor %vm3659, %vm3660
    %v3662 = vsel %vm3661, %v3654, %v3658
    %v3663 = vand.u32 2147483647, %v3638
    %vm3664 = vcmp.eq.f32.partialorder %v3663, 8.507059e+37
    %v3665 = vand.u32 %v3638, 2147483648
    %v3666 = vor.u32 1.1754944e-38, %v3665
    %v3667 = vsel %vm3664, %v3666, %v3662
    %v3668 = vmul.f32 %v3632, %v3667
    %3669 = vrot.lane.b32.xlu0 %v3555, 96
    %v3670 = vpop.permute.xlu0 %3669
    %v3673 = vsel %vm359, %v3653, 0
    %3675 = vmatpush.msra.mxu0 0.0
    %3676 = vmatpush.msra.mxu0 0.0
    %3677 = vmatpush.msra.mxu0 0.0
    %3678 = vmatpush.msra.mxu0 0.0
    %3679 = vmatpush.msra.mxu0 0.0
    %3680 = vmatpush.msra.mxu0 0.0
    %3681 = vmatpush.msra.mxu0 0.0
    %3682 = vmatpush.msra.mxu0 0.0
    %3683 = vmatpush.msra.mxu0 0.0
    %3684 = vmatpush.msra.mxu0 0.0
    %3685 = vmatpush.msra.mxu0 0.0
    %3686 = vmatpush.msra.mxu0 0.0
    %3687 = vmatpush.msra.mxu0 0.0
    %3688 = vmatpush.msra.mxu0 0.0
    %3689 = vmatpush.msra.mxu0 0.0
    %3690 = vmatpush.msra.mxu0 %v3670
    %3691 = vmatmul.f32.gmra.mxu0 %v3673
    %v3692 = vpop.f32.mrf.mxu0
    %v3693 = vadd.f32 0.0, %v3692
    %3694 = vdwg.mxu0
    %3695 = vrot.lane.b32.xlu0 %v3558, 96
    %v3696 = vpop.permute.xlu0 %3695
    %v3699 = vsel %vm359, %v3668, 0
    %3701 = vmatpush.msra.mxu0 0.0
    %3702 = vmatpush.msra.mxu0 0.0
    %3703 = vmatpush.msra.mxu0 0.0
    %3704 = vmatpush.msra.mxu0 0.0
    %3705 = vmatpush.msra.mxu0 0.0
    %3706 = vmatpush.msra.mxu0 0.0
    %3707 = vmatpush.msra.mxu0 0.0
    %3708 = vmatpush.msra.mxu0 0.0
    %3709 = vmatpush.msra.mxu0 0.0
    %3710 = vmatpush.msra.mxu0 0.0
    %3711 = vmatpush.msra.mxu0 0.0
    %3712 = vmatpush.msra.mxu0 0.0
    %3713 = vmatpush.msra.mxu0 0.0
    %3714 = vmatpush.msra.mxu0 0.0
    %3715 = vmatpush.msra.mxu0 0.0
    %3716 = vmatpush.msra.mxu0 %v3696
    %3717 = vmatmul.f32.gmra.mxu0 %v3699
    %v3718 = vpop.f32.mrf.mxu0
    %v3719 = vadd.f32 0.0, %v3718
    %3720 = vdwg.mxu0
    %3721 = vrot.lane.b32.xlu0 %v3522, 120
    %v3722 = vpop.permute.xlu0 %3721
    %3723 = vrot.lane.b32.xlu0 %v3555, 120
    %v3724 = vpop.permute.xlu0 %3723
    %v3725 = vsel %vm359, %v3722, 0
    %v3727 = vsel %vm359, %v3724, 0
    %3729 = vmatpush.xpose.msra.mxu0 0.0
    %3730 = vmatpush.xpose.msra.mxu0 0.0
    %3731 = vmatpush.xpose.msra.mxu0 0.0
    %3732 = vmatpush.xpose.msra.mxu0 0.0
    %3733 = vmatpush.xpose.msra.mxu0 0.0
    %3734 = vmatpush.xpose.msra.mxu0 0.0
    %3735 = vmatpush.xpose.msra.mxu0 0.0
    %3736 = vmatpush.xpose.msra.mxu0 0.0
    %3737 = vmatpush.xpose.msra.mxu0 0.0
    %3738 = vmatpush.xpose.msra.mxu0 0.0
    %3739 = vmatpush.xpose.msra.mxu0 0.0
    %3740 = vmatpush.xpose.msra.mxu0 0.0
    %3741 = vmatpush.xpose.msra.mxu0 0.0
    %3742 = vmatpush.xpose.msra.mxu0 0.0
    %3743 = vmatpush.xpose.msra.mxu0 0.0
    %3744 = vmatpush.xpose.msra.mxu0 %v3727
    %3745 = vmatmul.f32.gmra.mxu0 %v3725
    %v3746 = vpop.f32.mrf.mxu0
    %v3747 = vadd.f32 0.0, %v3746
    %3748 = vdwg.mxu0
    %3749 = vrot.lane.b32.xlu0 %v3525, 120
    %v3750 = vpop.permute.xlu0 %3749
    %3751 = vrot.lane.b32.xlu0 %v3558, 120
    %v3752 = vpop.permute.xlu0 %3751
    %v3753 = vsel %vm359, %v3750, 0
    %v3755 = vsel %vm359, %v3752, 0
    %3757 = vmatpush.xpose.msra.mxu0 0.0
    %3758 = vmatpush.xpose.msra.mxu0 0.0
    %3759 = vmatpush.xpose.msra.mxu0 0.0
    %3760 = vmatpush.xpose.msra.mxu0 0.0
    %3761 = vmatpush.xpose.msra.mxu0 0.0
    %3762 = vmatpush.xpose.msra.mxu0 0.0
    %3763 = vmatpush.xpose.msra.mxu0 0.0
    %3764 = vmatpush.xpose.msra.mxu0 0.0
    %3765 = vmatpush.xpose.msra.mxu0 0.0
    %3766 = vmatpush.xpose.msra.mxu0 0.0
    %3767 = vmatpush.xpose.msra.mxu0 0.0
    %3768 = vmatpush.xpose.msra.mxu0 0.0
    %3769 = vmatpush.xpose.msra.mxu0 0.0
    %3770 = vmatpush.xpose.msra.mxu0 0.0
    %3771 = vmatpush.xpose.msra.mxu0 0.0
    %3772 = vmatpush.xpose.msra.mxu0 %v3755
    %3773 = vmatmul.f32.gmra.mxu0 %v3753
    %v3774 = vpop.f32.mrf.mxu0
    %v3775 = vadd.f32 0.0, %v3774
    %3776 = vdwg.mxu0
    %v3777 = vmul.f32 %v3747, 0.35355338
    %v3778 = vmul.f32 %v3775, 0.35355338
    %v3779 = vsel %vm359, %v3777, -inf
    %3780 = vmax.xlane.f32.xlu0 %v3779
    %v3781 = vpop.xlane.xlu0 %3780
    %v3782 = vsel %vm359, %v3778, -inf
    %3783 = vmax.xlane.f32.xlu0 %v3782
    %v3784 = vpop.xlane.xlu0 %3783
    %v3785 = vsub.f32 %v3777, %v3781
    %v3786 = vsub.f32 %v3778, %v3784
    %v3787 = vmul.f32 %v3785, 1.442695
    %v3788 = vpow.pop %v3787
    %v3789 = vmul.f32 %v3786, 1.442695
    %v3790 = vpow.pop %v3789
    %v3791 = vsel %vm359, %v3788, 0.0
    %3792 = vadd.xlane.f32.xlu0 %v3791
    %v3793 = vpop.xlane.xlu0 %3792
    %v3794 = vsel %vm359, %v3790, 0.0
    %3795 = vadd.xlane.f32.xlu0 %v3794
    %v3796 = vpop.xlane.xlu0 %3795
    %v3797 = vrcp.pop %v3793
    %v3798 = vmul.f32 %v3793, %v3797
    %v3799 = vsub.f32 1.0, %v3798
    %v3800 = vmul.f32 %v3797, %v3799
    %v3801 = vadd.f32 %v3797, %v3800
    %vm3802 = vweird.f32 %v3793
    %vm3803 = vweird.f32 %v3797
    %vm3804 = vmor %vm3802, %vm3803
    %v3805 = vsel %vm3804, %v3797, %v3801
    %v3806 = vand.u32 2147483647, %v3793
    %vm3807 = vcmp.eq.f32.partialorder %v3806, 8.507059e+37
    %v3808 = vand.u32 %v3793, 2147483648
    %v3809 = vor.u32 1.1754944e-38, %v3808
    %v3810 = vsel %vm3807, %v3809, %v3805
    %v3811 = vmul.f32 %v3788, %v3810
    %v3812 = vrcp.pop %v3796
    %v3813 = vmul.f32 %v3796, %v3812
    %v3814 = vsub.f32 1.0, %v3813
    %v3815 = vmul.f32 %v3812, %v3814
    %v3816 = vadd.f32 %v3812, %v3815
    %vm3817 = vweird.f32 %v3796
    %vm3818 = vweird.f32 %v3812
    %vm3819 = vmor %vm3817, %vm3818
    %v3820 = vsel %vm3819, %v3812, %v3816
    %v3821 = vand.u32 2147483647, %v3796
    %vm3822 = vcmp.eq.f32.partialorder %v3821, 8.507059e+37
    %v3823 = vand.u32 %v3796, 2147483648
    %v3824 = vor.u32 1.1754944e-38, %v3823
    %v3825 = vsel %vm3822, %v3824, %v3820
    %v3826 = vmul.f32 %v3790, %v3825
    %3827 = vrot.lane.b32.xlu0 %v3555, 88
    %v3828 = vpop.permute.xlu0 %3827
    %v3831 = vsel %vm359, %v3811, 0
    %3833 = vmatpush.msra.mxu0 0.0
    %3834 = vmatpush.msra.mxu0 0.0
    %3835 = vmatpush.msra.mxu0 0.0
    %3836 = vmatpush.msra.mxu0 0.0
    %3837 = vmatpush.msra.mxu0 0.0
    %3838 = vmatpush.msra.mxu0 0.0
    %3839 = vmatpush.msra.mxu0 0.0
    %3840 = vmatpush.msra.mxu0 0.0
    %3841 = vmatpush.msra.mxu0 0.0
    %3842 = vmatpush.msra.mxu0 0.0
    %3843 = vmatpush.msra.mxu0 0.0
    %3844 = vmatpush.msra.mxu0 0.0
    %3845 = vmatpush.msra.mxu0 0.0
    %3846 = vmatpush.msra.mxu0 0.0
    %3847 = vmatpush.msra.mxu0 0.0
    %3848 = vmatpush.msra.mxu0 %v3828
    %3849 = vmatmul.f32.gmra.mxu0 %v3831
    %v3850 = vpop.f32.mrf.mxu0
    %v3851 = vadd.f32 0.0, %v3850
    %3852 = vdwg.mxu0
    %3853 = vrot.lane.b32.xlu0 %v3558, 88
    %v3854 = vpop.permute.xlu0 %3853
    %v3857 = vsel %vm359, %v3826, 0
    %3859 = vmatpush.msra.mxu0 0.0
    %3860 = vmatpush.msra.mxu0 0.0
    %3861 = vmatpush.msra.mxu0 0.0
    %3862 = vmatpush.msra.mxu0 0.0
    %3863 = vmatpush.msra.mxu0 0.0
    %3864 = vmatpush.msra.mxu0 0.0
    %3865 = vmatpush.msra.mxu0 0.0
    %3866 = vmatpush.msra.mxu0 0.0
    %3867 = vmatpush.msra.mxu0 0.0
    %3868 = vmatpush.msra.mxu0 0.0
    %3869 = vmatpush.msra.mxu0 0.0
    %3870 = vmatpush.msra.mxu0 0.0
    %3871 = vmatpush.msra.mxu0 0.0
    %3872 = vmatpush.msra.mxu0 0.0
    %3873 = vmatpush.msra.mxu0 0.0
    %3874 = vmatpush.msra.mxu0 %v3854
    %3875 = vmatmul.f32.gmra.mxu0 %v3857
    %v3876 = vpop.f32.mrf.mxu0
    %v3877 = vadd.f32 0.0, %v3876
    %3878 = vdwg.mxu0
    %v3880 = vsel %vm359, %v3851, 0
    %v3883 = vsel %vm359, %v3877, 0
    %3885 = vmatpush.msra.mxu0 0.0
    %3886 = vmatpush.msra.mxu0 0.0
    %3887 = vmatpush.msra.mxu0 0.0
    %3888 = vmatpush.msra.mxu0 0.0
    %3889 = vmatpush.msra.mxu0 0.0
    %3890 = vmatpush.msra.mxu0 0.0
    %3891 = vmatpush.msra.mxu0 0.0
    %3892 = vmatpush.msra.mxu0 0.0
    %3893 = vmatpush.msra.mxu0 0.0
    %3894 = vmatpush.msra.mxu0 0.0
    %3895 = vmatpush.msra.mxu0 0.0
    %3896 = vmatpush.msra.mxu0 0.0
    %3897 = vmatpush.msra.mxu0 0.0
    %3898 = vmatpush.msra.mxu0 0.0
    %3899 = vmatpush.msra.mxu0 0.0
    %3900 = vmatpush.msra.mxu0 %v3562
    %3901 = vmatmul.f32.gmra.mxu0 %v3880
    %v3902 = vpop.f32.mrf.mxu0
    %v3903 = vadd.f32 0.0, %v3902
    %3904 = vmatmul.f32.gmra.mxu0 %v3883
    %v3905 = vpop.f32.mrf.mxu0
    %v3906 = vadd.f32 0.0, %v3905
    %3907 = vdwg.mxu0
    %v3909 = vsel %vm359, %v3693, 0
    %v3912 = vsel %vm359, %v3719, 0
    %3914 = vmatpush.msra.mxu0 0.0
    %3915 = vmatpush.msra.mxu0 0.0
    %3916 = vmatpush.msra.mxu0 0.0
    %3917 = vmatpush.msra.mxu0 0.0
    %3918 = vmatpush.msra.mxu0 0.0
    %3919 = vmatpush.msra.mxu0 0.0
    %3920 = vmatpush.msra.mxu0 0.0
    %3921 = vmatpush.msra.mxu0 0.0
    %3922 = vmatpush.msra.mxu0 0.0
    %3923 = vmatpush.msra.mxu0 0.0
    %3924 = vmatpush.msra.mxu0 0.0
    %3925 = vmatpush.msra.mxu0 0.0
    %3926 = vmatpush.msra.mxu0 0.0
    %3927 = vmatpush.msra.mxu0 0.0
    %3928 = vmatpush.msra.mxu0 0.0
    %3929 = vmatpush.msra.mxu0 %v3561
    %3930 = vmatmul.f32.gmra.mxu0 %v3909
    %v3931 = vpop.f32.mrf.mxu0
    %v3932 = vadd.f32 %v3903, %v3931
    %3933 = vmatmul.f32.gmra.mxu0 %v3912
    %v3934 = vpop.f32.mrf.mxu0
    %v3935 = vadd.f32 %v3906, %v3934
    %3936 = vdwg.mxu0
    %3937 = vrot.lane.b32.xlu0 %v3522, 112
    %v3938 = vpop.permute.xlu0 %3937
    %3939 = vrot.lane.b32.xlu0 %v3555, 112
    %v3940 = vpop.permute.xlu0 %3939
    %v3941 = vsel %vm359, %v3938, 0
    %v3943 = vsel %vm359, %v3940, 0
    %3945 = vmatpush.xpose.msra.mxu0 0.0
    %3946 = vmatpush.xpose.msra.mxu0 0.0
    %3947 = vmatpush.xpose.msra.mxu0 0.0
    %3948 = vmatpush.xpose.msra.mxu0 0.0
    %3949 = vmatpush.xpose.msra.mxu0 0.0
    %3950 = vmatpush.xpose.msra.mxu0 0.0
    %3951 = vmatpush.xpose.msra.mxu0 0.0
    %3952 = vmatpush.xpose.msra.mxu0 0.0
    %3953 = vmatpush.xpose.msra.mxu0 0.0
    %3954 = vmatpush.xpose.msra.mxu0 0.0
    %3955 = vmatpush.xpose.msra.mxu0 0.0
    %3956 = vmatpush.xpose.msra.mxu0 0.0
    %3957 = vmatpush.xpose.msra.mxu0 0.0
    %3958 = vmatpush.xpose.msra.mxu0 0.0
    %3959 = vmatpush.xpose.msra.mxu0 0.0
    %3960 = vmatpush.xpose.msra.mxu0 %v3943
    %3961 = vmatmul.f32.gmra.mxu0 %v3941
    %v3962 = vpop.f32.mrf.mxu0
    %v3963 = vadd.f32 0.0, %v3962
    %3964 = vdwg.mxu0
    %3965 = vrot.lane.b32.xlu0 %v3525, 112
    %v3966 = vpop.permute.xlu0 %3965
    %3967 = vrot.lane.b32.xlu0 %v3558, 112
    %v3968 = vpop.permute.xlu0 %3967
    %v3969 = vsel %vm359, %v3966, 0
    %v3971 = vsel %vm359, %v3968, 0
    %3973 = vmatpush.xpose.msra.mxu0 0.0
    %3974 = vmatpush.xpose.msra.mxu0 0.0
    %3975 = vmatpush.xpose.msra.mxu0 0.0
    %3976 = vmatpush.xpose.msra.mxu0 0.0
    %3977 = vmatpush.xpose.msra.mxu0 0.0
    %3978 = vmatpush.xpose.msra.mxu0 0.0
    %3979 = vmatpush.xpose.msra.mxu0 0.0
    %3980 = vmatpush.xpose.msra.mxu0 0.0
    %3981 = vmatpush.xpose.msra.mxu0 0.0
    %3982 = vmatpush.xpose.msra.mxu0 0.0
    %3983 = vmatpush.xpose.msra.mxu0 0.0
    %3984 = vmatpush.xpose.msra.mxu0 0.0
    %3985 = vmatpush.xpose.msra.mxu0 0.0
    %3986 = vmatpush.xpose.msra.mxu0 0.0
    %3987 = vmatpush.xpose.msra.mxu0 0.0
    %3988 = vmatpush.xpose.msra.mxu0 %v3971
    %3989 = vmatmul.f32.gmra.mxu0 %v3969
    %v3990 = vpop.f32.mrf.mxu0
    %v3991 = vadd.f32 0.0, %v3990
    %3992 = vdwg.mxu0
    %v3993 = vmul.f32 %v3963, 0.35355338
    %v3994 = vmul.f32 %v3991, 0.35355338
    %v3995 = vsel %vm359, %v3993, -inf
    %3996 = vmax.xlane.f32.xlu0 %v3995
    %v3997 = vpop.xlane.xlu0 %3996
    %v3998 = vsel %vm359, %v3994, -inf
    %3999 = vmax.xlane.f32.xlu0 %v3998
    %v4000 = vpop.xlane.xlu0 %3999
    %v4001 = vsub.f32 %v3993, %v3997
    %v4002 = vsub.f32 %v3994, %v4000
    %v4003 = vmul.f32 %v4001, 1.442695
    %v4004 = vpow.pop %v4003
    %v4005 = vmul.f32 %v4002, 1.442695
    %v4006 = vpow.pop %v4005
    %v4007 = vsel %vm359, %v4004, 0.0
    %4008 = vadd.xlane.f32.xlu0 %v4007
    %v4009 = vpop.xlane.xlu0 %4008
    %v4010 = vsel %vm359, %v4006, 0.0
    %4011 = vadd.xlane.f32.xlu0 %v4010
    %v4012 = vpop.xlane.xlu0 %4011
    %v4013 = vrcp.pop %v4009
    %v4014 = vmul.f32 %v4009, %v4013
    %v4015 = vsub.f32 1.0, %v4014
    %v4016 = vmul.f32 %v4013, %v4015
    %v4017 = vadd.f32 %v4013, %v4016
    %vm4018 = vweird.f32 %v4009
    %vm4019 = vweird.f32 %v4013
    %vm4020 = vmor %vm4018, %vm4019
    %v4021 = vsel %vm4020, %v4013, %v4017
    %v4022 = vand.u32 2147483647, %v4009
    %vm4023 = vcmp.eq.f32.partialorder %v4022, 8.507059e+37
    %v4024 = vand.u32 %v4009, 2147483648
    %v4025 = vor.u32 1.1754944e-38, %v4024
    %v4026 = vsel %vm4023, %v4025, %v4021
    %v4027 = vmul.f32 %v4004, %v4026
    %v4028 = vrcp.pop %v4012
    %v4029 = vmul.f32 %v4012, %v4028
    %v4030 = vsub.f32 1.0, %v4029
    %v4031 = vmul.f32 %v4028, %v4030
    %v4032 = vadd.f32 %v4028, %v4031
    %vm4033 = vweird.f32 %v4012
    %vm4034 = vweird.f32 %v4028
    %vm4035 = vmor %vm4033, %vm4034
    %v4036 = vsel %vm4035, %v4028, %v4032
    %v4037 = vand.u32 2147483647, %v4012
    %vm4038 = vcmp.eq.f32.partialorder %v4037, 8.507059e+37
    %v4039 = vand.u32 %v4012, 2147483648
    %v4040 = vor.u32 1.1754944e-38, %v4039
    %v4041 = vsel %vm4038, %v4040, %v4036
    %v4042 = vmul.f32 %v4006, %v4041
    %4043 = vrot.lane.b32.xlu0 %v3555, 80
    %v4044 = vpop.permute.xlu0 %4043
    %v4047 = vsel %vm359, %v4027, 0
    %4049 = vmatpush.msra.mxu0 0.0
    %4050 = vmatpush.msra.mxu0 0.0
    %4051 = vmatpush.msra.mxu0 0.0
    %4052 = vmatpush.msra.mxu0 0.0
    %4053 = vmatpush.msra.mxu0 0.0
    %4054 = vmatpush.msra.mxu0 0.0
    %4055 = vmatpush.msra.mxu0 0.0
    %4056 = vmatpush.msra.mxu0 0.0
    %4057 = vmatpush.msra.mxu0 0.0
    %4058 = vmatpush.msra.mxu0 0.0
    %4059 = vmatpush.msra.mxu0 0.0
    %4060 = vmatpush.msra.mxu0 0.0
    %4061 = vmatpush.msra.mxu0 0.0
    %4062 = vmatpush.msra.mxu0 0.0
    %4063 = vmatpush.msra.mxu0 0.0
    %4064 = vmatpush.msra.mxu0 %v4044
    %4065 = vmatmul.f32.gmra.mxu0 %v4047
    %v4066 = vpop.f32.mrf.mxu0
    %v4067 = vadd.f32 0.0, %v4066
    %4068 = vdwg.mxu0
    %4069 = vrot.lane.b32.xlu0 %v3558, 80
    %v4070 = vpop.permute.xlu0 %4069
    %v4073 = vsel %vm359, %v4042, 0
    %4075 = vmatpush.msra.mxu0 0.0
    %4076 = vmatpush.msra.mxu0 0.0
    %4077 = vmatpush.msra.mxu0 0.0
    %4078 = vmatpush.msra.mxu0 0.0
    %4079 = vmatpush.msra.mxu0 0.0
    %4080 = vmatpush.msra.mxu0 0.0
    %4081 = vmatpush.msra.mxu0 0.0
    %4082 = vmatpush.msra.mxu0 0.0
    %4083 = vmatpush.msra.mxu0 0.0
    %4084 = vmatpush.msra.mxu0 0.0
    %4085 = vmatpush.msra.mxu0 0.0
    %4086 = vmatpush.msra.mxu0 0.0
    %4087 = vmatpush.msra.mxu0 0.0
    %4088 = vmatpush.msra.mxu0 0.0
    %4089 = vmatpush.msra.mxu0 0.0
    %4090 = vmatpush.msra.mxu0 %v4070
    %4091 = vmatmul.f32.gmra.mxu0 %v4073
    %v4092 = vpop.f32.mrf.mxu0
    %v4093 = vadd.f32 0.0, %v4092
    %4094 = vdwg.mxu0
    %v4096 = vsel %vm359, %v4067, 0
    %v4099 = vsel %vm359, %v4093, 0
    %4101 = vmatpush.msra.mxu0 0.0
    %4102 = vmatpush.msra.mxu0 0.0
    %4103 = vmatpush.msra.mxu0 0.0
    %4104 = vmatpush.msra.mxu0 0.0
    %4105 = vmatpush.msra.mxu0 0.0
    %4106 = vmatpush.msra.mxu0 0.0
    %4107 = vmatpush.msra.mxu0 0.0
    %4108 = vmatpush.msra.mxu0 0.0
    %4109 = vmatpush.msra.mxu0 0.0
    %4110 = vmatpush.msra.mxu0 0.0
    %4111 = vmatpush.msra.mxu0 0.0
    %4112 = vmatpush.msra.mxu0 0.0
    %4113 = vmatpush.msra.mxu0 0.0
    %4114 = vmatpush.msra.mxu0 0.0
    %4115 = vmatpush.msra.mxu0 0.0
    %4116 = vmatpush.msra.mxu0 %v3563
    %4117 = vmatmul.f32.gmra.mxu0 %v4096
    %v4118 = vpop.f32.mrf.mxu0
    %v4119 = vadd.f32 0.0, %v4118
    %4120 = vmatmul.f32.gmra.mxu0 %v4099
    %v4121 = vpop.f32.mrf.mxu0
    %v4122 = vadd.f32 0.0, %v4121
    %4123 = vdwg.mxu0
    %v4124 = vadd.f32 %v3932, %v4119
    %v4125 = vadd.f32 %v3935, %v4122
    %4126 = vrot.lane.b32.xlu0 %v3522, 104
    %v4127 = vpop.permute.xlu0 %4126
    %4128 = vrot.lane.b32.xlu0 %v3555, 104
    %v4129 = vpop.permute.xlu0 %4128
    %v4130 = vsel %vm359, %v4127, 0
    %v4132 = vsel %vm359, %v4129, 0
    %4134 = vmatpush.xpose.msra.mxu0 0.0
    %4135 = vmatpush.xpose.msra.mxu0 0.0
    %4136 = vmatpush.xpose.msra.mxu0 0.0
    %4137 = vmatpush.xpose.msra.mxu0 0.0
    %4138 = vmatpush.xpose.msra.mxu0 0.0
    %4139 = vmatpush.xpose.msra.mxu0 0.0
    %4140 = vmatpush.xpose.msra.mxu0 0.0
    %4141 = vmatpush.xpose.msra.mxu0 0.0
    %4142 = vmatpush.xpose.msra.mxu0 0.0
    %4143 = vmatpush.xpose.msra.mxu0 0.0
    %4144 = vmatpush.xpose.msra.mxu0 0.0
    %4145 = vmatpush.xpose.msra.mxu0 0.0
    %4146 = vmatpush.xpose.msra.mxu0 0.0
    %4147 = vmatpush.xpose.msra.mxu0 0.0
    %4148 = vmatpush.xpose.msra.mxu0 0.0
    %4149 = vmatpush.xpose.msra.mxu0 %v4132
    %4150 = vmatmul.f32.gmra.mxu0 %v4130
    %v4151 = vpop.f32.mrf.mxu0
    %v4152 = vadd.f32 0.0, %v4151
    %4153 = vdwg.mxu0
    %4154 = vrot.lane.b32.xlu0 %v3525, 104
    %v4155 = vpop.permute.xlu0 %4154
    %4156 = vrot.lane.b32.xlu0 %v3558, 104
    %v4157 = vpop.permute.xlu0 %4156
    %v4158 = vsel %vm359, %v4155, 0
    %v4160 = vsel %vm359, %v4157, 0
    %4162 = vmatpush.xpose.msra.mxu0 0.0
    %4163 = vmatpush.xpose.msra.mxu0 0.0
    %4164 = vmatpush.xpose.msra.mxu0 0.0
    %4165 = vmatpush.xpose.msra.mxu0 0.0
    %4166 = vmatpush.xpose.msra.mxu0 0.0
    %4167 = vmatpush.xpose.msra.mxu0 0.0
    %4168 = vmatpush.xpose.msra.mxu0 0.0
    %4169 = vmatpush.xpose.msra.mxu0 0.0
    %4170 = vmatpush.xpose.msra.mxu0 0.0
    %4171 = vmatpush.xpose.msra.mxu0 0.0
    %4172 = vmatpush.xpose.msra.mxu0 0.0
    %4173 = vmatpush.xpose.msra.mxu0 0.0
    %4174 = vmatpush.xpose.msra.mxu0 0.0
    %4175 = vmatpush.xpose.msra.mxu0 0.0
    %4176 = vmatpush.xpose.msra.mxu0 0.0
    %4177 = vmatpush.xpose.msra.mxu0 %v4160
    %4178 = vmatmul.f32.gmra.mxu0 %v4158
    %v4179 = vpop.f32.mrf.mxu0
    %v4180 = vadd.f32 0.0, %v4179
    %4181 = vdwg.mxu0
    %v4182 = vmul.f32 %v4152, 0.35355338
    %v4183 = vmul.f32 %v4180, 0.35355338
    %v4184 = vsel %vm359, %v4182, -inf
    %4185 = vmax.xlane.f32.xlu0 %v4184
    %v4186 = vpop.xlane.xlu0 %4185
    %v4187 = vsel %vm359, %v4183, -inf
    %4188 = vmax.xlane.f32.xlu0 %v4187
    %v4189 = vpop.xlane.xlu0 %4188
    %v4190 = vsub.f32 %v4182, %v4186
    %v4191 = vsub.f32 %v4183, %v4189
    %v4192 = vmul.f32 %v4190, 1.442695
    %v4193 = vpow.pop %v4192
    %v4194 = vmul.f32 %v4191, 1.442695
    %v4195 = vpow.pop %v4194
    %v4196 = vsel %vm359, %v4193, 0.0
    %4197 = vadd.xlane.f32.xlu0 %v4196
    %v4198 = vpop.xlane.xlu0 %4197
    %v4199 = vsel %vm359, %v4195, 0.0
    %4200 = vadd.xlane.f32.xlu0 %v4199
    %v4201 = vpop.xlane.xlu0 %4200
    %v4202 = vrcp.pop %v4198
    %v4203 = vmul.f32 %v4198, %v4202
    %v4204 = vsub.f32 1.0, %v4203
    %v4205 = vmul.f32 %v4202, %v4204
    %v4206 = vadd.f32 %v4202, %v4205
    %vm4207 = vweird.f32 %v4198
    %vm4208 = vweird.f32 %v4202
    %vm4209 = vmor %vm4207, %vm4208
    %v4210 = vsel %vm4209, %v4202, %v4206
    %v4211 = vand.u32 2147483647, %v4198
    %vm4212 = vcmp.eq.f32.partialorder %v4211, 8.507059e+37
    %v4213 = vand.u32 %v4198, 2147483648
    %v4214 = vor.u32 1.1754944e-38, %v4213
    %v4215 = vsel %vm4212, %v4214, %v4210
    %v4216 = vmul.f32 %v4193, %v4215
    %v4217 = vrcp.pop %v4201
    %v4218 = vmul.f32 %v4201, %v4217
    %v4219 = vsub.f32 1.0, %v4218
    %v4220 = vmul.f32 %v4217, %v4219
    %v4221 = vadd.f32 %v4217, %v4220
    %vm4222 = vweird.f32 %v4201
    %vm4223 = vweird.f32 %v4217
    %vm4224 = vmor %vm4222, %vm4223
    %v4225 = vsel %vm4224, %v4217, %v4221
    %v4226 = vand.u32 2147483647, %v4201
    %vm4227 = vcmp.eq.f32.partialorder %v4226, 8.507059e+37
    %v4228 = vand.u32 %v4201, 2147483648
    %v4229 = vor.u32 1.1754944e-38, %v4228
    %v4230 = vsel %vm4227, %v4229, %v4225
    %v4231 = vmul.f32 %v4195, %v4230
    %4232 = vrot.lane.b32.xlu0 %v3555, 72
    %v4233 = vpop.permute.xlu0 %4232
    %v4236 = vsel %vm359, %v4216, 0
    %4238 = vmatpush.msra.mxu0 0.0
    %4239 = vmatpush.msra.mxu0 0.0
    %4240 = vmatpush.msra.mxu0 0.0
    %4241 = vmatpush.msra.mxu0 0.0
    %4242 = vmatpush.msra.mxu0 0.0
    %4243 = vmatpush.msra.mxu0 0.0
    %4244 = vmatpush.msra.mxu0 0.0
    %4245 = vmatpush.msra.mxu0 0.0
    %4246 = vmatpush.msra.mxu0 0.0
    %4247 = vmatpush.msra.mxu0 0.0
    %4248 = vmatpush.msra.mxu0 0.0
    %4249 = vmatpush.msra.mxu0 0.0
    %4250 = vmatpush.msra.mxu0 0.0
    %4251 = vmatpush.msra.mxu0 0.0
    %4252 = vmatpush.msra.mxu0 0.0
    %4253 = vmatpush.msra.mxu0 %v4233
    %4254 = vmatmul.f32.gmra.mxu0 %v4236
    %v4255 = vpop.f32.mrf.mxu0
    %v4256 = vadd.f32 0.0, %v4255
    %4257 = vdwg.mxu0
    %4258 = vrot.lane.b32.xlu0 %v3558, 72
    %v4259 = vpop.permute.xlu0 %4258
    %v4262 = vsel %vm359, %v4231, 0
    %4264 = vmatpush.msra.mxu0 0.0
    %4265 = vmatpush.msra.mxu0 0.0
    %4266 = vmatpush.msra.mxu0 0.0
    %4267 = vmatpush.msra.mxu0 0.0
    %4268 = vmatpush.msra.mxu0 0.0
    %4269 = vmatpush.msra.mxu0 0.0
    %4270 = vmatpush.msra.mxu0 0.0
    %4271 = vmatpush.msra.mxu0 0.0
    %4272 = vmatpush.msra.mxu0 0.0
    %4273 = vmatpush.msra.mxu0 0.0
    %4274 = vmatpush.msra.mxu0 0.0
    %4275 = vmatpush.msra.mxu0 0.0
    %4276 = vmatpush.msra.mxu0 0.0
    %4277 = vmatpush.msra.mxu0 0.0
    %4278 = vmatpush.msra.mxu0 0.0
    %4279 = vmatpush.msra.mxu0 %v4259
    %4280 = vmatmul.f32.gmra.mxu0 %v4262
    %v4281 = vpop.f32.mrf.mxu0
    %v4282 = vadd.f32 0.0, %v4281
    %4283 = vdwg.mxu0
    %v4285 = vsel %vm359, %v4256, 0
    %v4288 = vsel %vm359, %v4282, 0
    %4290 = vmatpush.msra.mxu0 0.0
    %4291 = vmatpush.msra.mxu0 0.0
    %4292 = vmatpush.msra.mxu0 0.0
    %4293 = vmatpush.msra.mxu0 0.0
    %4294 = vmatpush.msra.mxu0 0.0
    %4295 = vmatpush.msra.mxu0 0.0
    %4296 = vmatpush.msra.mxu0 0.0
    %4297 = vmatpush.msra.mxu0 0.0
    %4298 = vmatpush.msra.mxu0 0.0
    %4299 = vmatpush.msra.mxu0 0.0
    %4300 = vmatpush.msra.mxu0 0.0
    %4301 = vmatpush.msra.mxu0 0.0
    %4302 = vmatpush.msra.mxu0 0.0
    %4303 = vmatpush.msra.mxu0 0.0
    %4304 = vmatpush.msra.mxu0 0.0
    %4305 = vmatpush.msra.mxu0 %v3564
    %4306 = vmatmul.f32.gmra.mxu0 %v4285
    %v4307 = vpop.f32.mrf.mxu0
    %v4308 = vadd.f32 0.0, %v4307
    %4309 = vmatmul.f32.gmra.mxu0 %v4288
    %v4310 = vpop.f32.mrf.mxu0
    %v4311 = vadd.f32 0.0, %v4310
    %4312 = vdwg.mxu0
    %v4313 = vadd.f32 %v4124, %v4308
    %v4314 = vadd.f32 %v4125, %v4311
    %v4316 = vperm.slane %v3566, 0
    %v4318 = vadd.f32 %v4313, %v4316
    %v4319 = vadd.f32 %v4314, %v4316
    %v4320 = vadd.f32 %v3486, %v4318
    %v4321 = vadd.f32 %v3487, %v4319
    %v4322 = vsel %vm321, %v4320, 0.0
    %4323 = vadd.xlane.f32.xlu0 %v4322
    %v4324 = vpop.xlane.xlu0 %4323
    %v4325 = vsel %vm321, %v4321, 0.0
    %4326 = vadd.xlane.f32.xlu0 %v4325
    %v4327 = vpop.xlane.xlu0 %4326
    %v4328 = vmul.f32 %v4324, %v1126
    %v4329 = vmul.f32 %v4327, %v1126
    %v4330 = vsub.f32 %v4320, %v4328
    %v4331 = vsub.f32 %v4321, %v4329
    %v4332 = vmul.f32 %v4330, %v4330
    %v4333 = vmul.f32 %v4331, %v4331
    %v4334 = vsel %vm321, %v4332, 0.0
    %4335 = vadd.xlane.f32.xlu0 %v4334
    %v4336 = vpop.xlane.xlu0 %4335
    %v4337 = vsel %vm321, %v4333, 0.0
    %4338 = vadd.xlane.f32.xlu0 %v4337
    %v4339 = vpop.xlane.xlu0 %4338
    %v4340 = vmul.f32 %v4336, %v1126
    %v4341 = vmul.f32 %v4339, %v1126
    %v4342 = vadd.f32 %v4340, 1e-05
    %v4343 = vadd.f32 %v4341, 1e-05
    %v4344 = vrsqrt.pop %v4342
    %v4345 = vmul.f32 %v4344, %v4342
    %v4346 = vmul.f32 %v4345, %v4344
    %v4347 = vmul.f32 0.5, %v4346
    %v4348 = vsub.f32 1.5, %v4347
    %v4349 = vmul.f32 %v4344, %v4348
    %vm4350 = vweird.f32 %v4342
    %vm4351 = vweird.f32 %v4344
    %vm4352 = vmor %vm4350, %vm4351
    %v4353 = vsel %vm4352, %v4344, %v4349
    %v4354 = vrsqrt.pop %v4343
    %v4355 = vmul.f32 %v4354, %v4343
    %v4356 = vmul.f32 %v4355, %v4354
    %v4357 = vmul.f32 0.5, %v4356
    %v4358 = vsub.f32 1.5, %v4357
    %v4359 = vmul.f32 %v4354, %v4358
    %vm4360 = vweird.f32 %v4343
    %vm4361 = vweird.f32 %v4354
    %vm4362 = vmor %vm4360, %vm4361
    %v4363 = vsel %vm4362, %v4354, %v4359
    %v4364 = vmul.f32 %v4330, %v4353
    %v4365 = vmul.f32 %v4331, %v4363
    %v4366 = vperm.slane %v2632, 1
    %v4367 = vmul.f32 %v4364, %v4366
    %v4368 = vmul.f32 %v4365, %v4366
    %v4369 = vperm.slane %v2634, 1
    %v4370 = vadd.f32 %v4367, %v4369
    %v4371 = vadd.f32 %v4368, %v4369
    %s4372 = scalar_lea.vmem [#allocation17], 32
    %v4373 = vld [vmem:[%s4372] sm:$0xff]
    %v4374 = vld [vmem:[%s4372 + $0x8] sm:$0xff]
    %v4375 = vld [vmem:[%s4372 + $0x10] sm:$0xff]
    %v4376 = vld [vmem:[%s4372 + $0x18] sm:$0xff]
    %s4377 = scalar_lea.vmem %s43, 1
    %v4378 = vld [vmem:[%s4377] sm:$0x1]
    %v4380 = vperm.slane %v4378, 0
    %v4383 = vsel %vm321, %v4370, 0
    %v4386 = vsel %vm321, %v4371, 0
    %4388 = vmatpush.msra.mxu0 0.0
    %4389 = vmatpush.msra.mxu0 0.0
    %4390 = vmatpush.msra.mxu0 0.0
    %4391 = vmatpush.msra.mxu0 0.0
    %4392 = vmatpush.msra.mxu0 0.0
    %4393 = vmatpush.msra.mxu0 0.0
    %4394 = vmatpush.msra.mxu0 0.0
    %4395 = vmatpush.msra.mxu0 0.0
    %4396 = vmatpush.msra.mxu0 0.0
    %4397 = vmatpush.msra.mxu0 0.0
    %4398 = vmatpush.msra.mxu0 0.0
    %4399 = vmatpush.msra.mxu0 0.0
    %4400 = vmatpush.msra.mxu0 %v4376
    %4401 = vmatpush.msra.mxu0 %v4375
    %4402 = vmatpush.msra.mxu0 %v4374
    %4403 = vmatpush.msra.mxu0 %v4373
    %4404 = vmatmul.f32.gmra.mxu0 %v4383
    %v4405 = vpop.f32.mrf.mxu0
    %v4406 = vadd.f32 %v4380, %v4405
    %4407 = vmatmul.f32.gmra.mxu0 %v4386
    %v4408 = vpop.f32.mrf.mxu0
    %v4409 = vadd.f32 %v4380, %v4408
    %4410 = vdwg.mxu0
    %v4411 = vmul.f32 %v4406, %v4406
    %v4412 = vmul.f32 %v4409, %v4409
    %v4413 = vmul.f32 %v4406, %v4411
    %v4414 = vmul.f32 %v4409, %v4412
    %v4415 = vmul.f32 %v4413, 0.044715
    %v4416 = vmul.f32 %v4414, 0.044715
    %v4417 = vadd.f32 %v4406, %v4415
    %v4418 = vadd.f32 %v4409, %v4416
    %v4419 = vmul.f32 %v4417, 0.7978846
    %v4420 = vmul.f32 %v4418, 0.7978846
    %v4421 = vtanh.pop %v4419
    %v4422 = vtanh.pop %v4420
    %v4423 = vadd.f32 %v4421, 1.0
    %v4424 = vadd.f32 %v4422, 1.0
    %v4425 = vmul.f32 %v4423, 0.5
    %v4426 = vmul.f32 %v4424, 0.5
    %v4427 = vmul.f32 %v4406, %v4425
    %v4428 = vmul.f32 %v4409, %v4426
    %s4429 = scalar_lea.vmem %s45, 64
    %v4430 = vld [vmem:[%s4429] sm:$0xff]
    %v4431 = vld [vmem:[%s4429 + $0x8] sm:$0xff]
    %v4432 = vld [vmem:[%s4429 + $0x10] sm:$0xff]
    %v4433 = vld [vmem:[%s4429 + $0x18] sm:$0xff]
    %v4434 = vld [vmem:[%s4429 + $0x20] sm:$0xff]
    %v4435 = vld [vmem:[%s4429 + $0x28] sm:$0xff]
    %v4436 = vld [vmem:[%s4429 + $0x30] sm:$0xff]
    %v4437 = vld [vmem:[%s4429 + $0x38] sm:$0xff]
    %s4438 = scalar_lea.vmem %s47, 1
    %v4439 = vld [vmem:[%s4438] sm:$0x1]
    %v4441 = vperm.slane %v4439, 0
    %v4444 = vsel %vm2122, %v4427, 0
    %v4447 = vsel %vm2122, %v4428, 0
    %4449 = vmatpush.msra.mxu0 0.0
    %4450 = vmatpush.msra.mxu0 0.0
    %4451 = vmatpush.msra.mxu0 0.0
    %4452 = vmatpush.msra.mxu0 0.0
    %4453 = vmatpush.msra.mxu0 0.0
    %4454 = vmatpush.msra.mxu0 0.0
    %4455 = vmatpush.msra.mxu0 0.0
    %4456 = vmatpush.msra.mxu0 0.0
    %4457 = vmatpush.msra.mxu0 %v4437
    %4458 = vmatpush.msra.mxu0 %v4436
    %4459 = vmatpush.msra.mxu0 %v4435
    %4460 = vmatpush.msra.mxu0 %v4434
    %4461 = vmatpush.msra.mxu0 %v4433
    %4462 = vmatpush.msra.mxu0 %v4432
    %4463 = vmatpush.msra.mxu0 %v4431
    %4464 = vmatpush.msra.mxu0 %v4430
    %4465 = vmatmul.f32.gmra.mxu0 %v4444
    %v4466 = vpop.f32.mrf.mxu0
    %v4467 = vadd.f32 %v4441, %v4466
    %4468 = vmatmul.f32.gmra.mxu0 %v4447
    %v4469 = vpop.f32.mrf.mxu0
    %v4470 = vadd.f32 %v4441, %v4469
    %4471 = vdwg.mxu0
    %v4472 = vadd.f32 %v4370, %v4467
    %v4473 = vadd.f32 %v4371, %v4470
    %v4474 = vsel %vm321, %v4472, 0.0
    %4475 = vadd.xlane.f32.xlu0 %v4474
    %v4476 = vpop.xlane.xlu0 %4475
    %v4477 = vsel %vm321, %v4473, 0.0
    %4478 = vadd.xlane.f32.xlu0 %v4477
    %v4479 = vpop.xlane.xlu0 %4478
    %v4480 = vmul.f32 %v4476, %v1126
    %v4481 = vmul.f32 %v4479, %v1126
    %v4482 = vsub.f32 %v4472, %v4480
    %v4483 = vsub.f32 %v4473, %v4481
    %v4484 = vmul.f32 %v4482, %v4482
    %v4485 = vmul.f32 %v4483, %v4483
    %v4486 = vsel %vm321, %v4484, 0.0
    %4487 = vadd.xlane.f32.xlu0 %v4486
    %v4488 = vpop.xlane.xlu0 %4487
    %v4489 = vsel %vm321, %v4485, 0.0
    %4490 = vadd.xlane.f32.xlu0 %v4489
    %v4491 = vpop.xlane.xlu0 %4490
    %v4492 = vmul.f32 %v4488, %v1126
    %v4493 = vmul.f32 %v4491, %v1126
    %v4494 = vadd.f32 %v4492, 1e-05
    %v4495 = vadd.f32 %v4493, 1e-05
    %v4496 = vrsqrt.pop %v4494
    %v4497 = vmul.f32 %v4496, %v4494
    %v4498 = vmul.f32 %v4497, %v4496
    %v4499 = vmul.f32 0.5, %v4498
    %v4500 = vsub.f32 1.5, %v4499
    %v4501 = vmul.f32 %v4496, %v4500
    %vm4502 = vweird.f32 %v4494
    %vm4503 = vweird.f32 %v4496
    %vm4504 = vmor %vm4502, %vm4503
    %v4505 = vsel %vm4504, %v4496, %v4501
    %v4506 = vrsqrt.pop %v4495
    %v4507 = vmul.f32 %v4506, %v4495
    %v4508 = vmul.f32 %v4507, %v4506
    %v4509 = vmul.f32 0.5, %v4508
    %v4510 = vsub.f32 1.5, %v4509
    %v4511 = vmul.f32 %v4506, %v4510
    %vm4512 = vweird.f32 %v4495
    %vm4513 = vweird.f32 %v4506
    %vm4514 = vmor %vm4512, %vm4513
    %v4515 = vsel %vm4514, %v4506, %v4511
    %v4516 = vmul.f32 %v4482, %v4505
    %v4517 = vmul.f32 %v4483, %v4515
    %v4518 = vperm.slane %v2632, 2
    %v4519 = vmul.f32 %v4516, %v4518
    %v4520 = vmul.f32 %v4517, %v4518
    %v4521 = vperm.slane %v2634, 2
    %v4522 = vadd.f32 %v4519, %v4521
    %v4523 = vadd.f32 %v4520, %v4521
    %v4525 = vsel %vm321, %v4522, 0
    %v4528 = vsel %vm321, %v4523, 0
    %4530 = vmatpush.msra.mxu0 0.0
    %4531 = vmatpush.msra.mxu0 0.0
    %4532 = vmatpush.msra.mxu0 0.0
    %4533 = vmatpush.msra.mxu0 0.0
    %4534 = vmatpush.msra.mxu0 0.0
    %4535 = vmatpush.msra.mxu0 0.0
    %4536 = vmatpush.msra.mxu0 0.0
    %4537 = vmatpush.msra.mxu0 0.0
    %4538 = vmatpush.msra.mxu0 0.0
    %4539 = vmatpush.msra.mxu0 0.0
    %4540 = vmatpush.msra.mxu0 0.0
    %4541 = vmatpush.msra.mxu0 0.0
    %4542 = vmatpush.msra.mxu0 %v303
    %4543 = vmatpush.msra.mxu0 %v302
    %4544 = vmatpush.msra.mxu0 %v301
    %4545 = vmatpush.msra.mxu0 %v300
    %4546 = vmatmul.f32.gmra.mxu0 %v4525
    %v4547 = vpop.f32.mrf.mxu0
    %v4548 = vadd.f32 %v2205, %v4547
    %4549 = vmatmul.f32.gmra.mxu0 %v4528
    %v4550 = vpop.f32.mrf.mxu0
    %v4551 = vadd.f32 %v2205, %v4550
    %4552 = vdwg.mxu0
    %v4553 = vadd.f32 %v4548, %v2237
    %v4554 = vadd.f32 %v4551, %v2237
    %4555 = vmax.xlane.f32.xlu0 %v4553
    %v4556 = vpop.xlane.xlu0 %4555
    %4557 = vmax.xlane.f32.xlu0 %v4554
    %v4558 = vpop.xlane.xlu0 %4557
    %v4559 = vsub.f32 %v4553, %v4556
    %v4560 = vsub.f32 %v4554, %v4558
    %v4561 = vmul.f32 %v4559, 1.442695
    %v4562 = vpow.pop %v4561
    %v4563 = vmul.f32 %v4560, 1.442695
    %v4564 = vpow.pop %v4563
    %4565 = vadd.xlane.f32.xlu0 %v4562
    %v4566 = vpop.xlane.xlu0 %4565
    %4567 = vadd.xlane.f32.xlu0 %v4564
    %v4568 = vpop.xlane.xlu0 %4567
    %v4569 = vlog2.pop %v4566
    %v4570 = vmul.f32 %v4569, 0.6931472
    %v4571 = vlog2.pop %v4568
    %v4572 = vmul.f32 %v4571, 0.6931472
    %v4573 = vsub.f32 %v4559, %v4570
    %v4574 = vsub.f32 %v4560, %v4572
    %v4575 = vmul.f32 %v4573, %v280
    %v4576 = vmul.f32 %v4574, %v281
    %v4577 = vadd.f32 %v4575, %v4576
    %4578 = vadd.xlane.f32.xlu0 %v4577
    %v4579 = vpop.xlane.xlu0 %4578
    %v4580 = vrot.slane %v4579, 4
    %v4581 = vadd.f32 %v4579, %v4580
    %v4582 = vrot.slane %v4581, 2
    %v4583 = vadd.f32 %v4581, %v4582
    %v4584 = vrot.slane %v4583, 1
    %v4585 = vadd.f32 %v4583, %v4584
    %s4586 = vtos %v4585
    %v4587 = vstv %s4586
    %v4588 = vsub.f32 0.0, %v4587
    %4589 = vst [vmem:[#allocation19] sm:$0xff] %v4573
    %4590 = vst [vmem:[#allocation19 + $0x8] sm:$0xff] %v4574
    %4591 = vst [vmem:[#allocation20 + $0x8] sm:$0x1] %v4588
    // Predicated region
    $region154: #{tpu_custom_call.1} parent=1 // pred_check
      _
    $region155: #{tpu_custom_call.1} parent=1 // pred_check_branch
      %4593 = sbr.rel (0) target = $region157
    $region156: #{tpu_custom_call.1} parent=1 // pred_region
      %4595 = vsyncadd [#allocation4], 0
      %s4596 = sshll.u32 [#allocation19], 4
      %s4597 = int_to_ptr.vmem [resolvable:$true] %s4596
      %s4598 = sshll.u32 %s57, 4
      %s4599 = int_to_ptr.hbm [resolvable:$true] %s4598
      %4604 = dma.vmem_to_hbm [thread:$0]  %s4597, 256, %s4599, [#allocation4], 128, 128, 8
    $region157: #{tpu_custom_call.1} parent=1 // pred_fallthru
      _
    // Predicated region
    $region158: #{tpu_custom_call.1} parent=1 // pred_check
      _
    $region159: #{tpu_custom_call.1} parent=1 // pred_check_branch
      %4606 = sbr.rel (0) target = $region161
    $region160: #{tpu_custom_call.1} parent=1 // pred_region
      %4608 = vsyncadd [#allocation21], 0
      %s4609 = sshll.u32 [#allocation20], 4
      %s4610 = int_to_ptr.vmem [resolvable:$true] %s4609
      %s4611 = sshll.u32 %s59, 4
      %s4612 = int_to_ptr.hbm [resolvable:$true] %s4611
      %4617 = dma.vmem_to_hbm [thread:$0]  %s4610, 256, %s4612, [#allocation21], 128, 128, 8
    $region161: #{tpu_custom_call.1} parent=1 // pred_fallthru
      _
    // Predicated region
    $region162: #{tpu_custom_call.1} parent=1 // pred_check
      _
    $region163: #{tpu_custom_call.1} parent=1 // pred_check_branch
      %4619 = sbr.rel (0) target = $region165
    $region164: #{tpu_custom_call.1} parent=1 // pred_region
      %4621 = dma.done [#allocation4], 256
    $region165: #{tpu_custom_call.1} parent=1 // pred_fallthru
      _
    // Predicated region
    $region166: #{tpu_custom_call.1} parent=1 // pred_check
      _
    $region167: #{tpu_custom_call.1} parent=1 // pred_check_branch
      %4623 = sbr.rel (0) target = $region169
    $region168: #{tpu_custom_call.1} parent=1 // pred_region
      %4625 = dma.done [#allocation21], 256
    $region169: #{tpu_custom_call.1} parent=1 // pred_fallthru
      _
    %4626 = vsyncpa [#allocation3], 1
    %4627 = vsyncpa [#allocation6], 1
    %4628 = vsyncpa [#allocation9], 1
    %4629 = vsyncpa [#allocation12], 1
    %4630 = vsyncpa [#allocation15], 1
    %4631 = vsyncpa [#allocation18], 1
    %4632 = vsyncpa [#allocation4], 1
    %4633 = vsyncpa [#allocation21], 1

</llo_original>
